<compile_context>
chip_gen: v6e
topology: v6e:2x2x1
jax: 0.10.0
libtpu: 0.0.40
codegen_flags: <defaults>
</compile_context>

<pallas_src>
import functools
import math

import jax
import jax.numpy as jnp
from jax import lax
from jax.experimental import pallas as pl
from jax.experimental.pallas import tpu as pltpu


# --------------------------------------------------------------------------
# small shared helper (used both inside kernels and in the pure-JAX reference)
# --------------------------------------------------------------------------
def _ln(x, g, b, eps=1e-5):
    mu = jnp.mean(x, axis=-1, keepdims=True)
    var = jnp.mean(jnp.square(x - mu), axis=-1, keepdims=True)
    return (x - mu) * lax.rsqrt(var + eps) * g + b


# --------------------------------------------------------------------------
# Kernel A: fused matmul + bias (+ReLU) ;  variant with residual add
# --------------------------------------------------------------------------
def _linear_kernel(x_ref, w_ref, b_ref, o_ref, *, act):
    y = jnp.dot(x_ref[...], w_ref[...],
                preferred_element_type=jnp.float32) + b_ref[...]
    if act == "relu":
        y = jnp.maximum(y, 0.0)
    o_ref[...] = y


def linear_pallas(x, w, b, act="none"):
    M, _ = x.shape
    N = w.shape[1]
    return pl.pallas_call(
        functools.partial(_linear_kernel, act=act),
        out_shape=jax.ShapeDtypeStruct((M, N), jnp.float32),
    )(x, w, b.reshape(1, N))


def _linear_res_kernel(x_ref, w_ref, b_ref, r_ref, o_ref):
    o_ref[...] = (jnp.dot(x_ref[...], w_ref[...],
                          preferred_element_type=jnp.float32)
                  + b_ref[...] + r_ref[...])


def linear_res_pallas(x, w, b, r):
    M, _ = x.shape
    N = w.shape[1]
    return pl.pallas_call(
        _linear_res_kernel,
        out_shape=jax.ShapeDtypeStruct((M, N), jnp.float32),
    )(x, w, b.reshape(1, N), r)


# --------------------------------------------------------------------------
# Kernel B: single-head attention core  softmax(QK^T/sqrt(E)) V   (batched)
# --------------------------------------------------------------------------
def _attn_core_kernel(q_ref, k_ref, v_ref, o_ref, *, scale):
    s = jnp.einsum("bte,bse->bts", q_ref[...], k_ref[...],
                   preferred_element_type=jnp.float32) * scale
    s = s - jnp.max(s, axis=-1, keepdims=True)
    p = jnp.exp(s)
    p = p / jnp.sum(p, axis=-1, keepdims=True)
    o_ref[...] = jnp.einsum("bts,bse->bte", p, v_ref[...],
                            preferred_element_type=jnp.float32)


def attn_core_pallas(q, k, v):
    scale = 1.0 / math.sqrt(q.shape[-1])
    return pl.pallas_call(
        functools.partial(_attn_core_kernel, scale=scale),
        out_shape=jax.ShapeDtypeStruct(q.shape, jnp.float32),
    )(q, k, v)


# --------------------------------------------------------------------------
# Kernel C: fused LayerNorm -> Linear -> ReLU -> Linear    (head_mlp/neck_mlp)
# --------------------------------------------------------------------------
def _ln_mlp_kernel(x_ref, g_ref, be_ref, w1_ref, b1_ref, w2_ref, b2_ref, o_ref):
    h = _ln(x_ref[...], g_ref[...], be_ref[...])
    h = jnp.dot(h, w1_ref[...], preferred_element_type=jnp.float32) + b1_ref[...]
    h = jnp.maximum(h, 0.0)
    o_ref[...] = jnp.dot(h, w2_ref[...],
                         preferred_element_type=jnp.float32) + b2_ref[...]


def ln_mlp_pallas(x, p):
    M, _ = x.shape
    N = p["w2"].shape[1]
    return pl.pallas_call(
        _ln_mlp_kernel,
        out_shape=jax.ShapeDtypeStruct((M, N), jnp.float32),
    )(x, p["g"].reshape(1, -1), p["be"].reshape(1, -1),
      p["w1"], p["b1"].reshape(1, -1), p["w2"], p["b2"].reshape(1, -1))


# --------------------------------------------------------------------------
# Kernel D: masked LayerNorm-LSTM, whole sequence in ONE pallas_call
#           (grid over T, h/c state in VMEM scratch, rnn_input fused in-kernel)
# --------------------------------------------------------------------------
def _lnlstm_kernel(head_ref, neck_ref, state_ref, mask_ref, h0_ref, c0_ref,
                   wx_ref, wh_ref, b_ref, gxg_ref, gxb_ref, ghg_ref, ghb_ref,
                   gcg_ref, gcb_ref,
                   y_ref, hN_ref, cN_ref, h_s, c_s, *, H):
    t = pl.program_id(0)

    @pl.when(t == 0)
    def _():
        h_s[...] = h0_ref[...]
        c_s[...] = c0_ref[...]

    m = mask_ref[0]                                         # (B, 1)
    x = head_ref[0] * neck_ref[0] * state_ref[0]            # fused rnn_input (B, E)
    h = h_s[...] * m
    c = c_s[...] * m

    gx = _ln(jnp.dot(x, wx_ref[...], preferred_element_type=jnp.float32),
             gxg_ref[...], gxb_ref[...])
    gh = _ln(jnp.dot(h, wh_ref[...], preferred_element_type=jnp.float32),
             ghg_ref[...], ghb_ref[...])
    gates = gx + gh + b_ref[...]                            # (B, 4H)

    i = jax.nn.sigmoid(gates[:, 0 * H:1 * H])
    f = jax.nn.sigmoid(gates[:, 1 * H:2 * H])
    g = jnp.tanh(gates[:, 2 * H:3 * H])
    o = jax.nn.sigmoid(gates[:, 3 * H:4 * H])

    c_new = f * c + i * g
    h_new = o * jnp.tanh(_ln(c_new, gcg_ref[...], gcb_ref[...]))

    h_s[...] = h_new
    c_s[...] = c_new
    y_ref[0] = h_new
    hN_ref[...] = h_new
    cN_ref[...] = c_new


def lnlstm_pallas(head, neck, state, mask, h0, c0, p):
    T, B, E = head.shape
    H = h0.shape[-1]

    def full(shape):
        return pl.BlockSpec(shape, lambda t: (0,) * len(shape))

    def step(shape):
        return pl.BlockSpec(shape, lambda t: (t, 0, 0))

    in_specs = [
        step((1, B, E)), step((1, B, E)), step((1, B, E)), step((1, B, 1)),
        full((B, H)), full((B, H)),
        full((E, 4 * H)), full((H, 4 * H)), full((1, 4 * H)),
        full((1, 4 * H)), full((1, 4 * H)), full((1, 4 * H)), full((1, 4 * H)),
        full((1, H)), full((1, H)),
    ]
    out_specs = [step((1, B, H)), full((B, H)), full((B, H))]
    out_shape = (jax.ShapeDtypeStruct((T, B, H), jnp.float32),
                 jax.ShapeDtypeStruct((B, H), jnp.float32),
                 jax.ShapeDtypeStruct((B, H), jnp.float32))

    return pl.pallas_call(
        functools.partial(_lnlstm_kernel, H=H),
        grid=(T,),
        in_specs=in_specs,
        out_specs=out_specs,
        out_shape=out_shape,
        scratch_shapes=[pltpu.VMEM((B, H), jnp.float32),
                        pltpu.VMEM((B, H), jnp.float32)],
        compiler_params=pltpu.CompilerParams(
            dimension_semantics=("arbitrary",)),
    )(head, neck, state, mask, h0, c0,
      p["wx"], p["wh"], p["b"].reshape(1, -1),
      p["gxg"].reshape(1, -1), p["gxb"].reshape(1, -1),
      p["ghg"].reshape(1, -1), p["ghb"].reshape(1, -1),
      p["gcg"].reshape(1, -1), p["gcb"].reshape(1, -1))


# --------------------------------------------------------------------------
# wrapper glue: im2col conv encoder, MHA, full module forward
# --------------------------------------------------------------------------
def _im2col(x, k, s):
    # x: (N, H, W, C) -> (N*Ho*Wo, k*k*C), patch features ordered (dy, dx, c)
    N, Hh, Ww, C = x.shape
    Ho = (Hh - k) // s + 1
    Wo = (Ww - k) // s + 1
    cols = []
    for dy in range(k):
        for dx in range(k):
            cols.append(x[:, dy:dy + (Ho - 1) * s + 1:s,
                          dx:dx + (Wo - 1) * s + 1:s, :])
    patches = jnp.concatenate(cols, axis=-1)
    return patches.reshape(N * Ho * Wo, k * k * C), Ho, Wo


def _conv_relu(x_nhwc, w_oihw, b, k, s):
    o, i = w_oihw.shape[0], w_oihw.shape[1]
    patches, Ho, Wo = _im2col(x_nhwc, k, s)
    w2d = jnp.transpose(w_oihw, (2, 3, 1, 0)).reshape(k * k * i, o)
    y = linear_pallas(patches, w2d, b, act="relu")
    return y.reshape(x_nhwc.shape[0], Ho, Wo, o)


def nature_encoder_pallas(x_nchw, p):
    x = jnp.transpose(x_nchw, (0, 2, 3, 1))                 # NHWC
    x = _conv_relu(x, p["w1"], p["b1"], 8, 4)
    x = _conv_relu(x, p["w2"], p["b2"], 4, 2)
    x = _conv_relu(x, p["w3"], p["b3"], 3, 1)
    N = x.shape[0]
    # flatten in PyTorch NCHW order
    return jnp.transpose(x, (0, 3, 1, 2)).reshape(N, -1)


def mha_pallas(query_flat, kv_flat, p, T, B, E):
    q = linear_pallas(query_flat, p["wq"], p["bq"])
    kv = linear_pallas(kv_flat, p["wkv"], p["bkv"])
    qb = q.reshape(T, B, E).transpose(1, 0, 2)
    kb = kv[:, :E].reshape(T, B, E).transpose(1, 0, 2)
    vb = kv[:, E:].reshape(T, B, E).transpose(1, 0, 2)
    a = attn_core_pallas(qb, kb, vb)
    a_flat = a.transpose(1, 0, 2).reshape(T * B, E)
    return linear_res_pallas(a_flat, p["wo"], p["bo"], query_flat)


def encoder_forward(x, states, mask, params, cfg):
    T, B, _ = x.shape
    S, Cin, wh, E = cfg["state_dim"], cfg["in_channels"], cfg["wh"], cfg["hidden"]

    state_x = x[..., :S]
    visual_x = x[..., S:].reshape(T * B, Cin, wh, wh)
    head_x = visual_x[:, :Cin // 2]
    neck_x = visual_x[:, Cin // 2:]

    head_feat = nature_encoder_pallas(head_x, params["head_cam"])
    neck_feat = nature_encoder_pallas(neck_x, params["neck_cam"])

    head_p = linear_pallas(head_feat, params["head_proj_w"],
                           params["head_proj_b"], act="relu")
    neck_p = linear_pallas(neck_feat, params["neck_proj_w"],
                           params["neck_proj_b"], act="relu")

    head_att = mha_pallas(head_p, neck_p, params["head_att"], T, B, E)
    head_out = ln_mlp_pallas(head_att, params["head_mlp"])

    neck_att = mha_pallas(neck_p, head_out, params["neck_att"], T, B, E)
    neck_out = ln_mlp_pallas(neck_att, params["neck_mlp"])

    s = state_x.reshape(T * B, S)
    s = linear_pallas(s, params["base_w1"], params["base_b1"], act="relu")
    s = linear_pallas(s, params["base_w2"], params["base_b2"], act="relu")

    y, hN, cN = lnlstm_pallas(head_out.reshape(T, B, E),
                              neck_out.reshape(T, B, E),
                              s.reshape(T, B, E),
                              mask, states[0], states[1], params["rnn"])
    return y, (hN, cN)


# --------------------------------------------------------------------------
# pure-JAX reference (lax.conv + jnp ops) for verification
# --------------------------------------------------------------------------
def ref_forward(x, states, mask, params, cfg):
    T, B, _ = x.shape
    S, Cin, wh, E = cfg["state_dim"], cfg["in_channels"], cfg["wh"], cfg["hidden"]

    state_x = x[..., :S]
    visual_x = x[..., S:].reshape(T * B, Cin, wh, wh)
    head_x = visual_x[:, :Cin // 2]
    neck_x = visual_x[:, Cin // 2:]

    def conv(xc, w, b, stride):
        y = lax.conv_general_dilated(xc, w, (stride, stride), "VALID",
                                     dimension_numbers=("NCHW", "OIHW", "NCHW"))
        return jnp.maximum(y + b[None, :, None, None], 0.0)

    def nature(xc, p):
        y = conv(xc, p["w1"], p["b1"], 4)
        y = conv(y, p["w2"], p["b2"], 2)
        y = conv(y, p["w3"], p["b3"], 1)
        return y.reshape(y.shape[0], -1)

    head_feat = nature(head_x, params["head_cam"])
    neck_feat = nature(neck_x, params["neck_cam"])
    head_p = jnp.maximum(head_feat @ params["head_proj_w"]
                         + params["head_proj_b"], 0.0)
    neck_p = jnp.maximum(neck_feat @ params["neck_proj_w"]
                         + params["neck_proj_b"], 0.0)

    def mha(qf, kvf, p):
        q = qf @ p["wq"] + p["bq"]
        kv = kvf @ p["wkv"] + p["bkv"]
        qb = q.reshape(T, B, E).transpose(1, 0, 2)
        kb = kv[:, :E].reshape(T, B, E).transpose(1, 0, 2)
        vb = kv[:, E:].reshape(T, B, E).transpose(1, 0, 2)
        sc = jnp.einsum("bte,bse->bts", qb, kb) / math.sqrt(E)
        pw = jax.nn.softmax(sc, axis=-1)
        a = jnp.einsum("bts,bse->bte", pw, vb)
        return a.transpose(1, 0, 2).reshape(T * B, E) @ p["wo"] + p["bo"] + qf

    def mlp(xf, p):
        h = _ln(xf, p["g"], p["be"])
        h = jnp.maximum(h @ p["w1"] + p["b1"], 0.0)
        return h @ p["w2"] + p["b2"]

    head_att = mha(head_p, neck_p, params["head_att"])
    head_out = mlp(head_att, params["head_mlp"])
    neck_att = mha(neck_p, head_out, params["neck_att"])
    neck_out = mlp(neck_att, params["neck_mlp"])

    st = state_x.reshape(T * B, S)
    st = jnp.maximum(st @ params["base_w1"] + params["base_b1"], 0.0)
    st = jnp.maximum(st @ params["base_w2"] + params["base_b2"], 0.0)

    rnn_in = (head_out * neck_out * st).reshape(T, B, E)
    h, c = states
    p = params["rnn"]
    H = h.shape[-1]
    ys = []
    for t in range(T):
        m = mask[t]
        hh = h * m
        cc = c * m
        gx = _ln(rnn_in[t] @ p["wx"], p["gxg"], p["gxb"])
        gh = _ln(hh @ p["wh"], p["ghg"], p["ghb"])
        gates = gx + gh + p["b"]
        i = jax.nn.sigmoid(gates[:, :H])
        f = jax.nn.sigmoid(gates[:, H:2 * H])
        g = jnp.tanh(gates[:, 2 * H:3 * H])
        o = jax.nn.sigmoid(gates[:, 3 * H:])
        c = f * cc + i * g
        h = o * jnp.tanh(_ln(c, p["gcg"], p["gcb"]))
        ys.append(h)
    return jnp.stack(ys), (h, c)


# --------------------------------------------------------------------------
if __name__ == "__main__":
    T, B = 4, 2
    state_dim = 24
    in_channels = 4
    wh = 64                      # 64x64 images -> NatureEncoder flatten dim 1024
    hidden_dims = (64, 32)
    E = H = hidden_dims[-1]
    cfg = dict(state_dim=state_dim, in_channels=in_channels, wh=wh, hidden=E)

    keys = iter(jax.random.split(jax.random.PRNGKey(0), 64))

    def dense(fan_in, shape):
        return jax.random.normal(next(keys), shape, jnp.float32) / math.sqrt(fan_in)

    def small(shape):
        return 0.01 * jax.random.normal(next(keys), shape, jnp.float32)

    def cam_params():
        ci = in_channels // 2
        return dict(w1=dense(ci * 64, (32, ci, 8, 8)), b1=small((32,)),
                    w2=dense(32 * 16, (64, 32, 4, 4)), b2=small((64,)),
                    w3=dense(64 * 9, (64, 64, 3, 3)), b3=small((64,)))

    def att_params():
        return dict(wq=dense(E, (E, E)), bq=small((E,)),
                    wkv=dense(E, (E, 2 * E)), bkv=small((2 * E,)),
                    wo=dense(E, (E, E)), bo=small((E,)))

    def mlp_params():
        return dict(g=1.0 + 0.1 * jax.random.normal(next(keys), (E,), jnp.float32),
                    be=small((E,)),
                    w1=dense(E, (E, E)), b1=small((E,)),
                    w2=dense(E, (E, E)), b2=small((E,)))

    params = dict(
        head_cam=cam_params(), neck_cam=cam_params(),
        head_proj_w=dense(1024, (1024, E)), head_proj_b=small((E,)),
        neck_proj_w=dense(1024, (1024, E)), neck_proj_b=small((E,)),
        head_att=att_params(), neck_att=att_params(),
        head_mlp=mlp_params(), neck_mlp=mlp_params(),
        base_w1=dense(state_dim, (state_dim, hidden_dims[0])),
        base_b1=small((hidden_dims[0],)),
        base_w2=dense(hidden_dims[0], (hidden_dims[0], E)),
        base_b2=small((E,)),
        rnn=dict(
            wx=dense(E, (E, 4 * H)), wh=dense(H, (H, 4 * H)), b=small((4 * H,)),
            gxg=1.0 + 0.1 * jax.random.normal(next(keys), (4 * H,), jnp.float32),
            gxb=small((4 * H,)),
            ghg=1.0 + 0.1 * jax.random.normal(next(keys), (4 * H,), jnp.float32),
            ghb=small((4 * H,)),
            gcg=1.0 + 0.1 * jax.random.normal(next(keys), (H,), jnp.float32),
            gcb=small((H,)),
        ),
    )

    visual_dim = in_channels * wh * wh
    x = jax.random.normal(next(keys), (T, B, state_dim + visual_dim), jnp.float32)
    h0 = 0.1 * jax.random.normal(next(keys), (B, H), jnp.float32)
    c0 = 0.1 * jax.random.normal(next(keys), (B, H), jnp.float32)
    mask = jnp.ones((T, B, 1), jnp.float32).at[2, 1, 0].set(0.0)

    @jax.jit
    def run(x, h0, c0, mask, params):
        return encoder_forward(x, (h0, c0), mask, params, cfg)

    (y, (hN, cN)) = jax.block_until_ready(run(x, h0, c0, mask, params))
    y_ref, (h_ref, c_ref) = ref_forward(x, (h0, c0), mask, params, cfg)

    assert y.shape == (T, B, H) and hN.shape == (B, H) and cN.shape == (B, H)
    err = max(float(jnp.max(jnp.abs(y - y_ref))),
              float(jnp.max(jnp.abs(hN - h_ref))),
              float(jnp.max(jnp.abs(cN - c_ref))))
    if err > 2e-2:
        raise AssertionError(f"mismatch vs reference: max abs err = {err}")
    print("KERNEL_OK")
</pallas_src>

<mosaic_0001>
module attributes {stable_mosaic.version = 11 : i64} {
  func.func @_linear_kernel(%arg0: memref<1800x128xf32, #tpu.memory_space<vmem>>, %arg1: memref<128x32xf32, #tpu.memory_space<vmem>>, %arg2: memref<1x32xf32, #tpu.memory_space<vmem>>, %arg3: memref<1800x32xf32, #tpu.memory_space<vmem>>) attributes {dimension_semantics = [], scalar_prefetch = 0 : i64, scratch_operands = 0 : i64, tpu.core_type = #tpu.core_type<tc>} {
    %c0 = arith.constant 0 : index
    %c0_0 = arith.constant 0 : index
    %0 = vector.load %arg0[%c0, %c0_0] : memref<1800x128xf32, #tpu.memory_space<vmem>>, vector<1800x128xf32>
    %c0_1 = arith.constant 0 : index
    %c0_2 = arith.constant 0 : index
    %1 = vector.load %arg1[%c0_1, %c0_2] : memref<128x32xf32, #tpu.memory_space<vmem>>, vector<128x32xf32>
    %cst = arith.constant dense<0.000000e+00> : vector<1800x32xf32>
    %2 = tpu.matmul %0, %1, %cst {dimension_numbers = #tpu.dot_dimension_numbers<[1], [0], [0], [1], [0, 0, 1, 1], [], []>} : vector<1800x128xf32>, vector<128x32xf32>, vector<1800x32xf32> -> vector<1800x32xf32>
    %c0_3 = arith.constant 0 : index
    %c0_4 = arith.constant 0 : index
    %3 = vector.load %arg2[%c0_3, %c0_4] : memref<1x32xf32, #tpu.memory_space<vmem>>, vector<1x32xf32>
    %4 = vector.broadcast %3 : vector<1x32xf32> to vector<1800x32xf32>
    %5 = arith.addf %2, %4 : vector<1800x32xf32>
    %cst_5 = arith.constant 0.000000e+00 : f32
    %6 = vector.broadcast %cst_5 : f32 to vector<1800x32xf32>
    %7 = arith.maximumf %5, %6 : vector<1800x32xf32>
    %c0_6 = arith.constant 0 : index
    %c0_7 = arith.constant 0 : index
    %8 = vector.load %arg3[%c0_6, %c0_7] : memref<1800x32xf32, #tpu.memory_space<vmem>>, vector<1800x32xf32>
    tpu.vector_store %arg3[%c0_6, %c0_7], %7 {strides = array<i32>} : memref<1800x32xf32, #tpu.memory_space<vmem>>, vector<1800x32xf32>,
    return
  }
}

module attributes {stable_mosaic.version = 11 : i64} {
  func.func @_linear_kernel(%arg0: memref<288x512xf32, #tpu.memory_space<vmem>>, %arg1: memref<512x64xf32, #tpu.memory_space<vmem>>, %arg2: memref<1x64xf32, #tpu.memory_space<vmem>>, %arg3: memref<288x64xf32, #tpu.memory_space<vmem>>) attributes {dimension_semantics = [], scalar_prefetch = 0 : i64, scratch_operands = 0 : i64, tpu.core_type = #tpu.core_type<tc>} {
    %c0 = arith.constant 0 : index
    %c0_0 = arith.constant 0 : index
    %0 = vector.load %arg0[%c0, %c0_0] : memref<288x512xf32, #tpu.memory_space<vmem>>, vector<288x512xf32>
    %c0_1 = arith.constant 0 : index
    %c0_2 = arith.constant 0 : index
    %1 = vector.load %arg1[%c0_1, %c0_2] : memref<512x64xf32, #tpu.memory_space<vmem>>, vector<512x64xf32>
    %cst = arith.constant dense<0.000000e+00> : vector<288x64xf32>
    %2 = tpu.matmul %0, %1, %cst {dimension_numbers = #tpu.dot_dimension_numbers<[1], [0], [0], [1], [0, 0, 1, 1], [], []>} : vector<288x512xf32>, vector<512x64xf32>, vector<288x64xf32> -> vector<288x64xf32>
    %c0_3 = arith.constant 0 : index
    %c0_4 = arith.constant 0 : index
    %3 = vector.load %arg2[%c0_3, %c0_4] : memref<1x64xf32, #tpu.memory_space<vmem>>, vector<1x64xf32>
    %4 = vector.broadcast %3 : vector<1x64xf32> to vector<288x64xf32>
    %5 = arith.addf %2, %4 : vector<288x64xf32>
    %cst_5 = arith.constant 0.000000e+00 : f32
    %6 = vector.broadcast %cst_5 : f32 to vector<288x64xf32>
    %7 = arith.maximumf %5, %6 : vector<288x64xf32>
    %c0_6 = arith.constant 0 : index
    %c0_7 = arith.constant 0 : index
    %8 = vector.load %arg3[%c0_6, %c0_7] : memref<288x64xf32, #tpu.memory_space<vmem>>, vector<288x64xf32>
    tpu.vector_store %arg3[%c0_6, %c0_7], %7 {strides = array<i32>} : memref<288x64xf32, #tpu.memory_space<vmem>>, vector<288x64xf32>,
    return
  }
}

module attributes {stable_mosaic.version = 11 : i64} {
  func.func @_linear_kernel(%arg0: memref<128x576xf32, #tpu.memory_space<vmem>>, %arg1: memref<576x64xf32, #tpu.memory_space<vmem>>, %arg2: memref<1x64xf32, #tpu.memory_space<vmem>>, %arg3: memref<128x64xf32, #tpu.memory_space<vmem>>) attributes {dimension_semantics = [], scalar_prefetch = 0 : i64, scratch_operands = 0 : i64, tpu.core_type = #tpu.core_type<tc>} {
    %c0 = arith.constant 0 : index
    %c0_0 = arith.constant 0 : index
    %0 = vector.load %arg0[%c0, %c0_0] : memref<128x576xf32, #tpu.memory_space<vmem>>, vector<128x576xf32>
    %c0_1 = arith.constant 0 : index
    %c0_2 = arith.constant 0 : index
    %1 = vector.load %arg1[%c0_1, %c0_2] : memref<576x64xf32, #tpu.memory_space<vmem>>, vector<576x64xf32>
    %cst = arith.constant dense<0.000000e+00> : vector<128x64xf32>
    %2 = tpu.matmul %0, %1, %cst {dimension_numbers = #tpu.dot_dimension_numbers<[1], [0], [0], [1], [0, 0, 1, 1], [], []>} : vector<128x576xf32>, vector<576x64xf32>, vector<128x64xf32> -> vector<128x64xf32>
    %c0_3 = arith.constant 0 : index
    %c0_4 = arith.constant 0 : index
    %3 = vector.load %arg2[%c0_3, %c0_4] : memref<1x64xf32, #tpu.memory_space<vmem>>, vector<1x64xf32>
    %4 = vector.broadcast %3 : vector<1x64xf32> to vector<128x64xf32>
    %5 = arith.addf %2, %4 : vector<128x64xf32>
    %cst_5 = arith.constant 0.000000e+00 : f32
    %6 = vector.broadcast %cst_5 : f32 to vector<128x64xf32>
    %7 = arith.maximumf %5, %6 : vector<128x64xf32>
    %c0_6 = arith.constant 0 : index
    %c0_7 = arith.constant 0 : index
    %8 = vector.load %arg3[%c0_6, %c0_7] : memref<128x64xf32, #tpu.memory_space<vmem>>, vector<128x64xf32>
    tpu.vector_store %arg3[%c0_6, %c0_7], %7 {strides = array<i32>} : memref<128x64xf32, #tpu.memory_space<vmem>>, vector<128x64xf32>,
    return
  }
}

module attributes {stable_mosaic.version = 11 : i64} {
  func.func @_linear_kernel(%arg0: memref<8x1024xf32, #tpu.memory_space<vmem>>, %arg1: memref<1024x32xf32, #tpu.memory_space<vmem>>, %arg2: memref<1x32xf32, #tpu.memory_space<vmem>>, %arg3: memref<8x32xf32, #tpu.memory_space<vmem>>) attributes {dimension_semantics = [], scalar_prefetch = 0 : i64, scratch_operands = 0 : i64, tpu.core_type = #tpu.core_type<tc>} {
    %c0 = arith.constant 0 : index
    %c0_0 = arith.constant 0 : index
    %0 = vector.load %arg0[%c0, %c0_0] : memref<8x1024xf32, #tpu.memory_space<vmem>>, vector<8x1024xf32>
    %c0_1 = arith.constant 0 : index
    %c0_2 = arith.constant 0 : index
    %1 = vector.load %arg1[%c0_1, %c0_2] : memref<1024x32xf32, #tpu.memory_space<vmem>>, vector<1024x32xf32>
    %cst = arith.constant dense<0.000000e+00> : vector<8x32xf32>
    %2 = tpu.matmul %0, %1, %cst {dimension_numbers = #tpu.dot_dimension_numbers<[1], [0], [0], [1], [0, 0, 1, 1], [], []>} : vector<8x1024xf32>, vector<1024x32xf32>, vector<8x32xf32> -> vector<8x32xf32>
    %c0_3 = arith.constant 0 : index
    %c0_4 = arith.constant 0 : index
    %3 = vector.load %arg2[%c0_3, %c0_4] : memref<1x32xf32, #tpu.memory_space<vmem>>, vector<1x32xf32>
    %4 = vector.broadcast %3 : vector<1x32xf32> to vector<8x32xf32>
    %5 = arith.addf %2, %4 : vector<8x32xf32>
    %cst_5 = arith.constant 0.000000e+00 : f32
    %6 = vector.broadcast %cst_5 : f32 to vector<8x32xf32>
    %7 = arith.maximumf %5, %6 : vector<8x32xf32>
    %c0_6 = arith.constant 0 : index
    %c0_7 = arith.constant 0 : index
    %8 = vector.load %arg3[%c0_6, %c0_7] : memref<8x32xf32, #tpu.memory_space<vmem>>, vector<8x32xf32>
    tpu.vector_store %arg3[%c0_6, %c0_7], %7 {strides = array<i32>} : memref<8x32xf32, #tpu.memory_space<vmem>>, vector<8x32xf32>,
    return
  }
}

module attributes {stable_mosaic.version = 11 : i64} {
  func.func @_linear_kernel(%arg0: memref<8x32xf32, #tpu.memory_space<vmem>>, %arg1: memref<32x64xf32, #tpu.memory_space<vmem>>, %arg2: memref<1x64xf32, #tpu.memory_space<vmem>>, %arg3: memref<8x64xf32, #tpu.memory_space<vmem>>) attributes {dimension_semantics = [], scalar_prefetch = 0 : i64, scratch_operands = 0 : i64, tpu.core_type = #tpu.core_type<tc>} {
    %c0 = arith.constant 0 : index
    %c0_0 = arith.constant 0 : index
    %0 = vector.load %arg0[%c0, %c0_0] : memref<8x32xf32, #tpu.memory_space<vmem>>, vector<8x32xf32>
    %c0_1 = arith.constant 0 : index
    %c0_2 = arith.constant 0 : index
    %1 = vector.load %arg1[%c0_1, %c0_2] : memref<32x64xf32, #tpu.memory_space<vmem>>, vector<32x64xf32>
    %cst = arith.constant dense<0.000000e+00> : vector<8x64xf32>
    %2 = tpu.matmul %0, %1, %cst {dimension_numbers = #tpu.dot_dimension_numbers<[1], [0], [0], [1], [0, 0, 1, 1], [], []>} : vector<8x32xf32>, vector<32x64xf32>, vector<8x64xf32> -> vector<8x64xf32>
    %c0_3 = arith.constant 0 : index
    %c0_4 = arith.constant 0 : index
    %3 = vector.load %arg2[%c0_3, %c0_4] : memref<1x64xf32, #tpu.memory_space<vmem>>, vector<1x64xf32>
    %4 = vector.broadcast %3 : vector<1x64xf32> to vector<8x64xf32>
    %5 = arith.addf %2, %4 : vector<8x64xf32>
    %c0_5 = arith.constant 0 : index
    %c0_6 = arith.constant 0 : index
    %6 = vector.load %arg3[%c0_5, %c0_6] : memref<8x64xf32, #tpu.memory_space<vmem>>, vector<8x64xf32>
    tpu.vector_store %arg3[%c0_5, %c0_6], %5 {strides = array<i32>} : memref<8x64xf32, #tpu.memory_space<vmem>>, vector<8x64xf32>,
    return
  }
}

module attributes {stable_mosaic.version = 11 : i64} {
  func.func @_linear_kernel(%arg0: memref<8x32xf32, #tpu.memory_space<vmem>>, %arg1: memref<32x32xf32, #tpu.memory_space<vmem>>, %arg2: memref<1x32xf32, #tpu.memory_space<vmem>>, %arg3: memref<8x32xf32, #tpu.memory_space<vmem>>) attributes {dimension_semantics = [], scalar_prefetch = 0 : i64, scratch_operands = 0 : i64, tpu.core_type = #tpu.core_type<tc>} {
    %c0 = arith.constant 0 : index
    %c0_0 = arith.constant 0 : index
    %0 = vector.load %arg0[%c0, %c0_0] : memref<8x32xf32, #tpu.memory_space<vmem>>, vector<8x32xf32>
    %c0_1 = arith.constant 0 : index
    %c0_2 = arith.constant 0 : index
    %1 = vector.load %arg1[%c0_1, %c0_2] : memref<32x32xf32, #tpu.memory_space<vmem>>, vector<32x32xf32>
    %cst = arith.constant dense<0.000000e+00> : vector<8x32xf32>
    %2 = tpu.matmul %0, %1, %cst {dimension_numbers = #tpu.dot_dimension_numbers<[1], [0], [0], [1], [0, 0, 1, 1], [], []>} : vector<8x32xf32>, vector<32x32xf32>, vector<8x32xf32> -> vector<8x32xf32>
    %c0_3 = arith.constant 0 : index
    %c0_4 = arith.constant 0 : index
    %3 = vector.load %arg2[%c0_3, %c0_4] : memref<1x32xf32, #tpu.memory_space<vmem>>, vector<1x32xf32>
    %4 = vector.broadcast %3 : vector<1x32xf32> to vector<8x32xf32>
    %5 = arith.addf %2, %4 : vector<8x32xf32>
    %c0_5 = arith.constant 0 : index
    %c0_6 = arith.constant 0 : index
    %6 = vector.load %arg3[%c0_5, %c0_6] : memref<8x32xf32, #tpu.memory_space<vmem>>, vector<8x32xf32>
    tpu.vector_store %arg3[%c0_5, %c0_6], %5 {strides = array<i32>} : memref<8x32xf32, #tpu.memory_space<vmem>>, vector<8x32xf32>,
    return
  }
}

module attributes {stable_mosaic.version = 11 : i64} {
  func.func @_attn_core_kernel(%arg0: memref<2x4x32xf32, #tpu.memory_space<vmem>>, %arg1: memref<2x4x32xf32, #tpu.memory_space<vmem>>, %arg2: memref<2x4x32xf32, #tpu.memory_space<vmem>>, %arg3: memref<2x4x32xf32, #tpu.memory_space<vmem>>) attributes {dimension_semantics = [], scalar_prefetch = 0 : i64, scratch_operands = 0 : i64, tpu.core_type = #tpu.core_type<tc>} {
    %c0 = arith.constant 0 : index
    %c0_0 = arith.constant 0 : index
    %c0_1 = arith.constant 0 : index
    %0 = vector.load %arg0[%c0, %c0_0, %c0_1] : memref<2x4x32xf32, #tpu.memory_space<vmem>>, vector<2x4x32xf32>
    %c0_2 = arith.constant 0 : index
    %c0_3 = arith.constant 0 : index
    %c0_4 = arith.constant 0 : index
    %1 = vector.load %arg1[%c0_2, %c0_3, %c0_4] : memref<2x4x32xf32, #tpu.memory_space<vmem>>, vector<2x4x32xf32>
    "tpu.trace_start"() <{level = 10 : i32, message = "bte,bse->bts"}> : () -> ()
    %cst = arith.constant dense<0.000000e+00> : vector<2x4x4xf32>
    %2 = tpu.matmul %0, %1, %cst {dimension_numbers = #tpu.dot_dimension_numbers<[2], [2], [1], [1], [0, 0, 0, 1, 1, 1], [0], [0]>} : vector<2x4x32xf32>, vector<2x4x32xf32>, vector<2x4x4xf32> -> vector<2x4x4xf32>
    "tpu.trace_stop"() : () -> ()
    %cst_5 = arith.constant 0.176776692 : f32
    %3 = vector.broadcast %cst_5 : f32 to vector<2x4x4xf32>
    %4 = arith.mulf %2, %3 : vector<2x4x4xf32>
    %cst_6 = arith.constant dense<0xFF800000> : vector<2x4xf32>
    %5 = vector.multi_reduction <maximumf>, %4, %cst_6 [2] : vector<2x4x4xf32> to vector<2x4xf32>
    %6 = vector.shape_cast %5 : vector<2x4xf32> to vector<2x4x1xf32>
    %7 = vector.broadcast %6 : vector<2x4x1xf32> to vector<2x4x4xf32>
    %8 = arith.subf %4, %7 : vector<2x4x4xf32>
    %9 = math.exp %8 : vector<2x4x4xf32>
    %cst_7 = arith.constant dense<0.000000e+00> : vector<2x4xf32>
    %10 = vector.multi_reduction <add>, %9, %cst_7 [2] : vector<2x4x4xf32> to vector<2x4xf32>
    %11 = vector.shape_cast %10 : vector<2x4xf32> to vector<2x4x1xf32>
    %12 = vector.broadcast %11 : vector<2x4x1xf32> to vector<2x4x4xf32>
    %13 = arith.divf %9, %12 : vector<2x4x4xf32>
    %c0_8 = arith.constant 0 : index
    %c0_9 = arith.constant 0 : index
    %c0_10 = arith.constant 0 : index
    %14 = vector.load %arg2[%c0_8, %c0_9, %c0_10] : memref<2x4x32xf32, #tpu.memory_space<vmem>>, vector<2x4x32xf32>
    "tpu.trace_start"() <{level = 10 : i32, message = "bts,bse->bte"}> : () -> ()
    %cst_11 = arith.constant dense<0.000000e+00> : vector<2x4x32xf32>
    %15 = tpu.matmul %13, %14, %cst_11 {dimension_numbers = #tpu.dot_dimension_numbers<[2], [1], [1], [2], [0, 0, 0, 1, 1, 2], [0], [0]>} : vector<2x4x4xf32>, vector<2x4x32xf32>, vector<2x4x32xf32> -> vector<2x4x32xf32>
    "tpu.trace_stop"() : () -> ()
    %c0_12 = arith.constant 0 : index
    %c0_13 = arith.constant 0 : index
    %c0_14 = arith.constant 0 : index
    %16 = vector.load %arg3[%c0_12, %c0_13, %c0_14] : memref<2x4x32xf32, #tpu.memory_space<vmem>>, vector<2x4x32xf32>
    tpu.vector_store %arg3[%c0_12, %c0_13, %c0_14], %15 {strides = array<i32>} : memref<2x4x32xf32, #tpu.memory_space<vmem>>, vector<2x4x32xf32>,
    return
  }
}

module attributes {stable_mosaic.version = 11 : i64} {
  func.func @_ln_mlp_kernel(%arg0: memref<8x32xf32, #tpu.memory_space<vmem>>, %arg1: memref<1x32xf32, #tpu.memory_space<vmem>>, %arg2: memref<1x32xf32, #tpu.memory_space<vmem>>, %arg3: memref<32x32xf32, #tpu.memory_space<vmem>>, %arg4: memref<1x32xf32, #tpu.memory_space<vmem>>, %arg5: memref<32x32xf32, #tpu.memory_space<vmem>>, %arg6: memref<1x32xf32, #tpu.memory_space<vmem>>, %arg7: memref<8x32xf32, #tpu.memory_space<vmem>>) attributes {dimension_semantics = [], scalar_prefetch = 0 : i64, scratch_operands = 0 : i64, tpu.core_type = #tpu.core_type<tc>} {
    %c0 = arith.constant 0 : index
    %c0_0 = arith.constant 0 : index
    %0 = vector.load %arg0[%c0, %c0_0] : memref<8x32xf32, #tpu.memory_space<vmem>>, vector<8x32xf32>
    %c0_1 = arith.constant 0 : index
    %c0_2 = arith.constant 0 : index
    %1 = vector.load %arg1[%c0_1, %c0_2] : memref<1x32xf32, #tpu.memory_space<vmem>>, vector<1x32xf32>
    %c0_3 = arith.constant 0 : index
    %c0_4 = arith.constant 0 : index
    %2 = vector.load %arg2[%c0_3, %c0_4] : memref<1x32xf32, #tpu.memory_space<vmem>>, vector<1x32xf32>
    %cst = arith.constant dense<0.000000e+00> : vector<8xf32>
    %3 = vector.multi_reduction <add>, %0, %cst [1] : vector<8x32xf32> to vector<8xf32>
    %4 = vector.shape_cast %3 : vector<8xf32> to vector<8x1xf32>
    %cst_5 = arith.constant 3.200000e+01 : f32
    %5 = vector.broadcast %cst_5 : f32 to vector<8x1xf32>
    %6 = arith.divf %4, %5 : vector<8x1xf32>
    %7 = vector.broadcast %6 : vector<8x1xf32> to vector<8x32xf32>
    %8 = arith.subf %0, %7 : vector<8x32xf32>
    %9 = arith.mulf %8, %8 : vector<8x32xf32>
    %cst_6 = arith.constant dense<0.000000e+00> : vector<8xf32>
    %10 = vector.multi_reduction <add>, %9, %cst_6 [1] : vector<8x32xf32> to vector<8xf32>
    %11 = vector.shape_cast %10 : vector<8xf32> to vector<8x1xf32>
    %cst_7 = arith.constant 3.200000e+01 : f32
    %12 = vector.broadcast %cst_7 : f32 to vector<8x1xf32>
    %13 = arith.divf %11, %12 : vector<8x1xf32>
    %14 = vector.broadcast %6 : vector<8x1xf32> to vector<8x32xf32>
    %15 = arith.subf %0, %14 : vector<8x32xf32>
    %cst_8 = arith.constant 9.99999974E-6 : f32
    %16 = vector.broadcast %cst_8 : f32 to vector<8x1xf32>
    %17 = arith.addf %13, %16 : vector<8x1xf32>
    %18 = math.rsqrt %17 : vector<8x1xf32>
    %19 = vector.broadcast %18 : vector<8x1xf32> to vector<8x32xf32>
    %20 = arith.mulf %15, %19 : vector<8x32xf32>
    %21 = vector.broadcast %1 : vector<1x32xf32> to vector<8x32xf32>
    %22 = arith.mulf %20, %21 : vector<8x32xf32>
    %23 = vector.broadcast %2 : vector<1x32xf32> to vector<8x32xf32>
    %24 = arith.addf %22, %23 : vector<8x32xf32>
    %c0_9 = arith.constant 0 : index
    %c0_10 = arith.constant 0 : index
    %25 = vector.load %arg3[%c0_9, %c0_10] : memref<32x32xf32, #tpu.memory_space<vmem>>, vector<32x32xf32>
    %cst_11 = arith.constant dense<0.000000e+00> : vector<8x32xf32>
    %26 = tpu.matmul %24, %25, %cst_11 {dimension_numbers = #tpu.dot_dimension_numbers<[1], [0], [0], [1], [0, 0, 1, 1], [], []>} : vector<8x32xf32>, vector<32x32xf32>, vector<8x32xf32> -> vector<8x32xf32>
    %c0_12 = arith.constant 0 : index
    %c0_13 = arith.constant 0 : index
    %27 = vector.load %arg4[%c0_12, %c0_13] : memref<1x32xf32, #tpu.memory_space<vmem>>, vector<1x32xf32>
    %28 = vector.broadcast %27 : vector<1x32xf32> to vector<8x32xf32>
    %29 = arith.addf %26, %28 : vector<8x32xf32>
    %cst_14 = arith.constant 0.000000e+00 : f32
    %30 = vector.broadcast %cst_14 : f32 to vector<8x32xf32>
    %31 = arith.maximumf %29, %30 : vector<8x32xf32>
    %c0_15 = arith.constant 0 : index
    %c0_16 = arith.constant 0 : index
    %32 = vector.load %arg5[%c0_15, %c0_16] : memref<32x32xf32, #tpu.memory_space<vmem>>, vector<32x32xf32>
    %cst_17 = arith.constant dense<0.000000e+00> : vector<8x32xf32>
    %33 = tpu.matmul %31, %32, %cst_17 {dimension_numbers = #tpu.dot_dimension_numbers<[1], [0], [0], [1], [0, 0, 1, 1], [], []>} : vector<8x32xf32>, vector<32x32xf32>, vector<8x32xf32> -> vector<8x32xf32>
    %c0_18 = arith.constant 0 : index
    %c0_19 = arith.constant 0 : index
    %34 = vector.load %arg6[%c0_18, %c0_19] : memref<1x32xf32, #tpu.memory_space<vmem>>, vector<1x32xf32>
    %35 = vector.broadcast %34 : vector<1x32xf32> to vector<8x32xf32>
    %36 = arith.addf %33, %35 : vector<8x32xf32>
    %c0_20 = arith.constant 0 : index
    %c0_21 = arith.constant 0 : index
    %37 = vector.load %arg7[%c0_20, %c0_21] : memref<8x32xf32, #tpu.memory_space<vmem>>, vector<8x32xf32>
    tpu.vector_store %arg7[%c0_20, %c0_21], %36 {strides = array<i32>} : memref<8x32xf32, #tpu.memory_space<vmem>>, vector<8x32xf32>,
    return
  }
}

module attributes {stable_mosaic.version = 11 : i64} {
  func.func @_ln_mlp_kernel(%arg0: memref<8x32xf32, #tpu.memory_space<vmem>>, %arg1: memref<1x32xf32, #tpu.memory_space<vmem>>, %arg2: memref<1x32xf32, #tpu.memory_space<vmem>>, %arg3: memref<32x32xf32, #tpu.memory_space<vmem>>, %arg4: memref<1x32xf32, #tpu.memory_space<vmem>>, %arg5: memref<32x32xf32, #tpu.memory_space<vmem>>, %arg6: memref<1x32xf32, #tpu.memory_space<vmem>>, %arg7: memref<8x32xf32, #tpu.memory_space<vmem>>) attributes {dimension_semantics = [], scalar_prefetch = 0 : i64, scratch_operands = 0 : i64, tpu.core_type = #tpu.core_type<tc>} {
    %c0 = arith.constant 0 : index
    %c0_0 = arith.constant 0 : index
    %0 = vector.load %arg0[%c0, %c0_0] : memref<8x32xf32, #tpu.memory_space<vmem>>, vector<8x32xf32>
    %c0_1 = arith.constant 0 : index
    %c0_2 = arith.constant 0 : index
    %1 = vector.load %arg1[%c0_1, %c0_2] : memref<1x32xf32, #tpu.memory_space<vmem>>, vector<1x32xf32>
    %c0_3 = arith.constant 0 : index
    %c0_4 = arith.constant 0 : index
    %2 = vector.load %arg2[%c0_3, %c0_4] : memref<1x32xf32, #tpu.memory_space<vmem>>, vector<1x32xf32>
    %cst = arith.constant dense<0.000000e+00> : vector<8xf32>
    %3 = vector.multi_reduction <add>, %0, %cst [1] : vector<8x32xf32> to vector<8xf32>
    %4 = vector.shape_cast %3 : vector<8xf32> to vector<8x1xf32>
    %cst_5 = arith.constant 3.200000e+01 : f32
    %5 = vector.broadcast %cst_5 : f32 to vector<8x1xf32>
    %6 = arith.divf %4, %5 : vector<8x1xf32>
    %7 = vector.broadcast %6 : vector<8x1xf32> to vector<8x32xf32>
    %8 = arith.subf %0, %7 : vector<8x32xf32>
    %9 = arith.mulf %8, %8 : vector<8x32xf32>
    %cst_6 = arith.constant dense<0.000000e+00> : vector<8xf32>
    %10 = vector.multi_reduction <add>, %9, %cst_6 [1] : vector<8x32xf32> to vector<8xf32>
    %11 = vector.shape_cast %10 : vector<8xf32> to vector<8x1xf32>
    %cst_7 = arith.constant 3.200000e+01 : f32
    %12 = vector.broadcast %cst_7 : f32 to vector<8x1xf32>
    %13 = arith.divf %11, %12 : vector<8x1xf32>
    %14 = vector.broadcast %6 : vector<8x1xf32> to vector<8x32xf32>
    %15 = arith.subf %0, %14 : vector<8x32xf32>
    %cst_8 = arith.constant 9.99999974E-6 : f32
    %16 = vector.broadcast %cst_8 : f32 to vector<8x1xf32>
    %17 = arith.addf %13, %16 : vector<8x1xf32>
    %18 = math.rsqrt %17 : vector<8x1xf32>
    %19 = vector.broadcast %18 : vector<8x1xf32> to vector<8x32xf32>
    %20 = arith.mulf %15, %19 : vector<8x32xf32>
    %21 = vector.broadcast %1 : vector<1x32xf32> to vector<8x32xf32>
    %22 = arith.mulf %20, %21 : vector<8x32xf32>
    %23 = vector.broadcast %2 : vector<1x32xf32> to vector<8x32xf32>
    %24 = arith.addf %22, %23 : vector<8x32xf32>
    %c0_9 = arith.constant 0 : index
    %c0_10 = arith.constant 0 : index
    %25 = vector.load %arg3[%c0_9, %c0_10] : memref<32x32xf32, #tpu.memory_space<vmem>>, vector<32x32xf32>
    %cst_11 = arith.constant dense<0.000000e+00> : vector<8x32xf32>
    %26 = tpu.matmul %24, %25, %cst_11 {dimension_numbers = #tpu.dot_dimension_numbers<[1], [0], [0], [1], [0, 0, 1, 1], [], []>} : vector<8x32xf32>, vector<32x32xf32>, vector<8x32xf32> -> vector<8x32xf32>
    %c0_12 = arith.constant 0 : index
    %c0_13 = arith.constant 0 : index
    %27 = vector.load %arg4[%c0_12, %c0_13] : memref<1x32xf32, #tpu.memory_space<vmem>>, vector<1x32xf32>
    %28 = vector.broadcast %27 : vector<1x32xf32> to vector<8x32xf32>
    %29 = arith.addf %26, %28 : vector<8x32xf32>
    %cst_14 = arith.constant 0.000000e+00 : f32
    %30 = vector.broadcast %cst_14 : f32 to vector<8x32xf32>
    %31 = arith.maximumf %29, %30 : vector<8x32xf32>
    %c0_15 = arith.constant 0 : index
    %c0_16 = arith.constant 0 : index
    %32 = vector.load %arg5[%c0_15, %c0_16] : memref<32x32xf32, #tpu.memory_space<vmem>>, vector<32x32xf32>
    %cst_17 = arith.constant dense<0.000000e+00> : vector<8x32xf32>
    %33 = tpu.matmul %31, %32, %cst_17 {dimension_numbers = #tpu.dot_dimension_numbers<[1], [0], [0], [1], [0, 0, 1, 1], [], []>} : vector<8x32xf32>, vector<32x32xf32>, vector<8x32xf32> -> vector<8x32xf32>
    %c0_18 = arith.constant 0 : index
    %c0_19 = arith.constant 0 : index
    %34 = vector.load %arg6[%c0_18, %c0_19] : memref<1x32xf32, #tpu.memory_space<vmem>>, vector<1x32xf32>
    %35 = vector.broadcast %34 : vector<1x32xf32> to vector<8x32xf32>
    %36 = arith.addf %33, %35 : vector<8x32xf32>
    %c0_20 = arith.constant 0 : index
    %c0_21 = arith.constant 0 : index
    %37 = vector.load %arg7[%c0_20, %c0_21] : memref<8x32xf32, #tpu.memory_space<vmem>>, vector<8x32xf32>
    tpu.vector_store %arg7[%c0_20, %c0_21], %36 {strides = array<i32>} : memref<8x32xf32, #tpu.memory_space<vmem>>, vector<8x32xf32>,
    return
  }
}

module attributes {stable_mosaic.version = 11 : i64} {
  func.func @_linear_res_kernel(%arg0: memref<8x32xf32, #tpu.memory_space<vmem>>, %arg1: memref<32x32xf32, #tpu.memory_space<vmem>>, %arg2: memref<1x32xf32, #tpu.memory_space<vmem>>, %arg3: memref<8x32xf32, #tpu.memory_space<vmem>>, %arg4: memref<8x32xf32, #tpu.memory_space<vmem>>) attributes {dimension_semantics = [], scalar_prefetch = 0 : i64, scratch_operands = 0 : i64, tpu.core_type = #tpu.core_type<tc>} {
    %c0 = arith.constant 0 : index
    %c0_0 = arith.constant 0 : index
    %0 = vector.load %arg0[%c0, %c0_0] : memref<8x32xf32, #tpu.memory_space<vmem>>, vector<8x32xf32>
    %c0_1 = arith.constant 0 : index
    %c0_2 = arith.constant 0 : index
    %1 = vector.load %arg1[%c0_1, %c0_2] : memref<32x32xf32, #tpu.memory_space<vmem>>, vector<32x32xf32>
    %cst = arith.constant dense<0.000000e+00> : vector<8x32xf32>
    %2 = tpu.matmul %0, %1, %cst {dimension_numbers = #tpu.dot_dimension_numbers<[1], [0], [0], [1], [0, 0, 1, 1], [], []>} : vector<8x32xf32>, vector<32x32xf32>, vector<8x32xf32> -> vector<8x32xf32>
    %c0_3 = arith.constant 0 : index
    %c0_4 = arith.constant 0 : index
    %3 = vector.load %arg2[%c0_3, %c0_4] : memref<1x32xf32, #tpu.memory_space<vmem>>, vector<1x32xf32>
    %4 = vector.broadcast %3 : vector<1x32xf32> to vector<8x32xf32>
    %5 = arith.addf %2, %4 : vector<8x32xf32>
    %c0_5 = arith.constant 0 : index
    %c0_6 = arith.constant 0 : index
    %6 = vector.load %arg3[%c0_5, %c0_6] : memref<8x32xf32, #tpu.memory_space<vmem>>, vector<8x32xf32>
    %7 = arith.addf %5, %6 : vector<8x32xf32>
    %c0_7 = arith.constant 0 : index
    %c0_8 = arith.constant 0 : index
    %8 = vector.load %arg4[%c0_7, %c0_8] : memref<8x32xf32, #tpu.memory_space<vmem>>, vector<8x32xf32>
    tpu.vector_store %arg4[%c0_7, %c0_8], %7 {strides = array<i32>} : memref<8x32xf32, #tpu.memory_space<vmem>>, vector<8x32xf32>,
    return
  }
}

module attributes {stable_mosaic.version = 11 : i64} {
  func.func @_linear_kernel(%arg0: memref<8x24xf32, #tpu.memory_space<vmem>>, %arg1: memref<24x64xf32, #tpu.memory_space<vmem>>, %arg2: memref<1x64xf32, #tpu.memory_space<vmem>>, %arg3: memref<8x64xf32, #tpu.memory_space<vmem>>) attributes {dimension_semantics = [], scalar_prefetch = 0 : i64, scratch_operands = 0 : i64, tpu.core_type = #tpu.core_type<tc>} {
    %c0 = arith.constant 0 : index
    %c0_0 = arith.constant 0 : index
    %0 = vector.load %arg0[%c0, %c0_0] : memref<8x24xf32, #tpu.memory_space<vmem>>, vector<8x24xf32>
    %c0_1 = arith.constant 0 : index
    %c0_2 = arith.constant 0 : index
    %1 = vector.load %arg1[%c0_1, %c0_2] : memref<24x64xf32, #tpu.memory_space<vmem>>, vector<24x64xf32>
    %cst = arith.constant dense<0.000000e+00> : vector<8x64xf32>
    %2 = tpu.matmul %0, %1, %cst {dimension_numbers = #tpu.dot_dimension_numbers<[1], [0], [0], [1], [0, 0, 1, 1], [], []>} : vector<8x24xf32>, vector<24x64xf32>, vector<8x64xf32> -> vector<8x64xf32>
    %c0_3 = arith.constant 0 : index
    %c0_4 = arith.constant 0 : index
    %3 = vector.load %arg2[%c0_3, %c0_4] : memref<1x64xf32, #tpu.memory_space<vmem>>, vector<1x64xf32>
    %4 = vector.broadcast %3 : vector<1x64xf32> to vector<8x64xf32>
    %5 = arith.addf %2, %4 : vector<8x64xf32>
    %cst_5 = arith.constant 0.000000e+00 : f32
    %6 = vector.broadcast %cst_5 : f32 to vector<8x64xf32>
    %7 = arith.maximumf %5, %6 : vector<8x64xf32>
    %c0_6 = arith.constant 0 : index
    %c0_7 = arith.constant 0 : index
    %8 = vector.load %arg3[%c0_6, %c0_7] : memref<8x64xf32, #tpu.memory_space<vmem>>, vector<8x64xf32>
    tpu.vector_store %arg3[%c0_6, %c0_7], %7 {strides = array<i32>} : memref<8x64xf32, #tpu.memory_space<vmem>>, vector<8x64xf32>,
    return
  }
}

module attributes {stable_mosaic.version = 11 : i64} {
  func.func @_linear_kernel(%arg0: memref<8x64xf32, #tpu.memory_space<vmem>>, %arg1: memref<64x32xf32, #tpu.memory_space<vmem>>, %arg2: memref<1x32xf32, #tpu.memory_space<vmem>>, %arg3: memref<8x32xf32, #tpu.memory_space<vmem>>) attributes {dimension_semantics = [], scalar_prefetch = 0 : i64, scratch_operands = 0 : i64, tpu.core_type = #tpu.core_type<tc>} {
    %c0 = arith.constant 0 : index
    %c0_0 = arith.constant 0 : index
    %0 = vector.load %arg0[%c0, %c0_0] : memref<8x64xf32, #tpu.memory_space<vmem>>, vector<8x64xf32>
    %c0_1 = arith.constant 0 : index
    %c0_2 = arith.constant 0 : index
    %1 = vector.load %arg1[%c0_1, %c0_2] : memref<64x32xf32, #tpu.memory_space<vmem>>, vector<64x32xf32>
    %cst = arith.constant dense<0.000000e+00> : vector<8x32xf32>
    %2 = tpu.matmul %0, %1, %cst {dimension_numbers = #tpu.dot_dimension_numbers<[1], [0], [0], [1], [0, 0, 1, 1], [], []>} : vector<8x64xf32>, vector<64x32xf32>, vector<8x32xf32> -> vector<8x32xf32>
    %c0_3 = arith.constant 0 : index
    %c0_4 = arith.constant 0 : index
    %3 = vector.load %arg2[%c0_3, %c0_4] : memref<1x32xf32, #tpu.memory_space<vmem>>, vector<1x32xf32>
    %4 = vector.broadcast %3 : vector<1x32xf32> to vector<8x32xf32>
    %5 = arith.addf %2, %4 : vector<8x32xf32>
    %cst_5 = arith.constant 0.000000e+00 : f32
    %6 = vector.broadcast %cst_5 : f32 to vector<8x32xf32>
    %7 = arith.maximumf %5, %6 : vector<8x32xf32>
    %c0_6 = arith.constant 0 : index
    %c0_7 = arith.constant 0 : index
    %8 = vector.load %arg3[%c0_6, %c0_7] : memref<8x32xf32, #tpu.memory_space<vmem>>, vector<8x32xf32>
    tpu.vector_store %arg3[%c0_6, %c0_7], %7 {strides = array<i32>} : memref<8x32xf32, #tpu.memory_space<vmem>>, vector<8x32xf32>,
    return
  }
}

module attributes {stable_mosaic.version = 11 : i64} {
  func.func @_lnlstm_kernel(%arg0: i32, %arg1: memref<1x2x32xf32, #tpu.memory_space<vmem>>, %arg2: memref<1x2x32xf32, #tpu.memory_space<vmem>>, %arg3: memref<1x2x32xf32, #tpu.memory_space<vmem>>, %arg4: memref<1x2x1xf32, #tpu.memory_space<vmem>>, %arg5: memref<2x32xf32, #tpu.memory_space<vmem>>, %arg6: memref<2x32xf32, #tpu.memory_space<vmem>>, %arg7: memref<32x128xf32, #tpu.memory_space<vmem>>, %arg8: memref<32x128xf32, #tpu.memory_space<vmem>>, %arg9: memref<1x128xf32, #tpu.memory_space<vmem>>, %arg10: memref<1x128xf32, #tpu.memory_space<vmem>>, %arg11: memref<1x128xf32, #tpu.memory_space<vmem>>, %arg12: memref<1x128xf32, #tpu.memory_space<vmem>>, %arg13: memref<1x128xf32, #tpu.memory_space<vmem>>, %arg14: memref<1x32xf32, #tpu.memory_space<vmem>>, %arg15: memref<1x32xf32, #tpu.memory_space<vmem>>, %arg16: memref<1x2x32xf32, #tpu.memory_space<vmem>>, %arg17: memref<2x32xf32, #tpu.memory_space<vmem>>, %arg18: memref<2x32xf32, #tpu.memory_space<vmem>>, %arg19: memref<2x32xf32, #tpu.memory_space<vmem>>, %arg20: memref<2x32xf32, #tpu.memory_space<vmem>>) attributes {dimension_semantics = [#tpu.dimension_semantics<arbitrary>], iteration_bounds = array<i64: 4>, scalar_prefetch = 0 : i64, scratch_operands = 2 : i64, tpu.core_type = #tpu.core_type<tc>, window_params = [{transform_indices = @transform_0, window_bounds = array<i64: 1, 2, 32>}, {transform_indices = @transform_1, window_bounds = array<i64: 1, 2, 32>}, {transform_indices = @transform_2, window_bounds = array<i64: 1, 2, 32>}, {transform_indices = @transform_3, window_bounds = array<i64: 1, 2, 1>}, {pipeline_mode = #tpu.pipeline_mode<synchronous>, transform_indices = @transform_4, window_bounds = array<i64: 2, 32>}, {pipeline_mode = #tpu.pipeline_mode<synchronous>, transform_indices = @transform_5, window_bounds = array<i64: 2, 32>}, {pipeline_mode = #tpu.pipeline_mode<synchronous>, transform_indices = @transform_6, window_bounds = array<i64: 32, 128>}, {pipeline_mode = #tpu.pipeline_mode<synchronous>, transform_indices = @transform_7, window_bounds = array<i64: 32, 128>}, {pipeline_mode = #tpu.pipeline_mode<synchronous>, transform_indices = @transform_8, window_bounds = array<i64: 1, 128>}, {pipeline_mode = #tpu.pipeline_mode<synchronous>, transform_indices = @transform_9, window_bounds = array<i64: 1, 128>}, {pipeline_mode = #tpu.pipeline_mode<synchronous>, transform_indices = @transform_10, window_bounds = array<i64: 1, 128>}, {pipeline_mode = #tpu.pipeline_mode<synchronous>, transform_indices = @transform_11, window_bounds = array<i64: 1, 128>}, {pipeline_mode = #tpu.pipeline_mode<synchronous>, transform_indices = @transform_12, window_bounds = array<i64: 1, 128>}, {pipeline_mode = #tpu.pipeline_mode<synchronous>, transform_indices = @transform_13, window_bounds = array<i64: 1, 32>}, {pipeline_mode = #tpu.pipeline_mode<synchronous>, transform_indices = @transform_14, window_bounds = array<i64: 1, 32>}, {transform_indices = @transform_15, window_bounds = array<i64: 1, 2, 32>}, {pipeline_mode = #tpu.pipeline_mode<synchronous>, transform_indices = @transform_16, window_bounds = array<i64: 2, 32>}, {pipeline_mode = #tpu.pipeline_mode<synchronous>, transform_indices = @transform_17, window_bounds = array<i64: 2, 32>}]} {
    %c0_i32 = arith.constant 0 : i32
    %0 = arith.cmpi eq, %arg0, %c0_i32 : i32
    %1 = arith.extui %0 : i1 to i32
    %c0_i32_0 = arith.constant 0 : i32
    %2 = arith.cmpi ne, %1, %c0_i32_0 : i32
    scf.if %2 {
      %c0_64 = arith.constant 0 : index
      %c0_65 = arith.constant 0 : index
      %131 = vector.load %arg5[%c0_64, %c0_65] : memref<2x32xf32, #tpu.memory_space<vmem>>, vector<2x32xf32>
      %c0_66 = arith.constant 0 : index
      %c0_67 = arith.constant 0 : index
      %132 = vector.load %arg19[%c0_66, %c0_67] : memref<2x32xf32, #tpu.memory_space<vmem>>, vector<2x32xf32>
      tpu.vector_store %arg19[%c0_66, %c0_67], %131 {strides = array<i32>} : memref<2x32xf32, #tpu.memory_space<vmem>>, vector<2x32xf32>,
      %c0_68 = arith.constant 0 : index
      %c0_69 = arith.constant 0 : index
      %133 = vector.load %arg6[%c0_68, %c0_69] : memref<2x32xf32, #tpu.memory_space<vmem>>, vector<2x32xf32>
      %c0_70 = arith.constant 0 : index
      %c0_71 = arith.constant 0 : index
      %134 = vector.load %arg20[%c0_70, %c0_71] : memref<2x32xf32, #tpu.memory_space<vmem>>, vector<2x32xf32>
      tpu.vector_store %arg20[%c0_70, %c0_71], %133 {strides = array<i32>} : memref<2x32xf32, #tpu.memory_space<vmem>>, vector<2x32xf32>,
    } else {
    }
    %c0 = arith.constant 0 : index
    %c0_1 = arith.constant 0 : index
    %c0_2 = arith.constant 0 : index
    %3 = vector.load %arg4[%c0, %c0_1, %c0_2] : memref<1x2x1xf32, #tpu.memory_space<vmem>>, vector<1x2x1xf32>
    %4 = vector.shape_cast %3 : vector<1x2x1xf32> to vector<2x1xf32>
    %c0_3 = arith.constant 0 : index
    %c0_4 = arith.constant 0 : index
    %c0_5 = arith.constant 0 : index
    %5 = vector.load %arg1[%c0_3, %c0_4, %c0_5] : memref<1x2x32xf32, #tpu.memory_space<vmem>>, vector<1x2x32xf32>
    %6 = vector.shape_cast %5 : vector<1x2x32xf32> to vector<2x32xf32>
    %c0_6 = arith.constant 0 : index
    %c0_7 = arith.constant 0 : index
    %c0_8 = arith.constant 0 : index
    %7 = vector.load %arg2[%c0_6, %c0_7, %c0_8] : memref<1x2x32xf32, #tpu.memory_space<vmem>>, vector<1x2x32xf32>
    %8 = vector.shape_cast %7 : vector<1x2x32xf32> to vector<2x32xf32>
    %9 = arith.mulf %6, %8 : vector<2x32xf32>
    %c0_9 = arith.constant 0 : index
    %c0_10 = arith.constant 0 : index
    %c0_11 = arith.constant 0 : index
    %10 = vector.load %arg3[%c0_9, %c0_10, %c0_11] : memref<1x2x32xf32, #tpu.memory_space<vmem>>, vector<1x2x32xf32>
    %11 = vector.shape_cast %10 : vector<1x2x32xf32> to vector<2x32xf32>
    %12 = arith.mulf %9, %11 : vector<2x32xf32>
    %c0_12 = arith.constant 0 : index
    %c0_13 = arith.constant 0 : index
    %13 = vector.load %arg19[%c0_12, %c0_13] : memref<2x32xf32, #tpu.memory_space<vmem>>, vector<2x32xf32>
    %14 = vector.broadcast %4 : vector<2x1xf32> to vector<2x32xf32>
    %15 = arith.mulf %13, %14 : vector<2x32xf32>
    %c0_14 = arith.constant 0 : index
    %c0_15 = arith.constant 0 : index
    %16 = vector.load %arg20[%c0_14, %c0_15] : memref<2x32xf32, #tpu.memory_space<vmem>>, vector<2x32xf32>
    %17 = vector.broadcast %4 : vector<2x1xf32> to vector<2x32xf32>
    %18 = arith.mulf %16, %17 : vector<2x32xf32>
    %c0_16 = arith.constant 0 : index
    %c0_17 = arith.constant 0 : index
    %19 = vector.load %arg7[%c0_16, %c0_17] : memref<32x128xf32, #tpu.memory_space<vmem>>, vector<32x128xf32>
    %cst = arith.constant dense<0.000000e+00> : vector<2x128xf32>
    %20 = tpu.matmul %12, %19, %cst {dimension_numbers = #tpu.dot_dimension_numbers<[1], [0], [0], [1], [0, 0, 1, 1], [], []>} : vector<2x32xf32>, vector<32x128xf32>, vector<2x128xf32> -> vector<2x128xf32>
    %c0_18 = arith.constant 0 : index
    %c0_19 = arith.constant 0 : index
    %21 = vector.load %arg10[%c0_18, %c0_19] : memref<1x128xf32, #tpu.memory_space<vmem>>, vector<1x128xf32>
    %c0_20 = arith.constant 0 : index
    %c0_21 = arith.constant 0 : index
    %22 = vector.load %arg11[%c0_20, %c0_21] : memref<1x128xf32, #tpu.memory_space<vmem>>, vector<1x128xf32>
    %cst_22 = arith.constant dense<0.000000e+00> : vector<2xf32>
    %23 = vector.multi_reduction <add>, %20, %cst_22 [1] : vector<2x128xf32> to vector<2xf32>
    %24 = vector.shape_cast %23 : vector<2xf32> to vector<2x1xf32>
    %cst_23 = arith.constant 1.280000e+02 : f32
    %25 = vector.broadcast %cst_23 : f32 to vector<2x1xf32>
    %26 = arith.divf %24, %25 : vector<2x1xf32>
    %27 = vector.broadcast %26 : vector<2x1xf32> to vector<2x128xf32>
    %28 = arith.subf %20, %27 : vector<2x128xf32>
    %29 = arith.mulf %28, %28 : vector<2x128xf32>
    %cst_24 = arith.constant dense<0.000000e+00> : vector<2xf32>
    %30 = vector.multi_reduction <add>, %29, %cst_24 [1] : vector<2x128xf32> to vector<2xf32>
    %31 = vector.shape_cast %30 : vector<2xf32> to vector<2x1xf32>
    %cst_25 = arith.constant 1.280000e+02 : f32
    %32 = vector.broadcast %cst_25 : f32 to vector<2x1xf32>
    %33 = arith.divf %31, %32 : vector<2x1xf32>
    %34 = vector.broadcast %26 : vector<2x1xf32> to vector<2x128xf32>
    %35 = arith.subf %20, %34 : vector<2x128xf32>
    %cst_26 = arith.constant 9.99999974E-6 : f32
    %36 = vector.broadcast %cst_26 : f32 to vector<2x1xf32>
    %37 = arith.addf %33, %36 : vector<2x1xf32>
    %38 = math.rsqrt %37 : vector<2x1xf32>
    %39 = vector.broadcast %38 : vector<2x1xf32> to vector<2x128xf32>
    %40 = arith.mulf %35, %39 : vector<2x128xf32>
    %41 = vector.broadcast %21 : vector<1x128xf32> to vector<2x128xf32>
    %42 = arith.mulf %40, %41 : vector<2x128xf32>
    %43 = vector.broadcast %22 : vector<1x128xf32> to vector<2x128xf32>
    %44 = arith.addf %42, %43 : vector<2x128xf32>
    %c0_27 = arith.constant 0 : index
    %c0_28 = arith.constant 0 : index
    %45 = vector.load %arg8[%c0_27, %c0_28] : memref<32x128xf32, #tpu.memory_space<vmem>>, vector<32x128xf32>
    %cst_29 = arith.constant dense<0.000000e+00> : vector<2x128xf32>
    %46 = tpu.matmul %15, %45, %cst_29 {dimension_numbers = #tpu.dot_dimension_numbers<[1], [0], [0], [1], [0, 0, 1, 1], [], []>} : vector<2x32xf32>, vector<32x128xf32>, vector<2x128xf32> -> vector<2x128xf32>
    %c0_30 = arith.constant 0 : index
    %c0_31 = arith.constant 0 : index
    %47 = vector.load %arg12[%c0_30, %c0_31] : memref<1x128xf32, #tpu.memory_space<vmem>>, vector<1x128xf32>
    %c0_32 = arith.constant 0 : index
    %c0_33 = arith.constant 0 : index
    %48 = vector.load %arg13[%c0_32, %c0_33] : memref<1x128xf32, #tpu.memory_space<vmem>>, vector<1x128xf32>
    %cst_34 = arith.constant dense<0.000000e+00> : vector<2xf32>
    %49 = vector.multi_reduction <add>, %46, %cst_34 [1] : vector<2x128xf32> to vector<2xf32>
    %50 = vector.shape_cast %49 : vector<2xf32> to vector<2x1xf32>
    %cst_35 = arith.constant 1.280000e+02 : f32
    %51 = vector.broadcast %cst_35 : f32 to vector<2x1xf32>
    %52 = arith.divf %50, %51 : vector<2x1xf32>
    %53 = vector.broadcast %52 : vector<2x1xf32> to vector<2x128xf32>
    %54 = arith.subf %46, %53 : vector<2x128xf32>
    %55 = arith.mulf %54, %54 : vector<2x128xf32>
    %cst_36 = arith.constant dense<0.000000e+00> : vector<2xf32>
    %56 = vector.multi_reduction <add>, %55, %cst_36 [1] : vector<2x128xf32> to vector<2xf32>
    %57 = vector.shape_cast %56 : vector<2xf32> to vector<2x1xf32>
    %cst_37 = arith.constant 1.280000e+02 : f32
    %58 = vector.broadcast %cst_37 : f32 to vector<2x1xf32>
    %59 = arith.divf %57, %58 : vector<2x1xf32>
    %60 = vector.broadcast %52 : vector<2x1xf32> to vector<2x128xf32>
    %61 = arith.subf %46, %60 : vector<2x128xf32>
    %cst_38 = arith.constant 9.99999974E-6 : f32
    %62 = vector.broadcast %cst_38 : f32 to vector<2x1xf32>
    %63 = arith.addf %59, %62 : vector<2x1xf32>
    %64 = math.rsqrt %63 : vector<2x1xf32>
    %65 = vector.broadcast %64 : vector<2x1xf32> to vector<2x128xf32>
    %66 = arith.mulf %61, %65 : vector<2x128xf32>
    %67 = vector.broadcast %47 : vector<1x128xf32> to vector<2x128xf32>
    %68 = arith.mulf %66, %67 : vector<2x128xf32>
    %69 = vector.broadcast %48 : vector<1x128xf32> to vector<2x128xf32>
    %70 = arith.addf %68, %69 : vector<2x128xf32>
    %71 = arith.addf %44, %70 : vector<2x128xf32>
    %c0_39 = arith.constant 0 : index
    %c0_40 = arith.constant 0 : index
    %72 = vector.load %arg9[%c0_39, %c0_40] : memref<1x128xf32, #tpu.memory_space<vmem>>, vector<1x128xf32>
    %73 = vector.broadcast %72 : vector<1x128xf32> to vector<2x128xf32>
    %74 = arith.addf %71, %73 : vector<2x128xf32>
    %75 = vector.extract_strided_slice %74 {offsets = [0, 0], sizes = [2, 32], strides = [1, 1]} : vector<2x128xf32> to vector<2x32xf32>
    %76 = arith.negf %75 : vector<2x32xf32>
    %77 = math.exp %76 : vector<2x32xf32>
    %cst_41 = arith.constant 1.000000e+00 : f32
    %78 = vector.broadcast %cst_41 : f32 to vector<2x32xf32>
    %79 = arith.addf %78, %77 : vector<2x32xf32>
    %80 = arith.divf %78, %79 : vector<2x32xf32>
    %81 = vector.extract_strided_slice %74 {offsets = [0, 32], sizes = [2, 32], strides = [1, 1]} : vector<2x128xf32> to vector<2x32xf32>
    %82 = arith.negf %81 : vector<2x32xf32>
    %83 = math.exp %82 : vector<2x32xf32>
    %cst_42 = arith.constant 1.000000e+00 : f32
    %84 = vector.broadcast %cst_42 : f32 to vector<2x32xf32>
    %85 = arith.addf %84, %83 : vector<2x32xf32>
    %86 = arith.divf %84, %85 : vector<2x32xf32>
    %87 = vector.extract_strided_slice %74 {offsets = [0, 64], sizes = [2, 32], strides = [1, 1]} : vector<2x128xf32> to vector<2x32xf32>
    %88 = math.tanh %87 : vector<2x32xf32>
    %89 = vector.extract_strided_slice %74 {offsets = [0, 96], sizes = [2, 32], strides = [1, 1]} : vector<2x128xf32> to vector<2x32xf32>
    %90 = arith.negf %89 : vector<2x32xf32>
    %91 = math.exp %90 : vector<2x32xf32>
    %cst_43 = arith.constant 1.000000e+00 : f32
    %92 = vector.broadcast %cst_43 : f32 to vector<2x32xf32>
    %93 = arith.addf %92, %91 : vector<2x32xf32>
    %94 = arith.divf %92, %93 : vector<2x32xf32>
    %95 = arith.mulf %86, %18 : vector<2x32xf32>
    %96 = arith.mulf %80, %88 : vector<2x32xf32>
    %97 = arith.addf %95, %96 : vector<2x32xf32>
    %c0_44 = arith.constant 0 : index
    %c0_45 = arith.constant 0 : index
    %98 = vector.load %arg14[%c0_44, %c0_45] : memref<1x32xf32, #tpu.memory_space<vmem>>, vector<1x32xf32>
    %c0_46 = arith.constant 0 : index
    %c0_47 = arith.constant 0 : index
    %99 = vector.load %arg15[%c0_46, %c0_47] : memref<1x32xf32, #tpu.memory_space<vmem>>, vector<1x32xf32>
    %cst_48 = arith.constant dense<0.000000e+00> : vector<2xf32>
    %100 = vector.multi_reduction <add>, %97, %cst_48 [1] : vector<2x32xf32> to vector<2xf32>
    %101 = vector.shape_cast %100 : vector<2xf32> to vector<2x1xf32>
    %cst_49 = arith.constant 3.200000e+01 : f32
    %102 = vector.broadcast %cst_49 : f32 to vector<2x1xf32>
    %103 = arith.divf %101, %102 : vector<2x1xf32>
    %104 = vector.broadcast %103 : vector<2x1xf32> to vector<2x32xf32>
    %105 = arith.subf %97, %104 : vector<2x32xf32>
    %106 = arith.mulf %105, %105 : vector<2x32xf32>
    %cst_50 = arith.constant dense<0.000000e+00> : vector<2xf32>
    %107 = vector.multi_reduction <add>, %106, %cst_50 [1] : vector<2x32xf32> to vector<2xf32>
    %108 = vector.shape_cast %107 : vector<2xf32> to vector<2x1xf32>
    %cst_51 = arith.constant 3.200000e+01 : f32
    %109 = vector.broadcast %cst_51 : f32 to vector<2x1xf32>
    %110 = arith.divf %108, %109 : vector<2x1xf32>
    %111 = vector.broadcast %103 : vector<2x1xf32> to vector<2x32xf32>
    %112 = arith.subf %97, %111 : vector<2x32xf32>
    %cst_52 = arith.constant 9.99999974E-6 : f32
    %113 = vector.broadcast %cst_52 : f32 to vector<2x1xf32>
    %114 = arith.addf %110, %113 : vector<2x1xf32>
    %115 = math.rsqrt %114 : vector<2x1xf32>
    %116 = vector.broadcast %115 : vector<2x1xf32> to vector<2x32xf32>
    %117 = arith.mulf %112, %116 : vector<2x32xf32>
    %118 = vector.broadcast %98 : vector<1x32xf32> to vector<2x32xf32>
    %119 = arith.mulf %117, %118 : vector<2x32xf32>
    %120 = vector.broadcast %99 : vector<1x32xf32> to vector<2x32xf32>
    %121 = arith.addf %119, %120 : vector<2x32xf32>
    %122 = math.tanh %121 : vector<2x32xf32>
    %123 = arith.mulf %94, %122 : vector<2x32xf32>
    %c0_53 = arith.constant 0 : index
    %c0_54 = arith.constant 0 : index
    %124 = vector.load %arg19[%c0_53, %c0_54] : memref<2x32xf32, #tpu.memory_space<vmem>>, vector<2x32xf32>
    tpu.vector_store %arg19[%c0_53, %c0_54], %123 {strides = array<i32>} : memref<2x32xf32, #tpu.memory_space<vmem>>, vector<2x32xf32>,
    %c0_55 = arith.constant 0 : index
    %c0_56 = arith.constant 0 : index
    %125 = vector.load %arg20[%c0_55, %c0_56] : memref<2x32xf32, #tpu.memory_space<vmem>>, vector<2x32xf32>
    tpu.vector_store %arg20[%c0_55, %c0_56], %97 {strides = array<i32>} : memref<2x32xf32, #tpu.memory_space<vmem>>, vector<2x32xf32>,
    %c0_57 = arith.constant 0 : index
    %c0_58 = arith.constant 0 : index
    %c0_59 = arith.constant 0 : index
    %126 = vector.load %arg16[%c0_57, %c0_58, %c0_59] : memref<1x2x32xf32, #tpu.memory_space<vmem>>, vector<1x2x32xf32>
    %127 = vector.shape_cast %126 : vector<1x2x32xf32> to vector<2x32xf32>
    %128 = vector.shape_cast %123 : vector<2x32xf32> to vector<1x2x32xf32>
    tpu.vector_store %arg16[%c0_57, %c0_58, %c0_59], %128 {strides = array<i32>} : memref<1x2x32xf32, #tpu.memory_space<vmem>>, vector<1x2x32xf32>,
    %c0_60 = arith.constant 0 : index
    %c0_61 = arith.constant 0 : index
    %129 = vector.load %arg17[%c0_60, %c0_61] : memref<2x32xf32, #tpu.memory_space<vmem>>, vector<2x32xf32>
    tpu.vector_store %arg17[%c0_60, %c0_61], %123 {strides = array<i32>} : memref<2x32xf32, #tpu.memory_space<vmem>>, vector<2x32xf32>,
    %c0_62 = arith.constant 0 : index
    %c0_63 = arith.constant 0 : index
    %130 = vector.load %arg18[%c0_62, %c0_63] : memref<2x32xf32, #tpu.memory_space<vmem>>, vector<2x32xf32>
    tpu.vector_store %arg18[%c0_62, %c0_63], %97 {strides = array<i32>} : memref<2x32xf32, #tpu.memory_space<vmem>>, vector<2x32xf32>,
    return
  }
  func.func @transform_0(%arg0: i32) -> (i32, i32, i32) {
    %c0_i32 = arith.constant 0 : i32
    %c0_i32_0 = arith.constant 0 : i32
    %c0_i32_1 = arith.constant 0 : i32
    return %arg0, %c0_i32, %c0_i32_0 : i32, i32, i32
  }
  func.func @transform_1(%arg0: i32) -> (i32, i32, i32) {
    %c0_i32 = arith.constant 0 : i32
    %c0_i32_0 = arith.constant 0 : i32
    %c0_i32_1 = arith.constant 0 : i32
    return %arg0, %c0_i32, %c0_i32_0 : i32, i32, i32
  }
  func.func @transform_2(%arg0: i32) -> (i32, i32, i32) {
    %c0_i32 = arith.constant 0 : i32
    %c0_i32_0 = arith.constant 0 : i32
    %c0_i32_1 = arith.constant 0 : i32
    return %arg0, %c0_i32, %c0_i32_0 : i32, i32, i32
  }
  func.func @transform_3(%arg0: i32) -> (i32, i32, i32) {
    %c0_i32 = arith.constant 0 : i32
    %c0_i32_0 = arith.constant 0 : i32
    %c0_i32_1 = arith.constant 0 : i32
    return %arg0, %c0_i32, %c0_i32_0 : i32, i32, i32
  }
  func.func @transform_4(%arg0: i32) -> (i32, i32) {
    %c0_i32 = arith.constant 0 : i32
    %c0_i32_0 = arith.constant 0 : i32
    %c0_i32_1 = arith.constant 0 : i32
    return %c0_i32, %c0_i32_0 : i32, i32
  }
  func.func @transform_5(%arg0: i32) -> (i32, i32) {
    %c0_i32 = arith.constant 0 : i32
    %c0_i32_0 = arith.constant 0 : i32
    %c0_i32_1 = arith.constant 0 : i32
    return %c0_i32, %c0_i32_0 : i32, i32
  }
  func.func @transform_6(%arg0: i32) -> (i32, i32) {
    %c0_i32 = arith.constant 0 : i32
    %c0_i32_0 = arith.constant 0 : i32
    %c0_i32_1 = arith.constant 0 : i32
    return %c0_i32, %c0_i32_0 : i32, i32
  }
  func.func @transform_7(%arg0: i32) -> (i32, i32) {
    %c0_i32 = arith.constant 0 : i32
    %c0_i32_0 = arith.constant 0 : i32
    %c0_i32_1 = arith.constant 0 : i32
    return %c0_i32, %c0_i32_0 : i32, i32
  }
  func.func @transform_8(%arg0: i32) -> (i32, i32) {
    %c0_i32 = arith.constant 0 : i32
    %c0_i32_0 = arith.constant 0 : i32
    %c0_i32_1 = arith.constant 0 : i32
    return %c0_i32, %c0_i32_0 : i32, i32
  }
  func.func @transform_9(%arg0: i32) -> (i32, i32) {
    %c0_i32 = arith.constant 0 : i32
    %c0_i32_0 = arith.constant 0 : i32
    %c0_i32_1 = arith.constant 0 : i32
    return %c0_i32, %c0_i32_0 : i32, i32
  }
  func.func @transform_10(%arg0: i32) -> (i32, i32) {
    %c0_i32 = arith.constant 0 : i32
    %c0_i32_0 = arith.constant 0 : i32
    %c0_i32_1 = arith.constant 0 : i32
    return %c0_i32, %c0_i32_0 : i32, i32
  }
  func.func @transform_11(%arg0: i32) -> (i32, i32) {
    %c0_i32 = arith.constant 0 : i32
    %c0_i32_0 = arith.constant 0 : i32
    %c0_i32_1 = arith.constant 0 : i32
    return %c0_i32, %c0_i32_0 : i32, i32
  }
  func.func @transform_12(%arg0: i32) -> (i32, i32) {
    %c0_i32 = arith.constant 0 : i32
    %c0_i32_0 = arith.constant 0 : i32
    %c0_i32_1 = arith.constant 0 : i32
    return %c0_i32, %c0_i32_0 : i32, i32
  }
  func.func @transform_13(%arg0: i32) -> (i32, i32) {
    %c0_i32 = arith.constant 0 : i32
    %c0_i32_0 = arith.constant 0 : i32
    %c0_i32_1 = arith.constant 0 : i32
    return %c0_i32, %c0_i32_0 : i32, i32
  }
  func.func @transform_14(%arg0: i32) -> (i32, i32) {
    %c0_i32 = arith.constant 0 : i32
    %c0_i32_0 = arith.constant 0 : i32
    %c0_i32_1 = arith.constant 0 : i32
    return %c0_i32, %c0_i32_0 : i32, i32
  }
  func.func @transform_15(%arg0: i32) -> (i32, i32, i32) {
    %c0_i32 = arith.constant 0 : i32
    %c0_i32_0 = arith.constant 0 : i32
    %c0_i32_1 = arith.constant 0 : i32
    return %arg0, %c0_i32, %c0_i32_0 : i32, i32, i32
  }
  func.func @transform_16(%arg0: i32) -> (i32, i32) {
    %c0_i32 = arith.constant 0 : i32
    %c0_i32_0 = arith.constant 0 : i32
    %c0_i32_1 = arith.constant 0 : i32
    return %c0_i32, %c0_i32_0 : i32, i32
  }
  func.func @transform_17(%arg0: i32) -> (i32, i32) {
    %c0_i32 = arith.constant 0 : i32
    %c0_i32_0 = arith.constant 0 : i32
    %c0_i32_1 = arith.constant 0 : i32
    return %c0_i32, %c0_i32_0 : i32, i32
  }
}

</mosaic_0001>

<llo_original>
// kernel: run.24
$region0: #{run.24}
  #allocation0 [shape = 'u32[]', space=smem, size = 0x4, offset = 0x4, fixed_abs, tag = 'smem constant byte address 0x4 - core index']
  #allocation1 [shape = 'u32[144,128]{1,0:T(1,128)}', space=vmem, size = 0x12000, scoped, tag = 'internal scratch']
  %s0 = inlined_call_operand.vmem [shape: f32[1800,128], index: 0, kind: input, shape index: {}]
  %s1 = inlined_call_operand.vmem [shape: f32[128,32], index: 1, kind: input, shape index: {}]
  %s2 = inlined_call_operand.vmem [shape: f32[1,32], index: 2, kind: input, shape index: {}]
  %s3 = inlined_call_operand.vmem [shape: f32[1800,32], index: 3, kind: output, shape index: {}]
  %s4 = sld [smem:[#allocation0]]
  $region22: #{run.24} parent=0
    _
  %s6 = ssub.s32 1, %s4
  %s7 = scalar_select 0, %s6, %s4
  // Predicated region
  $region2: #{run.24} parent=0 // pred_check
    _
  $region3: #{run.24} parent=0 // pred_check_branch
    %9 = sbr.rel (0) target = $region5
  $region4: #{run.24} parent=0 // pred_region
    _
  $region5: #{run.24} parent=0 // pred_fallthru
    _
  // Predicated region
  $region6: #{run.24} parent=0 // pred_check
    _
  $region7: #{run.24} parent=0 // pred_check_branch
    %11 = sbr.rel (0) target = $region9
  $region8: #{run.24} parent=0 // pred_region
    _
  $region9: #{run.24} parent=0 // pred_fallthru
    _
  // Predicated region
  $region10: #{run.24} parent=0 // pred_check
    _
  $region11: #{run.24} parent=0 // pred_check_branch
    %13 = sbr.rel (0) target = $region13
  $region12: #{run.24} parent=0 // pred_region
    _
  $region13: #{run.24} parent=0 // pred_fallthru
    _
  %v14 = vld [vmem:[%s0] sm:$0xff]
  %v15 = vld [vmem:[%s0 + $0x8] sm:$0xff]
  %v16 = vld [vmem:[%s0 + $0x10] sm:$0xff]
  %v17 = vld [vmem:[%s0 + $0x18] sm:$0xff]
  %v18 = vld [vmem:[%s0 + $0x20] sm:$0xff]
  %v19 = vld [vmem:[%s0 + $0x28] sm:$0xff]
  %v20 = vld [vmem:[%s0 + $0x30] sm:$0xff]
  %v21 = vld [vmem:[%s0 + $0x38] sm:$0xff]
  %v22 = vld [vmem:[%s0 + $0x40] sm:$0xff]
  %v23 = vld [vmem:[%s0 + $0x48] sm:$0xff]
  %v24 = vld [vmem:[%s0 + $0x50] sm:$0xff]
  %v25 = vld [vmem:[%s0 + $0x58] sm:$0xff]
  %v26 = vld [vmem:[%s0 + $0x60] sm:$0xff]
  %v27 = vld [vmem:[%s0 + $0x68] sm:$0xff]
  %v28 = vld [vmem:[%s0 + $0x70] sm:$0xff]
  %v29 = vld [vmem:[%s0 + $0x78] sm:$0xff]
  %v30 = vld [vmem:[%s0 + $0x80] sm:$0xff]
  %v31 = vld [vmem:[%s0 + $0x88] sm:$0xff]
  %v32 = vld [vmem:[%s0 + $0x90] sm:$0xff]
  %v33 = vld [vmem:[%s0 + $0x98] sm:$0xff]
  %v34 = vld [vmem:[%s0 + $0xa0] sm:$0xff]
  %v35 = vld [vmem:[%s0 + $0xa8] sm:$0xff]
  %v36 = vld [vmem:[%s0 + $0xb0] sm:$0xff]
  %v37 = vld [vmem:[%s0 + $0xb8] sm:$0xff]
  %v38 = vld [vmem:[%s0 + $0xc0] sm:$0xff]
  %v39 = vld [vmem:[%s0 + $0xc8] sm:$0xff]
  %v40 = vld [vmem:[%s0 + $0xd0] sm:$0xff]
  %v41 = vld [vmem:[%s0 + $0xd8] sm:$0xff]
  %v42 = vld [vmem:[%s0 + $0xe0] sm:$0xff]
  %v43 = vld [vmem:[%s0 + $0xe8] sm:$0xff]
  %v44 = vld [vmem:[%s0 + $0xf0] sm:$0xff]
  %v45 = vld [vmem:[%s0 + $0xf8] sm:$0xff]
  %v46 = vld [vmem:[%s0 + $0x100] sm:$0xff]
  %v47 = vld [vmem:[%s0 + $0x108] sm:$0xff]
  %v48 = vld [vmem:[%s0 + $0x110] sm:$0xff]
  %v49 = vld [vmem:[%s0 + $0x118] sm:$0xff]
  %v50 = vld [vmem:[%s0 + $0x120] sm:$0xff]
  %v51 = vld [vmem:[%s0 + $0x128] sm:$0xff]
  %v52 = vld [vmem:[%s0 + $0x130] sm:$0xff]
  %v53 = vld [vmem:[%s0 + $0x138] sm:$0xff]
  %v54 = vld [vmem:[%s0 + $0x140] sm:$0xff]
  %v55 = vld [vmem:[%s0 + $0x148] sm:$0xff]
  %v56 = vld [vmem:[%s0 + $0x150] sm:$0xff]
  %v57 = vld [vmem:[%s0 + $0x158] sm:$0xff]
  %v58 = vld [vmem:[%s0 + $0x160] sm:$0xff]
  %v59 = vld [vmem:[%s0 + $0x168] sm:$0xff]
  %v60 = vld [vmem:[%s0 + $0x170] sm:$0xff]
  %v61 = vld [vmem:[%s0 + $0x178] sm:$0xff]
  %v62 = vld [vmem:[%s0 + $0x180] sm:$0xff]
  %v63 = vld [vmem:[%s0 + $0x188] sm:$0xff]
  %v64 = vld [vmem:[%s0 + $0x190] sm:$0xff]
  %v65 = vld [vmem:[%s0 + $0x198] sm:$0xff]
  %v66 = vld [vmem:[%s0 + $0x1a0] sm:$0xff]
  %v67 = vld [vmem:[%s0 + $0x1a8] sm:$0xff]
  %v68 = vld [vmem:[%s0 + $0x1b0] sm:$0xff]
  %v69 = vld [vmem:[%s0 + $0x1b8] sm:$0xff]
  %v70 = vld [vmem:[%s0 + $0x1c0] sm:$0xff]
  %v71 = vld [vmem:[%s0 + $0x1c8] sm:$0xff]
  %v72 = vld [vmem:[%s0 + $0x1d0] sm:$0xff]
  %v73 = vld [vmem:[%s0 + $0x1d8] sm:$0xff]
  %v74 = vld [vmem:[%s0 + $0x1e0] sm:$0xff]
  %v75 = vld [vmem:[%s0 + $0x1e8] sm:$0xff]
  %v76 = vld [vmem:[%s0 + $0x1f0] sm:$0xff]
  %v77 = vld [vmem:[%s0 + $0x1f8] sm:$0xff]
  %v78 = vld [vmem:[%s0 + $0x200] sm:$0xff]
  %v79 = vld [vmem:[%s0 + $0x208] sm:$0xff]
  %v80 = vld [vmem:[%s0 + $0x210] sm:$0xff]
  %v81 = vld [vmem:[%s0 + $0x218] sm:$0xff]
  %v82 = vld [vmem:[%s0 + $0x220] sm:$0xff]
  %v83 = vld [vmem:[%s0 + $0x228] sm:$0xff]
  %v84 = vld [vmem:[%s0 + $0x230] sm:$0xff]
  %v85 = vld [vmem:[%s0 + $0x238] sm:$0xff]
  %v86 = vld [vmem:[%s0 + $0x240] sm:$0xff]
  %v87 = vld [vmem:[%s0 + $0x248] sm:$0xff]
  %v88 = vld [vmem:[%s0 + $0x250] sm:$0xff]
  %v89 = vld [vmem:[%s0 + $0x258] sm:$0xff]
  %v90 = vld [vmem:[%s0 + $0x260] sm:$0xff]
  %v91 = vld [vmem:[%s0 + $0x268] sm:$0xff]
  %v92 = vld [vmem:[%s0 + $0x270] sm:$0xff]
  %v93 = vld [vmem:[%s0 + $0x278] sm:$0xff]
  %v94 = vld [vmem:[%s0 + $0x280] sm:$0xff]
  %v95 = vld [vmem:[%s0 + $0x288] sm:$0xff]
  %v96 = vld [vmem:[%s0 + $0x290] sm:$0xff]
  %v97 = vld [vmem:[%s0 + $0x298] sm:$0xff]
  %v98 = vld [vmem:[%s0 + $0x2a0] sm:$0xff]
  %v99 = vld [vmem:[%s0 + $0x2a8] sm:$0xff]
  %v100 = vld [vmem:[%s0 + $0x2b0] sm:$0xff]
  %v101 = vld [vmem:[%s0 + $0x2b8] sm:$0xff]
  %v102 = vld [vmem:[%s0 + $0x2c0] sm:$0xff]
  %v103 = vld [vmem:[%s0 + $0x2c8] sm:$0xff]
  %v104 = vld [vmem:[%s0 + $0x2d0] sm:$0xff]
  %v105 = vld [vmem:[%s0 + $0x2d8] sm:$0xff]
  %v106 = vld [vmem:[%s0 + $0x2e0] sm:$0xff]
  %v107 = vld [vmem:[%s0 + $0x2e8] sm:$0xff]
  %v108 = vld [vmem:[%s0 + $0x2f0] sm:$0xff]
  %v109 = vld [vmem:[%s0 + $0x2f8] sm:$0xff]
  %v110 = vld [vmem:[%s0 + $0x300] sm:$0xff]
  %v111 = vld [vmem:[%s0 + $0x308] sm:$0xff]
  %v112 = vld [vmem:[%s0 + $0x310] sm:$0xff]
  %v113 = vld [vmem:[%s0 + $0x318] sm:$0xff]
  %v114 = vld [vmem:[%s0 + $0x320] sm:$0xff]
  %v115 = vld [vmem:[%s0 + $0x328] sm:$0xff]
  %v116 = vld [vmem:[%s0 + $0x330] sm:$0xff]
  %v117 = vld [vmem:[%s0 + $0x338] sm:$0xff]
  %v118 = vld [vmem:[%s0 + $0x340] sm:$0xff]
  %v119 = vld [vmem:[%s0 + $0x348] sm:$0xff]
  %v120 = vld [vmem:[%s0 + $0x350] sm:$0xff]
  %v121 = vld [vmem:[%s0 + $0x358] sm:$0xff]
  %v122 = vld [vmem:[%s0 + $0x360] sm:$0xff]
  %v123 = vld [vmem:[%s0 + $0x368] sm:$0xff]
  %v124 = vld [vmem:[%s0 + $0x370] sm:$0xff]
  %v125 = vld [vmem:[%s0 + $0x378] sm:$0xff]
  %v126 = vld [vmem:[%s0 + $0x380] sm:$0xff]
  %v127 = vld [vmem:[%s0 + $0x388] sm:$0xff]
  %v128 = vld [vmem:[%s0 + $0x390] sm:$0xff]
  %v129 = vld [vmem:[%s0 + $0x398] sm:$0xff]
  %v130 = vld [vmem:[%s0 + $0x3a0] sm:$0xff]
  %v131 = vld [vmem:[%s0 + $0x3a8] sm:$0xff]
  %v132 = vld [vmem:[%s0 + $0x3b0] sm:$0xff]
  %v133 = vld [vmem:[%s0 + $0x3b8] sm:$0xff]
  %v134 = vld [vmem:[%s0 + $0x3c0] sm:$0xff]
  %v135 = vld [vmem:[%s0 + $0x3c8] sm:$0xff]
  %v136 = vld [vmem:[%s0 + $0x3d0] sm:$0xff]
  %v137 = vld [vmem:[%s0 + $0x3d8] sm:$0xff]
  %v138 = vld [vmem:[%s0 + $0x3e0] sm:$0xff]
  %v139 = vld [vmem:[%s0 + $0x3e8] sm:$0xff]
  %v140 = vld [vmem:[%s0 + $0x3f0] sm:$0xff]
  %v141 = vld [vmem:[%s0 + $0x3f8] sm:$0xff]
  %v142 = vld [vmem:[%s0 + $0x400] sm:$0xff]
  %v143 = vld [vmem:[%s0 + $0x408] sm:$0xff]
  %v144 = vld [vmem:[%s0 + $0x410] sm:$0xff]
  %v145 = vld [vmem:[%s0 + $0x418] sm:$0xff]
  %v146 = vld [vmem:[%s0 + $0x420] sm:$0xff]
  %v147 = vld [vmem:[%s0 + $0x428] sm:$0xff]
  %v148 = vld [vmem:[%s0 + $0x430] sm:$0xff]
  %v149 = vld [vmem:[%s0 + $0x438] sm:$0xff]
  %v150 = vld [vmem:[%s0 + $0x440] sm:$0xff]
  %v151 = vld [vmem:[%s0 + $0x448] sm:$0xff]
  %v152 = vld [vmem:[%s0 + $0x450] sm:$0xff]
  %v153 = vld [vmem:[%s0 + $0x458] sm:$0xff]
  %v154 = vld [vmem:[%s0 + $0x460] sm:$0xff]
  %v155 = vld [vmem:[%s0 + $0x468] sm:$0xff]
  %v156 = vld [vmem:[%s0 + $0x470] sm:$0xff]
  %v157 = vld [vmem:[%s0 + $0x478] sm:$0xff]
  %v158 = vld [vmem:[%s0 + $0x480] sm:$0xff]
  %v159 = vld [vmem:[%s0 + $0x488] sm:$0xff]
  %v160 = vld [vmem:[%s0 + $0x490] sm:$0xff]
  %v161 = vld [vmem:[%s0 + $0x498] sm:$0xff]
  %v162 = vld [vmem:[%s0 + $0x4a0] sm:$0xff]
  %v163 = vld [vmem:[%s0 + $0x4a8] sm:$0xff]
  %v164 = vld [vmem:[%s0 + $0x4b0] sm:$0xff]
  %v165 = vld [vmem:[%s0 + $0x4b8] sm:$0xff]
  %v166 = vld [vmem:[%s0 + $0x4c0] sm:$0xff]
  %v167 = vld [vmem:[%s0 + $0x4c8] sm:$0xff]
  %v168 = vld [vmem:[%s0 + $0x4d0] sm:$0xff]
  %v169 = vld [vmem:[%s0 + $0x4d8] sm:$0xff]
  %v170 = vld [vmem:[%s0 + $0x4e0] sm:$0xff]
  %v171 = vld [vmem:[%s0 + $0x4e8] sm:$0xff]
  %v172 = vld [vmem:[%s0 + $0x4f0] sm:$0xff]
  %v173 = vld [vmem:[%s0 + $0x4f8] sm:$0xff]
  %v174 = vld [vmem:[%s0 + $0x500] sm:$0xff]
  %v175 = vld [vmem:[%s0 + $0x508] sm:$0xff]
  %v176 = vld [vmem:[%s0 + $0x510] sm:$0xff]
  %v177 = vld [vmem:[%s0 + $0x518] sm:$0xff]
  %v178 = vld [vmem:[%s0 + $0x520] sm:$0xff]
  %v179 = vld [vmem:[%s0 + $0x528] sm:$0xff]
  %v180 = vld [vmem:[%s0 + $0x530] sm:$0xff]
  %v181 = vld [vmem:[%s0 + $0x538] sm:$0xff]
  %v182 = vld [vmem:[%s0 + $0x540] sm:$0xff]
  %v183 = vld [vmem:[%s0 + $0x548] sm:$0xff]
  %v184 = vld [vmem:[%s0 + $0x550] sm:$0xff]
  %v185 = vld [vmem:[%s0 + $0x558] sm:$0xff]
  %v186 = vld [vmem:[%s0 + $0x560] sm:$0xff]
  %v187 = vld [vmem:[%s0 + $0x568] sm:$0xff]
  %v188 = vld [vmem:[%s0 + $0x570] sm:$0xff]
  %v189 = vld [vmem:[%s0 + $0x578] sm:$0xff]
  %v190 = vld [vmem:[%s0 + $0x580] sm:$0xff]
  %v191 = vld [vmem:[%s0 + $0x588] sm:$0xff]
  %v192 = vld [vmem:[%s0 + $0x590] sm:$0xff]
  %v193 = vld [vmem:[%s0 + $0x598] sm:$0xff]
  %v194 = vld [vmem:[%s0 + $0x5a0] sm:$0xff]
  %v195 = vld [vmem:[%s0 + $0x5a8] sm:$0xff]
  %v196 = vld [vmem:[%s0 + $0x5b0] sm:$0xff]
  %v197 = vld [vmem:[%s0 + $0x5b8] sm:$0xff]
  %v198 = vld [vmem:[%s0 + $0x5c0] sm:$0xff]
  %v199 = vld [vmem:[%s0 + $0x5c8] sm:$0xff]
  %v200 = vld [vmem:[%s0 + $0x5d0] sm:$0xff]
  %v201 = vld [vmem:[%s0 + $0x5d8] sm:$0xff]
  %v202 = vld [vmem:[%s0 + $0x5e0] sm:$0xff]
  %v203 = vld [vmem:[%s0 + $0x5e8] sm:$0xff]
  %v204 = vld [vmem:[%s0 + $0x5f0] sm:$0xff]
  %v205 = vld [vmem:[%s0 + $0x5f8] sm:$0xff]
  %v206 = vld [vmem:[%s0 + $0x600] sm:$0xff]
  %v207 = vld [vmem:[%s0 + $0x608] sm:$0xff]
  %v208 = vld [vmem:[%s0 + $0x610] sm:$0xff]
  %v209 = vld [vmem:[%s0 + $0x618] sm:$0xff]
  %v210 = vld [vmem:[%s0 + $0x620] sm:$0xff]
  %v211 = vld [vmem:[%s0 + $0x628] sm:$0xff]
  %v212 = vld [vmem:[%s0 + $0x630] sm:$0xff]
  %v213 = vld [vmem:[%s0 + $0x638] sm:$0xff]
  %v214 = vld [vmem:[%s0 + $0x640] sm:$0xff]
  %v215 = vld [vmem:[%s0 + $0x648] sm:$0xff]
  %v216 = vld [vmem:[%s0 + $0x650] sm:$0xff]
  %v217 = vld [vmem:[%s0 + $0x658] sm:$0xff]
  %v218 = vld [vmem:[%s0 + $0x660] sm:$0xff]
  %v219 = vld [vmem:[%s0 + $0x668] sm:$0xff]
  %v220 = vld [vmem:[%s0 + $0x670] sm:$0xff]
  %v221 = vld [vmem:[%s0 + $0x678] sm:$0xff]
  %v222 = vld [vmem:[%s0 + $0x680] sm:$0xff]
  %v223 = vld [vmem:[%s0 + $0x688] sm:$0xff]
  %v224 = vld [vmem:[%s0 + $0x690] sm:$0xff]
  %v225 = vld [vmem:[%s0 + $0x698] sm:$0xff]
  %v226 = vld [vmem:[%s0 + $0x6a0] sm:$0xff]
  %v227 = vld [vmem:[%s0 + $0x6a8] sm:$0xff]
  %v228 = vld [vmem:[%s0 + $0x6b0] sm:$0xff]
  %v229 = vld [vmem:[%s0 + $0x6b8] sm:$0xff]
  %v230 = vld [vmem:[%s0 + $0x6c0] sm:$0xff]
  %v231 = vld [vmem:[%s0 + $0x6c8] sm:$0xff]
  %v232 = vld [vmem:[%s0 + $0x6d0] sm:$0xff]
  %v233 = vld [vmem:[%s0 + $0x6d8] sm:$0xff]
  %v234 = vld [vmem:[%s0 + $0x6e0] sm:$0xff]
  %v235 = vld [vmem:[%s0 + $0x6e8] sm:$0xff]
  %v236 = vld [vmem:[%s0 + $0x6f0] sm:$0xff]
  %v237 = vld [vmem:[%s0 + $0x6f8] sm:$0xff]
  %v238 = vld [vmem:[%s0 + $0x700] sm:$0xff]
  %v239 = vld [vmem:[%s1] sm:$0xff]
  %v240 = vld [vmem:[%s1 + $0x8] sm:$0xff]
  %v241 = vld [vmem:[%s1 + $0x10] sm:$0xff]
  %v242 = vld [vmem:[%s1 + $0x18] sm:$0xff]
  %v243 = vld [vmem:[%s1 + $0x20] sm:$0xff]
  %v244 = vld [vmem:[%s1 + $0x28] sm:$0xff]
  %v245 = vld [vmem:[%s1 + $0x30] sm:$0xff]
  %v246 = vld [vmem:[%s1 + $0x38] sm:$0xff]
  %v247 = vld [vmem:[%s1 + $0x40] sm:$0xff]
  %v248 = vld [vmem:[%s1 + $0x48] sm:$0xff]
  %v249 = vld [vmem:[%s1 + $0x50] sm:$0xff]
  %v250 = vld [vmem:[%s1 + $0x58] sm:$0xff]
  %v251 = vld [vmem:[%s1 + $0x60] sm:$0xff]
  %v252 = vld [vmem:[%s1 + $0x68] sm:$0xff]
  %v253 = vld [vmem:[%s1 + $0x70] sm:$0xff]
  %v254 = vld [vmem:[%s1 + $0x78] sm:$0xff]
  %v255 = vld [vmem:[%s2] sm:$0x1]
  %v257 = vlaneseq
  %v258 = vshrl.u32 %v257, 7
  %v259 = vsub.s32 0, %v258
  %v260 = vrot.slane %v255, %v259
  %262 = vmatprep.subr.mxu0 0.0
  %263 = vmatpush1.msra.mxu0 %v254
  %264 = vmatprep.subr.mxu0 0.0
  %265 = vmatpush1.msra.mxu0 %v253
  %266 = vmatprep.subr.mxu0 0.0
  %267 = vmatpush1.msra.mxu0 %v252
  %268 = vmatprep.subr.mxu0 0.0
  %269 = vmatpush1.msra.mxu0 %v251
  %270 = vmatprep.subr.mxu0 0.0
  %271 = vmatpush1.msra.mxu0 %v250
  %272 = vmatprep.subr.mxu0 0.0
  %273 = vmatpush1.msra.mxu0 %v249
  %274 = vmatprep.subr.mxu0 0.0
  %275 = vmatpush1.msra.mxu0 %v248
  %276 = vmatprep.subr.mxu0 0.0
  %277 = vmatpush1.msra.mxu0 %v247
  %278 = vmatprep.subr.mxu0 0.0
  %279 = vmatpush1.msra.mxu0 %v246
  %280 = vmatprep.subr.mxu0 0.0
  %281 = vmatpush1.msra.mxu0 %v245
  %282 = vmatprep.subr.mxu0 0.0
  %283 = vmatpush1.msra.mxu0 %v244
  %284 = vmatprep.subr.mxu0 0.0
  %285 = vmatpush1.msra.mxu0 %v243
  %286 = vmatprep.subr.mxu0 0.0
  %287 = vmatpush1.msra.mxu0 %v242
  %288 = vmatprep.subr.mxu0 0.0
  %289 = vmatpush1.msra.mxu0 %v241
  %290 = vmatprep.subr.mxu0 0.0
  %291 = vmatpush1.msra.mxu0 %v240
  %292 = vmatprep.subr.mxu0 0.0
  %293 = vmatpush1.msra.mxu0 %v239
  %294 = vmatprep.subr.mxu0 0.0
  %295 = vmatpush2.msra.mxu0 0.0
  %296 = vmatprep.subr.mxu0 0.0
  %297 = vmatpush2.msra.mxu0 0.0
  %298 = vmatprep.subr.mxu0 0.0
  %299 = vmatpush2.msra.mxu0 0.0
  %300 = vmatprep.subr.mxu0 0.0
  %301 = vmatpush2.msra.mxu0 0.0
  %302 = vmatprep.subr.mxu0 0.0
  %303 = vmatpush2.msra.mxu0 0.0
  %304 = vmatprep.subr.mxu0 0.0
  %305 = vmatpush2.msra.mxu0 0.0
  %306 = vmatprep.subr.mxu0 0.0
  %307 = vmatpush2.msra.mxu0 0.0
  %308 = vmatprep.subr.mxu0 0.0
  %309 = vmatpush2.msra.mxu0 0.0
  %310 = vmatprep.subr.mxu0 0.0
  %311 = vmatpush2.msra.mxu0 0.0
  %312 = vmatprep.subr.mxu0 0.0
  %313 = vmatpush2.msra.mxu0 0.0
  %314 = vmatprep.subr.mxu0 0.0
  %315 = vmatpush2.msra.mxu0 0.0
  %316 = vmatprep.subr.mxu0 0.0
  %317 = vmatpush2.msra.mxu0 0.0
  %318 = vmatprep.subr.mxu0 0.0
  %319 = vmatpush2.msra.mxu0 0.0
  %320 = vmatprep.subr.mxu0 0.0
  %321 = vmatpush2.msra.mxu0 0.0
  %322 = vmatprep.subr.mxu0 0.0
  %323 = vmatpush2.msra.mxu0 0.0
  %324 = vmatprep.subr.mxu0 0.0
  %325 = vmatpush2.msra.mxu0 0.0
  %326 = vmatprep.mubr.f32.mxu0 0.0
  %327 = vmatmul.mubr.f32.gmra.mxu0 %v14
  %v328 = vpop.f32.mrf.mxu0
  %v329 = vadd.f32 %v260, %v328
  %v330 = vpop.f32.mrf.mxu0
  %331 = vmatprep.mubr.f32.mxu0 0.0
  %332 = vmatmul.mubr.f32.gmra.mxu0 %v15
  %v333 = vpop.f32.mrf.mxu0
  %v334 = vadd.f32 %v260, %v333
  %v335 = vpop.f32.mrf.mxu0
  %336 = vmatprep.mubr.f32.mxu0 0.0
  %337 = vmatmul.mubr.f32.gmra.mxu0 %v16
  %v338 = vpop.f32.mrf.mxu0
  %v339 = vadd.f32 %v260, %v338
  %v340 = vpop.f32.mrf.mxu0
  %341 = vmatprep.mubr.f32.mxu0 0.0
  %342 = vmatmul.mubr.f32.gmra.mxu0 %v17
  %v343 = vpop.f32.mrf.mxu0
  %v344 = vadd.f32 %v260, %v343
  %v345 = vpop.f32.mrf.mxu0
  %346 = vmatprep.mubr.f32.mxu0 0.0
  %347 = vmatmul.mubr.f32.gmra.mxu0 %v18
  %v348 = vpop.f32.mrf.mxu0
  %v349 = vadd.f32 %v260, %v348
  %v350 = vpop.f32.mrf.mxu0
  %351 = vmatprep.mubr.f32.mxu0 0.0
  %352 = vmatmul.mubr.f32.gmra.mxu0 %v19
  %v353 = vpop.f32.mrf.mxu0
  %v354 = vadd.f32 %v260, %v353
  %v355 = vpop.f32.mrf.mxu0
  %356 = vmatprep.mubr.f32.mxu0 0.0
  %357 = vmatmul.mubr.f32.gmra.mxu0 %v20
  %v358 = vpop.f32.mrf.mxu0
  %v359 = vadd.f32 %v260, %v358
  %v360 = vpop.f32.mrf.mxu0
  %361 = vmatprep.mubr.f32.mxu0 0.0
  %362 = vmatmul.mubr.f32.gmra.mxu0 %v21
  %v363 = vpop.f32.mrf.mxu0
  %v364 = vadd.f32 %v260, %v363
  %v365 = vpop.f32.mrf.mxu0
  %366 = vmatprep.mubr.f32.mxu0 0.0
  %367 = vmatmul.mubr.f32.gmra.mxu0 %v22
  %v368 = vpop.f32.mrf.mxu0
  %v369 = vadd.f32 %v260, %v368
  %v370 = vpop.f32.mrf.mxu0
  %371 = vmatprep.mubr.f32.mxu0 0.0
  %372 = vmatmul.mubr.f32.gmra.mxu0 %v23
  %v373 = vpop.f32.mrf.mxu0
  %v374 = vadd.f32 %v260, %v373
  %v375 = vpop.f32.mrf.mxu0
  %376 = vmatprep.mubr.f32.mxu0 0.0
  %377 = vmatmul.mubr.f32.gmra.mxu0 %v24
  %v378 = vpop.f32.mrf.mxu0
  %v379 = vadd.f32 %v260, %v378
  %v380 = vpop.f32.mrf.mxu0
  %381 = vmatprep.mubr.f32.mxu0 0.0
  %382 = vmatmul.mubr.f32.gmra.mxu0 %v25
  %v383 = vpop.f32.mrf.mxu0
  %v384 = vadd.f32 %v260, %v383
  %v385 = vpop.f32.mrf.mxu0
  %386 = vmatprep.mubr.f32.mxu0 0.0
  %387 = vmatmul.mubr.f32.gmra.mxu0 %v26
  %v388 = vpop.f32.mrf.mxu0
  %v389 = vadd.f32 %v260, %v388
  %v390 = vpop.f32.mrf.mxu0
  %391 = vmatprep.mubr.f32.mxu0 0.0
  %392 = vmatmul.mubr.f32.gmra.mxu0 %v27
  %v393 = vpop.f32.mrf.mxu0
  %v394 = vadd.f32 %v260, %v393
  %v395 = vpop.f32.mrf.mxu0
  %396 = vmatprep.mubr.f32.mxu0 0.0
  %397 = vmatmul.mubr.f32.gmra.mxu0 %v28
  %v398 = vpop.f32.mrf.mxu0
  %v399 = vadd.f32 %v260, %v398
  %v400 = vpop.f32.mrf.mxu0
  %401 = vmatprep.mubr.f32.mxu0 0.0
  %402 = vmatmul.mubr.f32.gmra.mxu0 %v29
  %v403 = vpop.f32.mrf.mxu0
  %v404 = vadd.f32 %v260, %v403
  %v405 = vpop.f32.mrf.mxu0
  %406 = vmatprep.mubr.f32.mxu0 0.0
  %407 = vmatmul.mubr.f32.gmra.mxu0 %v30
  %v408 = vpop.f32.mrf.mxu0
  %v409 = vadd.f32 %v260, %v408
  %v410 = vpop.f32.mrf.mxu0
  %411 = vmatprep.mubr.f32.mxu0 0.0
  %412 = vmatmul.mubr.f32.gmra.mxu0 %v31
  %v413 = vpop.f32.mrf.mxu0
  %v414 = vadd.f32 %v260, %v413
  %v415 = vpop.f32.mrf.mxu0
  %416 = vmatprep.mubr.f32.mxu0 0.0
  %417 = vmatmul.mubr.f32.gmra.mxu0 %v32
  %v418 = vpop.f32.mrf.mxu0
  %v419 = vadd.f32 %v260, %v418
  %v420 = vpop.f32.mrf.mxu0
  %421 = vmatprep.mubr.f32.mxu0 0.0
  %422 = vmatmul.mubr.f32.gmra.mxu0 %v33
  %v423 = vpop.f32.mrf.mxu0
  %v424 = vadd.f32 %v260, %v423
  %v425 = vpop.f32.mrf.mxu0
  %426 = vmatprep.mubr.f32.mxu0 0.0
  %427 = vmatmul.mubr.f32.gmra.mxu0 %v34
  %v428 = vpop.f32.mrf.mxu0
  %v429 = vadd.f32 %v260, %v428
  %v430 = vpop.f32.mrf.mxu0
  %431 = vmatprep.mubr.f32.mxu0 0.0
  %432 = vmatmul.mubr.f32.gmra.mxu0 %v35
  %v433 = vpop.f32.mrf.mxu0
  %v434 = vadd.f32 %v260, %v433
  %v435 = vpop.f32.mrf.mxu0
  %436 = vmatprep.mubr.f32.mxu0 0.0
  %437 = vmatmul.mubr.f32.gmra.mxu0 %v36
  %v438 = vpop.f32.mrf.mxu0
  %v439 = vadd.f32 %v260, %v438
  %v440 = vpop.f32.mrf.mxu0
  %441 = vmatprep.mubr.f32.mxu0 0.0
  %442 = vmatmul.mubr.f32.gmra.mxu0 %v37
  %v443 = vpop.f32.mrf.mxu0
  %v444 = vadd.f32 %v260, %v443
  %v445 = vpop.f32.mrf.mxu0
  %446 = vmatprep.mubr.f32.mxu0 0.0
  %447 = vmatmul.mubr.f32.gmra.mxu0 %v38
  %v448 = vpop.f32.mrf.mxu0
  %v449 = vadd.f32 %v260, %v448
  %v450 = vpop.f32.mrf.mxu0
  %451 = vmatprep.mubr.f32.mxu0 0.0
  %452 = vmatmul.mubr.f32.gmra.mxu0 %v39
  %v453 = vpop.f32.mrf.mxu0
  %v454 = vadd.f32 %v260, %v453
  %v455 = vpop.f32.mrf.mxu0
  %456 = vmatprep.mubr.f32.mxu0 0.0
  %457 = vmatmul.mubr.f32.gmra.mxu0 %v40
  %v458 = vpop.f32.mrf.mxu0
  %v459 = vadd.f32 %v260, %v458
  %v460 = vpop.f32.mrf.mxu0
  %461 = vmatprep.mubr.f32.mxu0 0.0
  %462 = vmatmul.mubr.f32.gmra.mxu0 %v41
  %v463 = vpop.f32.mrf.mxu0
  %v464 = vadd.f32 %v260, %v463
  %v465 = vpop.f32.mrf.mxu0
  %466 = vmatprep.mubr.f32.mxu0 0.0
  %467 = vmatmul.mubr.f32.gmra.mxu0 %v42
  %v468 = vpop.f32.mrf.mxu0
  %v469 = vadd.f32 %v260, %v468
  %v470 = vpop.f32.mrf.mxu0
  %471 = vmatprep.mubr.f32.mxu0 0.0
  %472 = vmatmul.mubr.f32.gmra.mxu0 %v43
  %v473 = vpop.f32.mrf.mxu0
  %v474 = vadd.f32 %v260, %v473
  %v475 = vpop.f32.mrf.mxu0
  %476 = vmatprep.mubr.f32.mxu0 0.0
  %477 = vmatmul.mubr.f32.gmra.mxu0 %v44
  %v478 = vpop.f32.mrf.mxu0
  %v479 = vadd.f32 %v260, %v478
  %v480 = vpop.f32.mrf.mxu0
  %481 = vmatprep.mubr.f32.mxu0 0.0
  %482 = vmatmul.mubr.f32.gmra.mxu0 %v45
  %v483 = vpop.f32.mrf.mxu0
  %v484 = vadd.f32 %v260, %v483
  %v485 = vpop.f32.mrf.mxu0
  %486 = vmatprep.mubr.f32.mxu0 0.0
  %487 = vmatmul.mubr.f32.gmra.mxu0 %v46
  %v488 = vpop.f32.mrf.mxu0
  %v489 = vadd.f32 %v260, %v488
  %v490 = vpop.f32.mrf.mxu0
  %491 = vmatprep.mubr.f32.mxu0 0.0
  %492 = vmatmul.mubr.f32.gmra.mxu0 %v47
  %v493 = vpop.f32.mrf.mxu0
  %v494 = vadd.f32 %v260, %v493
  %v495 = vpop.f32.mrf.mxu0
  %496 = vmatprep.mubr.f32.mxu0 0.0
  %497 = vmatmul.mubr.f32.gmra.mxu0 %v48
  %v498 = vpop.f32.mrf.mxu0
  %v499 = vadd.f32 %v260, %v498
  %v500 = vpop.f32.mrf.mxu0
  %501 = vmatprep.mubr.f32.mxu0 0.0
  %502 = vmatmul.mubr.f32.gmra.mxu0 %v49
  %v503 = vpop.f32.mrf.mxu0
  %v504 = vadd.f32 %v260, %v503
  %v505 = vpop.f32.mrf.mxu0
  %506 = vmatprep.mubr.f32.mxu0 0.0
  %507 = vmatmul.mubr.f32.gmra.mxu0 %v50
  %v508 = vpop.f32.mrf.mxu0
  %v509 = vadd.f32 %v260, %v508
  %v510 = vpop.f32.mrf.mxu0
  %511 = vmatprep.mubr.f32.mxu0 0.0
  %512 = vmatmul.mubr.f32.gmra.mxu0 %v51
  %v513 = vpop.f32.mrf.mxu0
  %v514 = vadd.f32 %v260, %v513
  %v515 = vpop.f32.mrf.mxu0
  %516 = vmatprep.mubr.f32.mxu0 0.0
  %517 = vmatmul.mubr.f32.gmra.mxu0 %v52
  %v518 = vpop.f32.mrf.mxu0
  %v519 = vadd.f32 %v260, %v518
  %v520 = vpop.f32.mrf.mxu0
  %521 = vmatprep.mubr.f32.mxu0 0.0
  %522 = vmatmul.mubr.f32.gmra.mxu0 %v53
  %v523 = vpop.f32.mrf.mxu0
  %v524 = vadd.f32 %v260, %v523
  %v525 = vpop.f32.mrf.mxu0
  %526 = vmatprep.mubr.f32.mxu0 0.0
  %527 = vmatmul.mubr.f32.gmra.mxu0 %v54
  %v528 = vpop.f32.mrf.mxu0
  %v529 = vadd.f32 %v260, %v528
  %v530 = vpop.f32.mrf.mxu0
  %531 = vmatprep.mubr.f32.mxu0 0.0
  %532 = vmatmul.mubr.f32.gmra.mxu0 %v55
  %v533 = vpop.f32.mrf.mxu0
  %v534 = vadd.f32 %v260, %v533
  %v535 = vpop.f32.mrf.mxu0
  %536 = vmatprep.mubr.f32.mxu0 0.0
  %537 = vmatmul.mubr.f32.gmra.mxu0 %v56
  %v538 = vpop.f32.mrf.mxu0
  %v539 = vadd.f32 %v260, %v538
  %v540 = vpop.f32.mrf.mxu0
  %541 = vmatprep.mubr.f32.mxu0 0.0
  %542 = vmatmul.mubr.f32.gmra.mxu0 %v57
  %v543 = vpop.f32.mrf.mxu0
  %v544 = vadd.f32 %v260, %v543
  %v545 = vpop.f32.mrf.mxu0
  %546 = vmatprep.mubr.f32.mxu0 0.0
  %547 = vmatmul.mubr.f32.gmra.mxu0 %v58
  %v548 = vpop.f32.mrf.mxu0
  %v549 = vadd.f32 %v260, %v548
  %v550 = vpop.f32.mrf.mxu0
  %551 = vmatprep.mubr.f32.mxu0 0.0
  %552 = vmatmul.mubr.f32.gmra.mxu0 %v59
  %v553 = vpop.f32.mrf.mxu0
  %v554 = vadd.f32 %v260, %v553
  %v555 = vpop.f32.mrf.mxu0
  %556 = vmatprep.mubr.f32.mxu0 0.0
  %557 = vmatmul.mubr.f32.gmra.mxu0 %v60
  %v558 = vpop.f32.mrf.mxu0
  %v559 = vadd.f32 %v260, %v558
  %v560 = vpop.f32.mrf.mxu0
  %561 = vmatprep.mubr.f32.mxu0 0.0
  %562 = vmatmul.mubr.f32.gmra.mxu0 %v61
  %v563 = vpop.f32.mrf.mxu0
  %v564 = vadd.f32 %v260, %v563
  %v565 = vpop.f32.mrf.mxu0
  %566 = vmatprep.mubr.f32.mxu0 0.0
  %567 = vmatmul.mubr.f32.gmra.mxu0 %v62
  %v568 = vpop.f32.mrf.mxu0
  %v569 = vadd.f32 %v260, %v568
  %v570 = vpop.f32.mrf.mxu0
  %571 = vmatprep.mubr.f32.mxu0 0.0
  %572 = vmatmul.mubr.f32.gmra.mxu0 %v63
  %v573 = vpop.f32.mrf.mxu0
  %v574 = vadd.f32 %v260, %v573
  %v575 = vpop.f32.mrf.mxu0
  %576 = vmatprep.mubr.f32.mxu0 0.0
  %577 = vmatmul.mubr.f32.gmra.mxu0 %v64
  %v578 = vpop.f32.mrf.mxu0
  %v579 = vadd.f32 %v260, %v578
  %v580 = vpop.f32.mrf.mxu0
  %581 = vmatprep.mubr.f32.mxu0 0.0
  %582 = vmatmul.mubr.f32.gmra.mxu0 %v65
  %v583 = vpop.f32.mrf.mxu0
  %v584 = vadd.f32 %v260, %v583
  %v585 = vpop.f32.mrf.mxu0
  %586 = vmatprep.mubr.f32.mxu0 0.0
  %587 = vmatmul.mubr.f32.gmra.mxu0 %v66
  %v588 = vpop.f32.mrf.mxu0
  %v589 = vadd.f32 %v260, %v588
  %v590 = vpop.f32.mrf.mxu0
  %591 = vmatprep.mubr.f32.mxu0 0.0
  %592 = vmatmul.mubr.f32.gmra.mxu0 %v67
  %v593 = vpop.f32.mrf.mxu0
  %v594 = vadd.f32 %v260, %v593
  %v595 = vpop.f32.mrf.mxu0
  %596 = vmatprep.mubr.f32.mxu0 0.0
  %597 = vmatmul.mubr.f32.gmra.mxu0 %v68
  %v598 = vpop.f32.mrf.mxu0
  %v599 = vadd.f32 %v260, %v598
  %v600 = vpop.f32.mrf.mxu0
  %601 = vmatprep.mubr.f32.mxu0 0.0
  %602 = vmatmul.mubr.f32.gmra.mxu0 %v69
  %v603 = vpop.f32.mrf.mxu0
  %v604 = vadd.f32 %v260, %v603
  %v605 = vpop.f32.mrf.mxu0
  %606 = vmatprep.mubr.f32.mxu0 0.0
  %607 = vmatmul.mubr.f32.gmra.mxu0 %v70
  %v608 = vpop.f32.mrf.mxu0
  %v609 = vadd.f32 %v260, %v608
  %v610 = vpop.f32.mrf.mxu0
  %611 = vmatprep.mubr.f32.mxu0 0.0
  %612 = vmatmul.mubr.f32.gmra.mxu0 %v71
  %v613 = vpop.f32.mrf.mxu0
  %v614 = vadd.f32 %v260, %v613
  %v615 = vpop.f32.mrf.mxu0
  %616 = vmatprep.mubr.f32.mxu0 0.0
  %617 = vmatmul.mubr.f32.gmra.mxu0 %v72
  %v618 = vpop.f32.mrf.mxu0
  %v619 = vadd.f32 %v260, %v618
  %v620 = vpop.f32.mrf.mxu0
  %621 = vmatprep.mubr.f32.mxu0 0.0
  %622 = vmatmul.mubr.f32.gmra.mxu0 %v73
  %v623 = vpop.f32.mrf.mxu0
  %v624 = vadd.f32 %v260, %v623
  %v625 = vpop.f32.mrf.mxu0
  %626 = vmatprep.mubr.f32.mxu0 0.0
  %627 = vmatmul.mubr.f32.gmra.mxu0 %v74
  %v628 = vpop.f32.mrf.mxu0
  %v629 = vadd.f32 %v260, %v628
  %v630 = vpop.f32.mrf.mxu0
  %631 = vmatprep.mubr.f32.mxu0 0.0
  %632 = vmatmul.mubr.f32.gmra.mxu0 %v75
  %v633 = vpop.f32.mrf.mxu0
  %v634 = vadd.f32 %v260, %v633
  %v635 = vpop.f32.mrf.mxu0
  %636 = vmatprep.mubr.f32.mxu0 0.0
  %637 = vmatmul.mubr.f32.gmra.mxu0 %v76
  %v638 = vpop.f32.mrf.mxu0
  %v639 = vadd.f32 %v260, %v638
  %v640 = vpop.f32.mrf.mxu0
  %641 = vmatprep.mubr.f32.mxu0 0.0
  %642 = vmatmul.mubr.f32.gmra.mxu0 %v77
  %v643 = vpop.f32.mrf.mxu0
  %v644 = vadd.f32 %v260, %v643
  %v645 = vpop.f32.mrf.mxu0
  %646 = vmatprep.mubr.f32.mxu0 0.0
  %647 = vmatmul.mubr.f32.gmra.mxu0 %v78
  %v648 = vpop.f32.mrf.mxu0
  %v649 = vadd.f32 %v260, %v648
  %v650 = vpop.f32.mrf.mxu0
  %651 = vmatprep.mubr.f32.mxu0 0.0
  %652 = vmatmul.mubr.f32.gmra.mxu0 %v79
  %v653 = vpop.f32.mrf.mxu0
  %v654 = vadd.f32 %v260, %v653
  %v655 = vpop.f32.mrf.mxu0
  %656 = vmatprep.mubr.f32.mxu0 0.0
  %657 = vmatmul.mubr.f32.gmra.mxu0 %v80
  %v658 = vpop.f32.mrf.mxu0
  %v659 = vadd.f32 %v260, %v658
  %v660 = vpop.f32.mrf.mxu0
  %661 = vmatprep.mubr.f32.mxu0 0.0
  %662 = vmatmul.mubr.f32.gmra.mxu0 %v81
  %v663 = vpop.f32.mrf.mxu0
  %v664 = vadd.f32 %v260, %v663
  %v665 = vpop.f32.mrf.mxu0
  %666 = vmatprep.mubr.f32.mxu0 0.0
  %667 = vmatmul.mubr.f32.gmra.mxu0 %v82
  %v668 = vpop.f32.mrf.mxu0
  %v669 = vadd.f32 %v260, %v668
  %v670 = vpop.f32.mrf.mxu0
  %671 = vmatprep.mubr.f32.mxu0 0.0
  %672 = vmatmul.mubr.f32.gmra.mxu0 %v83
  %v673 = vpop.f32.mrf.mxu0
  %v674 = vadd.f32 %v260, %v673
  %v675 = vpop.f32.mrf.mxu0
  %676 = vmatprep.mubr.f32.mxu0 0.0
  %677 = vmatmul.mubr.f32.gmra.mxu0 %v84
  %v678 = vpop.f32.mrf.mxu0
  %v679 = vadd.f32 %v260, %v678
  %v680 = vpop.f32.mrf.mxu0
  %681 = vmatprep.mubr.f32.mxu0 0.0
  %682 = vmatmul.mubr.f32.gmra.mxu0 %v85
  %v683 = vpop.f32.mrf.mxu0
  %v684 = vadd.f32 %v260, %v683
  %v685 = vpop.f32.mrf.mxu0
  %686 = vmatprep.mubr.f32.mxu0 0.0
  %687 = vmatmul.mubr.f32.gmra.mxu0 %v86
  %v688 = vpop.f32.mrf.mxu0
  %v689 = vadd.f32 %v260, %v688
  %v690 = vpop.f32.mrf.mxu0
  %691 = vmatprep.mubr.f32.mxu0 0.0
  %692 = vmatmul.mubr.f32.gmra.mxu0 %v87
  %v693 = vpop.f32.mrf.mxu0
  %v694 = vadd.f32 %v260, %v693
  %v695 = vpop.f32.mrf.mxu0
  %696 = vmatprep.mubr.f32.mxu0 0.0
  %697 = vmatmul.mubr.f32.gmra.mxu0 %v88
  %v698 = vpop.f32.mrf.mxu0
  %v699 = vadd.f32 %v260, %v698
  %v700 = vpop.f32.mrf.mxu0
  %701 = vmatprep.mubr.f32.mxu0 0.0
  %702 = vmatmul.mubr.f32.gmra.mxu0 %v89
  %v703 = vpop.f32.mrf.mxu0
  %v704 = vadd.f32 %v260, %v703
  %v705 = vpop.f32.mrf.mxu0
  %706 = vmatprep.mubr.f32.mxu0 0.0
  %707 = vmatmul.mubr.f32.gmra.mxu0 %v90
  %v708 = vpop.f32.mrf.mxu0
  %v709 = vadd.f32 %v260, %v708
  %v710 = vpop.f32.mrf.mxu0
  %711 = vmatprep.mubr.f32.mxu0 0.0
  %712 = vmatmul.mubr.f32.gmra.mxu0 %v91
  %v713 = vpop.f32.mrf.mxu0
  %v714 = vadd.f32 %v260, %v713
  %v715 = vpop.f32.mrf.mxu0
  %716 = vmatprep.mubr.f32.mxu0 0.0
  %717 = vmatmul.mubr.f32.gmra.mxu0 %v92
  %v718 = vpop.f32.mrf.mxu0
  %v719 = vadd.f32 %v260, %v718
  %v720 = vpop.f32.mrf.mxu0
  %721 = vmatprep.mubr.f32.mxu0 0.0
  %722 = vmatmul.mubr.f32.gmra.mxu0 %v93
  %v723 = vpop.f32.mrf.mxu0
  %v724 = vadd.f32 %v260, %v723
  %v725 = vpop.f32.mrf.mxu0
  %726 = vmatprep.mubr.f32.mxu0 0.0
  %727 = vmatmul.mubr.f32.gmra.mxu0 %v94
  %v728 = vpop.f32.mrf.mxu0
  %v729 = vadd.f32 %v260, %v728
  %v730 = vpop.f32.mrf.mxu0
  %731 = vmatprep.mubr.f32.mxu0 0.0
  %732 = vmatmul.mubr.f32.gmra.mxu0 %v95
  %v733 = vpop.f32.mrf.mxu0
  %v734 = vadd.f32 %v260, %v733
  %v735 = vpop.f32.mrf.mxu0
  %736 = vmatprep.mubr.f32.mxu0 0.0
  %737 = vmatmul.mubr.f32.gmra.mxu0 %v96
  %v738 = vpop.f32.mrf.mxu0
  %v739 = vadd.f32 %v260, %v738
  %v740 = vpop.f32.mrf.mxu0
  %741 = vmatprep.mubr.f32.mxu0 0.0
  %742 = vmatmul.mubr.f32.gmra.mxu0 %v97
  %v743 = vpop.f32.mrf.mxu0
  %v744 = vadd.f32 %v260, %v743
  %v745 = vpop.f32.mrf.mxu0
  %746 = vmatprep.mubr.f32.mxu0 0.0
  %747 = vmatmul.mubr.f32.gmra.mxu0 %v98
  %v748 = vpop.f32.mrf.mxu0
  %v749 = vadd.f32 %v260, %v748
  %v750 = vpop.f32.mrf.mxu0
  %751 = vmatprep.mubr.f32.mxu0 0.0
  %752 = vmatmul.mubr.f32.gmra.mxu0 %v99
  %v753 = vpop.f32.mrf.mxu0
  %v754 = vadd.f32 %v260, %v753
  %v755 = vpop.f32.mrf.mxu0
  %756 = vmatprep.mubr.f32.mxu0 0.0
  %757 = vmatmul.mubr.f32.gmra.mxu0 %v100
  %v758 = vpop.f32.mrf.mxu0
  %v759 = vadd.f32 %v260, %v758
  %v760 = vpop.f32.mrf.mxu0
  %761 = vmatprep.mubr.f32.mxu0 0.0
  %762 = vmatmul.mubr.f32.gmra.mxu0 %v101
  %v763 = vpop.f32.mrf.mxu0
  %v764 = vadd.f32 %v260, %v763
  %v765 = vpop.f32.mrf.mxu0
  %766 = vmatprep.mubr.f32.mxu0 0.0
  %767 = vmatmul.mubr.f32.gmra.mxu0 %v102
  %v768 = vpop.f32.mrf.mxu0
  %v769 = vadd.f32 %v260, %v768
  %v770 = vpop.f32.mrf.mxu0
  %771 = vmatprep.mubr.f32.mxu0 0.0
  %772 = vmatmul.mubr.f32.gmra.mxu0 %v103
  %v773 = vpop.f32.mrf.mxu0
  %v774 = vadd.f32 %v260, %v773
  %v775 = vpop.f32.mrf.mxu0
  %776 = vmatprep.mubr.f32.mxu0 0.0
  %777 = vmatmul.mubr.f32.gmra.mxu0 %v104
  %v778 = vpop.f32.mrf.mxu0
  %v779 = vadd.f32 %v260, %v778
  %v780 = vpop.f32.mrf.mxu0
  %781 = vmatprep.mubr.f32.mxu0 0.0
  %782 = vmatmul.mubr.f32.gmra.mxu0 %v105
  %v783 = vpop.f32.mrf.mxu0
  %v784 = vadd.f32 %v260, %v783
  %v785 = vpop.f32.mrf.mxu0
  %786 = vmatprep.mubr.f32.mxu0 0.0
  %787 = vmatmul.mubr.f32.gmra.mxu0 %v106
  %v788 = vpop.f32.mrf.mxu0
  %v789 = vadd.f32 %v260, %v788
  %v790 = vpop.f32.mrf.mxu0
  %791 = vmatprep.mubr.f32.mxu0 0.0
  %792 = vmatmul.mubr.f32.gmra.mxu0 %v107
  %v793 = vpop.f32.mrf.mxu0
  %v794 = vadd.f32 %v260, %v793
  %v795 = vpop.f32.mrf.mxu0
  %796 = vmatprep.mubr.f32.mxu0 0.0
  %797 = vmatmul.mubr.f32.gmra.mxu0 %v108
  %v798 = vpop.f32.mrf.mxu0
  %v799 = vadd.f32 %v260, %v798
  %v800 = vpop.f32.mrf.mxu0
  %801 = vmatprep.mubr.f32.mxu0 0.0
  %802 = vmatmul.mubr.f32.gmra.mxu0 %v109
  %v803 = vpop.f32.mrf.mxu0
  %v804 = vadd.f32 %v260, %v803
  %v805 = vpop.f32.mrf.mxu0
  %806 = vmatprep.mubr.f32.mxu0 0.0
  %807 = vmatmul.mubr.f32.gmra.mxu0 %v110
  %v808 = vpop.f32.mrf.mxu0
  %v809 = vadd.f32 %v260, %v808
  %v810 = vpop.f32.mrf.mxu0
  %811 = vmatprep.mubr.f32.mxu0 0.0
  %812 = vmatmul.mubr.f32.gmra.mxu0 %v111
  %v813 = vpop.f32.mrf.mxu0
  %v814 = vadd.f32 %v260, %v813
  %v815 = vpop.f32.mrf.mxu0
  %816 = vmatprep.mubr.f32.mxu0 0.0
  %817 = vmatmul.mubr.f32.gmra.mxu0 %v112
  %v818 = vpop.f32.mrf.mxu0
  %v819 = vadd.f32 %v260, %v818
  %v820 = vpop.f32.mrf.mxu0
  %821 = vmatprep.mubr.f32.mxu0 0.0
  %822 = vmatmul.mubr.f32.gmra.mxu0 %v113
  %v823 = vpop.f32.mrf.mxu0
  %v824 = vadd.f32 %v260, %v823
  %v825 = vpop.f32.mrf.mxu0
  %826 = vmatprep.mubr.f32.mxu0 0.0
  %827 = vmatmul.mubr.f32.gmra.mxu0 %v114
  %v828 = vpop.f32.mrf.mxu0
  %v829 = vadd.f32 %v260, %v828
  %v830 = vpop.f32.mrf.mxu0
  %831 = vmatprep.mubr.f32.mxu0 0.0
  %832 = vmatmul.mubr.f32.gmra.mxu0 %v115
  %v833 = vpop.f32.mrf.mxu0
  %v834 = vadd.f32 %v260, %v833
  %v835 = vpop.f32.mrf.mxu0
  %836 = vmatprep.mubr.f32.mxu0 0.0
  %837 = vmatmul.mubr.f32.gmra.mxu0 %v116
  %v838 = vpop.f32.mrf.mxu0
  %v839 = vadd.f32 %v260, %v838
  %v840 = vpop.f32.mrf.mxu0
  %841 = vmatprep.mubr.f32.mxu0 0.0
  %842 = vmatmul.mubr.f32.gmra.mxu0 %v117
  %v843 = vpop.f32.mrf.mxu0
  %v844 = vadd.f32 %v260, %v843
  %v845 = vpop.f32.mrf.mxu0
  %846 = vmatprep.mubr.f32.mxu0 0.0
  %847 = vmatmul.mubr.f32.gmra.mxu0 %v118
  %v848 = vpop.f32.mrf.mxu0
  %v849 = vadd.f32 %v260, %v848
  %v850 = vpop.f32.mrf.mxu0
  %851 = vmatprep.mubr.f32.mxu0 0.0
  %852 = vmatmul.mubr.f32.gmra.mxu0 %v119
  %v853 = vpop.f32.mrf.mxu0
  %v854 = vadd.f32 %v260, %v853
  %v855 = vpop.f32.mrf.mxu0
  %856 = vmatprep.mubr.f32.mxu0 0.0
  %857 = vmatmul.mubr.f32.gmra.mxu0 %v120
  %v858 = vpop.f32.mrf.mxu0
  %v859 = vadd.f32 %v260, %v858
  %v860 = vpop.f32.mrf.mxu0
  %861 = vmatprep.mubr.f32.mxu0 0.0
  %862 = vmatmul.mubr.f32.gmra.mxu0 %v121
  %v863 = vpop.f32.mrf.mxu0
  %v864 = vadd.f32 %v260, %v863
  %v865 = vpop.f32.mrf.mxu0
  %866 = vmatprep.mubr.f32.mxu0 0.0
  %867 = vmatmul.mubr.f32.gmra.mxu0 %v122
  %v868 = vpop.f32.mrf.mxu0
  %v869 = vadd.f32 %v260, %v868
  %v870 = vpop.f32.mrf.mxu0
  %871 = vmatprep.mubr.f32.mxu0 0.0
  %872 = vmatmul.mubr.f32.gmra.mxu0 %v123
  %v873 = vpop.f32.mrf.mxu0
  %v874 = vadd.f32 %v260, %v873
  %v875 = vpop.f32.mrf.mxu0
  %876 = vmatprep.mubr.f32.mxu0 0.0
  %877 = vmatmul.mubr.f32.gmra.mxu0 %v124
  %v878 = vpop.f32.mrf.mxu0
  %v879 = vadd.f32 %v260, %v878
  %v880 = vpop.f32.mrf.mxu0
  %881 = vmatprep.mubr.f32.mxu0 0.0
  %882 = vmatmul.mubr.f32.gmra.mxu0 %v125
  %v883 = vpop.f32.mrf.mxu0
  %v884 = vadd.f32 %v260, %v883
  %v885 = vpop.f32.mrf.mxu0
  %886 = vmatprep.mubr.f32.mxu0 0.0
  %887 = vmatmul.mubr.f32.gmra.mxu0 %v126
  %v888 = vpop.f32.mrf.mxu0
  %v889 = vadd.f32 %v260, %v888
  %v890 = vpop.f32.mrf.mxu0
  %891 = vmatprep.mubr.f32.mxu0 0.0
  %892 = vmatmul.mubr.f32.gmra.mxu0 %v127
  %v893 = vpop.f32.mrf.mxu0
  %v894 = vadd.f32 %v260, %v893
  %v895 = vpop.f32.mrf.mxu0
  %896 = vmatprep.mubr.f32.mxu0 0.0
  %897 = vmatmul.mubr.f32.gmra.mxu0 %v128
  %v898 = vpop.f32.mrf.mxu0
  %v899 = vadd.f32 %v260, %v898
  %v900 = vpop.f32.mrf.mxu0
  %901 = vmatprep.mubr.f32.mxu0 0.0
  %902 = vmatmul.mubr.f32.gmra.mxu0 %v129
  %v903 = vpop.f32.mrf.mxu0
  %v904 = vadd.f32 %v260, %v903
  %v905 = vpop.f32.mrf.mxu0
  %906 = vmatprep.mubr.f32.mxu0 0.0
  %907 = vmatmul.mubr.f32.gmra.mxu0 %v130
  %v908 = vpop.f32.mrf.mxu0
  %v909 = vadd.f32 %v260, %v908
  %v910 = vpop.f32.mrf.mxu0
  %911 = vmatprep.mubr.f32.mxu0 0.0
  %912 = vmatmul.mubr.f32.gmra.mxu0 %v131
  %v913 = vpop.f32.mrf.mxu0
  %v914 = vadd.f32 %v260, %v913
  %v915 = vpop.f32.mrf.mxu0
  %916 = vmatprep.mubr.f32.mxu0 0.0
  %917 = vmatmul.mubr.f32.gmra.mxu0 %v132
  %v918 = vpop.f32.mrf.mxu0
  %v919 = vadd.f32 %v260, %v918
  %v920 = vpop.f32.mrf.mxu0
  %921 = vmatprep.mubr.f32.mxu0 0.0
  %922 = vmatmul.mubr.f32.gmra.mxu0 %v133
  %v923 = vpop.f32.mrf.mxu0
  %v924 = vadd.f32 %v260, %v923
  %v925 = vpop.f32.mrf.mxu0
  %926 = vmatprep.mubr.f32.mxu0 0.0
  %927 = vmatmul.mubr.f32.gmra.mxu0 %v134
  %v928 = vpop.f32.mrf.mxu0
  %v929 = vadd.f32 %v260, %v928
  %v930 = vpop.f32.mrf.mxu0
  %931 = vmatprep.mubr.f32.mxu0 0.0
  %932 = vmatmul.mubr.f32.gmra.mxu0 %v135
  %v933 = vpop.f32.mrf.mxu0
  %v934 = vadd.f32 %v260, %v933
  %v935 = vpop.f32.mrf.mxu0
  %936 = vmatprep.mubr.f32.mxu0 0.0
  %937 = vmatmul.mubr.f32.gmra.mxu0 %v136
  %v938 = vpop.f32.mrf.mxu0
  %v939 = vadd.f32 %v260, %v938
  %v940 = vpop.f32.mrf.mxu0
  %941 = vmatprep.mubr.f32.mxu0 0.0
  %942 = vmatmul.mubr.f32.gmra.mxu0 %v137
  %v943 = vpop.f32.mrf.mxu0
  %v944 = vadd.f32 %v260, %v943
  %v945 = vpop.f32.mrf.mxu0
  %946 = vmatprep.mubr.f32.mxu0 0.0
  %947 = vmatmul.mubr.f32.gmra.mxu0 %v138
  %v948 = vpop.f32.mrf.mxu0
  %v949 = vadd.f32 %v260, %v948
  %v950 = vpop.f32.mrf.mxu0
  %951 = vmatprep.mubr.f32.mxu0 0.0
  %952 = vmatmul.mubr.f32.gmra.mxu0 %v139
  %v953 = vpop.f32.mrf.mxu0
  %v954 = vadd.f32 %v260, %v953
  %v955 = vpop.f32.mrf.mxu0
  %956 = vmatprep.mubr.f32.mxu0 0.0
  %957 = vmatmul.mubr.f32.gmra.mxu0 %v140
  %v958 = vpop.f32.mrf.mxu0
  %v959 = vadd.f32 %v260, %v958
  %v960 = vpop.f32.mrf.mxu0
  %961 = vmatprep.mubr.f32.mxu0 0.0
  %962 = vmatmul.mubr.f32.gmra.mxu0 %v141
  %v963 = vpop.f32.mrf.mxu0
  %v964 = vadd.f32 %v260, %v963
  %v965 = vpop.f32.mrf.mxu0
  %966 = vmatprep.mubr.f32.mxu0 0.0
  %967 = vmatmul.mubr.f32.gmra.mxu0 %v142
  %v968 = vpop.f32.mrf.mxu0
  %v969 = vadd.f32 %v260, %v968
  %v970 = vpop.f32.mrf.mxu0
  %971 = vmatprep.mubr.f32.mxu0 0.0
  %972 = vmatmul.mubr.f32.gmra.mxu0 %v143
  %v973 = vpop.f32.mrf.mxu0
  %v974 = vadd.f32 %v260, %v973
  %v975 = vpop.f32.mrf.mxu0
  %976 = vmatprep.mubr.f32.mxu0 0.0
  %977 = vmatmul.mubr.f32.gmra.mxu0 %v144
  %v978 = vpop.f32.mrf.mxu0
  %v979 = vadd.f32 %v260, %v978
  %v980 = vpop.f32.mrf.mxu0
  %981 = vmatprep.mubr.f32.mxu0 0.0
  %982 = vmatmul.mubr.f32.gmra.mxu0 %v145
  %v983 = vpop.f32.mrf.mxu0
  %v984 = vadd.f32 %v260, %v983
  %v985 = vpop.f32.mrf.mxu0
  %986 = vmatprep.mubr.f32.mxu0 0.0
  %987 = vmatmul.mubr.f32.gmra.mxu0 %v146
  %v988 = vpop.f32.mrf.mxu0
  %v989 = vadd.f32 %v260, %v988
  %v990 = vpop.f32.mrf.mxu0
  %991 = vmatprep.mubr.f32.mxu0 0.0
  %992 = vmatmul.mubr.f32.gmra.mxu0 %v147
  %v993 = vpop.f32.mrf.mxu0
  %v994 = vadd.f32 %v260, %v993
  %v995 = vpop.f32.mrf.mxu0
  %996 = vmatprep.mubr.f32.mxu0 0.0
  %997 = vmatmul.mubr.f32.gmra.mxu0 %v148
  %v998 = vpop.f32.mrf.mxu0
  %v999 = vadd.f32 %v260, %v998
  %v1000 = vpop.f32.mrf.mxu0
  %1001 = vmatprep.mubr.f32.mxu0 0.0
  %1002 = vmatmul.mubr.f32.gmra.mxu0 %v149
  %v1003 = vpop.f32.mrf.mxu0
  %v1004 = vadd.f32 %v260, %v1003
  %v1005 = vpop.f32.mrf.mxu0
  %1006 = vmatprep.mubr.f32.mxu0 0.0
  %1007 = vmatmul.mubr.f32.gmra.mxu0 %v150
  %v1008 = vpop.f32.mrf.mxu0
  %v1009 = vadd.f32 %v260, %v1008
  %v1010 = vpop.f32.mrf.mxu0
  %1011 = vmatprep.mubr.f32.mxu0 0.0
  %1012 = vmatmul.mubr.f32.gmra.mxu0 %v151
  %v1013 = vpop.f32.mrf.mxu0
  %v1014 = vadd.f32 %v260, %v1013
  %v1015 = vpop.f32.mrf.mxu0
  %1016 = vmatprep.mubr.f32.mxu0 0.0
  %1017 = vmatmul.mubr.f32.gmra.mxu0 %v152
  %v1018 = vpop.f32.mrf.mxu0
  %v1019 = vadd.f32 %v260, %v1018
  %v1020 = vpop.f32.mrf.mxu0
  %1021 = vmatprep.mubr.f32.mxu0 0.0
  %1022 = vmatmul.mubr.f32.gmra.mxu0 %v153
  %v1023 = vpop.f32.mrf.mxu0
  %v1024 = vadd.f32 %v260, %v1023
  %v1025 = vpop.f32.mrf.mxu0
  %1026 = vmatprep.mubr.f32.mxu0 0.0
  %1027 = vmatmul.mubr.f32.gmra.mxu0 %v154
  %v1028 = vpop.f32.mrf.mxu0
  %v1029 = vadd.f32 %v260, %v1028
  %v1030 = vpop.f32.mrf.mxu0
  %1031 = vmatprep.mubr.f32.mxu0 0.0
  %1032 = vmatmul.mubr.f32.gmra.mxu0 %v155
  %v1033 = vpop.f32.mrf.mxu0
  %v1034 = vadd.f32 %v260, %v1033
  %v1035 = vpop.f32.mrf.mxu0
  %1036 = vmatprep.mubr.f32.mxu0 0.0
  %1037 = vmatmul.mubr.f32.gmra.mxu0 %v156
  %v1038 = vpop.f32.mrf.mxu0
  %v1039 = vadd.f32 %v260, %v1038
  %v1040 = vpop.f32.mrf.mxu0
  %1041 = vmatprep.mubr.f32.mxu0 0.0
  %1042 = vmatmul.mubr.f32.gmra.mxu0 %v157
  %v1043 = vpop.f32.mrf.mxu0
  %v1044 = vadd.f32 %v260, %v1043
  %v1045 = vpop.f32.mrf.mxu0
  %1046 = vmatprep.mubr.f32.mxu0 0.0
  %1047 = vmatmul.mubr.f32.gmra.mxu0 %v158
  %v1048 = vpop.f32.mrf.mxu0
  %v1049 = vadd.f32 %v260, %v1048
  %v1050 = vpop.f32.mrf.mxu0
  %1051 = vmatprep.mubr.f32.mxu0 0.0
  %1052 = vmatmul.mubr.f32.gmra.mxu0 %v159
  %v1053 = vpop.f32.mrf.mxu0
  %v1054 = vadd.f32 %v260, %v1053
  %v1055 = vpop.f32.mrf.mxu0
  %1056 = vmatprep.mubr.f32.mxu0 0.0
  %1057 = vmatmul.mubr.f32.gmra.mxu0 %v160
  %v1058 = vpop.f32.mrf.mxu0
  %v1059 = vadd.f32 %v260, %v1058
  %v1060 = vpop.f32.mrf.mxu0
  %1061 = vmatprep.mubr.f32.mxu0 0.0
  %1062 = vmatmul.mubr.f32.gmra.mxu0 %v161
  %v1063 = vpop.f32.mrf.mxu0
  %v1064 = vadd.f32 %v260, %v1063
  %v1065 = vpop.f32.mrf.mxu0
  %1066 = vmatprep.mubr.f32.mxu0 0.0
  %1067 = vmatmul.mubr.f32.gmra.mxu0 %v162
  %v1068 = vpop.f32.mrf.mxu0
  %v1069 = vadd.f32 %v260, %v1068
  %v1070 = vpop.f32.mrf.mxu0
  %1071 = vmatprep.mubr.f32.mxu0 0.0
  %1072 = vmatmul.mubr.f32.gmra.mxu0 %v163
  %v1073 = vpop.f32.mrf.mxu0
  %v1074 = vadd.f32 %v260, %v1073
  %v1075 = vpop.f32.mrf.mxu0
  %1076 = vmatprep.mubr.f32.mxu0 0.0
  %1077 = vmatmul.mubr.f32.gmra.mxu0 %v164
  %v1078 = vpop.f32.mrf.mxu0
  %v1079 = vadd.f32 %v260, %v1078
  %v1080 = vpop.f32.mrf.mxu0
  %1081 = vmatprep.mubr.f32.mxu0 0.0
  %1082 = vmatmul.mubr.f32.gmra.mxu0 %v165
  %v1083 = vpop.f32.mrf.mxu0
  %v1084 = vadd.f32 %v260, %v1083
  %v1085 = vpop.f32.mrf.mxu0
  %1086 = vmatprep.mubr.f32.mxu0 0.0
  %1087 = vmatmul.mubr.f32.gmra.mxu0 %v166
  %v1088 = vpop.f32.mrf.mxu0
  %v1089 = vadd.f32 %v260, %v1088
  %v1090 = vpop.f32.mrf.mxu0
  %1091 = vmatprep.mubr.f32.mxu0 0.0
  %1092 = vmatmul.mubr.f32.gmra.mxu0 %v167
  %v1093 = vpop.f32.mrf.mxu0
  %v1094 = vadd.f32 %v260, %v1093
  %v1095 = vpop.f32.mrf.mxu0
  %1096 = vmatprep.mubr.f32.mxu0 0.0
  %1097 = vmatmul.mubr.f32.gmra.mxu0 %v168
  %v1098 = vpop.f32.mrf.mxu0
  %v1099 = vadd.f32 %v260, %v1098
  %v1100 = vpop.f32.mrf.mxu0
  %1101 = vmatprep.mubr.f32.mxu0 0.0
  %1102 = vmatmul.mubr.f32.gmra.mxu0 %v169
  %v1103 = vpop.f32.mrf.mxu0
  %v1104 = vadd.f32 %v260, %v1103
  %v1105 = vpop.f32.mrf.mxu0
  %1106 = vmatprep.mubr.f32.mxu0 0.0
  %1107 = vmatmul.mubr.f32.gmra.mxu0 %v170
  %v1108 = vpop.f32.mrf.mxu0
  %v1109 = vadd.f32 %v260, %v1108
  %v1110 = vpop.f32.mrf.mxu0
  %1111 = vmatprep.mubr.f32.mxu0 0.0
  %1112 = vmatmul.mubr.f32.gmra.mxu0 %v171
  %v1113 = vpop.f32.mrf.mxu0
  %v1114 = vadd.f32 %v260, %v1113
  %v1115 = vpop.f32.mrf.mxu0
  %1116 = vmatprep.mubr.f32.mxu0 0.0
  %1117 = vmatmul.mubr.f32.gmra.mxu0 %v172
  %v1118 = vpop.f32.mrf.mxu0
  %v1119 = vadd.f32 %v260, %v1118
  %v1120 = vpop.f32.mrf.mxu0
  %1121 = vmatprep.mubr.f32.mxu0 0.0
  %1122 = vmatmul.mubr.f32.gmra.mxu0 %v173
  %v1123 = vpop.f32.mrf.mxu0
  %v1124 = vadd.f32 %v260, %v1123
  %v1125 = vpop.f32.mrf.mxu0
  %1126 = vmatprep.mubr.f32.mxu0 0.0
  %1127 = vmatmul.mubr.f32.gmra.mxu0 %v174
  %v1128 = vpop.f32.mrf.mxu0
  %v1129 = vadd.f32 %v260, %v1128
  %v1130 = vpop.f32.mrf.mxu0
  %1131 = vmatprep.mubr.f32.mxu0 0.0
  %1132 = vmatmul.mubr.f32.gmra.mxu0 %v175
  %v1133 = vpop.f32.mrf.mxu0
  %v1134 = vadd.f32 %v260, %v1133
  %v1135 = vpop.f32.mrf.mxu0
  %1136 = vmatprep.mubr.f32.mxu0 0.0
  %1137 = vmatmul.mubr.f32.gmra.mxu0 %v176
  %v1138 = vpop.f32.mrf.mxu0
  %v1139 = vadd.f32 %v260, %v1138
  %v1140 = vpop.f32.mrf.mxu0
  %1141 = vmatprep.mubr.f32.mxu0 0.0
  %1142 = vmatmul.mubr.f32.gmra.mxu0 %v177
  %v1143 = vpop.f32.mrf.mxu0
  %v1144 = vadd.f32 %v260, %v1143
  %v1145 = vpop.f32.mrf.mxu0
  %1146 = vmatprep.mubr.f32.mxu0 0.0
  %1147 = vmatmul.mubr.f32.gmra.mxu0 %v178
  %v1148 = vpop.f32.mrf.mxu0
  %v1149 = vadd.f32 %v260, %v1148
  %v1150 = vpop.f32.mrf.mxu0
  %1151 = vmatprep.mubr.f32.mxu0 0.0
  %1152 = vmatmul.mubr.f32.gmra.mxu0 %v179
  %v1153 = vpop.f32.mrf.mxu0
  %v1154 = vadd.f32 %v260, %v1153
  %v1155 = vpop.f32.mrf.mxu0
  %1156 = vmatprep.mubr.f32.mxu0 0.0
  %1157 = vmatmul.mubr.f32.gmra.mxu0 %v180
  %v1158 = vpop.f32.mrf.mxu0
  %v1159 = vadd.f32 %v260, %v1158
  %v1160 = vpop.f32.mrf.mxu0
  %1161 = vmatprep.mubr.f32.mxu0 0.0
  %1162 = vmatmul.mubr.f32.gmra.mxu0 %v181
  %v1163 = vpop.f32.mrf.mxu0
  %v1164 = vadd.f32 %v260, %v1163
  %v1165 = vpop.f32.mrf.mxu0
  %1166 = vmatprep.mubr.f32.mxu0 0.0
  %1167 = vmatmul.mubr.f32.gmra.mxu0 %v182
  %v1168 = vpop.f32.mrf.mxu0
  %v1169 = vadd.f32 %v260, %v1168
  %v1170 = vpop.f32.mrf.mxu0
  %1171 = vmatprep.mubr.f32.mxu0 0.0
  %1172 = vmatmul.mubr.f32.gmra.mxu0 %v183
  %v1173 = vpop.f32.mrf.mxu0
  %v1174 = vadd.f32 %v260, %v1173
  %v1175 = vpop.f32.mrf.mxu0
  %1176 = vmatprep.mubr.f32.mxu0 0.0
  %1177 = vmatmul.mubr.f32.gmra.mxu0 %v184
  %v1178 = vpop.f32.mrf.mxu0
  %v1179 = vadd.f32 %v260, %v1178
  %v1180 = vpop.f32.mrf.mxu0
  %1181 = vmatprep.mubr.f32.mxu0 0.0
  %1182 = vmatmul.mubr.f32.gmra.mxu0 %v185
  %v1183 = vpop.f32.mrf.mxu0
  %v1184 = vadd.f32 %v260, %v1183
  %v1185 = vpop.f32.mrf.mxu0
  %1186 = vmatprep.mubr.f32.mxu0 0.0
  %1187 = vmatmul.mubr.f32.gmra.mxu0 %v186
  %v1188 = vpop.f32.mrf.mxu0
  %v1189 = vadd.f32 %v260, %v1188
  %v1190 = vpop.f32.mrf.mxu0
  %1191 = vmatprep.mubr.f32.mxu0 0.0
  %1192 = vmatmul.mubr.f32.gmra.mxu0 %v187
  %v1193 = vpop.f32.mrf.mxu0
  %v1194 = vadd.f32 %v260, %v1193
  %v1195 = vpop.f32.mrf.mxu0
  %1196 = vmatprep.mubr.f32.mxu0 0.0
  %1197 = vmatmul.mubr.f32.gmra.mxu0 %v188
  %v1198 = vpop.f32.mrf.mxu0
  %v1199 = vadd.f32 %v260, %v1198
  %v1200 = vpop.f32.mrf.mxu0
  %1201 = vmatprep.mubr.f32.mxu0 0.0
  %1202 = vmatmul.mubr.f32.gmra.mxu0 %v189
  %v1203 = vpop.f32.mrf.mxu0
  %v1204 = vadd.f32 %v260, %v1203
  %v1205 = vpop.f32.mrf.mxu0
  %1206 = vmatprep.mubr.f32.mxu0 0.0
  %1207 = vmatmul.mubr.f32.gmra.mxu0 %v190
  %v1208 = vpop.f32.mrf.mxu0
  %v1209 = vadd.f32 %v260, %v1208
  %v1210 = vpop.f32.mrf.mxu0
  %1211 = vmatprep.mubr.f32.mxu0 0.0
  %1212 = vmatmul.mubr.f32.gmra.mxu0 %v191
  %v1213 = vpop.f32.mrf.mxu0
  %v1214 = vadd.f32 %v260, %v1213
  %v1215 = vpop.f32.mrf.mxu0
  %1216 = vmatprep.mubr.f32.mxu0 0.0
  %1217 = vmatmul.mubr.f32.gmra.mxu0 %v192
  %v1218 = vpop.f32.mrf.mxu0
  %v1219 = vadd.f32 %v260, %v1218
  %v1220 = vpop.f32.mrf.mxu0
  %1221 = vmatprep.mubr.f32.mxu0 0.0
  %1222 = vmatmul.mubr.f32.gmra.mxu0 %v193
  %v1223 = vpop.f32.mrf.mxu0
  %v1224 = vadd.f32 %v260, %v1223
  %v1225 = vpop.f32.mrf.mxu0
  %1226 = vmatprep.mubr.f32.mxu0 0.0
  %1227 = vmatmul.mubr.f32.gmra.mxu0 %v194
  %v1228 = vpop.f32.mrf.mxu0
  %v1229 = vadd.f32 %v260, %v1228
  %v1230 = vpop.f32.mrf.mxu0
  %1231 = vmatprep.mubr.f32.mxu0 0.0
  %1232 = vmatmul.mubr.f32.gmra.mxu0 %v195
  %v1233 = vpop.f32.mrf.mxu0
  %v1234 = vadd.f32 %v260, %v1233
  %v1235 = vpop.f32.mrf.mxu0
  %1236 = vmatprep.mubr.f32.mxu0 0.0
  %1237 = vmatmul.mubr.f32.gmra.mxu0 %v196
  %v1238 = vpop.f32.mrf.mxu0
  %v1239 = vadd.f32 %v260, %v1238
  %v1240 = vpop.f32.mrf.mxu0
  %1241 = vmatprep.mubr.f32.mxu0 0.0
  %1242 = vmatmul.mubr.f32.gmra.mxu0 %v197
  %v1243 = vpop.f32.mrf.mxu0
  %v1244 = vadd.f32 %v260, %v1243
  %v1245 = vpop.f32.mrf.mxu0
  %1246 = vmatprep.mubr.f32.mxu0 0.0
  %1247 = vmatmul.mubr.f32.gmra.mxu0 %v198
  %v1248 = vpop.f32.mrf.mxu0
  %v1249 = vadd.f32 %v260, %v1248
  %v1250 = vpop.f32.mrf.mxu0
  %1251 = vmatprep.mubr.f32.mxu0 0.0
  %1252 = vmatmul.mubr.f32.gmra.mxu0 %v199
  %v1253 = vpop.f32.mrf.mxu0
  %v1254 = vadd.f32 %v260, %v1253
  %v1255 = vpop.f32.mrf.mxu0
  %1256 = vmatprep.mubr.f32.mxu0 0.0
  %1257 = vmatmul.mubr.f32.gmra.mxu0 %v200
  %v1258 = vpop.f32.mrf.mxu0
  %v1259 = vadd.f32 %v260, %v1258
  %v1260 = vpop.f32.mrf.mxu0
  %1261 = vmatprep.mubr.f32.mxu0 0.0
  %1262 = vmatmul.mubr.f32.gmra.mxu0 %v201
  %v1263 = vpop.f32.mrf.mxu0
  %v1264 = vadd.f32 %v260, %v1263
  %v1265 = vpop.f32.mrf.mxu0
  %1266 = vmatprep.mubr.f32.mxu0 0.0
  %1267 = vmatmul.mubr.f32.gmra.mxu0 %v202
  %v1268 = vpop.f32.mrf.mxu0
  %v1269 = vadd.f32 %v260, %v1268
  %v1270 = vpop.f32.mrf.mxu0
  %1271 = vmatprep.mubr.f32.mxu0 0.0
  %1272 = vmatmul.mubr.f32.gmra.mxu0 %v203
  %v1273 = vpop.f32.mrf.mxu0
  %v1274 = vadd.f32 %v260, %v1273
  %v1275 = vpop.f32.mrf.mxu0
  %1276 = vmatprep.mubr.f32.mxu0 0.0
  %1277 = vmatmul.mubr.f32.gmra.mxu0 %v204
  %v1278 = vpop.f32.mrf.mxu0
  %v1279 = vadd.f32 %v260, %v1278
  %v1280 = vpop.f32.mrf.mxu0
  %1281 = vmatprep.mubr.f32.mxu0 0.0
  %1282 = vmatmul.mubr.f32.gmra.mxu0 %v205
  %v1283 = vpop.f32.mrf.mxu0
  %v1284 = vadd.f32 %v260, %v1283
  %v1285 = vpop.f32.mrf.mxu0
  %1286 = vmatprep.mubr.f32.mxu0 0.0
  %1287 = vmatmul.mubr.f32.gmra.mxu0 %v206
  %v1288 = vpop.f32.mrf.mxu0
  %v1289 = vadd.f32 %v260, %v1288
  %v1290 = vpop.f32.mrf.mxu0
  %1291 = vmatprep.mubr.f32.mxu0 0.0
  %1292 = vmatmul.mubr.f32.gmra.mxu0 %v207
  %v1293 = vpop.f32.mrf.mxu0
  %v1294 = vadd.f32 %v260, %v1293
  %v1295 = vpop.f32.mrf.mxu0
  %1296 = vmatprep.mubr.f32.mxu0 0.0
  %1297 = vmatmul.mubr.f32.gmra.mxu0 %v208
  %v1298 = vpop.f32.mrf.mxu0
  %v1299 = vadd.f32 %v260, %v1298
  %v1300 = vpop.f32.mrf.mxu0
  %1301 = vmatprep.mubr.f32.mxu0 0.0
  %1302 = vmatmul.mubr.f32.gmra.mxu0 %v209
  %v1303 = vpop.f32.mrf.mxu0
  %v1304 = vadd.f32 %v260, %v1303
  %v1305 = vpop.f32.mrf.mxu0
  %1306 = vmatprep.mubr.f32.mxu0 0.0
  %1307 = vmatmul.mubr.f32.gmra.mxu0 %v210
  %v1308 = vpop.f32.mrf.mxu0
  %v1309 = vadd.f32 %v260, %v1308
  %v1310 = vpop.f32.mrf.mxu0
  %1311 = vmatprep.mubr.f32.mxu0 0.0
  %1312 = vmatmul.mubr.f32.gmra.mxu0 %v211
  %v1313 = vpop.f32.mrf.mxu0
  %v1314 = vadd.f32 %v260, %v1313
  %v1315 = vpop.f32.mrf.mxu0
  %1316 = vmatprep.mubr.f32.mxu0 0.0
  %1317 = vmatmul.mubr.f32.gmra.mxu0 %v212
  %v1318 = vpop.f32.mrf.mxu0
  %v1319 = vadd.f32 %v260, %v1318
  %v1320 = vpop.f32.mrf.mxu0
  %1321 = vmatprep.mubr.f32.mxu0 0.0
  %1322 = vmatmul.mubr.f32.gmra.mxu0 %v213
  %v1323 = vpop.f32.mrf.mxu0
  %v1324 = vadd.f32 %v260, %v1323
  %v1325 = vpop.f32.mrf.mxu0
  %1326 = vmatprep.mubr.f32.mxu0 0.0
  %1327 = vmatmul.mubr.f32.gmra.mxu0 %v214
  %v1328 = vpop.f32.mrf.mxu0
  %v1329 = vadd.f32 %v260, %v1328
  %v1330 = vpop.f32.mrf.mxu0
  %1331 = vmatprep.mubr.f32.mxu0 0.0
  %1332 = vmatmul.mubr.f32.gmra.mxu0 %v215
  %v1333 = vpop.f32.mrf.mxu0
  %v1334 = vadd.f32 %v260, %v1333
  %v1335 = vpop.f32.mrf.mxu0
  %1336 = vmatprep.mubr.f32.mxu0 0.0
  %1337 = vmatmul.mubr.f32.gmra.mxu0 %v216
  %v1338 = vpop.f32.mrf.mxu0
  %v1339 = vadd.f32 %v260, %v1338
  %v1340 = vpop.f32.mrf.mxu0
  %1341 = vmatprep.mubr.f32.mxu0 0.0
  %1342 = vmatmul.mubr.f32.gmra.mxu0 %v217
  %v1343 = vpop.f32.mrf.mxu0
  %v1344 = vadd.f32 %v260, %v1343
  %v1345 = vpop.f32.mrf.mxu0
  %1346 = vmatprep.mubr.f32.mxu0 0.0
  %1347 = vmatmul.mubr.f32.gmra.mxu0 %v218
  %v1348 = vpop.f32.mrf.mxu0
  %v1349 = vadd.f32 %v260, %v1348
  %v1350 = vpop.f32.mrf.mxu0
  %1351 = vmatprep.mubr.f32.mxu0 0.0
  %1352 = vmatmul.mubr.f32.gmra.mxu0 %v219
  %v1353 = vpop.f32.mrf.mxu0
  %v1354 = vadd.f32 %v260, %v1353
  %v1355 = vpop.f32.mrf.mxu0
  %1356 = vmatprep.mubr.f32.mxu0 0.0
  %1357 = vmatmul.mubr.f32.gmra.mxu0 %v220
  %v1358 = vpop.f32.mrf.mxu0
  %v1359 = vadd.f32 %v260, %v1358
  %v1360 = vpop.f32.mrf.mxu0
  %1361 = vmatprep.mubr.f32.mxu0 0.0
  %1362 = vmatmul.mubr.f32.gmra.mxu0 %v221
  %v1363 = vpop.f32.mrf.mxu0
  %v1364 = vadd.f32 %v260, %v1363
  %v1365 = vpop.f32.mrf.mxu0
  %1366 = vmatprep.mubr.f32.mxu0 0.0
  %1367 = vmatmul.mubr.f32.gmra.mxu0 %v222
  %v1368 = vpop.f32.mrf.mxu0
  %v1369 = vadd.f32 %v260, %v1368
  %v1370 = vpop.f32.mrf.mxu0
  %1371 = vmatprep.mubr.f32.mxu0 0.0
  %1372 = vmatmul.mubr.f32.gmra.mxu0 %v223
  %v1373 = vpop.f32.mrf.mxu0
  %v1374 = vadd.f32 %v260, %v1373
  %v1375 = vpop.f32.mrf.mxu0
  %1376 = vmatprep.mubr.f32.mxu0 0.0
  %1377 = vmatmul.mubr.f32.gmra.mxu0 %v224
  %v1378 = vpop.f32.mrf.mxu0
  %v1379 = vadd.f32 %v260, %v1378
  %v1380 = vpop.f32.mrf.mxu0
  %1381 = vmatprep.mubr.f32.mxu0 0.0
  %1382 = vmatmul.mubr.f32.gmra.mxu0 %v225
  %v1383 = vpop.f32.mrf.mxu0
  %v1384 = vadd.f32 %v260, %v1383
  %v1385 = vpop.f32.mrf.mxu0
  %1386 = vmatprep.mubr.f32.mxu0 0.0
  %1387 = vmatmul.mubr.f32.gmra.mxu0 %v226
  %v1388 = vpop.f32.mrf.mxu0
  %v1389 = vadd.f32 %v260, %v1388
  %v1390 = vpop.f32.mrf.mxu0
  %1391 = vmatprep.mubr.f32.mxu0 0.0
  %1392 = vmatmul.mubr.f32.gmra.mxu0 %v227
  %v1393 = vpop.f32.mrf.mxu0
  %v1394 = vadd.f32 %v260, %v1393
  %v1395 = vpop.f32.mrf.mxu0
  %1396 = vmatprep.mubr.f32.mxu0 0.0
  %1397 = vmatmul.mubr.f32.gmra.mxu0 %v228
  %v1398 = vpop.f32.mrf.mxu0
  %v1399 = vadd.f32 %v260, %v1398
  %v1400 = vpop.f32.mrf.mxu0
  %1401 = vmatprep.mubr.f32.mxu0 0.0
  %1402 = vmatmul.mubr.f32.gmra.mxu0 %v229
  %v1403 = vpop.f32.mrf.mxu0
  %v1404 = vadd.f32 %v260, %v1403
  %v1405 = vpop.f32.mrf.mxu0
  %1406 = vmatprep.mubr.f32.mxu0 0.0
  %1407 = vmatmul.mubr.f32.gmra.mxu0 %v230
  %v1408 = vpop.f32.mrf.mxu0
  %v1409 = vadd.f32 %v260, %v1408
  %v1410 = vpop.f32.mrf.mxu0
  %1411 = vmatprep.mubr.f32.mxu0 0.0
  %1412 = vmatmul.mubr.f32.gmra.mxu0 %v231
  %v1413 = vpop.f32.mrf.mxu0
  %v1414 = vadd.f32 %v260, %v1413
  %v1415 = vpop.f32.mrf.mxu0
  %1416 = vmatprep.mubr.f32.mxu0 0.0
  %1417 = vmatmul.mubr.f32.gmra.mxu0 %v232
  %v1418 = vpop.f32.mrf.mxu0
  %v1419 = vadd.f32 %v260, %v1418
  %v1420 = vpop.f32.mrf.mxu0
  %1421 = vmatprep.mubr.f32.mxu0 0.0
  %1422 = vmatmul.mubr.f32.gmra.mxu0 %v233
  %v1423 = vpop.f32.mrf.mxu0
  %v1424 = vadd.f32 %v260, %v1423
  %v1425 = vpop.f32.mrf.mxu0
  %1426 = vmatprep.mubr.f32.mxu0 0.0
  %1427 = vmatmul.mubr.f32.gmra.mxu0 %v234
  %v1428 = vpop.f32.mrf.mxu0
  %v1429 = vadd.f32 %v260, %v1428
  %v1430 = vpop.f32.mrf.mxu0
  %1431 = vmatprep.mubr.f32.mxu0 0.0
  %1432 = vmatmul.mubr.f32.gmra.mxu0 %v235
  %v1433 = vpop.f32.mrf.mxu0
  %v1434 = vadd.f32 %v260, %v1433
  %v1435 = vpop.f32.mrf.mxu0
  %1436 = vmatprep.mubr.f32.mxu0 0.0
  %1437 = vmatmul.mubr.f32.gmra.mxu0 %v236
  %v1438 = vpop.f32.mrf.mxu0
  %v1439 = vadd.f32 %v260, %v1438
  %v1440 = vpop.f32.mrf.mxu0
  %1441 = vmatprep.mubr.f32.mxu0 0.0
  %1442 = vmatmul.mubr.f32.gmra.mxu0 %v237
  %v1443 = vpop.f32.mrf.mxu0
  %v1444 = vadd.f32 %v260, %v1443
  %v1445 = vpop.f32.mrf.mxu0
  %1446 = vmatprep.mubr.f32.mxu0 0.0
  %1447 = vmatmul.mubr.f32.gmra.mxu0 %v238
  %v1448 = vpop.f32.mrf.mxu0
  %v1449 = vadd.f32 %v260, %v1448
  %v1450 = vpop.f32.mrf.mxu0
  %1451 = vdwg.mxu0
  %v1452 = vmax.f32 %v329, 0.0
  %v1453 = vmax.f32 %v334, 0.0
  %v1454 = vmax.f32 %v339, 0.0
  %v1455 = vmax.f32 %v344, 0.0
  %v1456 = vmax.f32 %v349, 0.0
  %v1457 = vmax.f32 %v354, 0.0
  %v1458 = vmax.f32 %v359, 0.0
  %v1459 = vmax.f32 %v364, 0.0
  %v1460 = vmax.f32 %v369, 0.0
  %v1461 = vmax.f32 %v374, 0.0
  %v1462 = vmax.f32 %v379, 0.0
  %v1463 = vmax.f32 %v384, 0.0
  %v1464 = vmax.f32 %v389, 0.0
  %v1465 = vmax.f32 %v394, 0.0
  %v1466 = vmax.f32 %v399, 0.0
  %v1467 = vmax.f32 %v404, 0.0
  %v1468 = vmax.f32 %v409, 0.0
  %v1469 = vmax.f32 %v414, 0.0
  %v1470 = vmax.f32 %v419, 0.0
  %v1471 = vmax.f32 %v424, 0.0
  %v1472 = vmax.f32 %v429, 0.0
  %v1473 = vmax.f32 %v434, 0.0
  %v1474 = vmax.f32 %v439, 0.0
  %v1475 = vmax.f32 %v444, 0.0
  %v1476 = vmax.f32 %v449, 0.0
  %v1477 = vmax.f32 %v454, 0.0
  %v1478 = vmax.f32 %v459, 0.0
  %v1479 = vmax.f32 %v464, 0.0
  %v1480 = vmax.f32 %v469, 0.0
  %v1481 = vmax.f32 %v474, 0.0
  %v1482 = vmax.f32 %v479, 0.0
  %v1483 = vmax.f32 %v484, 0.0
  %v1484 = vmax.f32 %v489, 0.0
  %v1485 = vmax.f32 %v494, 0.0
  %v1486 = vmax.f32 %v499, 0.0
  %v1487 = vmax.f32 %v504, 0.0
  %v1488 = vmax.f32 %v509, 0.0
  %v1489 = vmax.f32 %v514, 0.0
  %v1490 = vmax.f32 %v519, 0.0
  %v1491 = vmax.f32 %v524, 0.0
  %v1492 = vmax.f32 %v529, 0.0
  %v1493 = vmax.f32 %v534, 0.0
  %v1494 = vmax.f32 %v539, 0.0
  %v1495 = vmax.f32 %v544, 0.0
  %v1496 = vmax.f32 %v549, 0.0
  %v1497 = vmax.f32 %v554, 0.0
  %v1498 = vmax.f32 %v559, 0.0
  %v1499 = vmax.f32 %v564, 0.0
  %v1500 = vmax.f32 %v569, 0.0
  %v1501 = vmax.f32 %v574, 0.0
  %v1502 = vmax.f32 %v579, 0.0
  %v1503 = vmax.f32 %v584, 0.0
  %v1504 = vmax.f32 %v589, 0.0
  %v1505 = vmax.f32 %v594, 0.0
  %v1506 = vmax.f32 %v599, 0.0
  %v1507 = vmax.f32 %v604, 0.0
  %v1508 = vmax.f32 %v609, 0.0
  %v1509 = vmax.f32 %v614, 0.0
  %v1510 = vmax.f32 %v619, 0.0
  %v1511 = vmax.f32 %v624, 0.0
  %v1512 = vmax.f32 %v629, 0.0
  %v1513 = vmax.f32 %v634, 0.0
  %v1514 = vmax.f32 %v639, 0.0
  %v1515 = vmax.f32 %v644, 0.0
  %v1516 = vmax.f32 %v649, 0.0
  %v1517 = vmax.f32 %v654, 0.0
  %v1518 = vmax.f32 %v659, 0.0
  %v1519 = vmax.f32 %v664, 0.0
  %v1520 = vmax.f32 %v669, 0.0
  %v1521 = vmax.f32 %v674, 0.0
  %v1522 = vmax.f32 %v679, 0.0
  %v1523 = vmax.f32 %v684, 0.0
  %v1524 = vmax.f32 %v689, 0.0
  %v1525 = vmax.f32 %v694, 0.0
  %v1526 = vmax.f32 %v699, 0.0
  %v1527 = vmax.f32 %v704, 0.0
  %v1528 = vmax.f32 %v709, 0.0
  %v1529 = vmax.f32 %v714, 0.0
  %v1530 = vmax.f32 %v719, 0.0
  %v1531 = vmax.f32 %v724, 0.0
  %v1532 = vmax.f32 %v729, 0.0
  %v1533 = vmax.f32 %v734, 0.0
  %v1534 = vmax.f32 %v739, 0.0
  %v1535 = vmax.f32 %v744, 0.0
  %v1536 = vmax.f32 %v749, 0.0
  %v1537 = vmax.f32 %v754, 0.0
  %v1538 = vmax.f32 %v759, 0.0
  %v1539 = vmax.f32 %v764, 0.0
  %v1540 = vmax.f32 %v769, 0.0
  %v1541 = vmax.f32 %v774, 0.0
  %v1542 = vmax.f32 %v779, 0.0
  %v1543 = vmax.f32 %v784, 0.0
  %v1544 = vmax.f32 %v789, 0.0
  %v1545 = vmax.f32 %v794, 0.0
  %v1546 = vmax.f32 %v799, 0.0
  %v1547 = vmax.f32 %v804, 0.0
  %v1548 = vmax.f32 %v809, 0.0
  %v1549 = vmax.f32 %v814, 0.0
  %v1550 = vmax.f32 %v819, 0.0
  %v1551 = vmax.f32 %v824, 0.0
  %v1552 = vmax.f32 %v829, 0.0
  %v1553 = vmax.f32 %v834, 0.0
  %v1554 = vmax.f32 %v839, 0.0
  %v1555 = vmax.f32 %v844, 0.0
  %v1556 = vmax.f32 %v849, 0.0
  %v1557 = vmax.f32 %v854, 0.0
  %v1558 = vmax.f32 %v859, 0.0
  %v1559 = vmax.f32 %v864, 0.0
  %v1560 = vmax.f32 %v869, 0.0
  %v1561 = vmax.f32 %v874, 0.0
  %v1562 = vmax.f32 %v879, 0.0
  %v1563 = vmax.f32 %v884, 0.0
  %v1564 = vmax.f32 %v889, 0.0
  %v1565 = vmax.f32 %v894, 0.0
  %v1566 = vmax.f32 %v899, 0.0
  %v1567 = vmax.f32 %v904, 0.0
  %v1568 = vmax.f32 %v909, 0.0
  %v1569 = vmax.f32 %v914, 0.0
  %v1570 = vmax.f32 %v919, 0.0
  %v1571 = vmax.f32 %v924, 0.0
  %v1572 = vmax.f32 %v929, 0.0
  %v1573 = vmax.f32 %v934, 0.0
  %v1574 = vmax.f32 %v939, 0.0
  %v1575 = vmax.f32 %v944, 0.0
  %v1576 = vmax.f32 %v949, 0.0
  %v1577 = vmax.f32 %v954, 0.0
  %v1578 = vmax.f32 %v959, 0.0
  %v1579 = vmax.f32 %v964, 0.0
  %v1580 = vmax.f32 %v969, 0.0
  %v1581 = vmax.f32 %v974, 0.0
  %v1582 = vmax.f32 %v979, 0.0
  %v1583 = vmax.f32 %v984, 0.0
  %v1584 = vmax.f32 %v989, 0.0
  %v1585 = vmax.f32 %v994, 0.0
  %v1586 = vmax.f32 %v999, 0.0
  %v1587 = vmax.f32 %v1004, 0.0
  %v1588 = vmax.f32 %v1009, 0.0
  %v1589 = vmax.f32 %v1014, 0.0
  %v1590 = vmax.f32 %v1019, 0.0
  %v1591 = vmax.f32 %v1024, 0.0
  %v1592 = vmax.f32 %v1029, 0.0
  %v1593 = vmax.f32 %v1034, 0.0
  %v1594 = vmax.f32 %v1039, 0.0
  %v1595 = vmax.f32 %v1044, 0.0
  %v1596 = vmax.f32 %v1049, 0.0
  %v1597 = vmax.f32 %v1054, 0.0
  %v1598 = vmax.f32 %v1059, 0.0
  %v1599 = vmax.f32 %v1064, 0.0
  %v1600 = vmax.f32 %v1069, 0.0
  %v1601 = vmax.f32 %v1074, 0.0
  %v1602 = vmax.f32 %v1079, 0.0
  %v1603 = vmax.f32 %v1084, 0.0
  %v1604 = vmax.f32 %v1089, 0.0
  %v1605 = vmax.f32 %v1094, 0.0
  %v1606 = vmax.f32 %v1099, 0.0
  %v1607 = vmax.f32 %v1104, 0.0
  %v1608 = vmax.f32 %v1109, 0.0
  %v1609 = vmax.f32 %v1114, 0.0
  %v1610 = vmax.f32 %v1119, 0.0
  %v1611 = vmax.f32 %v1124, 0.0
  %v1612 = vmax.f32 %v1129, 0.0
  %v1613 = vmax.f32 %v1134, 0.0
  %v1614 = vmax.f32 %v1139, 0.0
  %v1615 = vmax.f32 %v1144, 0.0
  %v1616 = vmax.f32 %v1149, 0.0
  %v1617 = vmax.f32 %v1154, 0.0
  %v1618 = vmax.f32 %v1159, 0.0
  %v1619 = vmax.f32 %v1164, 0.0
  %v1620 = vmax.f32 %v1169, 0.0
  %v1621 = vmax.f32 %v1174, 0.0
  %v1622 = vmax.f32 %v1179, 0.0
  %v1623 = vmax.f32 %v1184, 0.0
  %v1624 = vmax.f32 %v1189, 0.0
  %v1625 = vmax.f32 %v1194, 0.0
  %v1626 = vmax.f32 %v1199, 0.0
  %v1627 = vmax.f32 %v1204, 0.0
  %v1628 = vmax.f32 %v1209, 0.0
  %v1629 = vmax.f32 %v1214, 0.0
  %v1630 = vmax.f32 %v1219, 0.0
  %v1631 = vmax.f32 %v1224, 0.0
  %v1632 = vmax.f32 %v1229, 0.0
  %v1633 = vmax.f32 %v1234, 0.0
  %v1634 = vmax.f32 %v1239, 0.0
  %v1635 = vmax.f32 %v1244, 0.0
  %v1636 = vmax.f32 %v1249, 0.0
  %v1637 = vmax.f32 %v1254, 0.0
  %v1638 = vmax.f32 %v1259, 0.0
  %v1639 = vmax.f32 %v1264, 0.0
  %v1640 = vmax.f32 %v1269, 0.0
  %v1641 = vmax.f32 %v1274, 0.0
  %v1642 = vmax.f32 %v1279, 0.0
  %v1643 = vmax.f32 %v1284, 0.0
  %v1644 = vmax.f32 %v1289, 0.0
  %v1645 = vmax.f32 %v1294, 0.0
  %v1646 = vmax.f32 %v1299, 0.0
  %v1647 = vmax.f32 %v1304, 0.0
  %v1648 = vmax.f32 %v1309, 0.0
  %v1649 = vmax.f32 %v1314, 0.0
  %v1650 = vmax.f32 %v1319, 0.0
  %v1651 = vmax.f32 %v1324, 0.0
  %v1652 = vmax.f32 %v1329, 0.0
  %v1653 = vmax.f32 %v1334, 0.0
  %v1654 = vmax.f32 %v1339, 0.0
  %v1655 = vmax.f32 %v1344, 0.0
  %v1656 = vmax.f32 %v1349, 0.0
  %v1657 = vmax.f32 %v1354, 0.0
  %v1658 = vmax.f32 %v1359, 0.0
  %v1659 = vmax.f32 %v1364, 0.0
  %v1660 = vmax.f32 %v1369, 0.0
  %v1661 = vmax.f32 %v1374, 0.0
  %v1662 = vmax.f32 %v1379, 0.0
  %v1663 = vmax.f32 %v1384, 0.0
  %v1664 = vmax.f32 %v1389, 0.0
  %v1665 = vmax.f32 %v1394, 0.0
  %v1666 = vmax.f32 %v1399, 0.0
  %v1667 = vmax.f32 %v1404, 0.0
  %v1668 = vmax.f32 %v1409, 0.0
  %v1669 = vmax.f32 %v1414, 0.0
  %v1670 = vmax.f32 %v1419, 0.0
  %v1671 = vmax.f32 %v1424, 0.0
  %v1672 = vmax.f32 %v1429, 0.0
  %v1673 = vmax.f32 %v1434, 0.0
  %v1674 = vmax.f32 %v1439, 0.0
  %v1675 = vmax.f32 %v1444, 0.0
  %v1676 = vmax.f32 %v1449, 0.0
  %vm1677 = vcmask 261120
  %1678 = vst.msk [vmem:[%s3] sm:$0xff] %vm1677, %v1452
  %1679 = vst.msk [vmem:[%s3 + $0x8] sm:$0xff] %vm1677, %v1453
  %1680 = vst.msk [vmem:[%s3 + $0x10] sm:$0xff] %vm1677, %v1454
  %1681 = vst.msk [vmem:[%s3 + $0x18] sm:$0xff] %vm1677, %v1455
  %1682 = vst.msk [vmem:[%s3 + $0x20] sm:$0xff] %vm1677, %v1456
  %1683 = vst.msk [vmem:[%s3 + $0x28] sm:$0xff] %vm1677, %v1457
  %1684 = vst.msk [vmem:[%s3 + $0x30] sm:$0xff] %vm1677, %v1458
  %1685 = vst.msk [vmem:[%s3 + $0x38] sm:$0xff] %vm1677, %v1459
  %1686 = vst.msk [vmem:[%s3 + $0x40] sm:$0xff] %vm1677, %v1460
  %1687 = vst.msk [vmem:[%s3 + $0x48] sm:$0xff] %vm1677, %v1461
  %1688 = vst.msk [vmem:[%s3 + $0x50] sm:$0xff] %vm1677, %v1462
  %1689 = vst.msk [vmem:[%s3 + $0x58] sm:$0xff] %vm1677, %v1463
  %1690 = vst.msk [vmem:[%s3 + $0x60] sm:$0xff] %vm1677, %v1464
  %1691 = vst.msk [vmem:[%s3 + $0x68] sm:$0xff] %vm1677, %v1465
  %1692 = vst.msk [vmem:[%s3 + $0x70] sm:$0xff] %vm1677, %v1466
  %1693 = vst.msk [vmem:[%s3 + $0x78] sm:$0xff] %vm1677, %v1467
  %1694 = vst.msk [vmem:[%s3 + $0x80] sm:$0xff] %vm1677, %v1468
  %1695 = vst.msk [vmem:[%s3 + $0x88] sm:$0xff] %vm1677, %v1469
  %1696 = vst.msk [vmem:[%s3 + $0x90] sm:$0xff] %vm1677, %v1470
  %1697 = vst.msk [vmem:[%s3 + $0x98] sm:$0xff] %vm1677, %v1471
  %1698 = vst.msk [vmem:[%s3 + $0xa0] sm:$0xff] %vm1677, %v1472
  %1699 = vst.msk [vmem:[%s3 + $0xa8] sm:$0xff] %vm1677, %v1473
  %1700 = vst.msk [vmem:[%s3 + $0xb0] sm:$0xff] %vm1677, %v1474
  %1701 = vst.msk [vmem:[%s3 + $0xb8] sm:$0xff] %vm1677, %v1475
  %1702 = vst.msk [vmem:[%s3 + $0xc0] sm:$0xff] %vm1677, %v1476
  %1703 = vst.msk [vmem:[%s3 + $0xc8] sm:$0xff] %vm1677, %v1477
  %1704 = vst.msk [vmem:[%s3 + $0xd0] sm:$0xff] %vm1677, %v1478
  %1705 = vst.msk [vmem:[%s3 + $0xd8] sm:$0xff] %vm1677, %v1479
  %1706 = vst.msk [vmem:[%s3 + $0xe0] sm:$0xff] %vm1677, %v1480
  %1707 = vst.msk [vmem:[%s3 + $0xe8] sm:$0xff] %vm1677, %v1481
  %1708 = vst.msk [vmem:[%s3 + $0xf0] sm:$0xff] %vm1677, %v1482
  %1709 = vst.msk [vmem:[%s3 + $0xf8] sm:$0xff] %vm1677, %v1483
  %1710 = vst.msk [vmem:[%s3 + $0x100] sm:$0xff] %vm1677, %v1484
  %1711 = vst.msk [vmem:[%s3 + $0x108] sm:$0xff] %vm1677, %v1485
  %1712 = vst.msk [vmem:[%s3 + $0x110] sm:$0xff] %vm1677, %v1486
  %1713 = vst.msk [vmem:[%s3 + $0x118] sm:$0xff] %vm1677, %v1487
  %1714 = vst.msk [vmem:[%s3 + $0x120] sm:$0xff] %vm1677, %v1488
  %1715 = vst.msk [vmem:[%s3 + $0x128] sm:$0xff] %vm1677, %v1489
  %1716 = vst.msk [vmem:[%s3 + $0x130] sm:$0xff] %vm1677, %v1490
  %1717 = vst.msk [vmem:[%s3 + $0x138] sm:$0xff] %vm1677, %v1491
  %1718 = vst.msk [vmem:[%s3 + $0x140] sm:$0xff] %vm1677, %v1492
  %1719 = vst.msk [vmem:[%s3 + $0x148] sm:$0xff] %vm1677, %v1493
  %1720 = vst.msk [vmem:[%s3 + $0x150] sm:$0xff] %vm1677, %v1494
  %1721 = vst.msk [vmem:[%s3 + $0x158] sm:$0xff] %vm1677, %v1495
  %1722 = vst.msk [vmem:[%s3 + $0x160] sm:$0xff] %vm1677, %v1496
  %1723 = vst.msk [vmem:[%s3 + $0x168] sm:$0xff] %vm1677, %v1497
  %1724 = vst.msk [vmem:[%s3 + $0x170] sm:$0xff] %vm1677, %v1498
  %1725 = vst.msk [vmem:[%s3 + $0x178] sm:$0xff] %vm1677, %v1499
  %1726 = vst.msk [vmem:[%s3 + $0x180] sm:$0xff] %vm1677, %v1500
  %1727 = vst.msk [vmem:[%s3 + $0x188] sm:$0xff] %vm1677, %v1501
  %1728 = vst.msk [vmem:[%s3 + $0x190] sm:$0xff] %vm1677, %v1502
  %1729 = vst.msk [vmem:[%s3 + $0x198] sm:$0xff] %vm1677, %v1503
  %1730 = vst.msk [vmem:[%s3 + $0x1a0] sm:$0xff] %vm1677, %v1504
  %1731 = vst.msk [vmem:[%s3 + $0x1a8] sm:$0xff] %vm1677, %v1505
  %1732 = vst.msk [vmem:[%s3 + $0x1b0] sm:$0xff] %vm1677, %v1506
  %1733 = vst.msk [vmem:[%s3 + $0x1b8] sm:$0xff] %vm1677, %v1507
  %1734 = vst.msk [vmem:[%s3 + $0x1c0] sm:$0xff] %vm1677, %v1508
  %1735 = vst.msk [vmem:[%s3 + $0x1c8] sm:$0xff] %vm1677, %v1509
  %1736 = vst.msk [vmem:[%s3 + $0x1d0] sm:$0xff] %vm1677, %v1510
  %1737 = vst.msk [vmem:[%s3 + $0x1d8] sm:$0xff] %vm1677, %v1511
  %1738 = vst.msk [vmem:[%s3 + $0x1e0] sm:$0xff] %vm1677, %v1512
  %1739 = vst.msk [vmem:[%s3 + $0x1e8] sm:$0xff] %vm1677, %v1513
  %1740 = vst.msk [vmem:[%s3 + $0x1f0] sm:$0xff] %vm1677, %v1514
  %1741 = vst.msk [vmem:[%s3 + $0x1f8] sm:$0xff] %vm1677, %v1515
  %1742 = vst.msk [vmem:[%s3 + $0x200] sm:$0xff] %vm1677, %v1516
  %1743 = vst.msk [vmem:[%s3 + $0x208] sm:$0xff] %vm1677, %v1517
  %1744 = vst.msk [vmem:[%s3 + $0x210] sm:$0xff] %vm1677, %v1518
  %1745 = vst.msk [vmem:[%s3 + $0x218] sm:$0xff] %vm1677, %v1519
  %1746 = vst.msk [vmem:[%s3 + $0x220] sm:$0xff] %vm1677, %v1520
  %1747 = vst.msk [vmem:[%s3 + $0x228] sm:$0xff] %vm1677, %v1521
  %1748 = vst.msk [vmem:[%s3 + $0x230] sm:$0xff] %vm1677, %v1522
  %1749 = vst.msk [vmem:[%s3 + $0x238] sm:$0xff] %vm1677, %v1523
  %1750 = vst.msk [vmem:[%s3 + $0x240] sm:$0xff] %vm1677, %v1524
  %1751 = vst.msk [vmem:[%s3 + $0x248] sm:$0xff] %vm1677, %v1525
  %1752 = vst.msk [vmem:[%s3 + $0x250] sm:$0xff] %vm1677, %v1526
  %1753 = vst.msk [vmem:[%s3 + $0x258] sm:$0xff] %vm1677, %v1527
  %1754 = vst.msk [vmem:[%s3 + $0x260] sm:$0xff] %vm1677, %v1528
  %1755 = vst.msk [vmem:[%s3 + $0x268] sm:$0xff] %vm1677, %v1529
  %1756 = vst.msk [vmem:[%s3 + $0x270] sm:$0xff] %vm1677, %v1530
  %1757 = vst.msk [vmem:[%s3 + $0x278] sm:$0xff] %vm1677, %v1531
  %1758 = vst.msk [vmem:[%s3 + $0x280] sm:$0xff] %vm1677, %v1532
  %1759 = vst.msk [vmem:[%s3 + $0x288] sm:$0xff] %vm1677, %v1533
  %1760 = vst.msk [vmem:[%s3 + $0x290] sm:$0xff] %vm1677, %v1534
  %1761 = vst.msk [vmem:[%s3 + $0x298] sm:$0xff] %vm1677, %v1535
  %1762 = vst.msk [vmem:[%s3 + $0x2a0] sm:$0xff] %vm1677, %v1536
  %1763 = vst.msk [vmem:[%s3 + $0x2a8] sm:$0xff] %vm1677, %v1537
  %1764 = vst.msk [vmem:[%s3 + $0x2b0] sm:$0xff] %vm1677, %v1538
  %1765 = vst.msk [vmem:[%s3 + $0x2b8] sm:$0xff] %vm1677, %v1539
  %1766 = vst.msk [vmem:[%s3 + $0x2c0] sm:$0xff] %vm1677, %v1540
  %1767 = vst.msk [vmem:[%s3 + $0x2c8] sm:$0xff] %vm1677, %v1541
  %1768 = vst.msk [vmem:[%s3 + $0x2d0] sm:$0xff] %vm1677, %v1542
  %1769 = vst.msk [vmem:[%s3 + $0x2d8] sm:$0xff] %vm1677, %v1543
  %1770 = vst.msk [vmem:[%s3 + $0x2e0] sm:$0xff] %vm1677, %v1544
  %1771 = vst.msk [vmem:[%s3 + $0x2e8] sm:$0xff] %vm1677, %v1545
  %1772 = vst.msk [vmem:[%s3 + $0x2f0] sm:$0xff] %vm1677, %v1546
  %1773 = vst.msk [vmem:[%s3 + $0x2f8] sm:$0xff] %vm1677, %v1547
  %1774 = vst.msk [vmem:[%s3 + $0x300] sm:$0xff] %vm1677, %v1548
  %1775 = vst.msk [vmem:[%s3 + $0x308] sm:$0xff] %vm1677, %v1549
  %1776 = vst.msk [vmem:[%s3 + $0x310] sm:$0xff] %vm1677, %v1550
  %1777 = vst.msk [vmem:[%s3 + $0x318] sm:$0xff] %vm1677, %v1551
  %1778 = vst.msk [vmem:[%s3 + $0x320] sm:$0xff] %vm1677, %v1552
  %1779 = vst.msk [vmem:[%s3 + $0x328] sm:$0xff] %vm1677, %v1553
  %1780 = vst.msk [vmem:[%s3 + $0x330] sm:$0xff] %vm1677, %v1554
  %1781 = vst.msk [vmem:[%s3 + $0x338] sm:$0xff] %vm1677, %v1555
  %1782 = vst.msk [vmem:[%s3 + $0x340] sm:$0xff] %vm1677, %v1556
  %1783 = vst.msk [vmem:[%s3 + $0x348] sm:$0xff] %vm1677, %v1557
  %1784 = vst.msk [vmem:[%s3 + $0x350] sm:$0xff] %vm1677, %v1558
  %1785 = vst.msk [vmem:[%s3 + $0x358] sm:$0xff] %vm1677, %v1559
  %1786 = vst.msk [vmem:[%s3 + $0x360] sm:$0xff] %vm1677, %v1560
  %1787 = vst.msk [vmem:[%s3 + $0x368] sm:$0xff] %vm1677, %v1561
  %1788 = vst.msk [vmem:[%s3 + $0x370] sm:$0xff] %vm1677, %v1562
  %1789 = vst.msk [vmem:[%s3 + $0x378] sm:$0xff] %vm1677, %v1563
  %1790 = vst.msk [vmem:[%s3 + $0x380] sm:$0xff] %vm1677, %v1564
  %1791 = vst.msk [vmem:[%s3 + $0x388] sm:$0xff] %vm1677, %v1565
  %1792 = vst.msk [vmem:[%s3 + $0x390] sm:$0xff] %vm1677, %v1566
  %1793 = vst.msk [vmem:[%s3 + $0x398] sm:$0xff] %vm1677, %v1567
  %1794 = vst.msk [vmem:[%s3 + $0x3a0] sm:$0xff] %vm1677, %v1568
  %1795 = vst.msk [vmem:[%s3 + $0x3a8] sm:$0xff] %vm1677, %v1569
  %1796 = vst.msk [vmem:[%s3 + $0x3b0] sm:$0xff] %vm1677, %v1570
  %1797 = vst.msk [vmem:[%s3 + $0x3b8] sm:$0xff] %vm1677, %v1571
  %1798 = vst.msk [vmem:[%s3 + $0x3c0] sm:$0xff] %vm1677, %v1572
  %1799 = vst.msk [vmem:[%s3 + $0x3c8] sm:$0xff] %vm1677, %v1573
  %1800 = vst.msk [vmem:[%s3 + $0x3d0] sm:$0xff] %vm1677, %v1574
  %1801 = vst.msk [vmem:[%s3 + $0x3d8] sm:$0xff] %vm1677, %v1575
  %1802 = vst.msk [vmem:[%s3 + $0x3e0] sm:$0xff] %vm1677, %v1576
  %1803 = vst.msk [vmem:[%s3 + $0x3e8] sm:$0xff] %vm1677, %v1577
  %1804 = vst.msk [vmem:[%s3 + $0x3f0] sm:$0xff] %vm1677, %v1578
  %1805 = vst.msk [vmem:[%s3 + $0x3f8] sm:$0xff] %vm1677, %v1579
  %1806 = vst.msk [vmem:[%s3 + $0x400] sm:$0xff] %vm1677, %v1580
  %1807 = vst.msk [vmem:[%s3 + $0x408] sm:$0xff] %vm1677, %v1581
  %1808 = vst.msk [vmem:[%s3 + $0x410] sm:$0xff] %vm1677, %v1582
  %1809 = vst.msk [vmem:[%s3 + $0x418] sm:$0xff] %vm1677, %v1583
  %1810 = vst.msk [vmem:[%s3 + $0x420] sm:$0xff] %vm1677, %v1584
  %1811 = vst.msk [vmem:[%s3 + $0x428] sm:$0xff] %vm1677, %v1585
  %1812 = vst.msk [vmem:[%s3 + $0x430] sm:$0xff] %vm1677, %v1586
  %1813 = vst.msk [vmem:[%s3 + $0x438] sm:$0xff] %vm1677, %v1587
  %1814 = vst.msk [vmem:[%s3 + $0x440] sm:$0xff] %vm1677, %v1588
  %1815 = vst.msk [vmem:[%s3 + $0x448] sm:$0xff] %vm1677, %v1589
  %1816 = vst.msk [vmem:[%s3 + $0x450] sm:$0xff] %vm1677, %v1590
  %1817 = vst.msk [vmem:[%s3 + $0x458] sm:$0xff] %vm1677, %v1591
  %1818 = vst.msk [vmem:[%s3 + $0x460] sm:$0xff] %vm1677, %v1592
  %1819 = vst.msk [vmem:[%s3 + $0x468] sm:$0xff] %vm1677, %v1593
  %1820 = vst.msk [vmem:[%s3 + $0x470] sm:$0xff] %vm1677, %v1594
  %1821 = vst.msk [vmem:[%s3 + $0x478] sm:$0xff] %vm1677, %v1595
  %1822 = vst.msk [vmem:[%s3 + $0x480] sm:$0xff] %vm1677, %v1596
  %1823 = vst.msk [vmem:[%s3 + $0x488] sm:$0xff] %vm1677, %v1597
  %1824 = vst.msk [vmem:[%s3 + $0x490] sm:$0xff] %vm1677, %v1598
  %1825 = vst.msk [vmem:[%s3 + $0x498] sm:$0xff] %vm1677, %v1599
  %1826 = vst.msk [vmem:[%s3 + $0x4a0] sm:$0xff] %vm1677, %v1600
  %1827 = vst.msk [vmem:[%s3 + $0x4a8] sm:$0xff] %vm1677, %v1601
  %1828 = vst.msk [vmem:[%s3 + $0x4b0] sm:$0xff] %vm1677, %v1602
  %1829 = vst.msk [vmem:[%s3 + $0x4b8] sm:$0xff] %vm1677, %v1603
  %1830 = vst.msk [vmem:[%s3 + $0x4c0] sm:$0xff] %vm1677, %v1604
  %1831 = vst.msk [vmem:[%s3 + $0x4c8] sm:$0xff] %vm1677, %v1605
  %1832 = vst.msk [vmem:[%s3 + $0x4d0] sm:$0xff] %vm1677, %v1606
  %1833 = vst.msk [vmem:[%s3 + $0x4d8] sm:$0xff] %vm1677, %v1607
  %1834 = vst.msk [vmem:[%s3 + $0x4e0] sm:$0xff] %vm1677, %v1608
  %1835 = vst.msk [vmem:[%s3 + $0x4e8] sm:$0xff] %vm1677, %v1609
  %1836 = vst.msk [vmem:[%s3 + $0x4f0] sm:$0xff] %vm1677, %v1610
  %1837 = vst.msk [vmem:[%s3 + $0x4f8] sm:$0xff] %vm1677, %v1611
  %1838 = vst.msk [vmem:[%s3 + $0x500] sm:$0xff] %vm1677, %v1612
  %1839 = vst.msk [vmem:[%s3 + $0x508] sm:$0xff] %vm1677, %v1613
  %1840 = vst.msk [vmem:[%s3 + $0x510] sm:$0xff] %vm1677, %v1614
  %1841 = vst.msk [vmem:[%s3 + $0x518] sm:$0xff] %vm1677, %v1615
  %1842 = vst.msk [vmem:[%s3 + $0x520] sm:$0xff] %vm1677, %v1616
  %1843 = vst.msk [vmem:[%s3 + $0x528] sm:$0xff] %vm1677, %v1617
  %1844 = vst.msk [vmem:[%s3 + $0x530] sm:$0xff] %vm1677, %v1618
  %1845 = vst.msk [vmem:[%s3 + $0x538] sm:$0xff] %vm1677, %v1619
  %1846 = vst.msk [vmem:[%s3 + $0x540] sm:$0xff] %vm1677, %v1620
  %1847 = vst.msk [vmem:[%s3 + $0x548] sm:$0xff] %vm1677, %v1621
  %1848 = vst.msk [vmem:[%s3 + $0x550] sm:$0xff] %vm1677, %v1622
  %1849 = vst.msk [vmem:[%s3 + $0x558] sm:$0xff] %vm1677, %v1623
  %1850 = vst.msk [vmem:[%s3 + $0x560] sm:$0xff] %vm1677, %v1624
  %1851 = vst.msk [vmem:[%s3 + $0x568] sm:$0xff] %vm1677, %v1625
  %1852 = vst.msk [vmem:[%s3 + $0x570] sm:$0xff] %vm1677, %v1626
  %1853 = vst.msk [vmem:[%s3 + $0x578] sm:$0xff] %vm1677, %v1627
  %1854 = vst.msk [vmem:[%s3 + $0x580] sm:$0xff] %vm1677, %v1628
  %1855 = vst.msk [vmem:[%s3 + $0x588] sm:$0xff] %vm1677, %v1629
  %1856 = vst.msk [vmem:[%s3 + $0x590] sm:$0xff] %vm1677, %v1630
  %1857 = vst.msk [vmem:[%s3 + $0x598] sm:$0xff] %vm1677, %v1631
  %1858 = vst.msk [vmem:[%s3 + $0x5a0] sm:$0xff] %vm1677, %v1632
  %1859 = vst.msk [vmem:[%s3 + $0x5a8] sm:$0xff] %vm1677, %v1633
  %1860 = vst.msk [vmem:[%s3 + $0x5b0] sm:$0xff] %vm1677, %v1634
  %1861 = vst.msk [vmem:[%s3 + $0x5b8] sm:$0xff] %vm1677, %v1635
  %1862 = vst.msk [vmem:[%s3 + $0x5c0] sm:$0xff] %vm1677, %v1636
  %1863 = vst.msk [vmem:[%s3 + $0x5c8] sm:$0xff] %vm1677, %v1637
  %1864 = vst.msk [vmem:[%s3 + $0x5d0] sm:$0xff] %vm1677, %v1638
  %1865 = vst.msk [vmem:[%s3 + $0x5d8] sm:$0xff] %vm1677, %v1639
  %1866 = vst.msk [vmem:[%s3 + $0x5e0] sm:$0xff] %vm1677, %v1640
  %1867 = vst.msk [vmem:[%s3 + $0x5e8] sm:$0xff] %vm1677, %v1641
  %1868 = vst.msk [vmem:[%s3 + $0x5f0] sm:$0xff] %vm1677, %v1642
  %1869 = vst.msk [vmem:[%s3 + $0x5f8] sm:$0xff] %vm1677, %v1643
  %1870 = vst.msk [vmem:[%s3 + $0x600] sm:$0xff] %vm1677, %v1644
  %1871 = vst.msk [vmem:[%s3 + $0x608] sm:$0xff] %vm1677, %v1645
  %1872 = vst.msk [vmem:[%s3 + $0x610] sm:$0xff] %vm1677, %v1646
  %1873 = vst.msk [vmem:[%s3 + $0x618] sm:$0xff] %vm1677, %v1647
  %1874 = vst.msk [vmem:[%s3 + $0x620] sm:$0xff] %vm1677, %v1648
  %1875 = vst.msk [vmem:[%s3 + $0x628] sm:$0xff] %vm1677, %v1649
  %1876 = vst.msk [vmem:[%s3 + $0x630] sm:$0xff] %vm1677, %v1650
  %1877 = vst.msk [vmem:[%s3 + $0x638] sm:$0xff] %vm1677, %v1651
  %1878 = vst.msk [vmem:[%s3 + $0x640] sm:$0xff] %vm1677, %v1652
  %1879 = vst.msk [vmem:[%s3 + $0x648] sm:$0xff] %vm1677, %v1653
  %1880 = vst.msk [vmem:[%s3 + $0x650] sm:$0xff] %vm1677, %v1654
  %1881 = vst.msk [vmem:[%s3 + $0x658] sm:$0xff] %vm1677, %v1655
  %1882 = vst.msk [vmem:[%s3 + $0x660] sm:$0xff] %vm1677, %v1656
  %1883 = vst.msk [vmem:[%s3 + $0x668] sm:$0xff] %vm1677, %v1657
  %1884 = vst.msk [vmem:[%s3 + $0x670] sm:$0xff] %vm1677, %v1658
  %1885 = vst.msk [vmem:[%s3 + $0x678] sm:$0xff] %vm1677, %v1659
  %1886 = vst.msk [vmem:[%s3 + $0x680] sm:$0xff] %vm1677, %v1660
  %1887 = vst.msk [vmem:[%s3 + $0x688] sm:$0xff] %vm1677, %v1661
  %1888 = vst.msk [vmem:[%s3 + $0x690] sm:$0xff] %vm1677, %v1662
  %1889 = vst.msk [vmem:[%s3 + $0x698] sm:$0xff] %vm1677, %v1663
  %1890 = vst.msk [vmem:[%s3 + $0x6a0] sm:$0xff] %vm1677, %v1664
  %1891 = vst.msk [vmem:[%s3 + $0x6a8] sm:$0xff] %vm1677, %v1665
  %1892 = vst.msk [vmem:[%s3 + $0x6b0] sm:$0xff] %vm1677, %v1666
  %1893 = vst.msk [vmem:[%s3 + $0x6b8] sm:$0xff] %vm1677, %v1667
  %1894 = vst.msk [vmem:[%s3 + $0x6c0] sm:$0xff] %vm1677, %v1668
  %1895 = vst.msk [vmem:[%s3 + $0x6c8] sm:$0xff] %vm1677, %v1669
  %1896 = vst.msk [vmem:[%s3 + $0x6d0] sm:$0xff] %vm1677, %v1670
  %1897 = vst.msk [vmem:[%s3 + $0x6d8] sm:$0xff] %vm1677, %v1671
  %1898 = vst.msk [vmem:[%s3 + $0x6e0] sm:$0xff] %vm1677, %v1672
  %1899 = vst.msk [vmem:[%s3 + $0x6e8] sm:$0xff] %vm1677, %v1673
  %1900 = vst.msk [vmem:[%s3 + $0x6f0] sm:$0xff] %vm1677, %v1674
  %1901 = vst.msk [vmem:[%s3 + $0x6f8] sm:$0xff] %vm1677, %v1675
  %1902 = vst.msk [vmem:[%s3 + $0x700] sm:$0xff] %vm1677, %v1676
  // Predicated region
  $region14: #{run.24} parent=0 // pred_check
    _
  $region15: #{run.24} parent=0 // pred_check_branch
    %1904 = sbr.rel (0) target = $region17
  $region16: #{run.24} parent=0 // pred_region
    _
  $region17: #{run.24} parent=0 // pred_fallthru
    _
  // Predicated region
  $region18: #{run.24} parent=0 // pred_check
    _
  $region19: #{run.24} parent=0 // pred_check_branch
    %1906 = sbr.rel (0) target = $region21
  $region20: #{run.24} parent=0 // pred_region
    _
  $region21: #{run.24} parent=0 // pred_fallthru
    _

// kernel: run.25
$region0: #{run.25}
  #allocation0 [shape = 'u32[]', space=smem, size = 0x4, offset = 0x4, fixed_abs, tag = 'smem constant byte address 0x4 - core index']
  #allocation1 [shape = 'u32[144,128]{1,0:T(1,128)}', space=vmem, size = 0x12000, scoped, tag = 'internal scratch']
  %s0 = inlined_call_operand.vmem [shape: f32[288,512], index: 0, kind: input, shape index: {}]
  %s1 = inlined_call_operand.vmem [shape: f32[512,64], index: 1, kind: input, shape index: {}]
  %s2 = inlined_call_operand.vmem [shape: f32[1,64], index: 2, kind: input, shape index: {}]
  %s3 = inlined_call_operand.vmem [shape: f32[288,64], index: 3, kind: output, shape index: {}]
  %s4 = sld [smem:[#allocation0]]
  $region22: #{run.25} parent=0
    _
  %s6 = ssub.s32 1, %s4
  %s7 = scalar_select 0, %s6, %s4
  // Predicated region
  $region2: #{run.25} parent=0 // pred_check
    _
  $region3: #{run.25} parent=0 // pred_check_branch
    %9 = sbr.rel (0) target = $region5
  $region4: #{run.25} parent=0 // pred_region
    _
  $region5: #{run.25} parent=0 // pred_fallthru
    _
  // Predicated region
  $region6: #{run.25} parent=0 // pred_check
    _
  $region7: #{run.25} parent=0 // pred_check_branch
    %11 = sbr.rel (0) target = $region9
  $region8: #{run.25} parent=0 // pred_region
    _
  $region9: #{run.25} parent=0 // pred_fallthru
    _
  // Predicated region
  $region10: #{run.25} parent=0 // pred_check
    _
  $region11: #{run.25} parent=0 // pred_check_branch
    %13 = sbr.rel (0) target = $region13
  $region12: #{run.25} parent=0 // pred_region
    _
  $region13: #{run.25} parent=0 // pred_fallthru
    _
  %v14 = vld [vmem:[%s0] sm:$0xff]
  %v15 = vld [vmem:[%s0 + $0x8] sm:$0xff]
  %v16 = vld [vmem:[%s0 + $0x10] sm:$0xff]
  %v17 = vld [vmem:[%s0 + $0x18] sm:$0xff]
  %v18 = vld [vmem:[%s0 + $0x20] sm:$0xff]
  %v19 = vld [vmem:[%s0 + $0x28] sm:$0xff]
  %v20 = vld [vmem:[%s0 + $0x30] sm:$0xff]
  %v21 = vld [vmem:[%s0 + $0x38] sm:$0xff]
  %v22 = vld [vmem:[%s0 + $0x40] sm:$0xff]
  %v23 = vld [vmem:[%s0 + $0x48] sm:$0xff]
  %v24 = vld [vmem:[%s0 + $0x50] sm:$0xff]
  %v25 = vld [vmem:[%s0 + $0x58] sm:$0xff]
  %v26 = vld [vmem:[%s0 + $0x60] sm:$0xff]
  %v27 = vld [vmem:[%s0 + $0x68] sm:$0xff]
  %v28 = vld [vmem:[%s0 + $0x70] sm:$0xff]
  %v29 = vld [vmem:[%s0 + $0x78] sm:$0xff]
  %v30 = vld [vmem:[%s0 + $0x80] sm:$0xff]
  %v31 = vld [vmem:[%s0 + $0x88] sm:$0xff]
  %v32 = vld [vmem:[%s0 + $0x90] sm:$0xff]
  %v33 = vld [vmem:[%s0 + $0x98] sm:$0xff]
  %v34 = vld [vmem:[%s0 + $0xa0] sm:$0xff]
  %v35 = vld [vmem:[%s0 + $0xa8] sm:$0xff]
  %v36 = vld [vmem:[%s0 + $0xb0] sm:$0xff]
  %v37 = vld [vmem:[%s0 + $0xb8] sm:$0xff]
  %v38 = vld [vmem:[%s0 + $0xc0] sm:$0xff]
  %v39 = vld [vmem:[%s0 + $0xc8] sm:$0xff]
  %v40 = vld [vmem:[%s0 + $0xd0] sm:$0xff]
  %v41 = vld [vmem:[%s0 + $0xd8] sm:$0xff]
  %v42 = vld [vmem:[%s0 + $0xe0] sm:$0xff]
  %v43 = vld [vmem:[%s0 + $0xe8] sm:$0xff]
  %v44 = vld [vmem:[%s0 + $0xf0] sm:$0xff]
  %v45 = vld [vmem:[%s0 + $0xf8] sm:$0xff]
  %v46 = vld [vmem:[%s0 + $0x100] sm:$0xff]
  %v47 = vld [vmem:[%s0 + $0x108] sm:$0xff]
  %v48 = vld [vmem:[%s0 + $0x110] sm:$0xff]
  %v49 = vld [vmem:[%s0 + $0x118] sm:$0xff]
  %v50 = vld [vmem:[%s0 + $0x120] sm:$0xff]
  %v51 = vld [vmem:[%s0 + $0x128] sm:$0xff]
  %v52 = vld [vmem:[%s0 + $0x130] sm:$0xff]
  %v53 = vld [vmem:[%s0 + $0x138] sm:$0xff]
  %v54 = vld [vmem:[%s0 + $0x140] sm:$0xff]
  %v55 = vld [vmem:[%s0 + $0x148] sm:$0xff]
  %v56 = vld [vmem:[%s0 + $0x150] sm:$0xff]
  %v57 = vld [vmem:[%s0 + $0x158] sm:$0xff]
  %v58 = vld [vmem:[%s0 + $0x160] sm:$0xff]
  %v59 = vld [vmem:[%s0 + $0x168] sm:$0xff]
  %v60 = vld [vmem:[%s0 + $0x170] sm:$0xff]
  %v61 = vld [vmem:[%s0 + $0x178] sm:$0xff]
  %v62 = vld [vmem:[%s0 + $0x180] sm:$0xff]
  %v63 = vld [vmem:[%s0 + $0x188] sm:$0xff]
  %v64 = vld [vmem:[%s0 + $0x190] sm:$0xff]
  %v65 = vld [vmem:[%s0 + $0x198] sm:$0xff]
  %v66 = vld [vmem:[%s0 + $0x1a0] sm:$0xff]
  %v67 = vld [vmem:[%s0 + $0x1a8] sm:$0xff]
  %v68 = vld [vmem:[%s0 + $0x1b0] sm:$0xff]
  %v69 = vld [vmem:[%s0 + $0x1b8] sm:$0xff]
  %v70 = vld [vmem:[%s0 + $0x1c0] sm:$0xff]
  %v71 = vld [vmem:[%s0 + $0x1c8] sm:$0xff]
  %v72 = vld [vmem:[%s0 + $0x1d0] sm:$0xff]
  %v73 = vld [vmem:[%s0 + $0x1d8] sm:$0xff]
  %v74 = vld [vmem:[%s0 + $0x1e0] sm:$0xff]
  %v75 = vld [vmem:[%s0 + $0x1e8] sm:$0xff]
  %v76 = vld [vmem:[%s0 + $0x1f0] sm:$0xff]
  %v77 = vld [vmem:[%s0 + $0x1f8] sm:$0xff]
  %v78 = vld [vmem:[%s0 + $0x200] sm:$0xff]
  %v79 = vld [vmem:[%s0 + $0x208] sm:$0xff]
  %v80 = vld [vmem:[%s0 + $0x210] sm:$0xff]
  %v81 = vld [vmem:[%s0 + $0x218] sm:$0xff]
  %v82 = vld [vmem:[%s0 + $0x220] sm:$0xff]
  %v83 = vld [vmem:[%s0 + $0x228] sm:$0xff]
  %v84 = vld [vmem:[%s0 + $0x230] sm:$0xff]
  %v85 = vld [vmem:[%s0 + $0x238] sm:$0xff]
  %v86 = vld [vmem:[%s0 + $0x240] sm:$0xff]
  %v87 = vld [vmem:[%s0 + $0x248] sm:$0xff]
  %v88 = vld [vmem:[%s0 + $0x250] sm:$0xff]
  %v89 = vld [vmem:[%s0 + $0x258] sm:$0xff]
  %v90 = vld [vmem:[%s0 + $0x260] sm:$0xff]
  %v91 = vld [vmem:[%s0 + $0x268] sm:$0xff]
  %v92 = vld [vmem:[%s0 + $0x270] sm:$0xff]
  %v93 = vld [vmem:[%s0 + $0x278] sm:$0xff]
  %v94 = vld [vmem:[%s0 + $0x280] sm:$0xff]
  %v95 = vld [vmem:[%s0 + $0x288] sm:$0xff]
  %v96 = vld [vmem:[%s0 + $0x290] sm:$0xff]
  %v97 = vld [vmem:[%s0 + $0x298] sm:$0xff]
  %v98 = vld [vmem:[%s0 + $0x2a0] sm:$0xff]
  %v99 = vld [vmem:[%s0 + $0x2a8] sm:$0xff]
  %v100 = vld [vmem:[%s0 + $0x2b0] sm:$0xff]
  %v101 = vld [vmem:[%s0 + $0x2b8] sm:$0xff]
  %v102 = vld [vmem:[%s0 + $0x2c0] sm:$0xff]
  %v103 = vld [vmem:[%s0 + $0x2c8] sm:$0xff]
  %v104 = vld [vmem:[%s0 + $0x2d0] sm:$0xff]
  %v105 = vld [vmem:[%s0 + $0x2d8] sm:$0xff]
  %v106 = vld [vmem:[%s0 + $0x2e0] sm:$0xff]
  %v107 = vld [vmem:[%s0 + $0x2e8] sm:$0xff]
  %v108 = vld [vmem:[%s0 + $0x2f0] sm:$0xff]
  %v109 = vld [vmem:[%s0 + $0x2f8] sm:$0xff]
  %v110 = vld [vmem:[%s0 + $0x300] sm:$0xff]
  %v111 = vld [vmem:[%s0 + $0x308] sm:$0xff]
  %v112 = vld [vmem:[%s0 + $0x310] sm:$0xff]
  %v113 = vld [vmem:[%s0 + $0x318] sm:$0xff]
  %v114 = vld [vmem:[%s0 + $0x320] sm:$0xff]
  %v115 = vld [vmem:[%s0 + $0x328] sm:$0xff]
  %v116 = vld [vmem:[%s0 + $0x330] sm:$0xff]
  %v117 = vld [vmem:[%s0 + $0x338] sm:$0xff]
  %v118 = vld [vmem:[%s0 + $0x340] sm:$0xff]
  %v119 = vld [vmem:[%s0 + $0x348] sm:$0xff]
  %v120 = vld [vmem:[%s0 + $0x350] sm:$0xff]
  %v121 = vld [vmem:[%s0 + $0x358] sm:$0xff]
  %v122 = vld [vmem:[%s0 + $0x360] sm:$0xff]
  %v123 = vld [vmem:[%s0 + $0x368] sm:$0xff]
  %v124 = vld [vmem:[%s0 + $0x370] sm:$0xff]
  %v125 = vld [vmem:[%s0 + $0x378] sm:$0xff]
  %v126 = vld [vmem:[%s0 + $0x380] sm:$0xff]
  %v127 = vld [vmem:[%s0 + $0x388] sm:$0xff]
  %v128 = vld [vmem:[%s0 + $0x390] sm:$0xff]
  %v129 = vld [vmem:[%s0 + $0x398] sm:$0xff]
  %v130 = vld [vmem:[%s0 + $0x3a0] sm:$0xff]
  %v131 = vld [vmem:[%s0 + $0x3a8] sm:$0xff]
  %v132 = vld [vmem:[%s0 + $0x3b0] sm:$0xff]
  %v133 = vld [vmem:[%s0 + $0x3b8] sm:$0xff]
  %v134 = vld [vmem:[%s0 + $0x3c0] sm:$0xff]
  %v135 = vld [vmem:[%s0 + $0x3c8] sm:$0xff]
  %v136 = vld [vmem:[%s0 + $0x3d0] sm:$0xff]
  %v137 = vld [vmem:[%s0 + $0x3d8] sm:$0xff]
  %v138 = vld [vmem:[%s0 + $0x3e0] sm:$0xff]
  %v139 = vld [vmem:[%s0 + $0x3e8] sm:$0xff]
  %v140 = vld [vmem:[%s0 + $0x3f0] sm:$0xff]
  %v141 = vld [vmem:[%s0 + $0x3f8] sm:$0xff]
  %v142 = vld [vmem:[%s0 + $0x400] sm:$0xff]
  %v143 = vld [vmem:[%s0 + $0x408] sm:$0xff]
  %v144 = vld [vmem:[%s0 + $0x410] sm:$0xff]
  %v145 = vld [vmem:[%s0 + $0x418] sm:$0xff]
  %v146 = vld [vmem:[%s0 + $0x420] sm:$0xff]
  %v147 = vld [vmem:[%s0 + $0x428] sm:$0xff]
  %v148 = vld [vmem:[%s0 + $0x430] sm:$0xff]
  %v149 = vld [vmem:[%s0 + $0x438] sm:$0xff]
  %v150 = vld [vmem:[%s0 + $0x440] sm:$0xff]
  %v151 = vld [vmem:[%s0 + $0x448] sm:$0xff]
  %v152 = vld [vmem:[%s0 + $0x450] sm:$0xff]
  %v153 = vld [vmem:[%s0 + $0x458] sm:$0xff]
  %v154 = vld [vmem:[%s0 + $0x460] sm:$0xff]
  %v155 = vld [vmem:[%s0 + $0x468] sm:$0xff]
  %v156 = vld [vmem:[%s0 + $0x470] sm:$0xff]
  %v157 = vld [vmem:[%s0 + $0x478] sm:$0xff]
  %v158 = vld [vmem:[%s1] sm:$0xff]
  %v159 = vld [vmem:[%s1 + $0x8] sm:$0xff]
  %v160 = vld [vmem:[%s1 + $0x10] sm:$0xff]
  %v161 = vld [vmem:[%s1 + $0x18] sm:$0xff]
  %v162 = vld [vmem:[%s1 + $0x20] sm:$0xff]
  %v163 = vld [vmem:[%s1 + $0x28] sm:$0xff]
  %v164 = vld [vmem:[%s1 + $0x30] sm:$0xff]
  %v165 = vld [vmem:[%s1 + $0x38] sm:$0xff]
  %v166 = vld [vmem:[%s1 + $0x40] sm:$0xff]
  %v167 = vld [vmem:[%s1 + $0x48] sm:$0xff]
  %v168 = vld [vmem:[%s1 + $0x50] sm:$0xff]
  %v169 = vld [vmem:[%s1 + $0x58] sm:$0xff]
  %v170 = vld [vmem:[%s1 + $0x60] sm:$0xff]
  %v171 = vld [vmem:[%s1 + $0x68] sm:$0xff]
  %v172 = vld [vmem:[%s1 + $0x70] sm:$0xff]
  %v173 = vld [vmem:[%s1 + $0x78] sm:$0xff]
  %v174 = vld [vmem:[%s1 + $0x80] sm:$0xff]
  %v175 = vld [vmem:[%s1 + $0x88] sm:$0xff]
  %v176 = vld [vmem:[%s1 + $0x90] sm:$0xff]
  %v177 = vld [vmem:[%s1 + $0x98] sm:$0xff]
  %v178 = vld [vmem:[%s1 + $0xa0] sm:$0xff]
  %v179 = vld [vmem:[%s1 + $0xa8] sm:$0xff]
  %v180 = vld [vmem:[%s1 + $0xb0] sm:$0xff]
  %v181 = vld [vmem:[%s1 + $0xb8] sm:$0xff]
  %v182 = vld [vmem:[%s1 + $0xc0] sm:$0xff]
  %v183 = vld [vmem:[%s1 + $0xc8] sm:$0xff]
  %v184 = vld [vmem:[%s1 + $0xd0] sm:$0xff]
  %v185 = vld [vmem:[%s1 + $0xd8] sm:$0xff]
  %v186 = vld [vmem:[%s1 + $0xe0] sm:$0xff]
  %v187 = vld [vmem:[%s1 + $0xe8] sm:$0xff]
  %v188 = vld [vmem:[%s1 + $0xf0] sm:$0xff]
  %v189 = vld [vmem:[%s1 + $0xf8] sm:$0xff]
  %v190 = vld [vmem:[%s1 + $0x100] sm:$0xff]
  %v191 = vld [vmem:[%s1 + $0x108] sm:$0xff]
  %v192 = vld [vmem:[%s1 + $0x110] sm:$0xff]
  %v193 = vld [vmem:[%s1 + $0x118] sm:$0xff]
  %v194 = vld [vmem:[%s1 + $0x120] sm:$0xff]
  %v195 = vld [vmem:[%s1 + $0x128] sm:$0xff]
  %v196 = vld [vmem:[%s1 + $0x130] sm:$0xff]
  %v197 = vld [vmem:[%s1 + $0x138] sm:$0xff]
  %v198 = vld [vmem:[%s1 + $0x140] sm:$0xff]
  %v199 = vld [vmem:[%s1 + $0x148] sm:$0xff]
  %v200 = vld [vmem:[%s1 + $0x150] sm:$0xff]
  %v201 = vld [vmem:[%s1 + $0x158] sm:$0xff]
  %v202 = vld [vmem:[%s1 + $0x160] sm:$0xff]
  %v203 = vld [vmem:[%s1 + $0x168] sm:$0xff]
  %v204 = vld [vmem:[%s1 + $0x170] sm:$0xff]
  %v205 = vld [vmem:[%s1 + $0x178] sm:$0xff]
  %v206 = vld [vmem:[%s1 + $0x180] sm:$0xff]
  %v207 = vld [vmem:[%s1 + $0x188] sm:$0xff]
  %v208 = vld [vmem:[%s1 + $0x190] sm:$0xff]
  %v209 = vld [vmem:[%s1 + $0x198] sm:$0xff]
  %v210 = vld [vmem:[%s1 + $0x1a0] sm:$0xff]
  %v211 = vld [vmem:[%s1 + $0x1a8] sm:$0xff]
  %v212 = vld [vmem:[%s1 + $0x1b0] sm:$0xff]
  %v213 = vld [vmem:[%s1 + $0x1b8] sm:$0xff]
  %v214 = vld [vmem:[%s1 + $0x1c0] sm:$0xff]
  %v215 = vld [vmem:[%s1 + $0x1c8] sm:$0xff]
  %v216 = vld [vmem:[%s1 + $0x1d0] sm:$0xff]
  %v217 = vld [vmem:[%s1 + $0x1d8] sm:$0xff]
  %v218 = vld [vmem:[%s1 + $0x1e0] sm:$0xff]
  %v219 = vld [vmem:[%s1 + $0x1e8] sm:$0xff]
  %v220 = vld [vmem:[%s1 + $0x1f0] sm:$0xff]
  %v221 = vld [vmem:[%s1 + $0x1f8] sm:$0xff]
  %v222 = vld [vmem:[%s2] sm:$0x1]
  %v224 = vlaneseq
  %v225 = vshrl.u32 %v224, 7
  %v226 = vsub.s32 0, %v225
  %v227 = vrot.slane %v222, %v226
  %229 = vmatprep.subr.mxu0 0.0
  %230 = vmatpush1.msra.mxu0 %v173
  %231 = vmatprep.subr.mxu0 0.0
  %232 = vmatpush1.msra.mxu0 %v172
  %233 = vmatprep.subr.mxu0 0.0
  %234 = vmatpush1.msra.mxu0 %v171
  %235 = vmatprep.subr.mxu0 0.0
  %236 = vmatpush1.msra.mxu0 %v170
  %237 = vmatprep.subr.mxu0 0.0
  %238 = vmatpush1.msra.mxu0 %v169
  %239 = vmatprep.subr.mxu0 0.0
  %240 = vmatpush1.msra.mxu0 %v168
  %241 = vmatprep.subr.mxu0 0.0
  %242 = vmatpush1.msra.mxu0 %v167
  %243 = vmatprep.subr.mxu0 0.0
  %244 = vmatpush1.msra.mxu0 %v166
  %245 = vmatprep.subr.mxu0 0.0
  %246 = vmatpush1.msra.mxu0 %v165
  %247 = vmatprep.subr.mxu0 0.0
  %248 = vmatpush1.msra.mxu0 %v164
  %249 = vmatprep.subr.mxu0 0.0
  %250 = vmatpush1.msra.mxu0 %v163
  %251 = vmatprep.subr.mxu0 0.0
  %252 = vmatpush1.msra.mxu0 %v162
  %253 = vmatprep.subr.mxu0 0.0
  %254 = vmatpush1.msra.mxu0 %v161
  %255 = vmatprep.subr.mxu0 0.0
  %256 = vmatpush1.msra.mxu0 %v160
  %257 = vmatprep.subr.mxu0 0.0
  %258 = vmatpush1.msra.mxu0 %v159
  %259 = vmatprep.subr.mxu0 0.0
  %260 = vmatpush1.msra.mxu0 %v158
  %261 = vmatprep.subr.mxu0 0.0
  %262 = vmatpush2.msra.mxu0 %v189
  %263 = vmatprep.subr.mxu0 0.0
  %264 = vmatpush2.msra.mxu0 %v188
  %265 = vmatprep.subr.mxu0 0.0
  %266 = vmatpush2.msra.mxu0 %v187
  %267 = vmatprep.subr.mxu0 0.0
  %268 = vmatpush2.msra.mxu0 %v186
  %269 = vmatprep.subr.mxu0 0.0
  %270 = vmatpush2.msra.mxu0 %v185
  %271 = vmatprep.subr.mxu0 0.0
  %272 = vmatpush2.msra.mxu0 %v184
  %273 = vmatprep.subr.mxu0 0.0
  %274 = vmatpush2.msra.mxu0 %v183
  %275 = vmatprep.subr.mxu0 0.0
  %276 = vmatpush2.msra.mxu0 %v182
  %277 = vmatprep.subr.mxu0 0.0
  %278 = vmatpush2.msra.mxu0 %v181
  %279 = vmatprep.subr.mxu0 0.0
  %280 = vmatpush2.msra.mxu0 %v180
  %281 = vmatprep.subr.mxu0 0.0
  %282 = vmatpush2.msra.mxu0 %v179
  %283 = vmatprep.subr.mxu0 0.0
  %284 = vmatpush2.msra.mxu0 %v178
  %285 = vmatprep.subr.mxu0 0.0
  %286 = vmatpush2.msra.mxu0 %v177
  %287 = vmatprep.subr.mxu0 0.0
  %288 = vmatpush2.msra.mxu0 %v176
  %289 = vmatprep.subr.mxu0 0.0
  %290 = vmatpush2.msra.mxu0 %v175
  %291 = vmatprep.subr.mxu0 0.0
  %292 = vmatpush2.msra.mxu0 %v174
  %293 = vmatprep.mubr.f32.mxu0 %v15
  %294 = vmatmul.mubr.f32.gmra.mxu0 %v14
  %v295 = vpop.f32.mrf.mxu0
  %v296 = vadd.f32 %v227, %v295
  %v297 = vpop.f32.mrf.mxu0
  %298 = vmatprep.mubr.f32.mxu0 %v19
  %299 = vmatmul.mubr.f32.gmra.mxu0 %v18
  %v300 = vpop.f32.mrf.mxu0
  %v301 = vadd.f32 %v227, %v300
  %v302 = vpop.f32.mrf.mxu0
  %303 = vmatprep.mubr.f32.mxu0 %v23
  %304 = vmatmul.mubr.f32.gmra.mxu0 %v22
  %v305 = vpop.f32.mrf.mxu0
  %v306 = vadd.f32 %v227, %v305
  %v307 = vpop.f32.mrf.mxu0
  %308 = vmatprep.mubr.f32.mxu0 %v27
  %309 = vmatmul.mubr.f32.gmra.mxu0 %v26
  %v310 = vpop.f32.mrf.mxu0
  %v311 = vadd.f32 %v227, %v310
  %v312 = vpop.f32.mrf.mxu0
  %313 = vmatprep.mubr.f32.mxu0 %v31
  %314 = vmatmul.mubr.f32.gmra.mxu0 %v30
  %v315 = vpop.f32.mrf.mxu0
  %v316 = vadd.f32 %v227, %v315
  %v317 = vpop.f32.mrf.mxu0
  %318 = vmatprep.mubr.f32.mxu0 %v35
  %319 = vmatmul.mubr.f32.gmra.mxu0 %v34
  %v320 = vpop.f32.mrf.mxu0
  %v321 = vadd.f32 %v227, %v320
  %v322 = vpop.f32.mrf.mxu0
  %323 = vmatprep.mubr.f32.mxu0 %v39
  %324 = vmatmul.mubr.f32.gmra.mxu0 %v38
  %v325 = vpop.f32.mrf.mxu0
  %v326 = vadd.f32 %v227, %v325
  %v327 = vpop.f32.mrf.mxu0
  %328 = vmatprep.mubr.f32.mxu0 %v43
  %329 = vmatmul.mubr.f32.gmra.mxu0 %v42
  %v330 = vpop.f32.mrf.mxu0
  %v331 = vadd.f32 %v227, %v330
  %v332 = vpop.f32.mrf.mxu0
  %333 = vmatprep.mubr.f32.mxu0 %v47
  %334 = vmatmul.mubr.f32.gmra.mxu0 %v46
  %v335 = vpop.f32.mrf.mxu0
  %v336 = vadd.f32 %v227, %v335
  %v337 = vpop.f32.mrf.mxu0
  %338 = vmatprep.mubr.f32.mxu0 %v51
  %339 = vmatmul.mubr.f32.gmra.mxu0 %v50
  %v340 = vpop.f32.mrf.mxu0
  %v341 = vadd.f32 %v227, %v340
  %v342 = vpop.f32.mrf.mxu0
  %343 = vmatprep.mubr.f32.mxu0 %v55
  %344 = vmatmul.mubr.f32.gmra.mxu0 %v54
  %v345 = vpop.f32.mrf.mxu0
  %v346 = vadd.f32 %v227, %v345
  %v347 = vpop.f32.mrf.mxu0
  %348 = vmatprep.mubr.f32.mxu0 %v59
  %349 = vmatmul.mubr.f32.gmra.mxu0 %v58
  %v350 = vpop.f32.mrf.mxu0
  %v351 = vadd.f32 %v227, %v350
  %v352 = vpop.f32.mrf.mxu0
  %353 = vmatprep.mubr.f32.mxu0 %v63
  %354 = vmatmul.mubr.f32.gmra.mxu0 %v62
  %v355 = vpop.f32.mrf.mxu0
  %v356 = vadd.f32 %v227, %v355
  %v357 = vpop.f32.mrf.mxu0
  %358 = vmatprep.mubr.f32.mxu0 %v67
  %359 = vmatmul.mubr.f32.gmra.mxu0 %v66
  %v360 = vpop.f32.mrf.mxu0
  %v361 = vadd.f32 %v227, %v360
  %v362 = vpop.f32.mrf.mxu0
  %363 = vmatprep.mubr.f32.mxu0 %v71
  %364 = vmatmul.mubr.f32.gmra.mxu0 %v70
  %v365 = vpop.f32.mrf.mxu0
  %v366 = vadd.f32 %v227, %v365
  %v367 = vpop.f32.mrf.mxu0
  %368 = vmatprep.mubr.f32.mxu0 %v75
  %369 = vmatmul.mubr.f32.gmra.mxu0 %v74
  %v370 = vpop.f32.mrf.mxu0
  %v371 = vadd.f32 %v227, %v370
  %v372 = vpop.f32.mrf.mxu0
  %373 = vmatprep.mubr.f32.mxu0 %v79
  %374 = vmatmul.mubr.f32.gmra.mxu0 %v78
  %v375 = vpop.f32.mrf.mxu0
  %v376 = vadd.f32 %v227, %v375
  %v377 = vpop.f32.mrf.mxu0
  %378 = vmatprep.mubr.f32.mxu0 %v83
  %379 = vmatmul.mubr.f32.gmra.mxu0 %v82
  %v380 = vpop.f32.mrf.mxu0
  %v381 = vadd.f32 %v227, %v380
  %v382 = vpop.f32.mrf.mxu0
  %383 = vmatprep.mubr.f32.mxu0 %v87
  %384 = vmatmul.mubr.f32.gmra.mxu0 %v86
  %v385 = vpop.f32.mrf.mxu0
  %v386 = vadd.f32 %v227, %v385
  %v387 = vpop.f32.mrf.mxu0
  %388 = vmatprep.mubr.f32.mxu0 %v91
  %389 = vmatmul.mubr.f32.gmra.mxu0 %v90
  %v390 = vpop.f32.mrf.mxu0
  %v391 = vadd.f32 %v227, %v390
  %v392 = vpop.f32.mrf.mxu0
  %393 = vmatprep.mubr.f32.mxu0 %v95
  %394 = vmatmul.mubr.f32.gmra.mxu0 %v94
  %v395 = vpop.f32.mrf.mxu0
  %v396 = vadd.f32 %v227, %v395
  %v397 = vpop.f32.mrf.mxu0
  %398 = vmatprep.mubr.f32.mxu0 %v99
  %399 = vmatmul.mubr.f32.gmra.mxu0 %v98
  %v400 = vpop.f32.mrf.mxu0
  %v401 = vadd.f32 %v227, %v400
  %v402 = vpop.f32.mrf.mxu0
  %403 = vmatprep.mubr.f32.mxu0 %v103
  %404 = vmatmul.mubr.f32.gmra.mxu0 %v102
  %v405 = vpop.f32.mrf.mxu0
  %v406 = vadd.f32 %v227, %v405
  %v407 = vpop.f32.mrf.mxu0
  %408 = vmatprep.mubr.f32.mxu0 %v107
  %409 = vmatmul.mubr.f32.gmra.mxu0 %v106
  %v410 = vpop.f32.mrf.mxu0
  %v411 = vadd.f32 %v227, %v410
  %v412 = vpop.f32.mrf.mxu0
  %413 = vmatprep.mubr.f32.mxu0 %v111
  %414 = vmatmul.mubr.f32.gmra.mxu0 %v110
  %v415 = vpop.f32.mrf.mxu0
  %v416 = vadd.f32 %v227, %v415
  %v417 = vpop.f32.mrf.mxu0
  %418 = vmatprep.mubr.f32.mxu0 %v115
  %419 = vmatmul.mubr.f32.gmra.mxu0 %v114
  %v420 = vpop.f32.mrf.mxu0
  %v421 = vadd.f32 %v227, %v420
  %v422 = vpop.f32.mrf.mxu0
  %423 = vmatprep.mubr.f32.mxu0 %v119
  %424 = vmatmul.mubr.f32.gmra.mxu0 %v118
  %v425 = vpop.f32.mrf.mxu0
  %v426 = vadd.f32 %v227, %v425
  %v427 = vpop.f32.mrf.mxu0
  %428 = vmatprep.mubr.f32.mxu0 %v123
  %429 = vmatmul.mubr.f32.gmra.mxu0 %v122
  %v430 = vpop.f32.mrf.mxu0
  %v431 = vadd.f32 %v227, %v430
  %v432 = vpop.f32.mrf.mxu0
  %433 = vmatprep.mubr.f32.mxu0 %v127
  %434 = vmatmul.mubr.f32.gmra.mxu0 %v126
  %v435 = vpop.f32.mrf.mxu0
  %v436 = vadd.f32 %v227, %v435
  %v437 = vpop.f32.mrf.mxu0
  %438 = vmatprep.mubr.f32.mxu0 %v131
  %439 = vmatmul.mubr.f32.gmra.mxu0 %v130
  %v440 = vpop.f32.mrf.mxu0
  %v441 = vadd.f32 %v227, %v440
  %v442 = vpop.f32.mrf.mxu0
  %443 = vmatprep.mubr.f32.mxu0 %v135
  %444 = vmatmul.mubr.f32.gmra.mxu0 %v134
  %v445 = vpop.f32.mrf.mxu0
  %v446 = vadd.f32 %v227, %v445
  %v447 = vpop.f32.mrf.mxu0
  %448 = vmatprep.mubr.f32.mxu0 %v139
  %449 = vmatmul.mubr.f32.gmra.mxu0 %v138
  %v450 = vpop.f32.mrf.mxu0
  %v451 = vadd.f32 %v227, %v450
  %v452 = vpop.f32.mrf.mxu0
  %453 = vmatprep.mubr.f32.mxu0 %v143
  %454 = vmatmul.mubr.f32.gmra.mxu0 %v142
  %v455 = vpop.f32.mrf.mxu0
  %v456 = vadd.f32 %v227, %v455
  %v457 = vpop.f32.mrf.mxu0
  %458 = vmatprep.mubr.f32.mxu0 %v147
  %459 = vmatmul.mubr.f32.gmra.mxu0 %v146
  %v460 = vpop.f32.mrf.mxu0
  %v461 = vadd.f32 %v227, %v460
  %v462 = vpop.f32.mrf.mxu0
  %463 = vmatprep.mubr.f32.mxu0 %v151
  %464 = vmatmul.mubr.f32.gmra.mxu0 %v150
  %v465 = vpop.f32.mrf.mxu0
  %v466 = vadd.f32 %v227, %v465
  %v467 = vpop.f32.mrf.mxu0
  %468 = vmatprep.mubr.f32.mxu0 %v155
  %469 = vmatmul.mubr.f32.gmra.mxu0 %v154
  %v470 = vpop.f32.mrf.mxu0
  %v471 = vadd.f32 %v227, %v470
  %v472 = vpop.f32.mrf.mxu0
  %473 = vdwg.mxu0
  %474 = vmatprep.subr.mxu0 0.0
  %475 = vmatpush1.msra.mxu0 %v205
  %476 = vmatprep.subr.mxu0 0.0
  %477 = vmatpush1.msra.mxu0 %v204
  %478 = vmatprep.subr.mxu0 0.0
  %479 = vmatpush1.msra.mxu0 %v203
  %480 = vmatprep.subr.mxu0 0.0
  %481 = vmatpush1.msra.mxu0 %v202
  %482 = vmatprep.subr.mxu0 0.0
  %483 = vmatpush1.msra.mxu0 %v201
  %484 = vmatprep.subr.mxu0 0.0
  %485 = vmatpush1.msra.mxu0 %v200
  %486 = vmatprep.subr.mxu0 0.0
  %487 = vmatpush1.msra.mxu0 %v199
  %488 = vmatprep.subr.mxu0 0.0
  %489 = vmatpush1.msra.mxu0 %v198
  %490 = vmatprep.subr.mxu0 0.0
  %491 = vmatpush1.msra.mxu0 %v197
  %492 = vmatprep.subr.mxu0 0.0
  %493 = vmatpush1.msra.mxu0 %v196
  %494 = vmatprep.subr.mxu0 0.0
  %495 = vmatpush1.msra.mxu0 %v195
  %496 = vmatprep.subr.mxu0 0.0
  %497 = vmatpush1.msra.mxu0 %v194
  %498 = vmatprep.subr.mxu0 0.0
  %499 = vmatpush1.msra.mxu0 %v193
  %500 = vmatprep.subr.mxu0 0.0
  %501 = vmatpush1.msra.mxu0 %v192
  %502 = vmatprep.subr.mxu0 0.0
  %503 = vmatpush1.msra.mxu0 %v191
  %504 = vmatprep.subr.mxu0 0.0
  %505 = vmatpush1.msra.mxu0 %v190
  %506 = vmatprep.subr.mxu0 0.0
  %507 = vmatpush2.msra.mxu0 %v221
  %508 = vmatprep.subr.mxu0 0.0
  %509 = vmatpush2.msra.mxu0 %v220
  %510 = vmatprep.subr.mxu0 0.0
  %511 = vmatpush2.msra.mxu0 %v219
  %512 = vmatprep.subr.mxu0 0.0
  %513 = vmatpush2.msra.mxu0 %v218
  %514 = vmatprep.subr.mxu0 0.0
  %515 = vmatpush2.msra.mxu0 %v217
  %516 = vmatprep.subr.mxu0 0.0
  %517 = vmatpush2.msra.mxu0 %v216
  %518 = vmatprep.subr.mxu0 0.0
  %519 = vmatpush2.msra.mxu0 %v215
  %520 = vmatprep.subr.mxu0 0.0
  %521 = vmatpush2.msra.mxu0 %v214
  %522 = vmatprep.subr.mxu0 0.0
  %523 = vmatpush2.msra.mxu0 %v213
  %524 = vmatprep.subr.mxu0 0.0
  %525 = vmatpush2.msra.mxu0 %v212
  %526 = vmatprep.subr.mxu0 0.0
  %527 = vmatpush2.msra.mxu0 %v211
  %528 = vmatprep.subr.mxu0 0.0
  %529 = vmatpush2.msra.mxu0 %v210
  %530 = vmatprep.subr.mxu0 0.0
  %531 = vmatpush2.msra.mxu0 %v209
  %532 = vmatprep.subr.mxu0 0.0
  %533 = vmatpush2.msra.mxu0 %v208
  %534 = vmatprep.subr.mxu0 0.0
  %535 = vmatpush2.msra.mxu0 %v207
  %536 = vmatprep.subr.mxu0 0.0
  %537 = vmatpush2.msra.mxu0 %v206
  %538 = vmatprep.mubr.f32.mxu0 %v17
  %539 = vmatmul.mubr.f32.gmra.mxu0 %v16
  %v540 = vpop.f32.mrf.mxu0
  %v541 = vadd.f32 %v296, %v540
  %v542 = vpop.f32.mrf.mxu0
  %543 = vmatprep.mubr.f32.mxu0 %v21
  %544 = vmatmul.mubr.f32.gmra.mxu0 %v20
  %v545 = vpop.f32.mrf.mxu0
  %v546 = vadd.f32 %v301, %v545
  %v547 = vpop.f32.mrf.mxu0
  %548 = vmatprep.mubr.f32.mxu0 %v25
  %549 = vmatmul.mubr.f32.gmra.mxu0 %v24
  %v550 = vpop.f32.mrf.mxu0
  %v551 = vadd.f32 %v306, %v550
  %v552 = vpop.f32.mrf.mxu0
  %553 = vmatprep.mubr.f32.mxu0 %v29
  %554 = vmatmul.mubr.f32.gmra.mxu0 %v28
  %v555 = vpop.f32.mrf.mxu0
  %v556 = vadd.f32 %v311, %v555
  %v557 = vpop.f32.mrf.mxu0
  %558 = vmatprep.mubr.f32.mxu0 %v33
  %559 = vmatmul.mubr.f32.gmra.mxu0 %v32
  %v560 = vpop.f32.mrf.mxu0
  %v561 = vadd.f32 %v316, %v560
  %v562 = vpop.f32.mrf.mxu0
  %563 = vmatprep.mubr.f32.mxu0 %v37
  %564 = vmatmul.mubr.f32.gmra.mxu0 %v36
  %v565 = vpop.f32.mrf.mxu0
  %v566 = vadd.f32 %v321, %v565
  %v567 = vpop.f32.mrf.mxu0
  %568 = vmatprep.mubr.f32.mxu0 %v41
  %569 = vmatmul.mubr.f32.gmra.mxu0 %v40
  %v570 = vpop.f32.mrf.mxu0
  %v571 = vadd.f32 %v326, %v570
  %v572 = vpop.f32.mrf.mxu0
  %573 = vmatprep.mubr.f32.mxu0 %v45
  %574 = vmatmul.mubr.f32.gmra.mxu0 %v44
  %v575 = vpop.f32.mrf.mxu0
  %v576 = vadd.f32 %v331, %v575
  %v577 = vpop.f32.mrf.mxu0
  %578 = vmatprep.mubr.f32.mxu0 %v49
  %579 = vmatmul.mubr.f32.gmra.mxu0 %v48
  %v580 = vpop.f32.mrf.mxu0
  %v581 = vadd.f32 %v336, %v580
  %v582 = vpop.f32.mrf.mxu0
  %583 = vmatprep.mubr.f32.mxu0 %v53
  %584 = vmatmul.mubr.f32.gmra.mxu0 %v52
  %v585 = vpop.f32.mrf.mxu0
  %v586 = vadd.f32 %v341, %v585
  %v587 = vpop.f32.mrf.mxu0
  %588 = vmatprep.mubr.f32.mxu0 %v57
  %589 = vmatmul.mubr.f32.gmra.mxu0 %v56
  %v590 = vpop.f32.mrf.mxu0
  %v591 = vadd.f32 %v346, %v590
  %v592 = vpop.f32.mrf.mxu0
  %593 = vmatprep.mubr.f32.mxu0 %v61
  %594 = vmatmul.mubr.f32.gmra.mxu0 %v60
  %v595 = vpop.f32.mrf.mxu0
  %v596 = vadd.f32 %v351, %v595
  %v597 = vpop.f32.mrf.mxu0
  %598 = vmatprep.mubr.f32.mxu0 %v65
  %599 = vmatmul.mubr.f32.gmra.mxu0 %v64
  %v600 = vpop.f32.mrf.mxu0
  %v601 = vadd.f32 %v356, %v600
  %v602 = vpop.f32.mrf.mxu0
  %603 = vmatprep.mubr.f32.mxu0 %v69
  %604 = vmatmul.mubr.f32.gmra.mxu0 %v68
  %v605 = vpop.f32.mrf.mxu0
  %v606 = vadd.f32 %v361, %v605
  %v607 = vpop.f32.mrf.mxu0
  %608 = vmatprep.mubr.f32.mxu0 %v73
  %609 = vmatmul.mubr.f32.gmra.mxu0 %v72
  %v610 = vpop.f32.mrf.mxu0
  %v611 = vadd.f32 %v366, %v610
  %v612 = vpop.f32.mrf.mxu0
  %613 = vmatprep.mubr.f32.mxu0 %v77
  %614 = vmatmul.mubr.f32.gmra.mxu0 %v76
  %v615 = vpop.f32.mrf.mxu0
  %v616 = vadd.f32 %v371, %v615
  %v617 = vpop.f32.mrf.mxu0
  %618 = vmatprep.mubr.f32.mxu0 %v81
  %619 = vmatmul.mubr.f32.gmra.mxu0 %v80
  %v620 = vpop.f32.mrf.mxu0
  %v621 = vadd.f32 %v376, %v620
  %v622 = vpop.f32.mrf.mxu0
  %623 = vmatprep.mubr.f32.mxu0 %v85
  %624 = vmatmul.mubr.f32.gmra.mxu0 %v84
  %v625 = vpop.f32.mrf.mxu0
  %v626 = vadd.f32 %v381, %v625
  %v627 = vpop.f32.mrf.mxu0
  %628 = vmatprep.mubr.f32.mxu0 %v89
  %629 = vmatmul.mubr.f32.gmra.mxu0 %v88
  %v630 = vpop.f32.mrf.mxu0
  %v631 = vadd.f32 %v386, %v630
  %v632 = vpop.f32.mrf.mxu0
  %633 = vmatprep.mubr.f32.mxu0 %v93
  %634 = vmatmul.mubr.f32.gmra.mxu0 %v92
  %v635 = vpop.f32.mrf.mxu0
  %v636 = vadd.f32 %v391, %v635
  %v637 = vpop.f32.mrf.mxu0
  %638 = vmatprep.mubr.f32.mxu0 %v97
  %639 = vmatmul.mubr.f32.gmra.mxu0 %v96
  %v640 = vpop.f32.mrf.mxu0
  %v641 = vadd.f32 %v396, %v640
  %v642 = vpop.f32.mrf.mxu0
  %643 = vmatprep.mubr.f32.mxu0 %v101
  %644 = vmatmul.mubr.f32.gmra.mxu0 %v100
  %v645 = vpop.f32.mrf.mxu0
  %v646 = vadd.f32 %v401, %v645
  %v647 = vpop.f32.mrf.mxu0
  %648 = vmatprep.mubr.f32.mxu0 %v105
  %649 = vmatmul.mubr.f32.gmra.mxu0 %v104
  %v650 = vpop.f32.mrf.mxu0
  %v651 = vadd.f32 %v406, %v650
  %v652 = vpop.f32.mrf.mxu0
  %653 = vmatprep.mubr.f32.mxu0 %v109
  %654 = vmatmul.mubr.f32.gmra.mxu0 %v108
  %v655 = vpop.f32.mrf.mxu0
  %v656 = vadd.f32 %v411, %v655
  %v657 = vpop.f32.mrf.mxu0
  %658 = vmatprep.mubr.f32.mxu0 %v113
  %659 = vmatmul.mubr.f32.gmra.mxu0 %v112
  %v660 = vpop.f32.mrf.mxu0
  %v661 = vadd.f32 %v416, %v660
  %v662 = vpop.f32.mrf.mxu0
  %663 = vmatprep.mubr.f32.mxu0 %v117
  %664 = vmatmul.mubr.f32.gmra.mxu0 %v116
  %v665 = vpop.f32.mrf.mxu0
  %v666 = vadd.f32 %v421, %v665
  %v667 = vpop.f32.mrf.mxu0
  %668 = vmatprep.mubr.f32.mxu0 %v121
  %669 = vmatmul.mubr.f32.gmra.mxu0 %v120
  %v670 = vpop.f32.mrf.mxu0
  %v671 = vadd.f32 %v426, %v670
  %v672 = vpop.f32.mrf.mxu0
  %673 = vmatprep.mubr.f32.mxu0 %v125
  %674 = vmatmul.mubr.f32.gmra.mxu0 %v124
  %v675 = vpop.f32.mrf.mxu0
  %v676 = vadd.f32 %v431, %v675
  %v677 = vpop.f32.mrf.mxu0
  %678 = vmatprep.mubr.f32.mxu0 %v129
  %679 = vmatmul.mubr.f32.gmra.mxu0 %v128
  %v680 = vpop.f32.mrf.mxu0
  %v681 = vadd.f32 %v436, %v680
  %v682 = vpop.f32.mrf.mxu0
  %683 = vmatprep.mubr.f32.mxu0 %v133
  %684 = vmatmul.mubr.f32.gmra.mxu0 %v132
  %v685 = vpop.f32.mrf.mxu0
  %v686 = vadd.f32 %v441, %v685
  %v687 = vpop.f32.mrf.mxu0
  %688 = vmatprep.mubr.f32.mxu0 %v137
  %689 = vmatmul.mubr.f32.gmra.mxu0 %v136
  %v690 = vpop.f32.mrf.mxu0
  %v691 = vadd.f32 %v446, %v690
  %v692 = vpop.f32.mrf.mxu0
  %693 = vmatprep.mubr.f32.mxu0 %v141
  %694 = vmatmul.mubr.f32.gmra.mxu0 %v140
  %v695 = vpop.f32.mrf.mxu0
  %v696 = vadd.f32 %v451, %v695
  %v697 = vpop.f32.mrf.mxu0
  %698 = vmatprep.mubr.f32.mxu0 %v145
  %699 = vmatmul.mubr.f32.gmra.mxu0 %v144
  %v700 = vpop.f32.mrf.mxu0
  %v701 = vadd.f32 %v456, %v700
  %v702 = vpop.f32.mrf.mxu0
  %703 = vmatprep.mubr.f32.mxu0 %v149
  %704 = vmatmul.mubr.f32.gmra.mxu0 %v148
  %v705 = vpop.f32.mrf.mxu0
  %v706 = vadd.f32 %v461, %v705
  %v707 = vpop.f32.mrf.mxu0
  %708 = vmatprep.mubr.f32.mxu0 %v153
  %709 = vmatmul.mubr.f32.gmra.mxu0 %v152
  %v710 = vpop.f32.mrf.mxu0
  %v711 = vadd.f32 %v466, %v710
  %v712 = vpop.f32.mrf.mxu0
  %713 = vmatprep.mubr.f32.mxu0 %v157
  %714 = vmatmul.mubr.f32.gmra.mxu0 %v156
  %v715 = vpop.f32.mrf.mxu0
  %v716 = vadd.f32 %v471, %v715
  %v717 = vpop.f32.mrf.mxu0
  %718 = vdwg.mxu0
  %v719 = vmax.f32 %v541, 0.0
  %v720 = vmax.f32 %v546, 0.0
  %v721 = vmax.f32 %v551, 0.0
  %v722 = vmax.f32 %v556, 0.0
  %v723 = vmax.f32 %v561, 0.0
  %v724 = vmax.f32 %v566, 0.0
  %v725 = vmax.f32 %v571, 0.0
  %v726 = vmax.f32 %v576, 0.0
  %v727 = vmax.f32 %v581, 0.0
  %v728 = vmax.f32 %v586, 0.0
  %v729 = vmax.f32 %v591, 0.0
  %v730 = vmax.f32 %v596, 0.0
  %v731 = vmax.f32 %v601, 0.0
  %v732 = vmax.f32 %v606, 0.0
  %v733 = vmax.f32 %v611, 0.0
  %v734 = vmax.f32 %v616, 0.0
  %v735 = vmax.f32 %v621, 0.0
  %v736 = vmax.f32 %v626, 0.0
  %v737 = vmax.f32 %v631, 0.0
  %v738 = vmax.f32 %v636, 0.0
  %v739 = vmax.f32 %v641, 0.0
  %v740 = vmax.f32 %v646, 0.0
  %v741 = vmax.f32 %v651, 0.0
  %v742 = vmax.f32 %v656, 0.0
  %v743 = vmax.f32 %v661, 0.0
  %v744 = vmax.f32 %v666, 0.0
  %v745 = vmax.f32 %v671, 0.0
  %v746 = vmax.f32 %v676, 0.0
  %v747 = vmax.f32 %v681, 0.0
  %v748 = vmax.f32 %v686, 0.0
  %v749 = vmax.f32 %v691, 0.0
  %v750 = vmax.f32 %v696, 0.0
  %v751 = vmax.f32 %v701, 0.0
  %v752 = vmax.f32 %v706, 0.0
  %v753 = vmax.f32 %v711, 0.0
  %v754 = vmax.f32 %v716, 0.0
  %vm755 = vcmask 523264
  %756 = vst.msk [vmem:[%s3] sm:$0xff] %vm755, %v719
  %757 = vst.msk [vmem:[%s3 + $0x8] sm:$0xff] %vm755, %v720
  %758 = vst.msk [vmem:[%s3 + $0x10] sm:$0xff] %vm755, %v721
  %759 = vst.msk [vmem:[%s3 + $0x18] sm:$0xff] %vm755, %v722
  %760 = vst.msk [vmem:[%s3 + $0x20] sm:$0xff] %vm755, %v723
  %761 = vst.msk [vmem:[%s3 + $0x28] sm:$0xff] %vm755, %v724
  %762 = vst.msk [vmem:[%s3 + $0x30] sm:$0xff] %vm755, %v725
  %763 = vst.msk [vmem:[%s3 + $0x38] sm:$0xff] %vm755, %v726
  %764 = vst.msk [vmem:[%s3 + $0x40] sm:$0xff] %vm755, %v727
  %765 = vst.msk [vmem:[%s3 + $0x48] sm:$0xff] %vm755, %v728
  %766 = vst.msk [vmem:[%s3 + $0x50] sm:$0xff] %vm755, %v729
  %767 = vst.msk [vmem:[%s3 + $0x58] sm:$0xff] %vm755, %v730
  %768 = vst.msk [vmem:[%s3 + $0x60] sm:$0xff] %vm755, %v731
  %769 = vst.msk [vmem:[%s3 + $0x68] sm:$0xff] %vm755, %v732
  %770 = vst.msk [vmem:[%s3 + $0x70] sm:$0xff] %vm755, %v733
  %771 = vst.msk [vmem:[%s3 + $0x78] sm:$0xff] %vm755, %v734
  %772 = vst.msk [vmem:[%s3 + $0x80] sm:$0xff] %vm755, %v735
  %773 = vst.msk [vmem:[%s3 + $0x88] sm:$0xff] %vm755, %v736
  %774 = vst.msk [vmem:[%s3 + $0x90] sm:$0xff] %vm755, %v737
  %775 = vst.msk [vmem:[%s3 + $0x98] sm:$0xff] %vm755, %v738
  %776 = vst.msk [vmem:[%s3 + $0xa0] sm:$0xff] %vm755, %v739
  %777 = vst.msk [vmem:[%s3 + $0xa8] sm:$0xff] %vm755, %v740
  %778 = vst.msk [vmem:[%s3 + $0xb0] sm:$0xff] %vm755, %v741
  %779 = vst.msk [vmem:[%s3 + $0xb8] sm:$0xff] %vm755, %v742
  %780 = vst.msk [vmem:[%s3 + $0xc0] sm:$0xff] %vm755, %v743
  %781 = vst.msk [vmem:[%s3 + $0xc8] sm:$0xff] %vm755, %v744
  %782 = vst.msk [vmem:[%s3 + $0xd0] sm:$0xff] %vm755, %v745
  %783 = vst.msk [vmem:[%s3 + $0xd8] sm:$0xff] %vm755, %v746
  %784 = vst.msk [vmem:[%s3 + $0xe0] sm:$0xff] %vm755, %v747
  %785 = vst.msk [vmem:[%s3 + $0xe8] sm:$0xff] %vm755, %v748
  %786 = vst.msk [vmem:[%s3 + $0xf0] sm:$0xff] %vm755, %v749
  %787 = vst.msk [vmem:[%s3 + $0xf8] sm:$0xff] %vm755, %v750
  %788 = vst.msk [vmem:[%s3 + $0x100] sm:$0xff] %vm755, %v751
  %789 = vst.msk [vmem:[%s3 + $0x108] sm:$0xff] %vm755, %v752
  %790 = vst.msk [vmem:[%s3 + $0x110] sm:$0xff] %vm755, %v753
  %791 = vst.msk [vmem:[%s3 + $0x118] sm:$0xff] %vm755, %v754
  // Predicated region
  $region14: #{run.25} parent=0 // pred_check
    _
  $region15: #{run.25} parent=0 // pred_check_branch
    %793 = sbr.rel (0) target = $region17
  $region16: #{run.25} parent=0 // pred_region
    _
  $region17: #{run.25} parent=0 // pred_fallthru
    _
  // Predicated region
  $region18: #{run.25} parent=0 // pred_check
    _
  $region19: #{run.25} parent=0 // pred_check_branch
    %795 = sbr.rel (0) target = $region21
  $region20: #{run.25} parent=0 // pred_region
    _
  $region21: #{run.25} parent=0 // pred_fallthru
    _

// kernel: run.26
$region0: #{run.26}
  #allocation0 [shape = 'u32[]', space=smem, size = 0x4, offset = 0x4, fixed_abs, tag = 'smem constant byte address 0x4 - core index']
  #allocation1 [shape = 'u32[144,128]{1,0:T(1,128)}', space=vmem, size = 0x12000, scoped, tag = 'internal scratch']
  %s0 = inlined_call_operand.vmem [shape: f32[128,576], index: 0, kind: input, shape index: {}]
  %s1 = inlined_call_operand.vmem [shape: f32[576,64], index: 1, kind: input, shape index: {}]
  %s2 = inlined_call_operand.vmem [shape: f32[1,64], index: 2, kind: input, shape index: {}]
  %s3 = inlined_call_operand.vmem [shape: f32[128,64], index: 3, kind: output, shape index: {}]
  %s4 = sld [smem:[#allocation0]]
  $region22: #{run.26} parent=0
    _
  %s6 = ssub.s32 1, %s4
  %s7 = scalar_select 0, %s6, %s4
  // Predicated region
  $region2: #{run.26} parent=0 // pred_check
    _
  $region3: #{run.26} parent=0 // pred_check_branch
    %9 = sbr.rel (0) target = $region5
  $region4: #{run.26} parent=0 // pred_region
    _
  $region5: #{run.26} parent=0 // pred_fallthru
    _
  // Predicated region
  $region6: #{run.26} parent=0 // pred_check
    _
  $region7: #{run.26} parent=0 // pred_check_branch
    %11 = sbr.rel (0) target = $region9
  $region8: #{run.26} parent=0 // pred_region
    _
  $region9: #{run.26} parent=0 // pred_fallthru
    _
  // Predicated region
  $region10: #{run.26} parent=0 // pred_check
    _
  $region11: #{run.26} parent=0 // pred_check_branch
    %13 = sbr.rel (0) target = $region13
  $region12: #{run.26} parent=0 // pred_region
    _
  $region13: #{run.26} parent=0 // pred_fallthru
    _
  %v14 = vld [vmem:[%s0] sm:$0xff]
  %v15 = vld [vmem:[%s0 + $0x8] sm:$0xff]
  %v16 = vld [vmem:[%s0 + $0x10] sm:$0xff]
  %v17 = vld [vmem:[%s0 + $0x18] sm:$0xff]
  %v18 = vld [vmem:[%s0 + $0x20] sm:$0xff]
  %v19 = vld [vmem:[%s0 + $0x28] sm:$0xff]
  %v20 = vld [vmem:[%s0 + $0x30] sm:$0xff]
  %v21 = vld [vmem:[%s0 + $0x38] sm:$0xff]
  %v22 = vld [vmem:[%s0 + $0x40] sm:$0xff]
  %v23 = vld [vmem:[%s0 + $0x48] sm:$0xff]
  %v24 = vld [vmem:[%s0 + $0x50] sm:$0xff]
  %v25 = vld [vmem:[%s0 + $0x58] sm:$0xff]
  %v26 = vld [vmem:[%s0 + $0x60] sm:$0xff]
  %v27 = vld [vmem:[%s0 + $0x68] sm:$0xff]
  %v28 = vld [vmem:[%s0 + $0x70] sm:$0xff]
  %v29 = vld [vmem:[%s0 + $0x78] sm:$0xff]
  %v30 = vld [vmem:[%s0 + $0x80] sm:$0xff]
  %v31 = vld [vmem:[%s0 + $0x88] sm:$0xff]
  %v32 = vld [vmem:[%s0 + $0x90] sm:$0xff]
  %v33 = vld [vmem:[%s0 + $0x98] sm:$0xff]
  %v34 = vld [vmem:[%s0 + $0xa0] sm:$0xff]
  %v35 = vld [vmem:[%s0 + $0xa8] sm:$0xff]
  %v36 = vld [vmem:[%s0 + $0xb0] sm:$0xff]
  %v37 = vld [vmem:[%s0 + $0xb8] sm:$0xff]
  %v38 = vld [vmem:[%s0 + $0xc0] sm:$0xff]
  %v39 = vld [vmem:[%s0 + $0xc8] sm:$0xff]
  %v40 = vld [vmem:[%s0 + $0xd0] sm:$0xff]
  %v41 = vld [vmem:[%s0 + $0xd8] sm:$0xff]
  %v42 = vld [vmem:[%s0 + $0xe0] sm:$0xff]
  %v43 = vld [vmem:[%s0 + $0xe8] sm:$0xff]
  %v44 = vld [vmem:[%s0 + $0xf0] sm:$0xff]
  %v45 = vld [vmem:[%s0 + $0xf8] sm:$0xff]
  %v46 = vld [vmem:[%s0 + $0x100] sm:$0xff]
  %v47 = vld [vmem:[%s0 + $0x108] sm:$0xff]
  %v48 = vld [vmem:[%s0 + $0x110] sm:$0xff]
  %v49 = vld [vmem:[%s0 + $0x118] sm:$0xff]
  %v50 = vld [vmem:[%s0 + $0x120] sm:$0xff]
  %v51 = vld [vmem:[%s0 + $0x128] sm:$0xff]
  %v52 = vld [vmem:[%s0 + $0x130] sm:$0xff]
  %v53 = vld [vmem:[%s0 + $0x138] sm:$0xff]
  %v54 = vld [vmem:[%s0 + $0x140] sm:$0xff]
  %v55 = vld [vmem:[%s0 + $0x148] sm:$0xff]
  %v56 = vld [vmem:[%s0 + $0x150] sm:$0xff]
  %v57 = vld [vmem:[%s0 + $0x158] sm:$0xff]
  %v58 = vld [vmem:[%s0 + $0x160] sm:$0xff]
  %v59 = vld [vmem:[%s0 + $0x168] sm:$0xff]
  %v60 = vld [vmem:[%s0 + $0x170] sm:$0xff]
  %v61 = vld [vmem:[%s0 + $0x178] sm:$0xff]
  %v62 = vld [vmem:[%s0 + $0x180] sm:$0xff]
  %v63 = vld [vmem:[%s0 + $0x188] sm:$0xff]
  %v64 = vld [vmem:[%s0 + $0x190] sm:$0xff]
  %v65 = vld [vmem:[%s0 + $0x198] sm:$0xff]
  %v66 = vld [vmem:[%s0 + $0x1a0] sm:$0xff]
  %v67 = vld [vmem:[%s0 + $0x1a8] sm:$0xff]
  %v68 = vld [vmem:[%s0 + $0x1b0] sm:$0xff]
  %v69 = vld [vmem:[%s0 + $0x1b8] sm:$0xff]
  %v70 = vld [vmem:[%s0 + $0x1c0] sm:$0xff]
  %v71 = vld [vmem:[%s0 + $0x1c8] sm:$0xff]
  %v72 = vld [vmem:[%s0 + $0x1d0] sm:$0xff]
  %v73 = vld [vmem:[%s0 + $0x1d8] sm:$0xff]
  %v74 = vld [vmem:[%s0 + $0x1e0] sm:$0xff]
  %v75 = vld [vmem:[%s0 + $0x1e8] sm:$0xff]
  %v76 = vld [vmem:[%s0 + $0x1f0] sm:$0xff]
  %v77 = vld [vmem:[%s0 + $0x1f8] sm:$0xff]
  %v78 = vld [vmem:[%s0 + $0x200] sm:$0xff]
  %v79 = vld [vmem:[%s0 + $0x208] sm:$0xff]
  %v80 = vld [vmem:[%s0 + $0x210] sm:$0xff]
  %v81 = vld [vmem:[%s0 + $0x218] sm:$0xff]
  %v82 = vld [vmem:[%s0 + $0x220] sm:$0xff]
  %v83 = vld [vmem:[%s0 + $0x228] sm:$0xff]
  %v84 = vld [vmem:[%s0 + $0x230] sm:$0xff]
  %v85 = vld [vmem:[%s0 + $0x238] sm:$0xff]
  %v86 = vld [vmem:[%s0 + $0x240] sm:$0xff]
  %v87 = vld [vmem:[%s0 + $0x248] sm:$0xff]
  %v88 = vld [vmem:[%s0 + $0x250] sm:$0xff]
  %v89 = vld [vmem:[%s0 + $0x258] sm:$0xff]
  %v90 = vld [vmem:[%s0 + $0x260] sm:$0xff]
  %v91 = vld [vmem:[%s0 + $0x268] sm:$0xff]
  %v92 = vld [vmem:[%s0 + $0x270] sm:$0xff]
  %v93 = vld [vmem:[%s0 + $0x278] sm:$0xff]
  %v94 = vld [vmem:[%s1] sm:$0xff]
  %v95 = vld [vmem:[%s1 + $0x8] sm:$0xff]
  %v96 = vld [vmem:[%s1 + $0x10] sm:$0xff]
  %v97 = vld [vmem:[%s1 + $0x18] sm:$0xff]
  %v98 = vld [vmem:[%s1 + $0x20] sm:$0xff]
  %v99 = vld [vmem:[%s1 + $0x28] sm:$0xff]
  %v100 = vld [vmem:[%s1 + $0x30] sm:$0xff]
  %v101 = vld [vmem:[%s1 + $0x38] sm:$0xff]
  %v102 = vld [vmem:[%s1 + $0x40] sm:$0xff]
  %v103 = vld [vmem:[%s1 + $0x48] sm:$0xff]
  %v104 = vld [vmem:[%s1 + $0x50] sm:$0xff]
  %v105 = vld [vmem:[%s1 + $0x58] sm:$0xff]
  %v106 = vld [vmem:[%s1 + $0x60] sm:$0xff]
  %v107 = vld [vmem:[%s1 + $0x68] sm:$0xff]
  %v108 = vld [vmem:[%s1 + $0x70] sm:$0xff]
  %v109 = vld [vmem:[%s1 + $0x78] sm:$0xff]
  %v110 = vld [vmem:[%s1 + $0x80] sm:$0xff]
  %v111 = vld [vmem:[%s1 + $0x88] sm:$0xff]
  %v112 = vld [vmem:[%s1 + $0x90] sm:$0xff]
  %v113 = vld [vmem:[%s1 + $0x98] sm:$0xff]
  %v114 = vld [vmem:[%s1 + $0xa0] sm:$0xff]
  %v115 = vld [vmem:[%s1 + $0xa8] sm:$0xff]
  %v116 = vld [vmem:[%s1 + $0xb0] sm:$0xff]
  %v117 = vld [vmem:[%s1 + $0xb8] sm:$0xff]
  %v118 = vld [vmem:[%s1 + $0xc0] sm:$0xff]
  %v119 = vld [vmem:[%s1 + $0xc8] sm:$0xff]
  %v120 = vld [vmem:[%s1 + $0xd0] sm:$0xff]
  %v121 = vld [vmem:[%s1 + $0xd8] sm:$0xff]
  %v122 = vld [vmem:[%s1 + $0xe0] sm:$0xff]
  %v123 = vld [vmem:[%s1 + $0xe8] sm:$0xff]
  %v124 = vld [vmem:[%s1 + $0xf0] sm:$0xff]
  %v125 = vld [vmem:[%s1 + $0xf8] sm:$0xff]
  %v126 = vld [vmem:[%s1 + $0x100] sm:$0xff]
  %v127 = vld [vmem:[%s1 + $0x108] sm:$0xff]
  %v128 = vld [vmem:[%s1 + $0x110] sm:$0xff]
  %v129 = vld [vmem:[%s1 + $0x118] sm:$0xff]
  %v130 = vld [vmem:[%s1 + $0x120] sm:$0xff]
  %v131 = vld [vmem:[%s1 + $0x128] sm:$0xff]
  %v132 = vld [vmem:[%s1 + $0x130] sm:$0xff]
  %v133 = vld [vmem:[%s1 + $0x138] sm:$0xff]
  %v134 = vld [vmem:[%s1 + $0x140] sm:$0xff]
  %v135 = vld [vmem:[%s1 + $0x148] sm:$0xff]
  %v136 = vld [vmem:[%s1 + $0x150] sm:$0xff]
  %v137 = vld [vmem:[%s1 + $0x158] sm:$0xff]
  %v138 = vld [vmem:[%s1 + $0x160] sm:$0xff]
  %v139 = vld [vmem:[%s1 + $0x168] sm:$0xff]
  %v140 = vld [vmem:[%s1 + $0x170] sm:$0xff]
  %v141 = vld [vmem:[%s1 + $0x178] sm:$0xff]
  %v142 = vld [vmem:[%s1 + $0x180] sm:$0xff]
  %v143 = vld [vmem:[%s1 + $0x188] sm:$0xff]
  %v144 = vld [vmem:[%s1 + $0x190] sm:$0xff]
  %v145 = vld [vmem:[%s1 + $0x198] sm:$0xff]
  %v146 = vld [vmem:[%s1 + $0x1a0] sm:$0xff]
  %v147 = vld [vmem:[%s1 + $0x1a8] sm:$0xff]
  %v148 = vld [vmem:[%s1 + $0x1b0] sm:$0xff]
  %v149 = vld [vmem:[%s1 + $0x1b8] sm:$0xff]
  %v150 = vld [vmem:[%s1 + $0x1c0] sm:$0xff]
  %v151 = vld [vmem:[%s1 + $0x1c8] sm:$0xff]
  %v152 = vld [vmem:[%s1 + $0x1d0] sm:$0xff]
  %v153 = vld [vmem:[%s1 + $0x1d8] sm:$0xff]
  %v154 = vld [vmem:[%s1 + $0x1e0] sm:$0xff]
  %v155 = vld [vmem:[%s1 + $0x1e8] sm:$0xff]
  %v156 = vld [vmem:[%s1 + $0x1f0] sm:$0xff]
  %v157 = vld [vmem:[%s1 + $0x1f8] sm:$0xff]
  %v158 = vld [vmem:[%s1 + $0x200] sm:$0xff]
  %v159 = vld [vmem:[%s1 + $0x208] sm:$0xff]
  %v160 = vld [vmem:[%s1 + $0x210] sm:$0xff]
  %v161 = vld [vmem:[%s1 + $0x218] sm:$0xff]
  %v162 = vld [vmem:[%s1 + $0x220] sm:$0xff]
  %v163 = vld [vmem:[%s1 + $0x228] sm:$0xff]
  %v164 = vld [vmem:[%s1 + $0x230] sm:$0xff]
  %v165 = vld [vmem:[%s1 + $0x238] sm:$0xff]
  %v166 = vld [vmem:[%s2] sm:$0x1]
  %v168 = vlaneseq
  %v169 = vshrl.u32 %v168, 7
  %v170 = vsub.s32 0, %v169
  %v171 = vrot.slane %v166, %v170
  %vm173 = vcmask 523264
  %v175 = vsel %vm173, %v18, 0
  %v178 = vsel %vm173, %v23, 0
  %v181 = vsel %vm173, %v28, 0
  %v184 = vsel %vm173, %v33, 0
  %v187 = vsel %vm173, %v38, 0
  %v190 = vsel %vm173, %v43, 0
  %v193 = vsel %vm173, %v48, 0
  %v196 = vsel %vm173, %v53, 0
  %v199 = vsel %vm173, %v58, 0
  %v202 = vsel %vm173, %v63, 0
  %v205 = vsel %vm173, %v68, 0
  %v208 = vsel %vm173, %v73, 0
  %v211 = vsel %vm173, %v78, 0
  %v214 = vsel %vm173, %v83, 0
  %v217 = vsel %vm173, %v88, 0
  %v220 = vsel %vm173, %v93, 0
  %222 = vmatprep.subr.mxu0 0.0
  %223 = vmatpush1.msra.mxu0 %v109
  %224 = vmatprep.subr.mxu0 0.0
  %225 = vmatpush1.msra.mxu0 %v108
  %226 = vmatprep.subr.mxu0 0.0
  %227 = vmatpush1.msra.mxu0 %v107
  %228 = vmatprep.subr.mxu0 0.0
  %229 = vmatpush1.msra.mxu0 %v106
  %230 = vmatprep.subr.mxu0 0.0
  %231 = vmatpush1.msra.mxu0 %v105
  %232 = vmatprep.subr.mxu0 0.0
  %233 = vmatpush1.msra.mxu0 %v104
  %234 = vmatprep.subr.mxu0 0.0
  %235 = vmatpush1.msra.mxu0 %v103
  %236 = vmatprep.subr.mxu0 0.0
  %237 = vmatpush1.msra.mxu0 %v102
  %238 = vmatprep.subr.mxu0 0.0
  %239 = vmatpush1.msra.mxu0 %v101
  %240 = vmatprep.subr.mxu0 0.0
  %241 = vmatpush1.msra.mxu0 %v100
  %242 = vmatprep.subr.mxu0 0.0
  %243 = vmatpush1.msra.mxu0 %v99
  %244 = vmatprep.subr.mxu0 0.0
  %245 = vmatpush1.msra.mxu0 %v98
  %246 = vmatprep.subr.mxu0 0.0
  %247 = vmatpush1.msra.mxu0 %v97
  %248 = vmatprep.subr.mxu0 0.0
  %249 = vmatpush1.msra.mxu0 %v96
  %250 = vmatprep.subr.mxu0 0.0
  %251 = vmatpush1.msra.mxu0 %v95
  %252 = vmatprep.subr.mxu0 0.0
  %253 = vmatpush1.msra.mxu0 %v94
  %254 = vmatprep.subr.mxu0 0.0
  %255 = vmatpush2.msra.mxu0 %v125
  %256 = vmatprep.subr.mxu0 0.0
  %257 = vmatpush2.msra.mxu0 %v124
  %258 = vmatprep.subr.mxu0 0.0
  %259 = vmatpush2.msra.mxu0 %v123
  %260 = vmatprep.subr.mxu0 0.0
  %261 = vmatpush2.msra.mxu0 %v122
  %262 = vmatprep.subr.mxu0 0.0
  %263 = vmatpush2.msra.mxu0 %v121
  %264 = vmatprep.subr.mxu0 0.0
  %265 = vmatpush2.msra.mxu0 %v120
  %266 = vmatprep.subr.mxu0 0.0
  %267 = vmatpush2.msra.mxu0 %v119
  %268 = vmatprep.subr.mxu0 0.0
  %269 = vmatpush2.msra.mxu0 %v118
  %270 = vmatprep.subr.mxu0 0.0
  %271 = vmatpush2.msra.mxu0 %v117
  %272 = vmatprep.subr.mxu0 0.0
  %273 = vmatpush2.msra.mxu0 %v116
  %274 = vmatprep.subr.mxu0 0.0
  %275 = vmatpush2.msra.mxu0 %v115
  %276 = vmatprep.subr.mxu0 0.0
  %277 = vmatpush2.msra.mxu0 %v114
  %278 = vmatprep.subr.mxu0 0.0
  %279 = vmatpush2.msra.mxu0 %v113
  %280 = vmatprep.subr.mxu0 0.0
  %281 = vmatpush2.msra.mxu0 %v112
  %282 = vmatprep.subr.mxu0 0.0
  %283 = vmatpush2.msra.mxu0 %v111
  %284 = vmatprep.subr.mxu0 0.0
  %285 = vmatpush2.msra.mxu0 %v110
  %286 = vmatprep.mubr.f32.mxu0 %v15
  %287 = vmatmul.mubr.f32.gmra.mxu0 %v14
  %v288 = vpop.f32.mrf.mxu0
  %v289 = vadd.f32 %v171, %v288
  %v290 = vpop.f32.mrf.mxu0
  %291 = vmatprep.mubr.f32.mxu0 %v20
  %292 = vmatmul.mubr.f32.gmra.mxu0 %v19
  %v293 = vpop.f32.mrf.mxu0
  %v294 = vadd.f32 %v171, %v293
  %v295 = vpop.f32.mrf.mxu0
  %296 = vmatprep.mubr.f32.mxu0 %v25
  %297 = vmatmul.mubr.f32.gmra.mxu0 %v24
  %v298 = vpop.f32.mrf.mxu0
  %v299 = vadd.f32 %v171, %v298
  %v300 = vpop.f32.mrf.mxu0
  %301 = vmatprep.mubr.f32.mxu0 %v30
  %302 = vmatmul.mubr.f32.gmra.mxu0 %v29
  %v303 = vpop.f32.mrf.mxu0
  %v304 = vadd.f32 %v171, %v303
  %v305 = vpop.f32.mrf.mxu0
  %306 = vmatprep.mubr.f32.mxu0 %v35
  %307 = vmatmul.mubr.f32.gmra.mxu0 %v34
  %v308 = vpop.f32.mrf.mxu0
  %v309 = vadd.f32 %v171, %v308
  %v310 = vpop.f32.mrf.mxu0
  %311 = vmatprep.mubr.f32.mxu0 %v40
  %312 = vmatmul.mubr.f32.gmra.mxu0 %v39
  %v313 = vpop.f32.mrf.mxu0
  %v314 = vadd.f32 %v171, %v313
  %v315 = vpop.f32.mrf.mxu0
  %316 = vmatprep.mubr.f32.mxu0 %v45
  %317 = vmatmul.mubr.f32.gmra.mxu0 %v44
  %v318 = vpop.f32.mrf.mxu0
  %v319 = vadd.f32 %v171, %v318
  %v320 = vpop.f32.mrf.mxu0
  %321 = vmatprep.mubr.f32.mxu0 %v50
  %322 = vmatmul.mubr.f32.gmra.mxu0 %v49
  %v323 = vpop.f32.mrf.mxu0
  %v324 = vadd.f32 %v171, %v323
  %v325 = vpop.f32.mrf.mxu0
  %326 = vmatprep.mubr.f32.mxu0 %v55
  %327 = vmatmul.mubr.f32.gmra.mxu0 %v54
  %v328 = vpop.f32.mrf.mxu0
  %v329 = vadd.f32 %v171, %v328
  %v330 = vpop.f32.mrf.mxu0
  %331 = vmatprep.mubr.f32.mxu0 %v60
  %332 = vmatmul.mubr.f32.gmra.mxu0 %v59
  %v333 = vpop.f32.mrf.mxu0
  %v334 = vadd.f32 %v171, %v333
  %v335 = vpop.f32.mrf.mxu0
  %336 = vmatprep.mubr.f32.mxu0 %v65
  %337 = vmatmul.mubr.f32.gmra.mxu0 %v64
  %v338 = vpop.f32.mrf.mxu0
  %v339 = vadd.f32 %v171, %v338
  %v340 = vpop.f32.mrf.mxu0
  %341 = vmatprep.mubr.f32.mxu0 %v70
  %342 = vmatmul.mubr.f32.gmra.mxu0 %v69
  %v343 = vpop.f32.mrf.mxu0
  %v344 = vadd.f32 %v171, %v343
  %v345 = vpop.f32.mrf.mxu0
  %346 = vmatprep.mubr.f32.mxu0 %v75
  %347 = vmatmul.mubr.f32.gmra.mxu0 %v74
  %v348 = vpop.f32.mrf.mxu0
  %v349 = vadd.f32 %v171, %v348
  %v350 = vpop.f32.mrf.mxu0
  %351 = vmatprep.mubr.f32.mxu0 %v80
  %352 = vmatmul.mubr.f32.gmra.mxu0 %v79
  %v353 = vpop.f32.mrf.mxu0
  %v354 = vadd.f32 %v171, %v353
  %v355 = vpop.f32.mrf.mxu0
  %356 = vmatprep.mubr.f32.mxu0 %v85
  %357 = vmatmul.mubr.f32.gmra.mxu0 %v84
  %v358 = vpop.f32.mrf.mxu0
  %v359 = vadd.f32 %v171, %v358
  %v360 = vpop.f32.mrf.mxu0
  %361 = vmatprep.mubr.f32.mxu0 %v90
  %362 = vmatmul.mubr.f32.gmra.mxu0 %v89
  %v363 = vpop.f32.mrf.mxu0
  %v364 = vadd.f32 %v171, %v363
  %v365 = vpop.f32.mrf.mxu0
  %366 = vdwg.mxu0
  %367 = vmatprep.subr.mxu0 0.0
  %368 = vmatpush1.msra.mxu0 %v141
  %369 = vmatprep.subr.mxu0 0.0
  %370 = vmatpush1.msra.mxu0 %v140
  %371 = vmatprep.subr.mxu0 0.0
  %372 = vmatpush1.msra.mxu0 %v139
  %373 = vmatprep.subr.mxu0 0.0
  %374 = vmatpush1.msra.mxu0 %v138
  %375 = vmatprep.subr.mxu0 0.0
  %376 = vmatpush1.msra.mxu0 %v137
  %377 = vmatprep.subr.mxu0 0.0
  %378 = vmatpush1.msra.mxu0 %v136
  %379 = vmatprep.subr.mxu0 0.0
  %380 = vmatpush1.msra.mxu0 %v135
  %381 = vmatprep.subr.mxu0 0.0
  %382 = vmatpush1.msra.mxu0 %v134
  %383 = vmatprep.subr.mxu0 0.0
  %384 = vmatpush1.msra.mxu0 %v133
  %385 = vmatprep.subr.mxu0 0.0
  %386 = vmatpush1.msra.mxu0 %v132
  %387 = vmatprep.subr.mxu0 0.0
  %388 = vmatpush1.msra.mxu0 %v131
  %389 = vmatprep.subr.mxu0 0.0
  %390 = vmatpush1.msra.mxu0 %v130
  %391 = vmatprep.subr.mxu0 0.0
  %392 = vmatpush1.msra.mxu0 %v129
  %393 = vmatprep.subr.mxu0 0.0
  %394 = vmatpush1.msra.mxu0 %v128
  %395 = vmatprep.subr.mxu0 0.0
  %396 = vmatpush1.msra.mxu0 %v127
  %397 = vmatprep.subr.mxu0 0.0
  %398 = vmatpush1.msra.mxu0 %v126
  %399 = vmatprep.subr.mxu0 0.0
  %400 = vmatpush2.msra.mxu0 %v157
  %401 = vmatprep.subr.mxu0 0.0
  %402 = vmatpush2.msra.mxu0 %v156
  %403 = vmatprep.subr.mxu0 0.0
  %404 = vmatpush2.msra.mxu0 %v155
  %405 = vmatprep.subr.mxu0 0.0
  %406 = vmatpush2.msra.mxu0 %v154
  %407 = vmatprep.subr.mxu0 0.0
  %408 = vmatpush2.msra.mxu0 %v153
  %409 = vmatprep.subr.mxu0 0.0
  %410 = vmatpush2.msra.mxu0 %v152
  %411 = vmatprep.subr.mxu0 0.0
  %412 = vmatpush2.msra.mxu0 %v151
  %413 = vmatprep.subr.mxu0 0.0
  %414 = vmatpush2.msra.mxu0 %v150
  %415 = vmatprep.subr.mxu0 0.0
  %416 = vmatpush2.msra.mxu0 %v149
  %417 = vmatprep.subr.mxu0 0.0
  %418 = vmatpush2.msra.mxu0 %v148
  %419 = vmatprep.subr.mxu0 0.0
  %420 = vmatpush2.msra.mxu0 %v147
  %421 = vmatprep.subr.mxu0 0.0
  %422 = vmatpush2.msra.mxu0 %v146
  %423 = vmatprep.subr.mxu0 0.0
  %424 = vmatpush2.msra.mxu0 %v145
  %425 = vmatprep.subr.mxu0 0.0
  %426 = vmatpush2.msra.mxu0 %v144
  %427 = vmatprep.subr.mxu0 0.0
  %428 = vmatpush2.msra.mxu0 %v143
  %429 = vmatprep.subr.mxu0 0.0
  %430 = vmatpush2.msra.mxu0 %v142
  %431 = vmatprep.mubr.f32.mxu0 %v17
  %432 = vmatmul.mubr.f32.gmra.mxu0 %v16
  %v433 = vpop.f32.mrf.mxu0
  %v434 = vadd.f32 %v289, %v433
  %v435 = vpop.f32.mrf.mxu0
  %436 = vmatprep.mubr.f32.mxu0 %v22
  %437 = vmatmul.mubr.f32.gmra.mxu0 %v21
  %v438 = vpop.f32.mrf.mxu0
  %v439 = vadd.f32 %v294, %v438
  %v440 = vpop.f32.mrf.mxu0
  %441 = vmatprep.mubr.f32.mxu0 %v27
  %442 = vmatmul.mubr.f32.gmra.mxu0 %v26
  %v443 = vpop.f32.mrf.mxu0
  %v444 = vadd.f32 %v299, %v443
  %v445 = vpop.f32.mrf.mxu0
  %446 = vmatprep.mubr.f32.mxu0 %v32
  %447 = vmatmul.mubr.f32.gmra.mxu0 %v31
  %v448 = vpop.f32.mrf.mxu0
  %v449 = vadd.f32 %v304, %v448
  %v450 = vpop.f32.mrf.mxu0
  %451 = vmatprep.mubr.f32.mxu0 %v37
  %452 = vmatmul.mubr.f32.gmra.mxu0 %v36
  %v453 = vpop.f32.mrf.mxu0
  %v454 = vadd.f32 %v309, %v453
  %v455 = vpop.f32.mrf.mxu0
  %456 = vmatprep.mubr.f32.mxu0 %v42
  %457 = vmatmul.mubr.f32.gmra.mxu0 %v41
  %v458 = vpop.f32.mrf.mxu0
  %v459 = vadd.f32 %v314, %v458
  %v460 = vpop.f32.mrf.mxu0
  %461 = vmatprep.mubr.f32.mxu0 %v47
  %462 = vmatmul.mubr.f32.gmra.mxu0 %v46
  %v463 = vpop.f32.mrf.mxu0
  %v464 = vadd.f32 %v319, %v463
  %v465 = vpop.f32.mrf.mxu0
  %466 = vmatprep.mubr.f32.mxu0 %v52
  %467 = vmatmul.mubr.f32.gmra.mxu0 %v51
  %v468 = vpop.f32.mrf.mxu0
  %v469 = vadd.f32 %v324, %v468
  %v470 = vpop.f32.mrf.mxu0
  %471 = vmatprep.mubr.f32.mxu0 %v57
  %472 = vmatmul.mubr.f32.gmra.mxu0 %v56
  %v473 = vpop.f32.mrf.mxu0
  %v474 = vadd.f32 %v329, %v473
  %v475 = vpop.f32.mrf.mxu0
  %476 = vmatprep.mubr.f32.mxu0 %v62
  %477 = vmatmul.mubr.f32.gmra.mxu0 %v61
  %v478 = vpop.f32.mrf.mxu0
  %v479 = vadd.f32 %v334, %v478
  %v480 = vpop.f32.mrf.mxu0
  %481 = vmatprep.mubr.f32.mxu0 %v67
  %482 = vmatmul.mubr.f32.gmra.mxu0 %v66
  %v483 = vpop.f32.mrf.mxu0
  %v484 = vadd.f32 %v339, %v483
  %v485 = vpop.f32.mrf.mxu0
  %486 = vmatprep.mubr.f32.mxu0 %v72
  %487 = vmatmul.mubr.f32.gmra.mxu0 %v71
  %v488 = vpop.f32.mrf.mxu0
  %v489 = vadd.f32 %v344, %v488
  %v490 = vpop.f32.mrf.mxu0
  %491 = vmatprep.mubr.f32.mxu0 %v77
  %492 = vmatmul.mubr.f32.gmra.mxu0 %v76
  %v493 = vpop.f32.mrf.mxu0
  %v494 = vadd.f32 %v349, %v493
  %v495 = vpop.f32.mrf.mxu0
  %496 = vmatprep.mubr.f32.mxu0 %v82
  %497 = vmatmul.mubr.f32.gmra.mxu0 %v81
  %v498 = vpop.f32.mrf.mxu0
  %v499 = vadd.f32 %v354, %v498
  %v500 = vpop.f32.mrf.mxu0
  %501 = vmatprep.mubr.f32.mxu0 %v87
  %502 = vmatmul.mubr.f32.gmra.mxu0 %v86
  %v503 = vpop.f32.mrf.mxu0
  %v504 = vadd.f32 %v359, %v503
  %v505 = vpop.f32.mrf.mxu0
  %506 = vmatprep.mubr.f32.mxu0 %v92
  %507 = vmatmul.mubr.f32.gmra.mxu0 %v91
  %v508 = vpop.f32.mrf.mxu0
  %v509 = vadd.f32 %v364, %v508
  %v510 = vpop.f32.mrf.mxu0
  %511 = vdwg.mxu0
  %512 = vmatprep.subr.mxu0 0.0
  %513 = vmatpush1.msra.mxu0 0.0
  %514 = vmatprep.subr.mxu0 0.0
  %515 = vmatpush1.msra.mxu0 0.0
  %516 = vmatprep.subr.mxu0 0.0
  %517 = vmatpush1.msra.mxu0 0.0
  %518 = vmatprep.subr.mxu0 0.0
  %519 = vmatpush1.msra.mxu0 0.0
  %520 = vmatprep.subr.mxu0 0.0
  %521 = vmatpush1.msra.mxu0 0.0
  %522 = vmatprep.subr.mxu0 0.0
  %523 = vmatpush1.msra.mxu0 0.0
  %524 = vmatprep.subr.mxu0 0.0
  %525 = vmatpush1.msra.mxu0 0.0
  %526 = vmatprep.subr.mxu0 0.0
  %527 = vmatpush1.msra.mxu0 0.0
  %528 = vmatprep.subr.mxu0 0.0
  %529 = vmatpush1.msra.mxu0 %v165
  %530 = vmatprep.subr.mxu0 0.0
  %531 = vmatpush1.msra.mxu0 %v164
  %532 = vmatprep.subr.mxu0 0.0
  %533 = vmatpush1.msra.mxu0 %v163
  %534 = vmatprep.subr.mxu0 0.0
  %535 = vmatpush1.msra.mxu0 %v162
  %536 = vmatprep.subr.mxu0 0.0
  %537 = vmatpush1.msra.mxu0 %v161
  %538 = vmatprep.subr.mxu0 0.0
  %539 = vmatpush1.msra.mxu0 %v160
  %540 = vmatprep.subr.mxu0 0.0
  %541 = vmatpush1.msra.mxu0 %v159
  %542 = vmatprep.subr.mxu0 0.0
  %543 = vmatpush1.msra.mxu0 %v158
  %544 = vmatprep.subr.mxu0 0.0
  %545 = vmatpush2.msra.mxu0 0.0
  %546 = vmatprep.subr.mxu0 0.0
  %547 = vmatpush2.msra.mxu0 0.0
  %548 = vmatprep.subr.mxu0 0.0
  %549 = vmatpush2.msra.mxu0 0.0
  %550 = vmatprep.subr.mxu0 0.0
  %551 = vmatpush2.msra.mxu0 0.0
  %552 = vmatprep.subr.mxu0 0.0
  %553 = vmatpush2.msra.mxu0 0.0
  %554 = vmatprep.subr.mxu0 0.0
  %555 = vmatpush2.msra.mxu0 0.0
  %556 = vmatprep.subr.mxu0 0.0
  %557 = vmatpush2.msra.mxu0 0.0
  %558 = vmatprep.subr.mxu0 0.0
  %559 = vmatpush2.msra.mxu0 0.0
  %560 = vmatprep.subr.mxu0 0.0
  %561 = vmatpush2.msra.mxu0 0.0
  %562 = vmatprep.subr.mxu0 0.0
  %563 = vmatpush2.msra.mxu0 0.0
  %564 = vmatprep.subr.mxu0 0.0
  %565 = vmatpush2.msra.mxu0 0.0
  %566 = vmatprep.subr.mxu0 0.0
  %567 = vmatpush2.msra.mxu0 0.0
  %568 = vmatprep.subr.mxu0 0.0
  %569 = vmatpush2.msra.mxu0 0.0
  %570 = vmatprep.subr.mxu0 0.0
  %571 = vmatpush2.msra.mxu0 0.0
  %572 = vmatprep.subr.mxu0 0.0
  %573 = vmatpush2.msra.mxu0 0.0
  %574 = vmatprep.subr.mxu0 0.0
  %575 = vmatpush2.msra.mxu0 0.0
  %576 = vmatprep.mubr.f32.mxu0 0.0
  %577 = vmatmul.mubr.f32.gmra.mxu0 %v175
  %v578 = vpop.f32.mrf.mxu0
  %v579 = vadd.f32 %v434, %v578
  %v580 = vpop.f32.mrf.mxu0
  %581 = vmatprep.mubr.f32.mxu0 0.0
  %582 = vmatmul.mubr.f32.gmra.mxu0 %v178
  %v583 = vpop.f32.mrf.mxu0
  %v584 = vadd.f32 %v439, %v583
  %v585 = vpop.f32.mrf.mxu0
  %586 = vmatprep.mubr.f32.mxu0 0.0
  %587 = vmatmul.mubr.f32.gmra.mxu0 %v181
  %v588 = vpop.f32.mrf.mxu0
  %v589 = vadd.f32 %v444, %v588
  %v590 = vpop.f32.mrf.mxu0
  %591 = vmatprep.mubr.f32.mxu0 0.0
  %592 = vmatmul.mubr.f32.gmra.mxu0 %v184
  %v593 = vpop.f32.mrf.mxu0
  %v594 = vadd.f32 %v449, %v593
  %v595 = vpop.f32.mrf.mxu0
  %596 = vmatprep.mubr.f32.mxu0 0.0
  %597 = vmatmul.mubr.f32.gmra.mxu0 %v187
  %v598 = vpop.f32.mrf.mxu0
  %v599 = vadd.f32 %v454, %v598
  %v600 = vpop.f32.mrf.mxu0
  %601 = vmatprep.mubr.f32.mxu0 0.0
  %602 = vmatmul.mubr.f32.gmra.mxu0 %v190
  %v603 = vpop.f32.mrf.mxu0
  %v604 = vadd.f32 %v459, %v603
  %v605 = vpop.f32.mrf.mxu0
  %606 = vmatprep.mubr.f32.mxu0 0.0
  %607 = vmatmul.mubr.f32.gmra.mxu0 %v193
  %v608 = vpop.f32.mrf.mxu0
  %v609 = vadd.f32 %v464, %v608
  %v610 = vpop.f32.mrf.mxu0
  %611 = vmatprep.mubr.f32.mxu0 0.0
  %612 = vmatmul.mubr.f32.gmra.mxu0 %v196
  %v613 = vpop.f32.mrf.mxu0
  %v614 = vadd.f32 %v469, %v613
  %v615 = vpop.f32.mrf.mxu0
  %616 = vmatprep.mubr.f32.mxu0 0.0
  %617 = vmatmul.mubr.f32.gmra.mxu0 %v199
  %v618 = vpop.f32.mrf.mxu0
  %v619 = vadd.f32 %v474, %v618
  %v620 = vpop.f32.mrf.mxu0
  %621 = vmatprep.mubr.f32.mxu0 0.0
  %622 = vmatmul.mubr.f32.gmra.mxu0 %v202
  %v623 = vpop.f32.mrf.mxu0
  %v624 = vadd.f32 %v479, %v623
  %v625 = vpop.f32.mrf.mxu0
  %626 = vmatprep.mubr.f32.mxu0 0.0
  %627 = vmatmul.mubr.f32.gmra.mxu0 %v205
  %v628 = vpop.f32.mrf.mxu0
  %v629 = vadd.f32 %v484, %v628
  %v630 = vpop.f32.mrf.mxu0
  %631 = vmatprep.mubr.f32.mxu0 0.0
  %632 = vmatmul.mubr.f32.gmra.mxu0 %v208
  %v633 = vpop.f32.mrf.mxu0
  %v634 = vadd.f32 %v489, %v633
  %v635 = vpop.f32.mrf.mxu0
  %636 = vmatprep.mubr.f32.mxu0 0.0
  %637 = vmatmul.mubr.f32.gmra.mxu0 %v211
  %v638 = vpop.f32.mrf.mxu0
  %v639 = vadd.f32 %v494, %v638
  %v640 = vpop.f32.mrf.mxu0
  %641 = vmatprep.mubr.f32.mxu0 0.0
  %642 = vmatmul.mubr.f32.gmra.mxu0 %v214
  %v643 = vpop.f32.mrf.mxu0
  %v644 = vadd.f32 %v499, %v643
  %v645 = vpop.f32.mrf.mxu0
  %646 = vmatprep.mubr.f32.mxu0 0.0
  %647 = vmatmul.mubr.f32.gmra.mxu0 %v217
  %v648 = vpop.f32.mrf.mxu0
  %v649 = vadd.f32 %v504, %v648
  %v650 = vpop.f32.mrf.mxu0
  %651 = vmatprep.mubr.f32.mxu0 0.0
  %652 = vmatmul.mubr.f32.gmra.mxu0 %v220
  %v653 = vpop.f32.mrf.mxu0
  %v654 = vadd.f32 %v509, %v653
  %v655 = vpop.f32.mrf.mxu0
  %656 = vdwg.mxu0
  %v657 = vmax.f32 %v579, 0.0
  %v658 = vmax.f32 %v584, 0.0
  %v659 = vmax.f32 %v589, 0.0
  %v660 = vmax.f32 %v594, 0.0
  %v661 = vmax.f32 %v599, 0.0
  %v662 = vmax.f32 %v604, 0.0
  %v663 = vmax.f32 %v609, 0.0
  %v664 = vmax.f32 %v614, 0.0
  %v665 = vmax.f32 %v619, 0.0
  %v666 = vmax.f32 %v624, 0.0
  %v667 = vmax.f32 %v629, 0.0
  %v668 = vmax.f32 %v634, 0.0
  %v669 = vmax.f32 %v639, 0.0
  %v670 = vmax.f32 %v644, 0.0
  %v671 = vmax.f32 %v649, 0.0
  %v672 = vmax.f32 %v654, 0.0
  %673 = vst.msk [vmem:[%s3] sm:$0xff] %vm173, %v657
  %674 = vst.msk [vmem:[%s3 + $0x8] sm:$0xff] %vm173, %v658
  %675 = vst.msk [vmem:[%s3 + $0x10] sm:$0xff] %vm173, %v659
  %676 = vst.msk [vmem:[%s3 + $0x18] sm:$0xff] %vm173, %v660
  %677 = vst.msk [vmem:[%s3 + $0x20] sm:$0xff] %vm173, %v661
  %678 = vst.msk [vmem:[%s3 + $0x28] sm:$0xff] %vm173, %v662
  %679 = vst.msk [vmem:[%s3 + $0x30] sm:$0xff] %vm173, %v663
  %680 = vst.msk [vmem:[%s3 + $0x38] sm:$0xff] %vm173, %v664
  %681 = vst.msk [vmem:[%s3 + $0x40] sm:$0xff] %vm173, %v665
  %682 = vst.msk [vmem:[%s3 + $0x48] sm:$0xff] %vm173, %v666
  %683 = vst.msk [vmem:[%s3 + $0x50] sm:$0xff] %vm173, %v667
  %684 = vst.msk [vmem:[%s3 + $0x58] sm:$0xff] %vm173, %v668
  %685 = vst.msk [vmem:[%s3 + $0x60] sm:$0xff] %vm173, %v669
  %686 = vst.msk [vmem:[%s3 + $0x68] sm:$0xff] %vm173, %v670
  %687 = vst.msk [vmem:[%s3 + $0x70] sm:$0xff] %vm173, %v671
  %688 = vst.msk [vmem:[%s3 + $0x78] sm:$0xff] %vm173, %v672
  // Predicated region
  $region14: #{run.26} parent=0 // pred_check
    _
  $region15: #{run.26} parent=0 // pred_check_branch
    %690 = sbr.rel (0) target = $region17
  $region16: #{run.26} parent=0 // pred_region
    _
  $region17: #{run.26} parent=0 // pred_fallthru
    _
  // Predicated region
  $region18: #{run.26} parent=0 // pred_check
    _
  $region19: #{run.26} parent=0 // pred_check_branch
    %692 = sbr.rel (0) target = $region21
  $region20: #{run.26} parent=0 // pred_region
    _
  $region21: #{run.26} parent=0 // pred_fallthru
    _

// kernel: run.30
$region0: #{run.30}
  #allocation0 [shape = 'u32[]', space=smem, size = 0x4, offset = 0x4, fixed_abs, tag = 'smem constant byte address 0x4 - core index']
  #allocation1 [shape = 'u32[144,128]{1,0:T(1,128)}', space=vmem, size = 0x12000, scoped, tag = 'internal scratch']
  %s0 = inlined_call_operand.vmem [shape: f32[8,32], index: 0, kind: input, shape index: {}]
  %s1 = inlined_call_operand.vmem [shape: f32[32,64], index: 1, kind: input, shape index: {}]
  %s2 = inlined_call_operand.vmem [shape: f32[1,64], index: 2, kind: input, shape index: {}]
  %s3 = inlined_call_operand.vmem [shape: f32[8,64], index: 3, kind: output, shape index: {}]
  %s4 = sld [smem:[#allocation0]]
  $region22: #{run.30} parent=0
    _
  %s6 = ssub.s32 1, %s4
  %s7 = scalar_select 0, %s6, %s4
  // Predicated region
  $region2: #{run.30} parent=0 // pred_check
    _
  $region3: #{run.30} parent=0 // pred_check_branch
    %9 = sbr.rel (0) target = $region5
  $region4: #{run.30} parent=0 // pred_region
    _
  $region5: #{run.30} parent=0 // pred_fallthru
    _
  // Predicated region
  $region6: #{run.30} parent=0 // pred_check
    _
  $region7: #{run.30} parent=0 // pred_check_branch
    %11 = sbr.rel (0) target = $region9
  $region8: #{run.30} parent=0 // pred_region
    _
  $region9: #{run.30} parent=0 // pred_fallthru
    _
  // Predicated region
  $region10: #{run.30} parent=0 // pred_check
    _
  $region11: #{run.30} parent=0 // pred_check_branch
    %13 = sbr.rel (0) target = $region13
  $region12: #{run.30} parent=0 // pred_region
    _
  $region13: #{run.30} parent=0 // pred_fallthru
    _
  %v14 = vld [vmem:[%s0] sm:$0xff]
  %v15 = vld [vmem:[%s1] sm:$0xff]
  %v16 = vld [vmem:[%s1 + $0x8] sm:$0xff]
  %v17 = vld [vmem:[%s1 + $0x10] sm:$0xff]
  %v18 = vld [vmem:[%s1 + $0x18] sm:$0xff]
  %v19 = vld [vmem:[%s2] sm:$0x1]
  %v21 = vlaneseq
  %v22 = vshrl.u32 %v21, 7
  %v23 = vsub.s32 0, %v22
  %v24 = vrot.slane %v19, %v23
  %vm26 = vcmask 261120
  %v28 = vsel %vm26, %v14, 0
  %30 = vmatprep.subr.mxu0 0.0
  %31 = vmatpush1.msra.mxu0 0.0
  %32 = vmatprep.subr.mxu0 0.0
  %33 = vmatpush1.msra.mxu0 0.0
  %34 = vmatprep.subr.mxu0 0.0
  %35 = vmatpush1.msra.mxu0 0.0
  %36 = vmatprep.subr.mxu0 0.0
  %37 = vmatpush1.msra.mxu0 0.0
  %38 = vmatprep.subr.mxu0 0.0
  %39 = vmatpush1.msra.mxu0 0.0
  %40 = vmatprep.subr.mxu0 0.0
  %41 = vmatpush1.msra.mxu0 0.0
  %42 = vmatprep.subr.mxu0 0.0
  %43 = vmatpush1.msra.mxu0 0.0
  %44 = vmatprep.subr.mxu0 0.0
  %45 = vmatpush1.msra.mxu0 0.0
  %46 = vmatprep.subr.mxu0 0.0
  %47 = vmatpush1.msra.mxu0 0.0
  %48 = vmatprep.subr.mxu0 0.0
  %49 = vmatpush1.msra.mxu0 0.0
  %50 = vmatprep.subr.mxu0 0.0
  %51 = vmatpush1.msra.mxu0 0.0
  %52 = vmatprep.subr.mxu0 0.0
  %53 = vmatpush1.msra.mxu0 0.0
  %54 = vmatprep.subr.mxu0 0.0
  %55 = vmatpush1.msra.mxu0 %v18
  %56 = vmatprep.subr.mxu0 0.0
  %57 = vmatpush1.msra.mxu0 %v17
  %58 = vmatprep.subr.mxu0 0.0
  %59 = vmatpush1.msra.mxu0 %v16
  %60 = vmatprep.subr.mxu0 0.0
  %61 = vmatpush1.msra.mxu0 %v15
  %62 = vmatprep.subr.mxu0 0.0
  %63 = vmatpush2.msra.mxu0 0.0
  %64 = vmatprep.subr.mxu0 0.0
  %65 = vmatpush2.msra.mxu0 0.0
  %66 = vmatprep.subr.mxu0 0.0
  %67 = vmatpush2.msra.mxu0 0.0
  %68 = vmatprep.subr.mxu0 0.0
  %69 = vmatpush2.msra.mxu0 0.0
  %70 = vmatprep.subr.mxu0 0.0
  %71 = vmatpush2.msra.mxu0 0.0
  %72 = vmatprep.subr.mxu0 0.0
  %73 = vmatpush2.msra.mxu0 0.0
  %74 = vmatprep.subr.mxu0 0.0
  %75 = vmatpush2.msra.mxu0 0.0
  %76 = vmatprep.subr.mxu0 0.0
  %77 = vmatpush2.msra.mxu0 0.0
  %78 = vmatprep.subr.mxu0 0.0
  %79 = vmatpush2.msra.mxu0 0.0
  %80 = vmatprep.subr.mxu0 0.0
  %81 = vmatpush2.msra.mxu0 0.0
  %82 = vmatprep.subr.mxu0 0.0
  %83 = vmatpush2.msra.mxu0 0.0
  %84 = vmatprep.subr.mxu0 0.0
  %85 = vmatpush2.msra.mxu0 0.0
  %86 = vmatprep.subr.mxu0 0.0
  %87 = vmatpush2.msra.mxu0 0.0
  %88 = vmatprep.subr.mxu0 0.0
  %89 = vmatpush2.msra.mxu0 0.0
  %90 = vmatprep.subr.mxu0 0.0
  %91 = vmatpush2.msra.mxu0 0.0
  %92 = vmatprep.subr.mxu0 0.0
  %93 = vmatpush2.msra.mxu0 0.0
  %94 = vmatprep.mubr.f32.mxu0 0.0
  %95 = vmatmul.mubr.f32.gmra.mxu0 %v28
  %v96 = vpop.f32.mrf.mxu0
  %v97 = vadd.f32 %v24, %v96
  %v98 = vpop.f32.mrf.mxu0
  %99 = vdwg.mxu0
  %vm100 = vcmask 523264
  %101 = vst.msk [vmem:[%s3] sm:$0xff] %vm100, %v97
  // Predicated region
  $region14: #{run.30} parent=0 // pred_check
    _
  $region15: #{run.30} parent=0 // pred_check_branch
    %103 = sbr.rel (0) target = $region17
  $region16: #{run.30} parent=0 // pred_region
    _
  $region17: #{run.30} parent=0 // pred_fallthru
    _
  // Predicated region
  $region18: #{run.30} parent=0 // pred_check
    _
  $region19: #{run.30} parent=0 // pred_check_branch
    %105 = sbr.rel (0) target = $region21
  $region20: #{run.30} parent=0 // pred_region
    _
  $region21: #{run.30} parent=0 // pred_fallthru
    _

// kernel: run.28
$region0: #{run.28}
  #allocation0 [shape = 'u32[]', space=smem, size = 0x4, offset = 0x4, fixed_abs, tag = 'smem constant byte address 0x4 - core index']
  #allocation1 [shape = 'u32[144,128]{1,0:T(1,128)}', space=vmem, size = 0x12000, scoped, tag = 'internal scratch']
  %s0 = inlined_call_operand.vmem [shape: f32[8,1024], index: 0, kind: input, shape index: {}]
  %s1 = inlined_call_operand.vmem [shape: f32[1024,32], index: 1, kind: input, shape index: {}]
  %s2 = inlined_call_operand.vmem [shape: f32[1,32], index: 2, kind: input, shape index: {}]
  %s3 = inlined_call_operand.vmem [shape: f32[8,32], index: 3, kind: output, shape index: {}]
  %s4 = sld [smem:[#allocation0]]
  $region22: #{run.28} parent=0
    _
  %s6 = ssub.s32 1, %s4
  %s7 = scalar_select 0, %s6, %s4
  // Predicated region
  $region2: #{run.28} parent=0 // pred_check
    _
  $region3: #{run.28} parent=0 // pred_check_branch
    %9 = sbr.rel (0) target = $region5
  $region4: #{run.28} parent=0 // pred_region
    _
  $region5: #{run.28} parent=0 // pred_fallthru
    _
  // Predicated region
  $region6: #{run.28} parent=0 // pred_check
    _
  $region7: #{run.28} parent=0 // pred_check_branch
    %11 = sbr.rel (0) target = $region9
  $region8: #{run.28} parent=0 // pred_region
    _
  $region9: #{run.28} parent=0 // pred_fallthru
    _
  // Predicated region
  $region10: #{run.28} parent=0 // pred_check
    _
  $region11: #{run.28} parent=0 // pred_check_branch
    %13 = sbr.rel (0) target = $region13
  $region12: #{run.28} parent=0 // pred_region
    _
  $region13: #{run.28} parent=0 // pred_fallthru
    _
  %v14 = vld [vmem:[%s0] sm:$0xff]
  %v15 = vld [vmem:[%s0 + $0x8] sm:$0xff]
  %v16 = vld [vmem:[%s0 + $0x10] sm:$0xff]
  %v17 = vld [vmem:[%s0 + $0x18] sm:$0xff]
  %v18 = vld [vmem:[%s0 + $0x20] sm:$0xff]
  %v19 = vld [vmem:[%s0 + $0x28] sm:$0xff]
  %v20 = vld [vmem:[%s0 + $0x30] sm:$0xff]
  %v21 = vld [vmem:[%s0 + $0x38] sm:$0xff]
  %v22 = vld [vmem:[%s1] sm:$0xff]
  %v23 = vld [vmem:[%s1 + $0x8] sm:$0xff]
  %v24 = vld [vmem:[%s1 + $0x10] sm:$0xff]
  %v25 = vld [vmem:[%s1 + $0x18] sm:$0xff]
  %v26 = vld [vmem:[%s1 + $0x20] sm:$0xff]
  %v27 = vld [vmem:[%s1 + $0x28] sm:$0xff]
  %v28 = vld [vmem:[%s1 + $0x30] sm:$0xff]
  %v29 = vld [vmem:[%s1 + $0x38] sm:$0xff]
  %v30 = vld [vmem:[%s1 + $0x40] sm:$0xff]
  %v31 = vld [vmem:[%s1 + $0x48] sm:$0xff]
  %v32 = vld [vmem:[%s1 + $0x50] sm:$0xff]
  %v33 = vld [vmem:[%s1 + $0x58] sm:$0xff]
  %v34 = vld [vmem:[%s1 + $0x60] sm:$0xff]
  %v35 = vld [vmem:[%s1 + $0x68] sm:$0xff]
  %v36 = vld [vmem:[%s1 + $0x70] sm:$0xff]
  %v37 = vld [vmem:[%s1 + $0x78] sm:$0xff]
  %v38 = vld [vmem:[%s1 + $0x80] sm:$0xff]
  %v39 = vld [vmem:[%s1 + $0x88] sm:$0xff]
  %v40 = vld [vmem:[%s1 + $0x90] sm:$0xff]
  %v41 = vld [vmem:[%s1 + $0x98] sm:$0xff]
  %v42 = vld [vmem:[%s1 + $0xa0] sm:$0xff]
  %v43 = vld [vmem:[%s1 + $0xa8] sm:$0xff]
  %v44 = vld [vmem:[%s1 + $0xb0] sm:$0xff]
  %v45 = vld [vmem:[%s1 + $0xb8] sm:$0xff]
  %v46 = vld [vmem:[%s1 + $0xc0] sm:$0xff]
  %v47 = vld [vmem:[%s1 + $0xc8] sm:$0xff]
  %v48 = vld [vmem:[%s1 + $0xd0] sm:$0xff]
  %v49 = vld [vmem:[%s1 + $0xd8] sm:$0xff]
  %v50 = vld [vmem:[%s1 + $0xe0] sm:$0xff]
  %v51 = vld [vmem:[%s1 + $0xe8] sm:$0xff]
  %v52 = vld [vmem:[%s1 + $0xf0] sm:$0xff]
  %v53 = vld [vmem:[%s1 + $0xf8] sm:$0xff]
  %v54 = vld [vmem:[%s1 + $0x100] sm:$0xff]
  %v55 = vld [vmem:[%s1 + $0x108] sm:$0xff]
  %v56 = vld [vmem:[%s1 + $0x110] sm:$0xff]
  %v57 = vld [vmem:[%s1 + $0x118] sm:$0xff]
  %v58 = vld [vmem:[%s1 + $0x120] sm:$0xff]
  %v59 = vld [vmem:[%s1 + $0x128] sm:$0xff]
  %v60 = vld [vmem:[%s1 + $0x130] sm:$0xff]
  %v61 = vld [vmem:[%s1 + $0x138] sm:$0xff]
  %v62 = vld [vmem:[%s1 + $0x140] sm:$0xff]
  %v63 = vld [vmem:[%s1 + $0x148] sm:$0xff]
  %v64 = vld [vmem:[%s1 + $0x150] sm:$0xff]
  %v65 = vld [vmem:[%s1 + $0x158] sm:$0xff]
  %v66 = vld [vmem:[%s1 + $0x160] sm:$0xff]
  %v67 = vld [vmem:[%s1 + $0x168] sm:$0xff]
  %v68 = vld [vmem:[%s1 + $0x170] sm:$0xff]
  %v69 = vld [vmem:[%s1 + $0x178] sm:$0xff]
  %v70 = vld [vmem:[%s1 + $0x180] sm:$0xff]
  %v71 = vld [vmem:[%s1 + $0x188] sm:$0xff]
  %v72 = vld [vmem:[%s1 + $0x190] sm:$0xff]
  %v73 = vld [vmem:[%s1 + $0x198] sm:$0xff]
  %v74 = vld [vmem:[%s1 + $0x1a0] sm:$0xff]
  %v75 = vld [vmem:[%s1 + $0x1a8] sm:$0xff]
  %v76 = vld [vmem:[%s1 + $0x1b0] sm:$0xff]
  %v77 = vld [vmem:[%s1 + $0x1b8] sm:$0xff]
  %v78 = vld [vmem:[%s1 + $0x1c0] sm:$0xff]
  %v79 = vld [vmem:[%s1 + $0x1c8] sm:$0xff]
  %v80 = vld [vmem:[%s1 + $0x1d0] sm:$0xff]
  %v81 = vld [vmem:[%s1 + $0x1d8] sm:$0xff]
  %v82 = vld [vmem:[%s1 + $0x1e0] sm:$0xff]
  %v83 = vld [vmem:[%s1 + $0x1e8] sm:$0xff]
  %v84 = vld [vmem:[%s1 + $0x1f0] sm:$0xff]
  %v85 = vld [vmem:[%s1 + $0x1f8] sm:$0xff]
  %v86 = vld [vmem:[%s1 + $0x200] sm:$0xff]
  %v87 = vld [vmem:[%s1 + $0x208] sm:$0xff]
  %v88 = vld [vmem:[%s1 + $0x210] sm:$0xff]
  %v89 = vld [vmem:[%s1 + $0x218] sm:$0xff]
  %v90 = vld [vmem:[%s1 + $0x220] sm:$0xff]
  %v91 = vld [vmem:[%s1 + $0x228] sm:$0xff]
  %v92 = vld [vmem:[%s1 + $0x230] sm:$0xff]
  %v93 = vld [vmem:[%s1 + $0x238] sm:$0xff]
  %v94 = vld [vmem:[%s1 + $0x240] sm:$0xff]
  %v95 = vld [vmem:[%s1 + $0x248] sm:$0xff]
  %v96 = vld [vmem:[%s1 + $0x250] sm:$0xff]
  %v97 = vld [vmem:[%s1 + $0x258] sm:$0xff]
  %v98 = vld [vmem:[%s1 + $0x260] sm:$0xff]
  %v99 = vld [vmem:[%s1 + $0x268] sm:$0xff]
  %v100 = vld [vmem:[%s1 + $0x270] sm:$0xff]
  %v101 = vld [vmem:[%s1 + $0x278] sm:$0xff]
  %v102 = vld [vmem:[%s1 + $0x280] sm:$0xff]
  %v103 = vld [vmem:[%s1 + $0x288] sm:$0xff]
  %v104 = vld [vmem:[%s1 + $0x290] sm:$0xff]
  %v105 = vld [vmem:[%s1 + $0x298] sm:$0xff]
  %v106 = vld [vmem:[%s1 + $0x2a0] sm:$0xff]
  %v107 = vld [vmem:[%s1 + $0x2a8] sm:$0xff]
  %v108 = vld [vmem:[%s1 + $0x2b0] sm:$0xff]
  %v109 = vld [vmem:[%s1 + $0x2b8] sm:$0xff]
  %v110 = vld [vmem:[%s1 + $0x2c0] sm:$0xff]
  %v111 = vld [vmem:[%s1 + $0x2c8] sm:$0xff]
  %v112 = vld [vmem:[%s1 + $0x2d0] sm:$0xff]
  %v113 = vld [vmem:[%s1 + $0x2d8] sm:$0xff]
  %v114 = vld [vmem:[%s1 + $0x2e0] sm:$0xff]
  %v115 = vld [vmem:[%s1 + $0x2e8] sm:$0xff]
  %v116 = vld [vmem:[%s1 + $0x2f0] sm:$0xff]
  %v117 = vld [vmem:[%s1 + $0x2f8] sm:$0xff]
  %v118 = vld [vmem:[%s1 + $0x300] sm:$0xff]
  %v119 = vld [vmem:[%s1 + $0x308] sm:$0xff]
  %v120 = vld [vmem:[%s1 + $0x310] sm:$0xff]
  %v121 = vld [vmem:[%s1 + $0x318] sm:$0xff]
  %v122 = vld [vmem:[%s1 + $0x320] sm:$0xff]
  %v123 = vld [vmem:[%s1 + $0x328] sm:$0xff]
  %v124 = vld [vmem:[%s1 + $0x330] sm:$0xff]
  %v125 = vld [vmem:[%s1 + $0x338] sm:$0xff]
  %v126 = vld [vmem:[%s1 + $0x340] sm:$0xff]
  %v127 = vld [vmem:[%s1 + $0x348] sm:$0xff]
  %v128 = vld [vmem:[%s1 + $0x350] sm:$0xff]
  %v129 = vld [vmem:[%s1 + $0x358] sm:$0xff]
  %v130 = vld [vmem:[%s1 + $0x360] sm:$0xff]
  %v131 = vld [vmem:[%s1 + $0x368] sm:$0xff]
  %v132 = vld [vmem:[%s1 + $0x370] sm:$0xff]
  %v133 = vld [vmem:[%s1 + $0x378] sm:$0xff]
  %v134 = vld [vmem:[%s1 + $0x380] sm:$0xff]
  %v135 = vld [vmem:[%s1 + $0x388] sm:$0xff]
  %v136 = vld [vmem:[%s1 + $0x390] sm:$0xff]
  %v137 = vld [vmem:[%s1 + $0x398] sm:$0xff]
  %v138 = vld [vmem:[%s1 + $0x3a0] sm:$0xff]
  %v139 = vld [vmem:[%s1 + $0x3a8] sm:$0xff]
  %v140 = vld [vmem:[%s1 + $0x3b0] sm:$0xff]
  %v141 = vld [vmem:[%s1 + $0x3b8] sm:$0xff]
  %v142 = vld [vmem:[%s1 + $0x3c0] sm:$0xff]
  %v143 = vld [vmem:[%s1 + $0x3c8] sm:$0xff]
  %v144 = vld [vmem:[%s1 + $0x3d0] sm:$0xff]
  %v145 = vld [vmem:[%s1 + $0x3d8] sm:$0xff]
  %v146 = vld [vmem:[%s1 + $0x3e0] sm:$0xff]
  %v147 = vld [vmem:[%s1 + $0x3e8] sm:$0xff]
  %v148 = vld [vmem:[%s1 + $0x3f0] sm:$0xff]
  %v149 = vld [vmem:[%s1 + $0x3f8] sm:$0xff]
  %v150 = vld [vmem:[%s2] sm:$0x1]
  %v152 = vlaneseq
  %v153 = vshrl.u32 %v152, 7
  %v154 = vsub.s32 0, %v153
  %v155 = vrot.slane %v150, %v154
  %157 = vmatprep.subr.mxu0 0.0
  %158 = vmatpush1.msra.mxu0 %v37
  %159 = vmatprep.subr.mxu0 0.0
  %160 = vmatpush1.msra.mxu0 %v36
  %161 = vmatprep.subr.mxu0 0.0
  %162 = vmatpush1.msra.mxu0 %v35
  %163 = vmatprep.subr.mxu0 0.0
  %164 = vmatpush1.msra.mxu0 %v34
  %165 = vmatprep.subr.mxu0 0.0
  %166 = vmatpush1.msra.mxu0 %v33
  %167 = vmatprep.subr.mxu0 0.0
  %168 = vmatpush1.msra.mxu0 %v32
  %169 = vmatprep.subr.mxu0 0.0
  %170 = vmatpush1.msra.mxu0 %v31
  %171 = vmatprep.subr.mxu0 0.0
  %172 = vmatpush1.msra.mxu0 %v30
  %173 = vmatprep.subr.mxu0 0.0
  %174 = vmatpush1.msra.mxu0 %v29
  %175 = vmatprep.subr.mxu0 0.0
  %176 = vmatpush1.msra.mxu0 %v28
  %177 = vmatprep.subr.mxu0 0.0
  %178 = vmatpush1.msra.mxu0 %v27
  %179 = vmatprep.subr.mxu0 0.0
  %180 = vmatpush1.msra.mxu0 %v26
  %181 = vmatprep.subr.mxu0 0.0
  %182 = vmatpush1.msra.mxu0 %v25
  %183 = vmatprep.subr.mxu0 0.0
  %184 = vmatpush1.msra.mxu0 %v24
  %185 = vmatprep.subr.mxu0 0.0
  %186 = vmatpush1.msra.mxu0 %v23
  %187 = vmatprep.subr.mxu0 0.0
  %188 = vmatpush1.msra.mxu0 %v22
  %189 = vmatprep.subr.mxu0 0.0
  %190 = vmatpush2.msra.mxu0 %v53
  %191 = vmatprep.subr.mxu0 0.0
  %192 = vmatpush2.msra.mxu0 %v52
  %193 = vmatprep.subr.mxu0 0.0
  %194 = vmatpush2.msra.mxu0 %v51
  %195 = vmatprep.subr.mxu0 0.0
  %196 = vmatpush2.msra.mxu0 %v50
  %197 = vmatprep.subr.mxu0 0.0
  %198 = vmatpush2.msra.mxu0 %v49
  %199 = vmatprep.subr.mxu0 0.0
  %200 = vmatpush2.msra.mxu0 %v48
  %201 = vmatprep.subr.mxu0 0.0
  %202 = vmatpush2.msra.mxu0 %v47
  %203 = vmatprep.subr.mxu0 0.0
  %204 = vmatpush2.msra.mxu0 %v46
  %205 = vmatprep.subr.mxu0 0.0
  %206 = vmatpush2.msra.mxu0 %v45
  %207 = vmatprep.subr.mxu0 0.0
  %208 = vmatpush2.msra.mxu0 %v44
  %209 = vmatprep.subr.mxu0 0.0
  %210 = vmatpush2.msra.mxu0 %v43
  %211 = vmatprep.subr.mxu0 0.0
  %212 = vmatpush2.msra.mxu0 %v42
  %213 = vmatprep.subr.mxu0 0.0
  %214 = vmatpush2.msra.mxu0 %v41
  %215 = vmatprep.subr.mxu0 0.0
  %216 = vmatpush2.msra.mxu0 %v40
  %217 = vmatprep.subr.mxu0 0.0
  %218 = vmatpush2.msra.mxu0 %v39
  %219 = vmatprep.subr.mxu0 0.0
  %220 = vmatpush2.msra.mxu0 %v38
  %221 = vmatprep.mubr.f32.mxu0 %v15
  %222 = vmatmul.mubr.f32.gmra.mxu0 %v14
  %v223 = vpop.f32.mrf.mxu0
  %v224 = vadd.f32 %v155, %v223
  %v225 = vpop.f32.mrf.mxu0
  %226 = vdwg.mxu0
  %227 = vmatprep.subr.mxu0 0.0
  %228 = vmatpush1.msra.mxu0 %v69
  %229 = vmatprep.subr.mxu0 0.0
  %230 = vmatpush1.msra.mxu0 %v68
  %231 = vmatprep.subr.mxu0 0.0
  %232 = vmatpush1.msra.mxu0 %v67
  %233 = vmatprep.subr.mxu0 0.0
  %234 = vmatpush1.msra.mxu0 %v66
  %235 = vmatprep.subr.mxu0 0.0
  %236 = vmatpush1.msra.mxu0 %v65
  %237 = vmatprep.subr.mxu0 0.0
  %238 = vmatpush1.msra.mxu0 %v64
  %239 = vmatprep.subr.mxu0 0.0
  %240 = vmatpush1.msra.mxu0 %v63
  %241 = vmatprep.subr.mxu0 0.0
  %242 = vmatpush1.msra.mxu0 %v62
  %243 = vmatprep.subr.mxu0 0.0
  %244 = vmatpush1.msra.mxu0 %v61
  %245 = vmatprep.subr.mxu0 0.0
  %246 = vmatpush1.msra.mxu0 %v60
  %247 = vmatprep.subr.mxu0 0.0
  %248 = vmatpush1.msra.mxu0 %v59
  %249 = vmatprep.subr.mxu0 0.0
  %250 = vmatpush1.msra.mxu0 %v58
  %251 = vmatprep.subr.mxu0 0.0
  %252 = vmatpush1.msra.mxu0 %v57
  %253 = vmatprep.subr.mxu0 0.0
  %254 = vmatpush1.msra.mxu0 %v56
  %255 = vmatprep.subr.mxu0 0.0
  %256 = vmatpush1.msra.mxu0 %v55
  %257 = vmatprep.subr.mxu0 0.0
  %258 = vmatpush1.msra.mxu0 %v54
  %259 = vmatprep.subr.mxu0 0.0
  %260 = vmatpush2.msra.mxu0 %v85
  %261 = vmatprep.subr.mxu0 0.0
  %262 = vmatpush2.msra.mxu0 %v84
  %263 = vmatprep.subr.mxu0 0.0
  %264 = vmatpush2.msra.mxu0 %v83
  %265 = vmatprep.subr.mxu0 0.0
  %266 = vmatpush2.msra.mxu0 %v82
  %267 = vmatprep.subr.mxu0 0.0
  %268 = vmatpush2.msra.mxu0 %v81
  %269 = vmatprep.subr.mxu0 0.0
  %270 = vmatpush2.msra.mxu0 %v80
  %271 = vmatprep.subr.mxu0 0.0
  %272 = vmatpush2.msra.mxu0 %v79
  %273 = vmatprep.subr.mxu0 0.0
  %274 = vmatpush2.msra.mxu0 %v78
  %275 = vmatprep.subr.mxu0 0.0
  %276 = vmatpush2.msra.mxu0 %v77
  %277 = vmatprep.subr.mxu0 0.0
  %278 = vmatpush2.msra.mxu0 %v76
  %279 = vmatprep.subr.mxu0 0.0
  %280 = vmatpush2.msra.mxu0 %v75
  %281 = vmatprep.subr.mxu0 0.0
  %282 = vmatpush2.msra.mxu0 %v74
  %283 = vmatprep.subr.mxu0 0.0
  %284 = vmatpush2.msra.mxu0 %v73
  %285 = vmatprep.subr.mxu0 0.0
  %286 = vmatpush2.msra.mxu0 %v72
  %287 = vmatprep.subr.mxu0 0.0
  %288 = vmatpush2.msra.mxu0 %v71
  %289 = vmatprep.subr.mxu0 0.0
  %290 = vmatpush2.msra.mxu0 %v70
  %291 = vmatprep.mubr.f32.mxu0 %v17
  %292 = vmatmul.mubr.f32.gmra.mxu0 %v16
  %v293 = vpop.f32.mrf.mxu0
  %v294 = vadd.f32 %v224, %v293
  %v295 = vpop.f32.mrf.mxu0
  %296 = vdwg.mxu0
  %297 = vmatprep.subr.mxu0 0.0
  %298 = vmatpush1.msra.mxu0 %v101
  %299 = vmatprep.subr.mxu0 0.0
  %300 = vmatpush1.msra.mxu0 %v100
  %301 = vmatprep.subr.mxu0 0.0
  %302 = vmatpush1.msra.mxu0 %v99
  %303 = vmatprep.subr.mxu0 0.0
  %304 = vmatpush1.msra.mxu0 %v98
  %305 = vmatprep.subr.mxu0 0.0
  %306 = vmatpush1.msra.mxu0 %v97
  %307 = vmatprep.subr.mxu0 0.0
  %308 = vmatpush1.msra.mxu0 %v96
  %309 = vmatprep.subr.mxu0 0.0
  %310 = vmatpush1.msra.mxu0 %v95
  %311 = vmatprep.subr.mxu0 0.0
  %312 = vmatpush1.msra.mxu0 %v94
  %313 = vmatprep.subr.mxu0 0.0
  %314 = vmatpush1.msra.mxu0 %v93
  %315 = vmatprep.subr.mxu0 0.0
  %316 = vmatpush1.msra.mxu0 %v92
  %317 = vmatprep.subr.mxu0 0.0
  %318 = vmatpush1.msra.mxu0 %v91
  %319 = vmatprep.subr.mxu0 0.0
  %320 = vmatpush1.msra.mxu0 %v90
  %321 = vmatprep.subr.mxu0 0.0
  %322 = vmatpush1.msra.mxu0 %v89
  %323 = vmatprep.subr.mxu0 0.0
  %324 = vmatpush1.msra.mxu0 %v88
  %325 = vmatprep.subr.mxu0 0.0
  %326 = vmatpush1.msra.mxu0 %v87
  %327 = vmatprep.subr.mxu0 0.0
  %328 = vmatpush1.msra.mxu0 %v86
  %329 = vmatprep.subr.mxu0 0.0
  %330 = vmatpush2.msra.mxu0 %v117
  %331 = vmatprep.subr.mxu0 0.0
  %332 = vmatpush2.msra.mxu0 %v116
  %333 = vmatprep.subr.mxu0 0.0
  %334 = vmatpush2.msra.mxu0 %v115
  %335 = vmatprep.subr.mxu0 0.0
  %336 = vmatpush2.msra.mxu0 %v114
  %337 = vmatprep.subr.mxu0 0.0
  %338 = vmatpush2.msra.mxu0 %v113
  %339 = vmatprep.subr.mxu0 0.0
  %340 = vmatpush2.msra.mxu0 %v112
  %341 = vmatprep.subr.mxu0 0.0
  %342 = vmatpush2.msra.mxu0 %v111
  %343 = vmatprep.subr.mxu0 0.0
  %344 = vmatpush2.msra.mxu0 %v110
  %345 = vmatprep.subr.mxu0 0.0
  %346 = vmatpush2.msra.mxu0 %v109
  %347 = vmatprep.subr.mxu0 0.0
  %348 = vmatpush2.msra.mxu0 %v108
  %349 = vmatprep.subr.mxu0 0.0
  %350 = vmatpush2.msra.mxu0 %v107
  %351 = vmatprep.subr.mxu0 0.0
  %352 = vmatpush2.msra.mxu0 %v106
  %353 = vmatprep.subr.mxu0 0.0
  %354 = vmatpush2.msra.mxu0 %v105
  %355 = vmatprep.subr.mxu0 0.0
  %356 = vmatpush2.msra.mxu0 %v104
  %357 = vmatprep.subr.mxu0 0.0
  %358 = vmatpush2.msra.mxu0 %v103
  %359 = vmatprep.subr.mxu0 0.0
  %360 = vmatpush2.msra.mxu0 %v102
  %361 = vmatprep.mubr.f32.mxu0 %v19
  %362 = vmatmul.mubr.f32.gmra.mxu0 %v18
  %v363 = vpop.f32.mrf.mxu0
  %v364 = vadd.f32 %v294, %v363
  %v365 = vpop.f32.mrf.mxu0
  %366 = vdwg.mxu0
  %367 = vmatprep.subr.mxu0 0.0
  %368 = vmatpush1.msra.mxu0 %v133
  %369 = vmatprep.subr.mxu0 0.0
  %370 = vmatpush1.msra.mxu0 %v132
  %371 = vmatprep.subr.mxu0 0.0
  %372 = vmatpush1.msra.mxu0 %v131
  %373 = vmatprep.subr.mxu0 0.0
  %374 = vmatpush1.msra.mxu0 %v130
  %375 = vmatprep.subr.mxu0 0.0
  %376 = vmatpush1.msra.mxu0 %v129
  %377 = vmatprep.subr.mxu0 0.0
  %378 = vmatpush1.msra.mxu0 %v128
  %379 = vmatprep.subr.mxu0 0.0
  %380 = vmatpush1.msra.mxu0 %v127
  %381 = vmatprep.subr.mxu0 0.0
  %382 = vmatpush1.msra.mxu0 %v126
  %383 = vmatprep.subr.mxu0 0.0
  %384 = vmatpush1.msra.mxu0 %v125
  %385 = vmatprep.subr.mxu0 0.0
  %386 = vmatpush1.msra.mxu0 %v124
  %387 = vmatprep.subr.mxu0 0.0
  %388 = vmatpush1.msra.mxu0 %v123
  %389 = vmatprep.subr.mxu0 0.0
  %390 = vmatpush1.msra.mxu0 %v122
  %391 = vmatprep.subr.mxu0 0.0
  %392 = vmatpush1.msra.mxu0 %v121
  %393 = vmatprep.subr.mxu0 0.0
  %394 = vmatpush1.msra.mxu0 %v120
  %395 = vmatprep.subr.mxu0 0.0
  %396 = vmatpush1.msra.mxu0 %v119
  %397 = vmatprep.subr.mxu0 0.0
  %398 = vmatpush1.msra.mxu0 %v118
  %399 = vmatprep.subr.mxu0 0.0
  %400 = vmatpush2.msra.mxu0 %v149
  %401 = vmatprep.subr.mxu0 0.0
  %402 = vmatpush2.msra.mxu0 %v148
  %403 = vmatprep.subr.mxu0 0.0
  %404 = vmatpush2.msra.mxu0 %v147
  %405 = vmatprep.subr.mxu0 0.0
  %406 = vmatpush2.msra.mxu0 %v146
  %407 = vmatprep.subr.mxu0 0.0
  %408 = vmatpush2.msra.mxu0 %v145
  %409 = vmatprep.subr.mxu0 0.0
  %410 = vmatpush2.msra.mxu0 %v144
  %411 = vmatprep.subr.mxu0 0.0
  %412 = vmatpush2.msra.mxu0 %v143
  %413 = vmatprep.subr.mxu0 0.0
  %414 = vmatpush2.msra.mxu0 %v142
  %415 = vmatprep.subr.mxu0 0.0
  %416 = vmatpush2.msra.mxu0 %v141
  %417 = vmatprep.subr.mxu0 0.0
  %418 = vmatpush2.msra.mxu0 %v140
  %419 = vmatprep.subr.mxu0 0.0
  %420 = vmatpush2.msra.mxu0 %v139
  %421 = vmatprep.subr.mxu0 0.0
  %422 = vmatpush2.msra.mxu0 %v138
  %423 = vmatprep.subr.mxu0 0.0
  %424 = vmatpush2.msra.mxu0 %v137
  %425 = vmatprep.subr.mxu0 0.0
  %426 = vmatpush2.msra.mxu0 %v136
  %427 = vmatprep.subr.mxu0 0.0
  %428 = vmatpush2.msra.mxu0 %v135
  %429 = vmatprep.subr.mxu0 0.0
  %430 = vmatpush2.msra.mxu0 %v134
  %431 = vmatprep.mubr.f32.mxu0 %v21
  %432 = vmatmul.mubr.f32.gmra.mxu0 %v20
  %v433 = vpop.f32.mrf.mxu0
  %v434 = vadd.f32 %v364, %v433
  %v435 = vpop.f32.mrf.mxu0
  %436 = vdwg.mxu0
  %v437 = vmax.f32 %v434, 0.0
  %vm438 = vcmask 261120
  %439 = vst.msk [vmem:[%s3] sm:$0xff] %vm438, %v437
  // Predicated region
  $region14: #{run.28} parent=0 // pred_check
    _
  $region15: #{run.28} parent=0 // pred_check_branch
    %441 = sbr.rel (0) target = $region17
  $region16: #{run.28} parent=0 // pred_region
    _
  $region17: #{run.28} parent=0 // pred_fallthru
    _
  // Predicated region
  $region18: #{run.28} parent=0 // pred_check
    _
  $region19: #{run.28} parent=0 // pred_check_branch
    %443 = sbr.rel (0) target = $region21
  $region20: #{run.28} parent=0 // pred_region
    _
  $region21: #{run.28} parent=0 // pred_fallthru
    _

// kernel: run.29
$region0: #{run.29}
  #allocation0 [shape = 'u32[]', space=smem, size = 0x4, offset = 0x4, fixed_abs, tag = 'smem constant byte address 0x4 - core index']
  #allocation1 [shape = 'u32[144,128]{1,0:T(1,128)}', space=vmem, size = 0x12000, scoped, tag = 'internal scratch']
  %s0 = inlined_call_operand.vmem [shape: f32[8,32], index: 0, kind: input, shape index: {}]
  %s1 = inlined_call_operand.vmem [shape: f32[32,32], index: 1, kind: input, shape index: {}]
  %s2 = inlined_call_operand.vmem [shape: f32[1,32], index: 2, kind: input, shape index: {}]
  %s3 = inlined_call_operand.vmem [shape: f32[8,32], index: 3, kind: output, shape index: {}]
  %s4 = sld [smem:[#allocation0]]
  $region22: #{run.29} parent=0
    _
  %s6 = ssub.s32 1, %s4
  %s7 = scalar_select 0, %s6, %s4
  // Predicated region
  $region2: #{run.29} parent=0 // pred_check
    _
  $region3: #{run.29} parent=0 // pred_check_branch
    %9 = sbr.rel (0) target = $region5
  $region4: #{run.29} parent=0 // pred_region
    _
  $region5: #{run.29} parent=0 // pred_fallthru
    _
  // Predicated region
  $region6: #{run.29} parent=0 // pred_check
    _
  $region7: #{run.29} parent=0 // pred_check_branch
    %11 = sbr.rel (0) target = $region9
  $region8: #{run.29} parent=0 // pred_region
    _
  $region9: #{run.29} parent=0 // pred_fallthru
    _
  // Predicated region
  $region10: #{run.29} parent=0 // pred_check
    _
  $region11: #{run.29} parent=0 // pred_check_branch
    %13 = sbr.rel (0) target = $region13
  $region12: #{run.29} parent=0 // pred_region
    _
  $region13: #{run.29} parent=0 // pred_fallthru
    _
  %v14 = vld [vmem:[%s0] sm:$0xff]
  %v15 = vld [vmem:[%s1] sm:$0xff]
  %v16 = vld [vmem:[%s1 + $0x8] sm:$0xff]
  %v17 = vld [vmem:[%s1 + $0x10] sm:$0xff]
  %v18 = vld [vmem:[%s1 + $0x18] sm:$0xff]
  %v19 = vld [vmem:[%s2] sm:$0x1]
  %v21 = vlaneseq
  %v22 = vshrl.u32 %v21, 7
  %v23 = vsub.s32 0, %v22
  %v24 = vrot.slane %v19, %v23
  %vm26 = vcmask 261120
  %v28 = vsel %vm26, %v14, 0
  %30 = vmatprep.subr.mxu0 0.0
  %31 = vmatpush1.msra.mxu0 0.0
  %32 = vmatprep.subr.mxu0 0.0
  %33 = vmatpush1.msra.mxu0 0.0
  %34 = vmatprep.subr.mxu0 0.0
  %35 = vmatpush1.msra.mxu0 0.0
  %36 = vmatprep.subr.mxu0 0.0
  %37 = vmatpush1.msra.mxu0 0.0
  %38 = vmatprep.subr.mxu0 0.0
  %39 = vmatpush1.msra.mxu0 0.0
  %40 = vmatprep.subr.mxu0 0.0
  %41 = vmatpush1.msra.mxu0 0.0
  %42 = vmatprep.subr.mxu0 0.0
  %43 = vmatpush1.msra.mxu0 0.0
  %44 = vmatprep.subr.mxu0 0.0
  %45 = vmatpush1.msra.mxu0 0.0
  %46 = vmatprep.subr.mxu0 0.0
  %47 = vmatpush1.msra.mxu0 0.0
  %48 = vmatprep.subr.mxu0 0.0
  %49 = vmatpush1.msra.mxu0 0.0
  %50 = vmatprep.subr.mxu0 0.0
  %51 = vmatpush1.msra.mxu0 0.0
  %52 = vmatprep.subr.mxu0 0.0
  %53 = vmatpush1.msra.mxu0 0.0
  %54 = vmatprep.subr.mxu0 0.0
  %55 = vmatpush1.msra.mxu0 %v18
  %56 = vmatprep.subr.mxu0 0.0
  %57 = vmatpush1.msra.mxu0 %v17
  %58 = vmatprep.subr.mxu0 0.0
  %59 = vmatpush1.msra.mxu0 %v16
  %60 = vmatprep.subr.mxu0 0.0
  %61 = vmatpush1.msra.mxu0 %v15
  %62 = vmatprep.subr.mxu0 0.0
  %63 = vmatpush2.msra.mxu0 0.0
  %64 = vmatprep.subr.mxu0 0.0
  %65 = vmatpush2.msra.mxu0 0.0
  %66 = vmatprep.subr.mxu0 0.0
  %67 = vmatpush2.msra.mxu0 0.0
  %68 = vmatprep.subr.mxu0 0.0
  %69 = vmatpush2.msra.mxu0 0.0
  %70 = vmatprep.subr.mxu0 0.0
  %71 = vmatpush2.msra.mxu0 0.0
  %72 = vmatprep.subr.mxu0 0.0
  %73 = vmatpush2.msra.mxu0 0.0
  %74 = vmatprep.subr.mxu0 0.0
  %75 = vmatpush2.msra.mxu0 0.0
  %76 = vmatprep.subr.mxu0 0.0
  %77 = vmatpush2.msra.mxu0 0.0
  %78 = vmatprep.subr.mxu0 0.0
  %79 = vmatpush2.msra.mxu0 0.0
  %80 = vmatprep.subr.mxu0 0.0
  %81 = vmatpush2.msra.mxu0 0.0
  %82 = vmatprep.subr.mxu0 0.0
  %83 = vmatpush2.msra.mxu0 0.0
  %84 = vmatprep.subr.mxu0 0.0
  %85 = vmatpush2.msra.mxu0 0.0
  %86 = vmatprep.subr.mxu0 0.0
  %87 = vmatpush2.msra.mxu0 0.0
  %88 = vmatprep.subr.mxu0 0.0
  %89 = vmatpush2.msra.mxu0 0.0
  %90 = vmatprep.subr.mxu0 0.0
  %91 = vmatpush2.msra.mxu0 0.0
  %92 = vmatprep.subr.mxu0 0.0
  %93 = vmatpush2.msra.mxu0 0.0
  %94 = vmatprep.mubr.f32.mxu0 0.0
  %95 = vmatmul.mubr.f32.gmra.mxu0 %v28
  %v96 = vpop.f32.mrf.mxu0
  %v97 = vadd.f32 %v24, %v96
  %v98 = vpop.f32.mrf.mxu0
  %99 = vdwg.mxu0
  %100 = vst.msk [vmem:[%s3] sm:$0xff] %vm26, %v97
  // Predicated region
  $region14: #{run.29} parent=0 // pred_check
    _
  $region15: #{run.29} parent=0 // pred_check_branch
    %102 = sbr.rel (0) target = $region17
  $region16: #{run.29} parent=0 // pred_region
    _
  $region17: #{run.29} parent=0 // pred_fallthru
    _
  // Predicated region
  $region18: #{run.29} parent=0 // pred_check
    _
  $region19: #{run.29} parent=0 // pred_check_branch
    %104 = sbr.rel (0) target = $region21
  $region20: #{run.29} parent=0 // pred_region
    _
  $region21: #{run.29} parent=0 // pred_fallthru
    _

// kernel: run.31
$region0: #{run.31}
  #allocation0 [shape = 'u32[]', space=smem, size = 0x4, offset = 0x4, fixed_abs, tag = 'smem constant byte address 0x4 - core index']
  #allocation1 [shape = 'u32[144,128]{1,0:T(1,128)}', space=vmem, size = 0x12000, scoped, tag = 'internal scratch']
  %s0 = inlined_call_operand.vmem [shape: f32[2,4,32], index: 0, kind: input, shape index: {}]
  %s1 = inlined_call_operand.vmem [shape: f32[2,4,32], index: 1, kind: input, shape index: {}]
  %s2 = inlined_call_operand.vmem [shape: f32[2,4,32], index: 2, kind: input, shape index: {}]
  %s3 = inlined_call_operand.vmem [shape: f32[2,4,32], index: 3, kind: output, shape index: {}]
  %s4 = sld [smem:[#allocation0]]
  $region22: #{run.31} parent=0
    _
  %s6 = ssub.s32 1, %s4
  %s7 = scalar_select 0, %s6, %s4
  // Predicated region
  $region2: #{run.31} parent=0 // pred_check
    _
  $region3: #{run.31} parent=0 // pred_check_branch
    %9 = sbr.rel (0) target = $region5
  $region4: #{run.31} parent=0 // pred_region
    _
  $region5: #{run.31} parent=0 // pred_fallthru
    _
  // Predicated region
  $region6: #{run.31} parent=0 // pred_check
    _
  $region7: #{run.31} parent=0 // pred_check_branch
    %11 = sbr.rel (0) target = $region9
  $region8: #{run.31} parent=0 // pred_region
    _
  $region9: #{run.31} parent=0 // pred_fallthru
    _
  // Predicated region
  $region10: #{run.31} parent=0 // pred_check
    _
  $region11: #{run.31} parent=0 // pred_check_branch
    %13 = sbr.rel (0) target = $region13
  $region12: #{run.31} parent=0 // pred_region
    _
  $region13: #{run.31} parent=0 // pred_fallthru
    _
  %v14 = vld [vmem:[%s0] sm:$0xf]
  %v15 = vld [vmem:[%s0 + $0x4] sm:$0xf]
  %v16 = vld [vmem:[%s1] sm:$0xf]
  %v17 = vld [vmem:[%s1 + $0x4] sm:$0xf]
  %vm18 = vcmask 261120
  %v20 = vsel %vm18, %v14, 0
  %v23 = vsel %vm18, %v16, 0
  %25 = vmatprep.subr.mxu0 0.0
  %26 = vmatpush1.xpose.msra.mxu0 0.0
  %27 = vmatprep.subr.mxu0 0.0
  %28 = vmatpush1.xpose.msra.mxu0 0.0
  %29 = vmatprep.subr.mxu0 0.0
  %30 = vmatpush1.xpose.msra.mxu0 0.0
  %31 = vmatprep.subr.mxu0 0.0
  %32 = vmatpush1.xpose.msra.mxu0 0.0
  %33 = vmatprep.subr.mxu0 0.0
  %34 = vmatpush1.xpose.msra.mxu0 0.0
  %35 = vmatprep.subr.mxu0 0.0
  %36 = vmatpush1.xpose.msra.mxu0 0.0
  %37 = vmatprep.subr.mxu0 0.0
  %38 = vmatpush1.xpose.msra.mxu0 0.0
  %39 = vmatprep.subr.mxu0 0.0
  %40 = vmatpush1.xpose.msra.mxu0 0.0
  %41 = vmatprep.subr.mxu0 0.0
  %42 = vmatpush1.xpose.msra.mxu0 0.0
  %43 = vmatprep.subr.mxu0 0.0
  %44 = vmatpush1.xpose.msra.mxu0 0.0
  %45 = vmatprep.subr.mxu0 0.0
  %46 = vmatpush1.xpose.msra.mxu0 0.0
  %47 = vmatprep.subr.mxu0 0.0
  %48 = vmatpush1.xpose.msra.mxu0 0.0
  %49 = vmatprep.subr.mxu0 0.0
  %50 = vmatpush1.xpose.msra.mxu0 0.0
  %51 = vmatprep.subr.mxu0 0.0
  %52 = vmatpush1.xpose.msra.mxu0 0.0
  %53 = vmatprep.subr.mxu0 0.0
  %54 = vmatpush1.xpose.msra.mxu0 0.0
  %55 = vmatprep.subr.mxu0 0.0
  %56 = vmatpush1.xpose.msra.mxu0 %v23
  %57 = vmatprep.subr.mxu0 0.0
  %58 = vmatpush2.xpose.msra.mxu0 0.0
  %59 = vmatprep.subr.mxu0 0.0
  %60 = vmatpush2.xpose.msra.mxu0 0.0
  %61 = vmatprep.subr.mxu0 0.0
  %62 = vmatpush2.xpose.msra.mxu0 0.0
  %63 = vmatprep.subr.mxu0 0.0
  %64 = vmatpush2.xpose.msra.mxu0 0.0
  %65 = vmatprep.subr.mxu0 0.0
  %66 = vmatpush2.xpose.msra.mxu0 0.0
  %67 = vmatprep.subr.mxu0 0.0
  %68 = vmatpush2.xpose.msra.mxu0 0.0
  %69 = vmatprep.subr.mxu0 0.0
  %70 = vmatpush2.xpose.msra.mxu0 0.0
  %71 = vmatprep.subr.mxu0 0.0
  %72 = vmatpush2.xpose.msra.mxu0 0.0
  %73 = vmatprep.subr.mxu0 0.0
  %74 = vmatpush2.xpose.msra.mxu0 0.0
  %75 = vmatprep.subr.mxu0 0.0
  %76 = vmatpush2.xpose.msra.mxu0 0.0
  %77 = vmatprep.subr.mxu0 0.0
  %78 = vmatpush2.xpose.msra.mxu0 0.0
  %79 = vmatprep.subr.mxu0 0.0
  %80 = vmatpush2.xpose.msra.mxu0 0.0
  %81 = vmatprep.subr.mxu0 0.0
  %82 = vmatpush2.xpose.msra.mxu0 0.0
  %83 = vmatprep.subr.mxu0 0.0
  %84 = vmatpush2.xpose.msra.mxu0 0.0
  %85 = vmatprep.subr.mxu0 0.0
  %86 = vmatpush2.xpose.msra.mxu0 0.0
  %87 = vmatprep.subr.mxu0 0.0
  %88 = vmatpush2.xpose.msra.mxu0 0.0
  %89 = vmatprep.mubr.f32.mxu0 0.0
  %90 = vmatmul.mubr.f32.gmra.mxu0 %v20
  %v91 = vpop.f32.mrf.mxu0
  %v92 = vadd.f32 0.0, %v91
  %v93 = vpop.f32.mrf.mxu0
  %94 = vdwg.mxu0
  %v96 = vsel %vm18, %v15, 0
  %v99 = vsel %vm18, %v17, 0
  %101 = vmatprep.subr.mxu0 0.0
  %102 = vmatpush1.xpose.msra.mxu0 0.0
  %103 = vmatprep.subr.mxu0 0.0
  %104 = vmatpush1.xpose.msra.mxu0 0.0
  %105 = vmatprep.subr.mxu0 0.0
  %106 = vmatpush1.xpose.msra.mxu0 0.0
  %107 = vmatprep.subr.mxu0 0.0
  %108 = vmatpush1.xpose.msra.mxu0 0.0
  %109 = vmatprep.subr.mxu0 0.0
  %110 = vmatpush1.xpose.msra.mxu0 0.0
  %111 = vmatprep.subr.mxu0 0.0
  %112 = vmatpush1.xpose.msra.mxu0 0.0
  %113 = vmatprep.subr.mxu0 0.0
  %114 = vmatpush1.xpose.msra.mxu0 0.0
  %115 = vmatprep.subr.mxu0 0.0
  %116 = vmatpush1.xpose.msra.mxu0 0.0
  %117 = vmatprep.subr.mxu0 0.0
  %118 = vmatpush1.xpose.msra.mxu0 0.0
  %119 = vmatprep.subr.mxu0 0.0
  %120 = vmatpush1.xpose.msra.mxu0 0.0
  %121 = vmatprep.subr.mxu0 0.0
  %122 = vmatpush1.xpose.msra.mxu0 0.0
  %123 = vmatprep.subr.mxu0 0.0
  %124 = vmatpush1.xpose.msra.mxu0 0.0
  %125 = vmatprep.subr.mxu0 0.0
  %126 = vmatpush1.xpose.msra.mxu0 0.0
  %127 = vmatprep.subr.mxu0 0.0
  %128 = vmatpush1.xpose.msra.mxu0 0.0
  %129 = vmatprep.subr.mxu0 0.0
  %130 = vmatpush1.xpose.msra.mxu0 0.0
  %131 = vmatprep.subr.mxu0 0.0
  %132 = vmatpush1.xpose.msra.mxu0 %v99
  %133 = vmatprep.subr.mxu0 0.0
  %134 = vmatpush2.xpose.msra.mxu0 0.0
  %135 = vmatprep.subr.mxu0 0.0
  %136 = vmatpush2.xpose.msra.mxu0 0.0
  %137 = vmatprep.subr.mxu0 0.0
  %138 = vmatpush2.xpose.msra.mxu0 0.0
  %139 = vmatprep.subr.mxu0 0.0
  %140 = vmatpush2.xpose.msra.mxu0 0.0
  %141 = vmatprep.subr.mxu0 0.0
  %142 = vmatpush2.xpose.msra.mxu0 0.0
  %143 = vmatprep.subr.mxu0 0.0
  %144 = vmatpush2.xpose.msra.mxu0 0.0
  %145 = vmatprep.subr.mxu0 0.0
  %146 = vmatpush2.xpose.msra.mxu0 0.0
  %147 = vmatprep.subr.mxu0 0.0
  %148 = vmatpush2.xpose.msra.mxu0 0.0
  %149 = vmatprep.subr.mxu0 0.0
  %150 = vmatpush2.xpose.msra.mxu0 0.0
  %151 = vmatprep.subr.mxu0 0.0
  %152 = vmatpush2.xpose.msra.mxu0 0.0
  %153 = vmatprep.subr.mxu0 0.0
  %154 = vmatpush2.xpose.msra.mxu0 0.0
  %155 = vmatprep.subr.mxu0 0.0
  %156 = vmatpush2.xpose.msra.mxu0 0.0
  %157 = vmatprep.subr.mxu0 0.0
  %158 = vmatpush2.xpose.msra.mxu0 0.0
  %159 = vmatprep.subr.mxu0 0.0
  %160 = vmatpush2.xpose.msra.mxu0 0.0
  %161 = vmatprep.subr.mxu0 0.0
  %162 = vmatpush2.xpose.msra.mxu0 0.0
  %163 = vmatprep.subr.mxu0 0.0
  %164 = vmatpush2.xpose.msra.mxu0 0.0
  %165 = vmatprep.mubr.f32.mxu0 0.0
  %166 = vmatmul.mubr.f32.gmra.mxu0 %v96
  %v167 = vpop.f32.mrf.mxu0
  %v168 = vadd.f32 0.0, %v167
  %v169 = vpop.f32.mrf.mxu0
  %170 = vdwg.mxu0
  %v171 = vmul.f32 %v92, 0.17677669
  %v172 = vmul.f32 %v168, 0.17677669
  %vm173 = vcmask 27648
  %v174 = vsel %vm173, %v171, -inf
  %175 = vmax.xlane.f32.xlu0 %v174
  %v176 = vpop.xlane.xlu0 %175
  %v177 = vsel %vm173, %v172, -inf
  %178 = vmax.xlane.f32.xlu0 %v177
  %v179 = vpop.xlane.xlu0 %178
  %v180 = vsub.f32 %v171, %v176
  %v181 = vsub.f32 %v172, %v179
  %v182 = vmul.f32 %v180, 1.442695
  %v183 = vpow.pop %v182
  %v184 = vmul.f32 %v181, 1.442695
  %v185 = vpow.pop %v184
  %v186 = vsel %vm173, %v183, 0.0
  %187 = vadd.xlane.f32.xlu0 %v186
  %v188 = vpop.xlane.xlu0 %187
  %v189 = vsel %vm173, %v185, 0.0
  %190 = vadd.xlane.f32.xlu0 %v189
  %v191 = vpop.xlane.xlu0 %190
  %v192 = vrcp.pop %v188
  %v193 = vmul.f32 %v183, %v192
  %v194 = vrcp.pop %v191
  %v195 = vmul.f32 %v185, %v194
  %v196 = vld [vmem:[%s2] sm:$0xf]
  %v197 = vld [vmem:[%s2 + $0x4] sm:$0xf]
  %vm198 = vcmask 31744
  %v200 = vsel %vm198, %v193, 0
  %vm202 = vcmask 1043456
  %v204 = vsel %vm202, %v196, 0
  %206 = vmatprep.subr.mxu0 0.0
  %207 = vmatpush1.msra.mxu0 0.0
  %208 = vmatprep.subr.mxu0 0.0
  %209 = vmatpush1.msra.mxu0 0.0
  %210 = vmatprep.subr.mxu0 0.0
  %211 = vmatpush1.msra.mxu0 0.0
  %212 = vmatprep.subr.mxu0 0.0
  %213 = vmatpush1.msra.mxu0 0.0
  %214 = vmatprep.subr.mxu0 0.0
  %215 = vmatpush1.msra.mxu0 0.0
  %216 = vmatprep.subr.mxu0 0.0
  %217 = vmatpush1.msra.mxu0 0.0
  %218 = vmatprep.subr.mxu0 0.0
  %219 = vmatpush1.msra.mxu0 0.0
  %220 = vmatprep.subr.mxu0 0.0
  %221 = vmatpush1.msra.mxu0 0.0
  %222 = vmatprep.subr.mxu0 0.0
  %223 = vmatpush1.msra.mxu0 0.0
  %224 = vmatprep.subr.mxu0 0.0
  %225 = vmatpush1.msra.mxu0 0.0
  %226 = vmatprep.subr.mxu0 0.0
  %227 = vmatpush1.msra.mxu0 0.0
  %228 = vmatprep.subr.mxu0 0.0
  %229 = vmatpush1.msra.mxu0 0.0
  %230 = vmatprep.subr.mxu0 0.0
  %231 = vmatpush1.msra.mxu0 0.0
  %232 = vmatprep.subr.mxu0 0.0
  %233 = vmatpush1.msra.mxu0 0.0
  %234 = vmatprep.subr.mxu0 0.0
  %235 = vmatpush1.msra.mxu0 0.0
  %236 = vmatprep.subr.mxu0 0.0
  %237 = vmatpush1.msra.mxu0 %v204
  %238 = vmatprep.subr.mxu0 0.0
  %239 = vmatpush2.msra.mxu0 0.0
  %240 = vmatprep.subr.mxu0 0.0
  %241 = vmatpush2.msra.mxu0 0.0
  %242 = vmatprep.subr.mxu0 0.0
  %243 = vmatpush2.msra.mxu0 0.0
  %244 = vmatprep.subr.mxu0 0.0
  %245 = vmatpush2.msra.mxu0 0.0
  %246 = vmatprep.subr.mxu0 0.0
  %247 = vmatpush2.msra.mxu0 0.0
  %248 = vmatprep.subr.mxu0 0.0
  %249 = vmatpush2.msra.mxu0 0.0
  %250 = vmatprep.subr.mxu0 0.0
  %251 = vmatpush2.msra.mxu0 0.0
  %252 = vmatprep.subr.mxu0 0.0
  %253 = vmatpush2.msra.mxu0 0.0
  %254 = vmatprep.subr.mxu0 0.0
  %255 = vmatpush2.msra.mxu0 0.0
  %256 = vmatprep.subr.mxu0 0.0
  %257 = vmatpush2.msra.mxu0 0.0
  %258 = vmatprep.subr.mxu0 0.0
  %259 = vmatpush2.msra.mxu0 0.0
  %260 = vmatprep.subr.mxu0 0.0
  %261 = vmatpush2.msra.mxu0 0.0
  %262 = vmatprep.subr.mxu0 0.0
  %263 = vmatpush2.msra.mxu0 0.0
  %264 = vmatprep.subr.mxu0 0.0
  %265 = vmatpush2.msra.mxu0 0.0
  %266 = vmatprep.subr.mxu0 0.0
  %267 = vmatpush2.msra.mxu0 0.0
  %268 = vmatprep.subr.mxu0 0.0
  %269 = vmatpush2.msra.mxu0 0.0
  %270 = vmatprep.mubr.f32.mxu0 0.0
  %271 = vmatmul.mubr.f32.gmra.mxu0 %v200
  %v272 = vpop.f32.mrf.mxu0
  %v273 = vadd.f32 0.0, %v272
  %v274 = vpop.f32.mrf.mxu0
  %275 = vdwg.mxu0
  %v277 = vsel %vm198, %v195, 0
  %v280 = vsel %vm202, %v197, 0
  %282 = vmatprep.subr.mxu0 0.0
  %283 = vmatpush1.msra.mxu0 0.0
  %284 = vmatprep.subr.mxu0 0.0
  %285 = vmatpush1.msra.mxu0 0.0
  %286 = vmatprep.subr.mxu0 0.0
  %287 = vmatpush1.msra.mxu0 0.0
  %288 = vmatprep.subr.mxu0 0.0
  %289 = vmatpush1.msra.mxu0 0.0
  %290 = vmatprep.subr.mxu0 0.0
  %291 = vmatpush1.msra.mxu0 0.0
  %292 = vmatprep.subr.mxu0 0.0
  %293 = vmatpush1.msra.mxu0 0.0
  %294 = vmatprep.subr.mxu0 0.0
  %295 = vmatpush1.msra.mxu0 0.0
  %296 = vmatprep.subr.mxu0 0.0
  %297 = vmatpush1.msra.mxu0 0.0
  %298 = vmatprep.subr.mxu0 0.0
  %299 = vmatpush1.msra.mxu0 0.0
  %300 = vmatprep.subr.mxu0 0.0
  %301 = vmatpush1.msra.mxu0 0.0
  %302 = vmatprep.subr.mxu0 0.0
  %303 = vmatpush1.msra.mxu0 0.0
  %304 = vmatprep.subr.mxu0 0.0
  %305 = vmatpush1.msra.mxu0 0.0
  %306 = vmatprep.subr.mxu0 0.0
  %307 = vmatpush1.msra.mxu0 0.0
  %308 = vmatprep.subr.mxu0 0.0
  %309 = vmatpush1.msra.mxu0 0.0
  %310 = vmatprep.subr.mxu0 0.0
  %311 = vmatpush1.msra.mxu0 0.0
  %312 = vmatprep.subr.mxu0 0.0
  %313 = vmatpush1.msra.mxu0 %v280
  %314 = vmatprep.subr.mxu0 0.0
  %315 = vmatpush2.msra.mxu0 0.0
  %316 = vmatprep.subr.mxu0 0.0
  %317 = vmatpush2.msra.mxu0 0.0
  %318 = vmatprep.subr.mxu0 0.0
  %319 = vmatpush2.msra.mxu0 0.0
  %320 = vmatprep.subr.mxu0 0.0
  %321 = vmatpush2.msra.mxu0 0.0
  %322 = vmatprep.subr.mxu0 0.0
  %323 = vmatpush2.msra.mxu0 0.0
  %324 = vmatprep.subr.mxu0 0.0
  %325 = vmatpush2.msra.mxu0 0.0
  %326 = vmatprep.subr.mxu0 0.0
  %327 = vmatpush2.msra.mxu0 0.0
  %328 = vmatprep.subr.mxu0 0.0
  %329 = vmatpush2.msra.mxu0 0.0
  %330 = vmatprep.subr.mxu0 0.0
  %331 = vmatpush2.msra.mxu0 0.0
  %332 = vmatprep.subr.mxu0 0.0
  %333 = vmatpush2.msra.mxu0 0.0
  %334 = vmatprep.subr.mxu0 0.0
  %335 = vmatpush2.msra.mxu0 0.0
  %336 = vmatprep.subr.mxu0 0.0
  %337 = vmatpush2.msra.mxu0 0.0
  %338 = vmatprep.subr.mxu0 0.0
  %339 = vmatpush2.msra.mxu0 0.0
  %340 = vmatprep.subr.mxu0 0.0
  %341 = vmatpush2.msra.mxu0 0.0
  %342 = vmatprep.subr.mxu0 0.0
  %343 = vmatpush2.msra.mxu0 0.0
  %344 = vmatprep.subr.mxu0 0.0
  %345 = vmatpush2.msra.mxu0 0.0
  %346 = vmatprep.mubr.f32.mxu0 0.0
  %347 = vmatmul.mubr.f32.gmra.mxu0 %v277
  %v348 = vpop.f32.mrf.mxu0
  %v349 = vadd.f32 0.0, %v348
  %v350 = vpop.f32.mrf.mxu0
  %351 = vdwg.mxu0
  %vm352 = vcmask 257024
  %353 = vst.msk [vmem:[%s3] sm:$0xf] %vm352, %v273
  %354 = vst.msk [vmem:[%s3 + $0x4] sm:$0xf] %vm352, %v349
  // Predicated region
  $region14: #{run.31} parent=0 // pred_check
    _
  $region15: #{run.31} parent=0 // pred_check_branch
    %356 = sbr.rel (0) target = $region17
  $region16: #{run.31} parent=0 // pred_region
    _
  $region17: #{run.31} parent=0 // pred_fallthru
    _
  // Predicated region
  $region18: #{run.31} parent=0 // pred_check
    _
  $region19: #{run.31} parent=0 // pred_check_branch
    %358 = sbr.rel (0) target = $region21
  $region20: #{run.31} parent=0 // pred_region
    _
  $region21: #{run.31} parent=0 // pred_fallthru
    _

// kernel: run.32
$region0: #{run.32}
  #allocation0 [shape = 'u32[]', space=smem, size = 0x4, offset = 0x4, fixed_abs, tag = 'smem constant byte address 0x4 - core index']
  #allocation1 [shape = 'u32[144,128]{1,0:T(1,128)}', space=vmem, size = 0x12000, scoped, tag = 'internal scratch']
  %s0 = inlined_call_operand.vmem [shape: f32[8,32], index: 0, kind: input, shape index: {}]
  %s1 = inlined_call_operand.vmem [shape: f32[32,32], index: 1, kind: input, shape index: {}]
  %s2 = inlined_call_operand.vmem [shape: f32[1,32], index: 2, kind: input, shape index: {}]
  %s3 = inlined_call_operand.vmem [shape: f32[8,32], index: 3, kind: input, shape index: {}]
  %s4 = inlined_call_operand.vmem [shape: f32[8,32], index: 4, kind: output, shape index: {}]
  %s5 = sld [smem:[#allocation0]]
  $region26: #{run.32} parent=0
    _
  %s7 = ssub.s32 1, %s5
  %s8 = scalar_select 0, %s7, %s5
  // Predicated region
  $region2: #{run.32} parent=0 // pred_check
    _
  $region3: #{run.32} parent=0 // pred_check_branch
    %10 = sbr.rel (0) target = $region5
  $region4: #{run.32} parent=0 // pred_region
    _
  $region5: #{run.32} parent=0 // pred_fallthru
    _
  // Predicated region
  $region6: #{run.32} parent=0 // pred_check
    _
  $region7: #{run.32} parent=0 // pred_check_branch
    %12 = sbr.rel (0) target = $region9
  $region8: #{run.32} parent=0 // pred_region
    _
  $region9: #{run.32} parent=0 // pred_fallthru
    _
  // Predicated region
  $region10: #{run.32} parent=0 // pred_check
    _
  $region11: #{run.32} parent=0 // pred_check_branch
    %14 = sbr.rel (0) target = $region13
  $region12: #{run.32} parent=0 // pred_region
    _
  $region13: #{run.32} parent=0 // pred_fallthru
    _
  // Predicated region
  $region14: #{run.32} parent=0 // pred_check
    _
  $region15: #{run.32} parent=0 // pred_check_branch
    %16 = sbr.rel (0) target = $region17
  $region16: #{run.32} parent=0 // pred_region
    _
  $region17: #{run.32} parent=0 // pred_fallthru
    _
  %v17 = vld [vmem:[%s0] sm:$0xff]
  %v18 = vld [vmem:[%s1] sm:$0xff]
  %v19 = vld [vmem:[%s1 + $0x8] sm:$0xff]
  %v20 = vld [vmem:[%s1 + $0x10] sm:$0xff]
  %v21 = vld [vmem:[%s1 + $0x18] sm:$0xff]
  %v22 = vld [vmem:[%s2] sm:$0x1]
  %v24 = vlaneseq
  %v25 = vshrl.u32 %v24, 7
  %v26 = vsub.s32 0, %v25
  %v27 = vrot.slane %v22, %v26
  %vm29 = vcmask 261120
  %v31 = vsel %vm29, %v17, 0
  %33 = vmatprep.subr.mxu0 0.0
  %34 = vmatpush1.msra.mxu0 0.0
  %35 = vmatprep.subr.mxu0 0.0
  %36 = vmatpush1.msra.mxu0 0.0
  %37 = vmatprep.subr.mxu0 0.0
  %38 = vmatpush1.msra.mxu0 0.0
  %39 = vmatprep.subr.mxu0 0.0
  %40 = vmatpush1.msra.mxu0 0.0
  %41 = vmatprep.subr.mxu0 0.0
  %42 = vmatpush1.msra.mxu0 0.0
  %43 = vmatprep.subr.mxu0 0.0
  %44 = vmatpush1.msra.mxu0 0.0
  %45 = vmatprep.subr.mxu0 0.0
  %46 = vmatpush1.msra.mxu0 0.0
  %47 = vmatprep.subr.mxu0 0.0
  %48 = vmatpush1.msra.mxu0 0.0
  %49 = vmatprep.subr.mxu0 0.0
  %50 = vmatpush1.msra.mxu0 0.0
  %51 = vmatprep.subr.mxu0 0.0
  %52 = vmatpush1.msra.mxu0 0.0
  %53 = vmatprep.subr.mxu0 0.0
  %54 = vmatpush1.msra.mxu0 0.0
  %55 = vmatprep.subr.mxu0 0.0
  %56 = vmatpush1.msra.mxu0 0.0
  %57 = vmatprep.subr.mxu0 0.0
  %58 = vmatpush1.msra.mxu0 %v21
  %59 = vmatprep.subr.mxu0 0.0
  %60 = vmatpush1.msra.mxu0 %v20
  %61 = vmatprep.subr.mxu0 0.0
  %62 = vmatpush1.msra.mxu0 %v19
  %63 = vmatprep.subr.mxu0 0.0
  %64 = vmatpush1.msra.mxu0 %v18
  %65 = vmatprep.subr.mxu0 0.0
  %66 = vmatpush2.msra.mxu0 0.0
  %67 = vmatprep.subr.mxu0 0.0
  %68 = vmatpush2.msra.mxu0 0.0
  %69 = vmatprep.subr.mxu0 0.0
  %70 = vmatpush2.msra.mxu0 0.0
  %71 = vmatprep.subr.mxu0 0.0
  %72 = vmatpush2.msra.mxu0 0.0
  %73 = vmatprep.subr.mxu0 0.0
  %74 = vmatpush2.msra.mxu0 0.0
  %75 = vmatprep.subr.mxu0 0.0
  %76 = vmatpush2.msra.mxu0 0.0
  %77 = vmatprep.subr.mxu0 0.0
  %78 = vmatpush2.msra.mxu0 0.0
  %79 = vmatprep.subr.mxu0 0.0
  %80 = vmatpush2.msra.mxu0 0.0
  %81 = vmatprep.subr.mxu0 0.0
  %82 = vmatpush2.msra.mxu0 0.0
  %83 = vmatprep.subr.mxu0 0.0
  %84 = vmatpush2.msra.mxu0 0.0
  %85 = vmatprep.subr.mxu0 0.0
  %86 = vmatpush2.msra.mxu0 0.0
  %87 = vmatprep.subr.mxu0 0.0
  %88 = vmatpush2.msra.mxu0 0.0
  %89 = vmatprep.subr.mxu0 0.0
  %90 = vmatpush2.msra.mxu0 0.0
  %91 = vmatprep.subr.mxu0 0.0
  %92 = vmatpush2.msra.mxu0 0.0
  %93 = vmatprep.subr.mxu0 0.0
  %94 = vmatpush2.msra.mxu0 0.0
  %95 = vmatprep.subr.mxu0 0.0
  %96 = vmatpush2.msra.mxu0 0.0
  %97 = vmatprep.mubr.f32.mxu0 0.0
  %98 = vmatmul.mubr.f32.gmra.mxu0 %v31
  %v99 = vpop.f32.mrf.mxu0
  %v100 = vadd.f32 %v27, %v99
  %v101 = vpop.f32.mrf.mxu0
  %102 = vdwg.mxu0
  %v103 = vld [vmem:[%s3] sm:$0xff]
  %v104 = vadd.f32 %v100, %v103
  %105 = vst.msk [vmem:[%s4] sm:$0xff] %vm29, %v104
  // Predicated region
  $region18: #{run.32} parent=0 // pred_check
    _
  $region19: #{run.32} parent=0 // pred_check_branch
    %107 = sbr.rel (0) target = $region21
  $region20: #{run.32} parent=0 // pred_region
    _
  $region21: #{run.32} parent=0 // pred_fallthru
    _
  // Predicated region
  $region22: #{run.32} parent=0 // pred_check
    _
  $region23: #{run.32} parent=0 // pred_check_branch
    %109 = sbr.rel (0) target = $region25
  $region24: #{run.32} parent=0 // pred_region
    _
  $region25: #{run.32} parent=0 // pred_fallthru
    _

// kernel: run.33
$region0: #{run.33}
  #allocation0 [shape = 'u32[]', space=smem, size = 0x4, offset = 0x4, fixed_abs, tag = 'smem constant byte address 0x4 - core index']
  #allocation1 [shape = 'u32[144,128]{1,0:T(1,128)}', space=vmem, size = 0x12000, scoped, tag = 'internal scratch']
  %s0 = inlined_call_operand.vmem [shape: f32[8,32], index: 0, kind: input, shape index: {}]
  %s1 = inlined_call_operand.vmem [shape: f32[1,32], index: 1, kind: input, shape index: {}]
  %s2 = inlined_call_operand.vmem [shape: f32[1,32], index: 2, kind: input, shape index: {}]
  %s3 = inlined_call_operand.vmem [shape: f32[32,32], index: 3, kind: input, shape index: {}]
  %s4 = inlined_call_operand.vmem [shape: f32[1,32], index: 4, kind: input, shape index: {}]
  %s5 = inlined_call_operand.vmem [shape: f32[32,32], index: 5, kind: input, shape index: {}]
  %s6 = inlined_call_operand.vmem [shape: f32[1,32], index: 6, kind: input, shape index: {}]
  %s7 = inlined_call_operand.vmem [shape: f32[8,32], index: 7, kind: output, shape index: {}]
  %s8 = sld [smem:[#allocation0]]
  $region38: #{run.33} parent=0
    _
  %s10 = ssub.s32 1, %s8
  %s11 = scalar_select 0, %s10, %s8
  // Predicated region
  $region2: #{run.33} parent=0 // pred_check
    _
  $region3: #{run.33} parent=0 // pred_check_branch
    %13 = sbr.rel (0) target = $region5
  $region4: #{run.33} parent=0 // pred_region
    _
  $region5: #{run.33} parent=0 // pred_fallthru
    _
  // Predicated region
  $region6: #{run.33} parent=0 // pred_check
    _
  $region7: #{run.33} parent=0 // pred_check_branch
    %15 = sbr.rel (0) target = $region9
  $region8: #{run.33} parent=0 // pred_region
    _
  $region9: #{run.33} parent=0 // pred_fallthru
    _
  // Predicated region
  $region10: #{run.33} parent=0 // pred_check
    _
  $region11: #{run.33} parent=0 // pred_check_branch
    %17 = sbr.rel (0) target = $region13
  $region12: #{run.33} parent=0 // pred_region
    _
  $region13: #{run.33} parent=0 // pred_fallthru
    _
  // Predicated region
  $region14: #{run.33} parent=0 // pred_check
    _
  $region15: #{run.33} parent=0 // pred_check_branch
    %19 = sbr.rel (0) target = $region17
  $region16: #{run.33} parent=0 // pred_region
    _
  $region17: #{run.33} parent=0 // pred_fallthru
    _
  // Predicated region
  $region18: #{run.33} parent=0 // pred_check
    _
  $region19: #{run.33} parent=0 // pred_check_branch
    %21 = sbr.rel (0) target = $region21
  $region20: #{run.33} parent=0 // pred_region
    _
  $region21: #{run.33} parent=0 // pred_fallthru
    _
  // Predicated region
  $region22: #{run.33} parent=0 // pred_check
    _
  $region23: #{run.33} parent=0 // pred_check_branch
    %23 = sbr.rel (0) target = $region25
  $region24: #{run.33} parent=0 // pred_region
    _
  $region25: #{run.33} parent=0 // pred_fallthru
    _
  // Predicated region
  $region26: #{run.33} parent=0 // pred_check
    _
  $region27: #{run.33} parent=0 // pred_check_branch
    %25 = sbr.rel (0) target = $region29
  $region28: #{run.33} parent=0 // pred_region
    _
  $region29: #{run.33} parent=0 // pred_fallthru
    _
  %v26 = vld [vmem:[%s0] sm:$0xff]
  %v27 = vld [vmem:[%s1] sm:$0x1]
  %v28 = vld [vmem:[%s2] sm:$0x1]
  %vm29 = vcmask 261120
  %v30 = vsel %vm29, %v26, 0.0
  %31 = vadd.xlane.f32.xlu0 %v30
  %v32 = vpop.xlane.xlu0 %31
  %v33 = vrcp.pop 32.0
  %v34 = vmul.f32 %v32, %v33
  %v35 = vsub.f32 %v26, %v34
  %v36 = vmul.f32 %v35, %v35
  %v37 = vsel %vm29, %v36, 0.0
  %38 = vadd.xlane.f32.xlu0 %v37
  %v39 = vpop.xlane.xlu0 %38
  %v40 = vmul.f32 %v39, %v33
  %v41 = vadd.f32 %v40, 1e-05
  %v42 = vrsqrt.pop %v41
  %v43 = vmul.f32 %v35, %v42
  %v45 = vlaneseq
  %v46 = vshrl.u32 %v45, 7
  %v47 = vsub.s32 0, %v46
  %v48 = vrot.slane %v27, %v47
  %v50 = vmul.f32 %v43, %v48
  %v52 = vlaneseq
  %v53 = vshrl.u32 %v52, 7
  %v54 = vsub.s32 0, %v53
  %v55 = vrot.slane %v28, %v54
  %v57 = vadd.f32 %v50, %v55
  %v58 = vld [vmem:[%s3] sm:$0xff]
  %v59 = vld [vmem:[%s3 + $0x8] sm:$0xff]
  %v60 = vld [vmem:[%s3 + $0x10] sm:$0xff]
  %v61 = vld [vmem:[%s3 + $0x18] sm:$0xff]
  %v62 = vld [vmem:[%s4] sm:$0x1]
  %v64 = vlaneseq
  %v65 = vshrl.u32 %v64, 7
  %v66 = vsub.s32 0, %v65
  %v67 = vrot.slane %v62, %v66
  %v70 = vsel %vm29, %v57, 0
  %72 = vmatprep.subr.mxu0 0.0
  %73 = vmatpush1.msra.mxu0 0.0
  %74 = vmatprep.subr.mxu0 0.0
  %75 = vmatpush1.msra.mxu0 0.0
  %76 = vmatprep.subr.mxu0 0.0
  %77 = vmatpush1.msra.mxu0 0.0
  %78 = vmatprep.subr.mxu0 0.0
  %79 = vmatpush1.msra.mxu0 0.0
  %80 = vmatprep.subr.mxu0 0.0
  %81 = vmatpush1.msra.mxu0 0.0
  %82 = vmatprep.subr.mxu0 0.0
  %83 = vmatpush1.msra.mxu0 0.0
  %84 = vmatprep.subr.mxu0 0.0
  %85 = vmatpush1.msra.mxu0 0.0
  %86 = vmatprep.subr.mxu0 0.0
  %87 = vmatpush1.msra.mxu0 0.0
  %88 = vmatprep.subr.mxu0 0.0
  %89 = vmatpush1.msra.mxu0 0.0
  %90 = vmatprep.subr.mxu0 0.0
  %91 = vmatpush1.msra.mxu0 0.0
  %92 = vmatprep.subr.mxu0 0.0
  %93 = vmatpush1.msra.mxu0 0.0
  %94 = vmatprep.subr.mxu0 0.0
  %95 = vmatpush1.msra.mxu0 0.0
  %96 = vmatprep.subr.mxu0 0.0
  %97 = vmatpush1.msra.mxu0 %v61
  %98 = vmatprep.subr.mxu0 0.0
  %99 = vmatpush1.msra.mxu0 %v60
  %100 = vmatprep.subr.mxu0 0.0
  %101 = vmatpush1.msra.mxu0 %v59
  %102 = vmatprep.subr.mxu0 0.0
  %103 = vmatpush1.msra.mxu0 %v58
  %104 = vmatprep.subr.mxu0 0.0
  %105 = vmatpush2.msra.mxu0 0.0
  %106 = vmatprep.subr.mxu0 0.0
  %107 = vmatpush2.msra.mxu0 0.0
  %108 = vmatprep.subr.mxu0 0.0
  %109 = vmatpush2.msra.mxu0 0.0
  %110 = vmatprep.subr.mxu0 0.0
  %111 = vmatpush2.msra.mxu0 0.0
  %112 = vmatprep.subr.mxu0 0.0
  %113 = vmatpush2.msra.mxu0 0.0
  %114 = vmatprep.subr.mxu0 0.0
  %115 = vmatpush2.msra.mxu0 0.0
  %116 = vmatprep.subr.mxu0 0.0
  %117 = vmatpush2.msra.mxu0 0.0
  %118 = vmatprep.subr.mxu0 0.0
  %119 = vmatpush2.msra.mxu0 0.0
  %120 = vmatprep.subr.mxu0 0.0
  %121 = vmatpush2.msra.mxu0 0.0
  %122 = vmatprep.subr.mxu0 0.0
  %123 = vmatpush2.msra.mxu0 0.0
  %124 = vmatprep.subr.mxu0 0.0
  %125 = vmatpush2.msra.mxu0 0.0
  %126 = vmatprep.subr.mxu0 0.0
  %127 = vmatpush2.msra.mxu0 0.0
  %128 = vmatprep.subr.mxu0 0.0
  %129 = vmatpush2.msra.mxu0 0.0
  %130 = vmatprep.subr.mxu0 0.0
  %131 = vmatpush2.msra.mxu0 0.0
  %132 = vmatprep.subr.mxu0 0.0
  %133 = vmatpush2.msra.mxu0 0.0
  %134 = vmatprep.subr.mxu0 0.0
  %135 = vmatpush2.msra.mxu0 0.0
  %136 = vmatprep.mubr.f32.mxu0 0.0
  %137 = vmatmul.mubr.f32.gmra.mxu0 %v70
  %v138 = vpop.f32.mrf.mxu0
  %v139 = vadd.f32 %v67, %v138
  %v140 = vpop.f32.mrf.mxu0
  %141 = vdwg.mxu0
  %v142 = vmax.f32 %v139, 0.0
  %v143 = vld [vmem:[%s5] sm:$0xff]
  %v144 = vld [vmem:[%s5 + $0x8] sm:$0xff]
  %v145 = vld [vmem:[%s5 + $0x10] sm:$0xff]
  %v146 = vld [vmem:[%s5 + $0x18] sm:$0xff]
  %v147 = vld [vmem:[%s6] sm:$0x1]
  %v149 = vlaneseq
  %v150 = vshrl.u32 %v149, 7
  %v151 = vsub.s32 0, %v150
  %v152 = vrot.slane %v147, %v151
  %v155 = vsel %vm29, %v142, 0
  %157 = vmatprep.subr.mxu0 0.0
  %158 = vmatpush1.msra.mxu0 0.0
  %159 = vmatprep.subr.mxu0 0.0
  %160 = vmatpush1.msra.mxu0 0.0
  %161 = vmatprep.subr.mxu0 0.0
  %162 = vmatpush1.msra.mxu0 0.0
  %163 = vmatprep.subr.mxu0 0.0
  %164 = vmatpush1.msra.mxu0 0.0
  %165 = vmatprep.subr.mxu0 0.0
  %166 = vmatpush1.msra.mxu0 0.0
  %167 = vmatprep.subr.mxu0 0.0
  %168 = vmatpush1.msra.mxu0 0.0
  %169 = vmatprep.subr.mxu0 0.0
  %170 = vmatpush1.msra.mxu0 0.0
  %171 = vmatprep.subr.mxu0 0.0
  %172 = vmatpush1.msra.mxu0 0.0
  %173 = vmatprep.subr.mxu0 0.0
  %174 = vmatpush1.msra.mxu0 0.0
  %175 = vmatprep.subr.mxu0 0.0
  %176 = vmatpush1.msra.mxu0 0.0
  %177 = vmatprep.subr.mxu0 0.0
  %178 = vmatpush1.msra.mxu0 0.0
  %179 = vmatprep.subr.mxu0 0.0
  %180 = vmatpush1.msra.mxu0 0.0
  %181 = vmatprep.subr.mxu0 0.0
  %182 = vmatpush1.msra.mxu0 %v146
  %183 = vmatprep.subr.mxu0 0.0
  %184 = vmatpush1.msra.mxu0 %v145
  %185 = vmatprep.subr.mxu0 0.0
  %186 = vmatpush1.msra.mxu0 %v144
  %187 = vmatprep.subr.mxu0 0.0
  %188 = vmatpush1.msra.mxu0 %v143
  %189 = vmatprep.subr.mxu0 0.0
  %190 = vmatpush2.msra.mxu0 0.0
  %191 = vmatprep.subr.mxu0 0.0
  %192 = vmatpush2.msra.mxu0 0.0
  %193 = vmatprep.subr.mxu0 0.0
  %194 = vmatpush2.msra.mxu0 0.0
  %195 = vmatprep.subr.mxu0 0.0
  %196 = vmatpush2.msra.mxu0 0.0
  %197 = vmatprep.subr.mxu0 0.0
  %198 = vmatpush2.msra.mxu0 0.0
  %199 = vmatprep.subr.mxu0 0.0
  %200 = vmatpush2.msra.mxu0 0.0
  %201 = vmatprep.subr.mxu0 0.0
  %202 = vmatpush2.msra.mxu0 0.0
  %203 = vmatprep.subr.mxu0 0.0
  %204 = vmatpush2.msra.mxu0 0.0
  %205 = vmatprep.subr.mxu0 0.0
  %206 = vmatpush2.msra.mxu0 0.0
  %207 = vmatprep.subr.mxu0 0.0
  %208 = vmatpush2.msra.mxu0 0.0
  %209 = vmatprep.subr.mxu0 0.0
  %210 = vmatpush2.msra.mxu0 0.0
  %211 = vmatprep.subr.mxu0 0.0
  %212 = vmatpush2.msra.mxu0 0.0
  %213 = vmatprep.subr.mxu0 0.0
  %214 = vmatpush2.msra.mxu0 0.0
  %215 = vmatprep.subr.mxu0 0.0
  %216 = vmatpush2.msra.mxu0 0.0
  %217 = vmatprep.subr.mxu0 0.0
  %218 = vmatpush2.msra.mxu0 0.0
  %219 = vmatprep.subr.mxu0 0.0
  %220 = vmatpush2.msra.mxu0 0.0
  %221 = vmatprep.mubr.f32.mxu0 0.0
  %222 = vmatmul.mubr.f32.gmra.mxu0 %v155
  %v223 = vpop.f32.mrf.mxu0
  %v224 = vadd.f32 %v152, %v223
  %v225 = vpop.f32.mrf.mxu0
  %226 = vdwg.mxu0
  %227 = vst.msk [vmem:[%s7] sm:$0xff] %vm29, %v224
  // Predicated region
  $region30: #{run.33} parent=0 // pred_check
    _
  $region31: #{run.33} parent=0 // pred_check_branch
    %229 = sbr.rel (0) target = $region33
  $region32: #{run.33} parent=0 // pred_region
    _
  $region33: #{run.33} parent=0 // pred_fallthru
    _
  // Predicated region
  $region34: #{run.33} parent=0 // pred_check
    _
  $region35: #{run.33} parent=0 // pred_check_branch
    %231 = sbr.rel (0) target = $region37
  $region36: #{run.33} parent=0 // pred_region
    _
  $region37: #{run.33} parent=0 // pred_fallthru
    _

// kernel: run.38
$region0: #{run.38}
  #allocation0 [shape = 'u32[]', space=smem, size = 0x4, offset = 0x4, fixed_abs, tag = 'smem constant byte address 0x4 - core index']
  #allocation1 [shape = 'u32[144,128]{1,0:T(1,128)}', space=vmem, size = 0x12000, scoped, tag = 'internal scratch']
  %s0 = inlined_call_operand.vmem [shape: f32[8,32], index: 0, kind: input, shape index: {}]
  %s1 = inlined_call_operand.vmem [shape: f32[1,32], index: 1, kind: input, shape index: {}]
  %s2 = inlined_call_operand.hbm [shape: f32[1,32], index: 2, kind: input, shape index: {}]
  %s3 = inlined_call_operand.vmem [shape: f32[32,32], index: 3, kind: input, shape index: {}]
  %s4 = inlined_call_operand.hbm [shape: f32[1,32], index: 4, kind: input, shape index: {}]
  %s5 = inlined_call_operand.vmem [shape: f32[32,32], index: 5, kind: input, shape index: {}]
  %s6 = inlined_call_operand.hbm [shape: f32[1,32], index: 6, kind: input, shape index: {}]
  %s7 = inlined_call_operand.vmem [shape: f32[8,32], index: 7, kind: output, shape index: {}]
  %s8 = sld [smem:[#allocation0]]
  $region50: #{run.38} parent=0
    _
  %s10 = ssub.s32 1, %s8
  %s11 = scalar_select 0, %s10, %s8
  $region1: #{run.38} parent=0
    #allocation2 [shape = 'u8[512]{0}', space=vmem, size = 0x400, scoped, tag = 'input window, operand 2, single buffered']
    #allocation3 [shape = 's32[1]{0}', space=sflag, size = 0x4, scoped, tag = 'scoped memory for run.38']
    #allocation4 [shape = 'u8[512]{0}', space=vmem, size = 0x400, scoped, tag = 'input window, operand 4, single buffered']
    #allocation5 [shape = 's32[1]{0}', space=sflag, size = 0x4, scoped, tag = 'scoped memory for run.38']
    #allocation6 [shape = 'u8[512]{0}', space=vmem, size = 0x400, scoped, tag = 'input window, operand 6, single buffered']
    %12 = vsyncpa [#allocation3], 0
    %13 = vsyncpa [#allocation5], 0
    // Predicated region
    $region2: #{run.38} parent=1 // pred_check
      _
    $region3: #{run.38} parent=1 // pred_check_branch
      %15 = sbr.rel (0) target = $region5
    $region4: #{run.38} parent=1 // pred_region
      _
    $region5: #{run.38} parent=1 // pred_fallthru
      _
    // Predicated region
    $region6: #{run.38} parent=1 // pred_check
      _
    $region7: #{run.38} parent=1 // pred_check_branch
      %17 = sbr.rel (0) target = $region9
    $region8: #{run.38} parent=1 // pred_region
      _
    $region9: #{run.38} parent=1 // pred_fallthru
      _
    // Predicated region
    $region10: #{run.38} parent=1 // pred_check
      _
    $region11: #{run.38} parent=1 // pred_check_branch
      %19 = sbr.rel (0) target = $region13
    $region12: #{run.38} parent=1 // pred_region
      %s21 = ssub.s32 16, 16
      %22 = vsyncadd [#allocation3], %s21
      %s24 = sshll.u32 [#allocation2], 4
      %s25 = int_to_ptr.vmem [resolvable:$true] %s24
      %27 = dma.hbm_to_vmem [thread:$0]  %s2, 16, %s25, [#allocation3]
    $region13: #{run.38} parent=1 // pred_fallthru
      _
    // Predicated region
    $region14: #{run.38} parent=1 // pred_check
      _
    $region15: #{run.38} parent=1 // pred_check_branch
      %29 = sbr.rel (0) target = $region17
    $region16: #{run.38} parent=1 // pred_region
      _
    $region17: #{run.38} parent=1 // pred_fallthru
      _
    // Predicated region
    $region18: #{run.38} parent=1 // pred_check
      _
    $region19: #{run.38} parent=1 // pred_check_branch
      %31 = sbr.rel (0) target = $region21
    $region20: #{run.38} parent=1 // pred_region
      %s33 = ssub.s32 16, 16
      %34 = vsyncadd [#allocation5], %s33
      %s36 = sshll.u32 [#allocation4], 4
      %s37 = int_to_ptr.vmem [resolvable:$true] %s36
      %39 = dma.hbm_to_vmem [thread:$0]  %s4, 16, %s37, [#allocation5]
    $region21: #{run.38} parent=1 // pred_fallthru
      _
    // Predicated region
    $region22: #{run.38} parent=1 // pred_check
      _
    $region23: #{run.38} parent=1 // pred_check_branch
      %41 = sbr.rel (0) target = $region25
    $region24: #{run.38} parent=1 // pred_region
      _
    $region25: #{run.38} parent=1 // pred_fallthru
      _
    // Predicated region
    $region26: #{run.38} parent=1 // pred_check
      _
    $region27: #{run.38} parent=1 // pred_check_branch
      %43 = sbr.rel (0) target = $region29
    $region28: #{run.38} parent=1 // pred_region
      %s45 = ssub.s32 16, 16
      %46 = vsyncadd [#allocation5], %s45
      %s48 = sshll.u32 [#allocation6], 4
      %s49 = int_to_ptr.vmem [resolvable:$true] %s48
      %51 = dma.hbm_to_vmem [thread:$0]  %s6, 16, %s49, [#allocation5]
    $region29: #{run.38} parent=1 // pred_fallthru
      _
    // Predicated region
    $region30: #{run.38} parent=1 // pred_check
      _
    $region31: #{run.38} parent=1 // pred_check_branch
      %53 = sbr.rel (0) target = $region33
    $region32: #{run.38} parent=1 // pred_region
      %54 = dma.done [#allocation3], 16
    $region33: #{run.38} parent=1 // pred_fallthru
      _
    // Predicated region
    $region34: #{run.38} parent=1 // pred_check
      _
    $region35: #{run.38} parent=1 // pred_check_branch
      %56 = sbr.rel (0) target = $region37
    $region36: #{run.38} parent=1 // pred_region
      %57 = dma.done [#allocation5], 16
    $region37: #{run.38} parent=1 // pred_fallthru
      _
    // Predicated region
    $region38: #{run.38} parent=1 // pred_check
      _
    $region39: #{run.38} parent=1 // pred_check_branch
      %59 = sbr.rel (0) target = $region41
    $region40: #{run.38} parent=1 // pred_region
      %60 = dma.done [#allocation5], 16
    $region41: #{run.38} parent=1 // pred_fallthru
      _
    %v61 = vld [vmem:[%s0] sm:$0xff]
    %v62 = vld [vmem:[%s1] sm:$0x1]
    %v63 = vld [vmem:[#allocation2] sm:$0x1]
    %vm64 = vcmask 261120
    %v65 = vsel %vm64, %v61, 0.0
    %66 = vadd.xlane.f32.xlu0 %v65
    %v67 = vpop.xlane.xlu0 %66
    %v68 = vrcp.pop 32.0
    %v69 = vmul.f32 %v67, %v68
    %v70 = vsub.f32 %v61, %v69
    %v71 = vmul.f32 %v70, %v70
    %v72 = vsel %vm64, %v71, 0.0
    %73 = vadd.xlane.f32.xlu0 %v72
    %v74 = vpop.xlane.xlu0 %73
    %v75 = vmul.f32 %v74, %v68
    %v76 = vadd.f32 %v75, 1e-05
    %v77 = vrsqrt.pop %v76
    %v78 = vmul.f32 %v70, %v77
    %v80 = vlaneseq
    %v81 = vshrl.u32 %v80, 7
    %v82 = vsub.s32 0, %v81
    %v83 = vrot.slane %v62, %v82
    %v85 = vmul.f32 %v78, %v83
    %v87 = vlaneseq
    %v88 = vshrl.u32 %v87, 7
    %v89 = vsub.s32 0, %v88
    %v90 = vrot.slane %v63, %v89
    %v92 = vadd.f32 %v85, %v90
    %v93 = vld [vmem:[%s3] sm:$0xff]
    %v94 = vld [vmem:[%s3 + $0x8] sm:$0xff]
    %v95 = vld [vmem:[%s3 + $0x10] sm:$0xff]
    %v96 = vld [vmem:[%s3 + $0x18] sm:$0xff]
    %v97 = vld [vmem:[#allocation4] sm:$0x1]
    %v99 = vlaneseq
    %v100 = vshrl.u32 %v99, 7
    %v101 = vsub.s32 0, %v100
    %v102 = vrot.slane %v97, %v101
    %v105 = vsel %vm64, %v92, 0
    %107 = vmatprep.subr.mxu0 0.0
    %108 = vmatpush1.msra.mxu0 0.0
    %109 = vmatprep.subr.mxu0 0.0
    %110 = vmatpush1.msra.mxu0 0.0
    %111 = vmatprep.subr.mxu0 0.0
    %112 = vmatpush1.msra.mxu0 0.0
    %113 = vmatprep.subr.mxu0 0.0
    %114 = vmatpush1.msra.mxu0 0.0
    %115 = vmatprep.subr.mxu0 0.0
    %116 = vmatpush1.msra.mxu0 0.0
    %117 = vmatprep.subr.mxu0 0.0
    %118 = vmatpush1.msra.mxu0 0.0
    %119 = vmatprep.subr.mxu0 0.0
    %120 = vmatpush1.msra.mxu0 0.0
    %121 = vmatprep.subr.mxu0 0.0
    %122 = vmatpush1.msra.mxu0 0.0
    %123 = vmatprep.subr.mxu0 0.0
    %124 = vmatpush1.msra.mxu0 0.0
    %125 = vmatprep.subr.mxu0 0.0
    %126 = vmatpush1.msra.mxu0 0.0
    %127 = vmatprep.subr.mxu0 0.0
    %128 = vmatpush1.msra.mxu0 0.0
    %129 = vmatprep.subr.mxu0 0.0
    %130 = vmatpush1.msra.mxu0 0.0
    %131 = vmatprep.subr.mxu0 0.0
    %132 = vmatpush1.msra.mxu0 %v96
    %133 = vmatprep.subr.mxu0 0.0
    %134 = vmatpush1.msra.mxu0 %v95
    %135 = vmatprep.subr.mxu0 0.0
    %136 = vmatpush1.msra.mxu0 %v94
    %137 = vmatprep.subr.mxu0 0.0
    %138 = vmatpush1.msra.mxu0 %v93
    %139 = vmatprep.subr.mxu0 0.0
    %140 = vmatpush2.msra.mxu0 0.0
    %141 = vmatprep.subr.mxu0 0.0
    %142 = vmatpush2.msra.mxu0 0.0
    %143 = vmatprep.subr.mxu0 0.0
    %144 = vmatpush2.msra.mxu0 0.0
    %145 = vmatprep.subr.mxu0 0.0
    %146 = vmatpush2.msra.mxu0 0.0
    %147 = vmatprep.subr.mxu0 0.0
    %148 = vmatpush2.msra.mxu0 0.0
    %149 = vmatprep.subr.mxu0 0.0
    %150 = vmatpush2.msra.mxu0 0.0
    %151 = vmatprep.subr.mxu0 0.0
    %152 = vmatpush2.msra.mxu0 0.0
    %153 = vmatprep.subr.mxu0 0.0
    %154 = vmatpush2.msra.mxu0 0.0
    %155 = vmatprep.subr.mxu0 0.0
    %156 = vmatpush2.msra.mxu0 0.0
    %157 = vmatprep.subr.mxu0 0.0
    %158 = vmatpush2.msra.mxu0 0.0
    %159 = vmatprep.subr.mxu0 0.0
    %160 = vmatpush2.msra.mxu0 0.0
    %161 = vmatprep.subr.mxu0 0.0
    %162 = vmatpush2.msra.mxu0 0.0
    %163 = vmatprep.subr.mxu0 0.0
    %164 = vmatpush2.msra.mxu0 0.0
    %165 = vmatprep.subr.mxu0 0.0
    %166 = vmatpush2.msra.mxu0 0.0
    %167 = vmatprep.subr.mxu0 0.0
    %168 = vmatpush2.msra.mxu0 0.0
    %169 = vmatprep.subr.mxu0 0.0
    %170 = vmatpush2.msra.mxu0 0.0
    %171 = vmatprep.mubr.f32.mxu0 0.0
    %172 = vmatmul.mubr.f32.gmra.mxu0 %v105
    %v173 = vpop.f32.mrf.mxu0
    %v174 = vadd.f32 %v102, %v173
    %v175 = vpop.f32.mrf.mxu0
    %176 = vdwg.mxu0
    %v177 = vmax.f32 %v174, 0.0
    %v178 = vld [vmem:[%s5] sm:$0xff]
    %v179 = vld [vmem:[%s5 + $0x8] sm:$0xff]
    %v180 = vld [vmem:[%s5 + $0x10] sm:$0xff]
    %v181 = vld [vmem:[%s5 + $0x18] sm:$0xff]
    %v182 = vld [vmem:[#allocation6] sm:$0x1]
    %v184 = vlaneseq
    %v185 = vshrl.u32 %v184, 7
    %v186 = vsub.s32 0, %v185
    %v187 = vrot.slane %v182, %v186
    %v190 = vsel %vm64, %v177, 0
    %192 = vmatprep.subr.mxu0 0.0
    %193 = vmatpush1.msra.mxu0 0.0
    %194 = vmatprep.subr.mxu0 0.0
    %195 = vmatpush1.msra.mxu0 0.0
    %196 = vmatprep.subr.mxu0 0.0
    %197 = vmatpush1.msra.mxu0 0.0
    %198 = vmatprep.subr.mxu0 0.0
    %199 = vmatpush1.msra.mxu0 0.0
    %200 = vmatprep.subr.mxu0 0.0
    %201 = vmatpush1.msra.mxu0 0.0
    %202 = vmatprep.subr.mxu0 0.0
    %203 = vmatpush1.msra.mxu0 0.0
    %204 = vmatprep.subr.mxu0 0.0
    %205 = vmatpush1.msra.mxu0 0.0
    %206 = vmatprep.subr.mxu0 0.0
    %207 = vmatpush1.msra.mxu0 0.0
    %208 = vmatprep.subr.mxu0 0.0
    %209 = vmatpush1.msra.mxu0 0.0
    %210 = vmatprep.subr.mxu0 0.0
    %211 = vmatpush1.msra.mxu0 0.0
    %212 = vmatprep.subr.mxu0 0.0
    %213 = vmatpush1.msra.mxu0 0.0
    %214 = vmatprep.subr.mxu0 0.0
    %215 = vmatpush1.msra.mxu0 0.0
    %216 = vmatprep.subr.mxu0 0.0
    %217 = vmatpush1.msra.mxu0 %v181
    %218 = vmatprep.subr.mxu0 0.0
    %219 = vmatpush1.msra.mxu0 %v180
    %220 = vmatprep.subr.mxu0 0.0
    %221 = vmatpush1.msra.mxu0 %v179
    %222 = vmatprep.subr.mxu0 0.0
    %223 = vmatpush1.msra.mxu0 %v178
    %224 = vmatprep.subr.mxu0 0.0
    %225 = vmatpush2.msra.mxu0 0.0
    %226 = vmatprep.subr.mxu0 0.0
    %227 = vmatpush2.msra.mxu0 0.0
    %228 = vmatprep.subr.mxu0 0.0
    %229 = vmatpush2.msra.mxu0 0.0
    %230 = vmatprep.subr.mxu0 0.0
    %231 = vmatpush2.msra.mxu0 0.0
    %232 = vmatprep.subr.mxu0 0.0
    %233 = vmatpush2.msra.mxu0 0.0
    %234 = vmatprep.subr.mxu0 0.0
    %235 = vmatpush2.msra.mxu0 0.0
    %236 = vmatprep.subr.mxu0 0.0
    %237 = vmatpush2.msra.mxu0 0.0
    %238 = vmatprep.subr.mxu0 0.0
    %239 = vmatpush2.msra.mxu0 0.0
    %240 = vmatprep.subr.mxu0 0.0
    %241 = vmatpush2.msra.mxu0 0.0
    %242 = vmatprep.subr.mxu0 0.0
    %243 = vmatpush2.msra.mxu0 0.0
    %244 = vmatprep.subr.mxu0 0.0
    %245 = vmatpush2.msra.mxu0 0.0
    %246 = vmatprep.subr.mxu0 0.0
    %247 = vmatpush2.msra.mxu0 0.0
    %248 = vmatprep.subr.mxu0 0.0
    %249 = vmatpush2.msra.mxu0 0.0
    %250 = vmatprep.subr.mxu0 0.0
    %251 = vmatpush2.msra.mxu0 0.0
    %252 = vmatprep.subr.mxu0 0.0
    %253 = vmatpush2.msra.mxu0 0.0
    %254 = vmatprep.subr.mxu0 0.0
    %255 = vmatpush2.msra.mxu0 0.0
    %256 = vmatprep.mubr.f32.mxu0 0.0
    %257 = vmatmul.mubr.f32.gmra.mxu0 %v190
    %v258 = vpop.f32.mrf.mxu0
    %v259 = vadd.f32 %v187, %v258
    %v260 = vpop.f32.mrf.mxu0
    %261 = vdwg.mxu0
    %262 = vst.msk [vmem:[%s7] sm:$0xff] %vm64, %v259
    // Predicated region
    $region42: #{run.38} parent=1 // pred_check
      _
    $region43: #{run.38} parent=1 // pred_check_branch
      %264 = sbr.rel (0) target = $region45
    $region44: #{run.38} parent=1 // pred_region
      _
    $region45: #{run.38} parent=1 // pred_fallthru
      _
    // Predicated region
    $region46: #{run.38} parent=1 // pred_check
      _
    $region47: #{run.38} parent=1 // pred_check_branch
      %266 = sbr.rel (0) target = $region49
    $region48: #{run.38} parent=1 // pred_region
      _
    $region49: #{run.38} parent=1 // pred_fallthru
      _
    %267 = vsyncpa [#allocation3], 1
    %268 = vsyncpa [#allocation5], 1

// kernel: run.39
$region0: #{run.39}
  #allocation0 [shape = 'u32[]', space=smem, size = 0x4, offset = 0x4, fixed_abs, tag = 'smem constant byte address 0x4 - core index']
  #allocation1 [shape = 'u32[144,128]{1,0:T(1,128)}', space=vmem, size = 0x12000, scoped, tag = 'internal scratch']
  %s0 = inlined_call_operand.vmem [shape: f32[8,24], index: 0, kind: input, shape index: {}]
  %s1 = inlined_call_operand.vmem [shape: f32[24,64], index: 1, kind: input, shape index: {}]
  %s2 = inlined_call_operand.hbm [shape: f32[1,64], index: 2, kind: input, shape index: {}]
  %s3 = inlined_call_operand.vmem [shape: f32[8,64], index: 3, kind: output, shape index: {}]
  %s4 = sld [smem:[#allocation0]]
  $region26: #{run.39} parent=0
    _
  %s6 = ssub.s32 1, %s4
  %s7 = scalar_select 0, %s6, %s4
  $region1: #{run.39} parent=0
    #allocation2 [shape = 'u8[512]{0}', space=vmem, size = 0x400, scoped, tag = 'input window, operand 2, single buffered']
    #allocation3 [shape = 's32[1]{0}', space=sflag, size = 0x4, scoped, tag = 'scoped memory for run.39']
    %8 = vsyncpa [#allocation3], 0
    // Predicated region
    $region2: #{run.39} parent=1 // pred_check
      _
    $region3: #{run.39} parent=1 // pred_check_branch
      %10 = sbr.rel (0) target = $region5
    $region4: #{run.39} parent=1 // pred_region
      _
    $region5: #{run.39} parent=1 // pred_fallthru
      _
    // Predicated region
    $region6: #{run.39} parent=1 // pred_check
      _
    $region7: #{run.39} parent=1 // pred_check_branch
      %12 = sbr.rel (0) target = $region9
    $region8: #{run.39} parent=1 // pred_region
      _
    $region9: #{run.39} parent=1 // pred_fallthru
      _
    // Predicated region
    $region10: #{run.39} parent=1 // pred_check
      _
    $region11: #{run.39} parent=1 // pred_check_branch
      %14 = sbr.rel (0) target = $region13
    $region12: #{run.39} parent=1 // pred_region
      %s16 = ssub.s32 16, 16
      %17 = vsyncadd [#allocation3], %s16
      %s19 = sshll.u32 [#allocation2], 4
      %s20 = int_to_ptr.vmem [resolvable:$true] %s19
      %22 = dma.hbm_to_vmem [thread:$0]  %s2, 16, %s20, [#allocation3]
    $region13: #{run.39} parent=1 // pred_fallthru
      _
    // Predicated region
    $region14: #{run.39} parent=1 // pred_check
      _
    $region15: #{run.39} parent=1 // pred_check_branch
      %24 = sbr.rel (0) target = $region17
    $region16: #{run.39} parent=1 // pred_region
      %25 = dma.done [#allocation3], 16
    $region17: #{run.39} parent=1 // pred_fallthru
      _
    %v26 = vld [vmem:[%s0] sm:$0xff]
    %v27 = vld [vmem:[%s1] sm:$0xff]
    %v28 = vld [vmem:[%s1 + $0x8] sm:$0xff]
    %v29 = vld [vmem:[%s1 + $0x10] sm:$0xff]
    %v30 = vld [vmem:[#allocation2] sm:$0x1]
    %v32 = vlaneseq
    %v33 = vshrl.u32 %v32, 7
    %v34 = vsub.s32 0, %v33
    %v35 = vrot.slane %v30, %v34
    %vm37 = vcmask 195584
    %v39 = vsel %vm37, %v26, 0
    %41 = vmatprep.subr.mxu0 0.0
    %42 = vmatpush1.msra.mxu0 0.0
    %43 = vmatprep.subr.mxu0 0.0
    %44 = vmatpush1.msra.mxu0 0.0
    %45 = vmatprep.subr.mxu0 0.0
    %46 = vmatpush1.msra.mxu0 0.0
    %47 = vmatprep.subr.mxu0 0.0
    %48 = vmatpush1.msra.mxu0 0.0
    %49 = vmatprep.subr.mxu0 0.0
    %50 = vmatpush1.msra.mxu0 0.0
    %51 = vmatprep.subr.mxu0 0.0
    %52 = vmatpush1.msra.mxu0 0.0
    %53 = vmatprep.subr.mxu0 0.0
    %54 = vmatpush1.msra.mxu0 0.0
    %55 = vmatprep.subr.mxu0 0.0
    %56 = vmatpush1.msra.mxu0 0.0
    %57 = vmatprep.subr.mxu0 0.0
    %58 = vmatpush1.msra.mxu0 0.0
    %59 = vmatprep.subr.mxu0 0.0
    %60 = vmatpush1.msra.mxu0 0.0
    %61 = vmatprep.subr.mxu0 0.0
    %62 = vmatpush1.msra.mxu0 0.0
    %63 = vmatprep.subr.mxu0 0.0
    %64 = vmatpush1.msra.mxu0 0.0
    %65 = vmatprep.subr.mxu0 0.0
    %66 = vmatpush1.msra.mxu0 0.0
    %67 = vmatprep.subr.mxu0 0.0
    %68 = vmatpush1.msra.mxu0 %v29
    %69 = vmatprep.subr.mxu0 0.0
    %70 = vmatpush1.msra.mxu0 %v28
    %71 = vmatprep.subr.mxu0 0.0
    %72 = vmatpush1.msra.mxu0 %v27
    %73 = vmatprep.subr.mxu0 0.0
    %74 = vmatpush2.msra.mxu0 0.0
    %75 = vmatprep.subr.mxu0 0.0
    %76 = vmatpush2.msra.mxu0 0.0
    %77 = vmatprep.subr.mxu0 0.0
    %78 = vmatpush2.msra.mxu0 0.0
    %79 = vmatprep.subr.mxu0 0.0
    %80 = vmatpush2.msra.mxu0 0.0
    %81 = vmatprep.subr.mxu0 0.0
    %82 = vmatpush2.msra.mxu0 0.0
    %83 = vmatprep.subr.mxu0 0.0
    %84 = vmatpush2.msra.mxu0 0.0
    %85 = vmatprep.subr.mxu0 0.0
    %86 = vmatpush2.msra.mxu0 0.0
    %87 = vmatprep.subr.mxu0 0.0
    %88 = vmatpush2.msra.mxu0 0.0
    %89 = vmatprep.subr.mxu0 0.0
    %90 = vmatpush2.msra.mxu0 0.0
    %91 = vmatprep.subr.mxu0 0.0
    %92 = vmatpush2.msra.mxu0 0.0
    %93 = vmatprep.subr.mxu0 0.0
    %94 = vmatpush2.msra.mxu0 0.0
    %95 = vmatprep.subr.mxu0 0.0
    %96 = vmatpush2.msra.mxu0 0.0
    %97 = vmatprep.subr.mxu0 0.0
    %98 = vmatpush2.msra.mxu0 0.0
    %99 = vmatprep.subr.mxu0 0.0
    %100 = vmatpush2.msra.mxu0 0.0
    %101 = vmatprep.subr.mxu0 0.0
    %102 = vmatpush2.msra.mxu0 0.0
    %103 = vmatprep.subr.mxu0 0.0
    %104 = vmatpush2.msra.mxu0 0.0
    %105 = vmatprep.mubr.f32.mxu0 0.0
    %106 = vmatmul.mubr.f32.gmra.mxu0 %v39
    %v107 = vpop.f32.mrf.mxu0
    %v108 = vadd.f32 %v35, %v107
    %v109 = vpop.f32.mrf.mxu0
    %110 = vdwg.mxu0
    %v111 = vmax.f32 %v108, 0.0
    %vm112 = vcmask 523264
    %113 = vst.msk [vmem:[%s3] sm:$0xff] %vm112, %v111
    // Predicated region
    $region18: #{run.39} parent=1 // pred_check
      _
    $region19: #{run.39} parent=1 // pred_check_branch
      %115 = sbr.rel (0) target = $region21
    $region20: #{run.39} parent=1 // pred_region
      _
    $region21: #{run.39} parent=1 // pred_fallthru
      _
    // Predicated region
    $region22: #{run.39} parent=1 // pred_check
      _
    $region23: #{run.39} parent=1 // pred_check_branch
      %117 = sbr.rel (0) target = $region25
    $region24: #{run.39} parent=1 // pred_region
      _
    $region25: #{run.39} parent=1 // pred_fallthru
      _
    %118 = vsyncpa [#allocation3], 1

// kernel: run.40
$region0: #{run.40}
  #allocation0 [shape = 'u32[]', space=smem, size = 0x4, offset = 0x4, fixed_abs, tag = 'smem constant byte address 0x4 - core index']
  #allocation1 [shape = 'u32[144,128]{1,0:T(1,128)}', space=vmem, size = 0x12000, scoped, tag = 'internal scratch']
  %s0 = inlined_call_operand.vmem [shape: f32[8,64], index: 0, kind: input, shape index: {}]
  %s1 = inlined_call_operand.vmem [shape: f32[64,32], index: 1, kind: input, shape index: {}]
  %s2 = inlined_call_operand.hbm [shape: f32[1,32], index: 2, kind: input, shape index: {}]
  %s3 = inlined_call_operand.vmem [shape: f32[8,32], index: 3, kind: output, shape index: {}]
  %s4 = sld [smem:[#allocation0]]
  $region26: #{run.40} parent=0
    _
  %s6 = ssub.s32 1, %s4
  %s7 = scalar_select 0, %s6, %s4
  $region1: #{run.40} parent=0
    #allocation2 [shape = 'u8[512]{0}', space=vmem, size = 0x400, scoped, tag = 'input window, operand 2, single buffered']
    #allocation3 [shape = 's32[1]{0}', space=sflag, size = 0x4, scoped, tag = 'scoped memory for run.40']
    %8 = vsyncpa [#allocation3], 0
    // Predicated region
    $region2: #{run.40} parent=1 // pred_check
      _
    $region3: #{run.40} parent=1 // pred_check_branch
      %10 = sbr.rel (0) target = $region5
    $region4: #{run.40} parent=1 // pred_region
      _
    $region5: #{run.40} parent=1 // pred_fallthru
      _
    // Predicated region
    $region6: #{run.40} parent=1 // pred_check
      _
    $region7: #{run.40} parent=1 // pred_check_branch
      %12 = sbr.rel (0) target = $region9
    $region8: #{run.40} parent=1 // pred_region
      _
    $region9: #{run.40} parent=1 // pred_fallthru
      _
    // Predicated region
    $region10: #{run.40} parent=1 // pred_check
      _
    $region11: #{run.40} parent=1 // pred_check_branch
      %14 = sbr.rel (0) target = $region13
    $region12: #{run.40} parent=1 // pred_region
      %s16 = ssub.s32 16, 16
      %17 = vsyncadd [#allocation3], %s16
      %s19 = sshll.u32 [#allocation2], 4
      %s20 = int_to_ptr.vmem [resolvable:$true] %s19
      %22 = dma.hbm_to_vmem [thread:$0]  %s2, 16, %s20, [#allocation3]
    $region13: #{run.40} parent=1 // pred_fallthru
      _
    // Predicated region
    $region14: #{run.40} parent=1 // pred_check
      _
    $region15: #{run.40} parent=1 // pred_check_branch
      %24 = sbr.rel (0) target = $region17
    $region16: #{run.40} parent=1 // pred_region
      %25 = dma.done [#allocation3], 16
    $region17: #{run.40} parent=1 // pred_fallthru
      _
    %v26 = vld [vmem:[%s0] sm:$0xff]
    %v27 = vld [vmem:[%s1] sm:$0xff]
    %v28 = vld [vmem:[%s1 + $0x8] sm:$0xff]
    %v29 = vld [vmem:[%s1 + $0x10] sm:$0xff]
    %v30 = vld [vmem:[%s1 + $0x18] sm:$0xff]
    %v31 = vld [vmem:[%s1 + $0x20] sm:$0xff]
    %v32 = vld [vmem:[%s1 + $0x28] sm:$0xff]
    %v33 = vld [vmem:[%s1 + $0x30] sm:$0xff]
    %v34 = vld [vmem:[%s1 + $0x38] sm:$0xff]
    %v35 = vld [vmem:[#allocation2] sm:$0x1]
    %v37 = vlaneseq
    %v38 = vshrl.u32 %v37, 7
    %v39 = vsub.s32 0, %v38
    %v40 = vrot.slane %v35, %v39
    %vm42 = vcmask 523264
    %v44 = vsel %vm42, %v26, 0
    %46 = vmatprep.subr.mxu0 0.0
    %47 = vmatpush1.msra.mxu0 0.0
    %48 = vmatprep.subr.mxu0 0.0
    %49 = vmatpush1.msra.mxu0 0.0
    %50 = vmatprep.subr.mxu0 0.0
    %51 = vmatpush1.msra.mxu0 0.0
    %52 = vmatprep.subr.mxu0 0.0
    %53 = vmatpush1.msra.mxu0 0.0
    %54 = vmatprep.subr.mxu0 0.0
    %55 = vmatpush1.msra.mxu0 0.0
    %56 = vmatprep.subr.mxu0 0.0
    %57 = vmatpush1.msra.mxu0 0.0
    %58 = vmatprep.subr.mxu0 0.0
    %59 = vmatpush1.msra.mxu0 0.0
    %60 = vmatprep.subr.mxu0 0.0
    %61 = vmatpush1.msra.mxu0 0.0
    %62 = vmatprep.subr.mxu0 0.0
    %63 = vmatpush1.msra.mxu0 %v34
    %64 = vmatprep.subr.mxu0 0.0
    %65 = vmatpush1.msra.mxu0 %v33
    %66 = vmatprep.subr.mxu0 0.0
    %67 = vmatpush1.msra.mxu0 %v32
    %68 = vmatprep.subr.mxu0 0.0
    %69 = vmatpush1.msra.mxu0 %v31
    %70 = vmatprep.subr.mxu0 0.0
    %71 = vmatpush1.msra.mxu0 %v30
    %72 = vmatprep.subr.mxu0 0.0
    %73 = vmatpush1.msra.mxu0 %v29
    %74 = vmatprep.subr.mxu0 0.0
    %75 = vmatpush1.msra.mxu0 %v28
    %76 = vmatprep.subr.mxu0 0.0
    %77 = vmatpush1.msra.mxu0 %v27
    %78 = vmatprep.subr.mxu0 0.0
    %79 = vmatpush2.msra.mxu0 0.0
    %80 = vmatprep.subr.mxu0 0.0
    %81 = vmatpush2.msra.mxu0 0.0
    %82 = vmatprep.subr.mxu0 0.0
    %83 = vmatpush2.msra.mxu0 0.0
    %84 = vmatprep.subr.mxu0 0.0
    %85 = vmatpush2.msra.mxu0 0.0
    %86 = vmatprep.subr.mxu0 0.0
    %87 = vmatpush2.msra.mxu0 0.0
    %88 = vmatprep.subr.mxu0 0.0
    %89 = vmatpush2.msra.mxu0 0.0
    %90 = vmatprep.subr.mxu0 0.0
    %91 = vmatpush2.msra.mxu0 0.0
    %92 = vmatprep.subr.mxu0 0.0
    %93 = vmatpush2.msra.mxu0 0.0
    %94 = vmatprep.subr.mxu0 0.0
    %95 = vmatpush2.msra.mxu0 0.0
    %96 = vmatprep.subr.mxu0 0.0
    %97 = vmatpush2.msra.mxu0 0.0
    %98 = vmatprep.subr.mxu0 0.0
    %99 = vmatpush2.msra.mxu0 0.0
    %100 = vmatprep.subr.mxu0 0.0
    %101 = vmatpush2.msra.mxu0 0.0
    %102 = vmatprep.subr.mxu0 0.0
    %103 = vmatpush2.msra.mxu0 0.0
    %104 = vmatprep.subr.mxu0 0.0
    %105 = vmatpush2.msra.mxu0 0.0
    %106 = vmatprep.subr.mxu0 0.0
    %107 = vmatpush2.msra.mxu0 0.0
    %108 = vmatprep.subr.mxu0 0.0
    %109 = vmatpush2.msra.mxu0 0.0
    %110 = vmatprep.mubr.f32.mxu0 0.0
    %111 = vmatmul.mubr.f32.gmra.mxu0 %v44
    %v112 = vpop.f32.mrf.mxu0
    %v113 = vadd.f32 %v40, %v112
    %v114 = vpop.f32.mrf.mxu0
    %115 = vdwg.mxu0
    %v116 = vmax.f32 %v113, 0.0
    %vm117 = vcmask 261120
    %118 = vst.msk [vmem:[%s3] sm:$0xff] %vm117, %v116
    // Predicated region
    $region18: #{run.40} parent=1 // pred_check
      _
    $region19: #{run.40} parent=1 // pred_check_branch
      %120 = sbr.rel (0) target = $region21
    $region20: #{run.40} parent=1 // pred_region
      _
    $region21: #{run.40} parent=1 // pred_fallthru
      _
    // Predicated region
    $region22: #{run.40} parent=1 // pred_check
      _
    $region23: #{run.40} parent=1 // pred_check_branch
      %122 = sbr.rel (0) target = $region25
    $region24: #{run.40} parent=1 // pred_region
      _
    $region25: #{run.40} parent=1 // pred_fallthru
      _
    %123 = vsyncpa [#allocation3], 1

// kernel: run.41
$region0: #{run.41}
  #allocation0 [shape = 'u32[]', space=smem, size = 0x4, offset = 0x4, fixed_abs, tag = 'smem constant byte address 0x4 - core index']
  #allocation1 [shape = 'u32[144,128]{1,0:T(1,128)}', space=vmem, size = 0x12000, scoped, tag = 'internal scratch']
  #allocation2 [shape = 'f32[2,32]{1,0:T(2,128)}', space=vmem, size = 0x400, scoped, tag = 'scratch operand']
  #allocation3 [shape = 'f32[2,32]{1,0:T(2,128)}', space=vmem, size = 0x400, scoped, tag = 'scratch operand']
  %s0 = inlined_call_operand.vmem [shape: f32[4,2,32], index: 0, kind: input, shape index: {}]
  %s1 = inlined_call_operand.vmem [shape: f32[4,2,32], index: 1, kind: input, shape index: {}]
  %s2 = inlined_call_operand.vmem [shape: f32[4,2,32], index: 2, kind: input, shape index: {}]
  %s3 = inlined_call_operand.vmem [shape: f32[4,2,1], index: 3, kind: input, shape index: {}]
  %s4 = inlined_call_operand.vmem [shape: f32[2,32], index: 4, kind: input, shape index: {}]
  %s5 = inlined_call_operand.vmem [shape: f32[2,32], index: 5, kind: input, shape index: {}]
  %s6 = inlined_call_operand.vmem [shape: f32[32,128], index: 6, kind: input, shape index: {}]
  %s7 = inlined_call_operand.vmem [shape: f32[32,128], index: 7, kind: input, shape index: {}]
  %s8 = inlined_call_operand.vmem [shape: f32[1,128], index: 8, kind: input, shape index: {}]
  %s9 = inlined_call_operand.vmem [shape: f32[1,128], index: 9, kind: input, shape index: {}]
  %s10 = inlined_call_operand.vmem [shape: f32[1,128], index: 10, kind: input, shape index: {}]
  %s11 = inlined_call_operand.vmem [shape: f32[1,128], index: 11, kind: input, shape index: {}]
  %s12 = inlined_call_operand.vmem [shape: f32[1,128], index: 12, kind: input, shape index: {}]
  %s13 = inlined_call_operand.vmem [shape: f32[1,32], index: 13, kind: input, shape index: {}]
  %s14 = inlined_call_operand.vmem [shape: f32[1,32], index: 14, kind: input, shape index: {}]
  %s15 = inlined_call_operand.hbm [shape: f32[4,2,32], index: 15, kind: output, shape index: {0}]
  %s16 = inlined_call_operand.hbm [shape: f32[2,32], index: 16, kind: output, shape index: {1}]
  %s17 = inlined_call_operand.hbm [shape: f32[2,32], index: 17, kind: output, shape index: {2}]
  %18 = xla_tuple %s15, %s16, %s17
  %s19 = sld [smem:[#allocation0]]
  $region113: #{run.41} parent=0
    _
  %s21 = ssub.s32 1, %s19
  %s22 = scalar_select 0, %s21, %s19
  $region1: #{run.41} parent=0
    #allocation4 [shape = 'u8[2048]{0}', space=vmem, size = 0x800, scoped, tag = 'output window, operand 0']
    #allocation5 [shape = 's32[2]{0}', space=sflag, size = 0x8, scoped, tag = 'scoped memory for run.41']
    #allocation6 [shape = 'u8[1024]{0}', space=vmem, size = 0x400, scoped, tag = 'output window, operand 1, single buffered']
    #allocation7 [shape = 's32[1]{0}', space=sflag, size = 0x4, scoped, tag = 'scoped memory for run.41']
    #allocation8 [shape = 'u8[1024]{0}', space=vmem, size = 0x400, scoped, tag = 'output window, operand 2, single buffered']
    %23 = vsyncpa [#allocation5], 0
    %s24 = scalar_lea.sflag [#allocation5], 1
    %25 = vsyncpa %s24, 0
    %26 = vsyncpa [#allocation7], 0
    loop: start=0, step=1, limit=6
    $region2: #{run.41} parent=1 // loop_pre_header
      _
    $region3: #{run.41} parent=1 // loop_header
      %s28 = sphi 0, %s32
      %p29 = scmp.ge.s32.totalorder %s28, 6
      %s38 = sphi 0, %s40
      %s41 = sphi 0, %s38
      %s42 = sphi 0, %s41
      %s58 = sphi 0, %s42
      %s64 = sphi 0, %s66
      %s67 = sphi 0, %s64
      %s68 = sphi 0, %s67
      %s84 = sphi 0, %s68
      %s90 = sphi 0, %s92
      %s93 = sphi 0, %s90
      %s94 = sphi 0, %s93
      %s110 = sphi 0, %s94
      %s116 = sphi 0, %s118
      %s119 = sphi 0, %s116
      %s120 = sphi 0, %s119
      %s136 = sphi 0, %s120
      %s140 = sphi 0, %s140
      %s142 = sphi 0, %s140
      %s143 = sphi 0, %s142
      %s157 = sphi 0, %s143
      %s161 = sphi 0, %s161
      %s163 = sphi 0, %s161
      %s164 = sphi 0, %s163
      %s178 = sphi 0, %s164
      %s182 = sphi 0, %s182
      %s184 = sphi 0, %s182
      %s185 = sphi 0, %s184
      %s199 = sphi 0, %s185
      %s203 = sphi 0, %s203
      %s205 = sphi 0, %s203
      %s206 = sphi 0, %s205
      %s220 = sphi 0, %s206
      %s224 = sphi 0, %s224
      %s226 = sphi 0, %s224
      %s227 = sphi 0, %s226
      %s241 = sphi 0, %s227
      %s245 = sphi 0, %s245
      %s247 = sphi 0, %s245
      %s248 = sphi 0, %s247
      %s262 = sphi 0, %s248
      %s266 = sphi 0, %s266
      %s268 = sphi 0, %s266
      %s269 = sphi 0, %s268
      %s283 = sphi 0, %s269
      %s287 = sphi 0, %s287
      %s289 = sphi 0, %s287
      %s290 = sphi 0, %s289
      %s304 = sphi 0, %s290
      %s308 = sphi 0, %s308
      %s310 = sphi 0, %s308
      %s311 = sphi 0, %s310
      %s325 = sphi 0, %s311
      %s329 = sphi 0, %s329
      %s331 = sphi 0, %s329
      %s332 = sphi 0, %s331
      %s346 = sphi 0, %s332
      %s350 = sphi 0, %s350
      %s352 = sphi 0, %s350
      %s353 = sphi 0, %s352
      %s367 = sphi 0, %s353
      %s373 = sphi 0, %s375
      %s376 = sphi 0, %s373
      %s377 = sphi 0, %s376
      %s393 = sphi 0, %s377
      %s397 = sphi 0, %s397
      %s399 = sphi 0, %s397
      %s400 = sphi 0, %s399
      %s414 = sphi 0, %s400
      %s418 = sphi 0, %s418
      %s420 = sphi 0, %s418
      %s421 = sphi 0, %s420
      %s435 = sphi 0, %s421
    $region4: #{run.41} parent=1 // loop_header_branch
      %31 = sbr.rel (%p29) target = $region8
    $region5: #{run.41} parent=1 // loop_body
      %s33 = ssub.s32 %s28, 1
      %s34 = ssub.s32 %s28, 2
      %s35 = sadd.s32 %s28, 1
      %s36 = ssub.s32 %s28, %s35
      %p37 = scmp.eq.s32.totalorder %s36, 0
      %s39 = sadd.s32 %s38, 1
      %s40 = scalar_select %p37, %s38, %s39
      %p43 = pneg %p37
      %p44 = scmp.eq.s32.totalorder %s28, 3
      %p45 = por %p43, %p44
      %p46 = scmp.ne.s32.totalorder %s38, %s41
      %p47 = scmp.eq.s32.totalorder %s28, 0
      %p48 = por %p46, %p47
      %p49 = scmp.ne.s32.totalorder %s38, %s41
      %p50 = scmp.eq.s32.totalorder %s33, 3
      %p51 = por %p49, %p50
      %p52 = scmp.ne.s32.totalorder %s41, %s42
      %p53 = scmp.eq.s32.totalorder %s33, 0
      %p54 = por %p52, %p53
      %p55 = scmp.ne.s32.totalorder %s41, %s42
      %p56 = scmp.eq.s32.totalorder %s34, 3
      %p57 = por %p55, %p56
      %p59 = scmp.ne.s32.totalorder %s42, %s58
      %p60 = scmp.eq.s32.totalorder %s34, 0
      %p61 = por %p59, %p60
      %s62 = ssub.s32 %s28, %s35
      %p63 = scmp.eq.s32.totalorder %s62, 0
      %s65 = sadd.s32 %s64, 1
      %s66 = scalar_select %p63, %s64, %s65
      %p69 = pneg %p63
      %p70 = scmp.eq.s32.totalorder %s28, 3
      %p71 = por %p69, %p70
      %p72 = scmp.ne.s32.totalorder %s64, %s67
      %p73 = scmp.eq.s32.totalorder %s28, 0
      %p74 = por %p72, %p73
      %p75 = scmp.ne.s32.totalorder %s64, %s67
      %p76 = scmp.eq.s32.totalorder %s33, 3
      %p77 = por %p75, %p76
      %p78 = scmp.ne.s32.totalorder %s67, %s68
      %p79 = scmp.eq.s32.totalorder %s33, 0
      %p80 = por %p78, %p79
      %p81 = scmp.ne.s32.totalorder %s67, %s68
      %p82 = scmp.eq.s32.totalorder %s34, 3
      %p83 = por %p81, %p82
      %p85 = scmp.ne.s32.totalorder %s68, %s84
      %p86 = scmp.eq.s32.totalorder %s34, 0
      %p87 = por %p85, %p86
      %s88 = ssub.s32 %s28, %s35
      %p89 = scmp.eq.s32.totalorder %s88, 0
      %s91 = sadd.s32 %s90, 1
      %s92 = scalar_select %p89, %s90, %s91
      %p95 = pneg %p89
      %p96 = scmp.eq.s32.totalorder %s28, 3
      %p97 = por %p95, %p96
      %p98 = scmp.ne.s32.totalorder %s90, %s93
      %p99 = scmp.eq.s32.totalorder %s28, 0
      %p100 = por %p98, %p99
      %p101 = scmp.ne.s32.totalorder %s90, %s93
      %p102 = scmp.eq.s32.totalorder %s33, 3
      %p103 = por %p101, %p102
      %p104 = scmp.ne.s32.totalorder %s93, %s94
      %p105 = scmp.eq.s32.totalorder %s33, 0
      %p106 = por %p104, %p105
      %p107 = scmp.ne.s32.totalorder %s93, %s94
      %p108 = scmp.eq.s32.totalorder %s34, 3
      %p109 = por %p107, %p108
      %p111 = scmp.ne.s32.totalorder %s94, %s110
      %p112 = scmp.eq.s32.totalorder %s34, 0
      %p113 = por %p111, %p112
      %s114 = ssub.s32 %s28, %s35
      %p115 = scmp.eq.s32.totalorder %s114, 0
      %s117 = sadd.s32 %s116, 1
      %s118 = scalar_select %p115, %s116, %s117
      %p121 = pneg %p115
      %p122 = scmp.eq.s32.totalorder %s28, 3
      %p123 = por %p121, %p122
      %p124 = scmp.ne.s32.totalorder %s116, %s119
      %p125 = scmp.eq.s32.totalorder %s28, 0
      %p126 = por %p124, %p125
      %p127 = scmp.ne.s32.totalorder %s116, %s119
      %p128 = scmp.eq.s32.totalorder %s33, 3
      %p129 = por %p127, %p128
      %p130 = scmp.ne.s32.totalorder %s119, %s120
      %p131 = scmp.eq.s32.totalorder %s33, 0
      %p132 = por %p130, %p131
      %p133 = scmp.ne.s32.totalorder %s119, %s120
      %p134 = scmp.eq.s32.totalorder %s34, 3
      %p135 = por %p133, %p134
      %p137 = scmp.ne.s32.totalorder %s120, %s136
      %p138 = scmp.eq.s32.totalorder %s34, 0
      %p139 = por %p137, %p138
      %s141 = sadd.s32 %s140, 1
      %p144 = scmp.eq.s32.totalorder %s28, 3
      %p145 = scmp.ne.s32.totalorder %s140, %s142
      %p146 = scmp.eq.s32.totalorder %s28, 0
      %p147 = por %p145, %p146
      %p148 = scmp.ne.s32.totalorder %s140, %s142
      %p149 = scmp.eq.s32.totalorder %s33, 3
      %p150 = por %p148, %p149
      %p151 = scmp.ne.s32.totalorder %s142, %s143
      %p152 = scmp.eq.s32.totalorder %s33, 0
      %p153 = por %p151, %p152
      %p154 = scmp.ne.s32.totalorder %s142, %s143
      %p155 = scmp.eq.s32.totalorder %s34, 3
      %p156 = por %p154, %p155
      %p158 = scmp.ne.s32.totalorder %s143, %s157
      %p159 = scmp.eq.s32.totalorder %s34, 0
      %p160 = por %p158, %p159
      %s162 = sadd.s32 %s161, 1
      %p165 = scmp.eq.s32.totalorder %s28, 3
      %p166 = scmp.ne.s32.totalorder %s161, %s163
      %p167 = scmp.eq.s32.totalorder %s28, 0
      %p168 = por %p166, %p167
      %p169 = scmp.ne.s32.totalorder %s161, %s163
      %p170 = scmp.eq.s32.totalorder %s33, 3
      %p171 = por %p169, %p170
      %p172 = scmp.ne.s32.totalorder %s163, %s164
      %p173 = scmp.eq.s32.totalorder %s33, 0
      %p174 = por %p172, %p173
      %p175 = scmp.ne.s32.totalorder %s163, %s164
      %p176 = scmp.eq.s32.totalorder %s34, 3
      %p177 = por %p175, %p176
      %p179 = scmp.ne.s32.totalorder %s164, %s178
      %p180 = scmp.eq.s32.totalorder %s34, 0
      %p181 = por %p179, %p180
      %s183 = sadd.s32 %s182, 1
      %p186 = scmp.eq.s32.totalorder %s28, 3
      %p187 = scmp.ne.s32.totalorder %s182, %s184
      %p188 = scmp.eq.s32.totalorder %s28, 0
      %p189 = por %p187, %p188
      %p190 = scmp.ne.s32.totalorder %s182, %s184
      %p191 = scmp.eq.s32.totalorder %s33, 3
      %p192 = por %p190, %p191
      %p193 = scmp.ne.s32.totalorder %s184, %s185
      %p194 = scmp.eq.s32.totalorder %s33, 0
      %p195 = por %p193, %p194
      %p196 = scmp.ne.s32.totalorder %s184, %s185
      %p197 = scmp.eq.s32.totalorder %s34, 3
      %p198 = por %p196, %p197
      %p200 = scmp.ne.s32.totalorder %s185, %s199
      %p201 = scmp.eq.s32.totalorder %s34, 0
      %p202 = por %p200, %p201
      %s204 = sadd.s32 %s203, 1
      %p207 = scmp.eq.s32.totalorder %s28, 3
      %p208 = scmp.ne.s32.totalorder %s203, %s205
      %p209 = scmp.eq.s32.totalorder %s28, 0
      %p210 = por %p208, %p209
      %p211 = scmp.ne.s32.totalorder %s203, %s205
      %p212 = scmp.eq.s32.totalorder %s33, 3
      %p213 = por %p211, %p212
      %p214 = scmp.ne.s32.totalorder %s205, %s206
      %p215 = scmp.eq.s32.totalorder %s33, 0
      %p216 = por %p214, %p215
      %p217 = scmp.ne.s32.totalorder %s205, %s206
      %p218 = scmp.eq.s32.totalorder %s34, 3
      %p219 = por %p217, %p218
      %p221 = scmp.ne.s32.totalorder %s206, %s220
      %p222 = scmp.eq.s32.totalorder %s34, 0
      %p223 = por %p221, %p222
      %s225 = sadd.s32 %s224, 1
      %p228 = scmp.eq.s32.totalorder %s28, 3
      %p229 = scmp.ne.s32.totalorder %s224, %s226
      %p230 = scmp.eq.s32.totalorder %s28, 0
      %p231 = por %p229, %p230
      %p232 = scmp.ne.s32.totalorder %s224, %s226
      %p233 = scmp.eq.s32.totalorder %s33, 3
      %p234 = por %p232, %p233
      %p235 = scmp.ne.s32.totalorder %s226, %s227
      %p236 = scmp.eq.s32.totalorder %s33, 0
      %p237 = por %p235, %p236
      %p238 = scmp.ne.s32.totalorder %s226, %s227
      %p239 = scmp.eq.s32.totalorder %s34, 3
      %p240 = por %p238, %p239
      %p242 = scmp.ne.s32.totalorder %s227, %s241
      %p243 = scmp.eq.s32.totalorder %s34, 0
      %p244 = por %p242, %p243
      %s246 = sadd.s32 %s245, 1
      %p249 = scmp.eq.s32.totalorder %s28, 3
      %p250 = scmp.ne.s32.totalorder %s245, %s247
      %p251 = scmp.eq.s32.totalorder %s28, 0
      %p252 = por %p250, %p251
      %p253 = scmp.ne.s32.totalorder %s245, %s247
      %p254 = scmp.eq.s32.totalorder %s33, 3
      %p255 = por %p253, %p254
      %p256 = scmp.ne.s32.totalorder %s247, %s248
      %p257 = scmp.eq.s32.totalorder %s33, 0
      %p258 = por %p256, %p257
      %p259 = scmp.ne.s32.totalorder %s247, %s248
      %p260 = scmp.eq.s32.totalorder %s34, 3
      %p261 = por %p259, %p260
      %p263 = scmp.ne.s32.totalorder %s248, %s262
      %p264 = scmp.eq.s32.totalorder %s34, 0
      %p265 = por %p263, %p264
      %s267 = sadd.s32 %s266, 1
      %p270 = scmp.eq.s32.totalorder %s28, 3
      %p271 = scmp.ne.s32.totalorder %s266, %s268
      %p272 = scmp.eq.s32.totalorder %s28, 0
      %p273 = por %p271, %p272
      %p274 = scmp.ne.s32.totalorder %s266, %s268
      %p275 = scmp.eq.s32.totalorder %s33, 3
      %p276 = por %p274, %p275
      %p277 = scmp.ne.s32.totalorder %s268, %s269
      %p278 = scmp.eq.s32.totalorder %s33, 0
      %p279 = por %p277, %p278
      %p280 = scmp.ne.s32.totalorder %s268, %s269
      %p281 = scmp.eq.s32.totalorder %s34, 3
      %p282 = por %p280, %p281
      %p284 = scmp.ne.s32.totalorder %s269, %s283
      %p285 = scmp.eq.s32.totalorder %s34, 0
      %p286 = por %p284, %p285
      %s288 = sadd.s32 %s287, 1
      %p291 = scmp.eq.s32.totalorder %s28, 3
      %p292 = scmp.ne.s32.totalorder %s287, %s289
      %p293 = scmp.eq.s32.totalorder %s28, 0
      %p294 = por %p292, %p293
      %p295 = scmp.ne.s32.totalorder %s287, %s289
      %p296 = scmp.eq.s32.totalorder %s33, 3
      %p297 = por %p295, %p296
      %p298 = scmp.ne.s32.totalorder %s289, %s290
      %p299 = scmp.eq.s32.totalorder %s33, 0
      %p300 = por %p298, %p299
      %p301 = scmp.ne.s32.totalorder %s289, %s290
      %p302 = scmp.eq.s32.totalorder %s34, 3
      %p303 = por %p301, %p302
      %p305 = scmp.ne.s32.totalorder %s290, %s304
      %p306 = scmp.eq.s32.totalorder %s34, 0
      %p307 = por %p305, %p306
      %s309 = sadd.s32 %s308, 1
      %p312 = scmp.eq.s32.totalorder %s28, 3
      %p313 = scmp.ne.s32.totalorder %s308, %s310
      %p314 = scmp.eq.s32.totalorder %s28, 0
      %p315 = por %p313, %p314
      %p316 = scmp.ne.s32.totalorder %s308, %s310
      %p317 = scmp.eq.s32.totalorder %s33, 3
      %p318 = por %p316, %p317
      %p319 = scmp.ne.s32.totalorder %s310, %s311
      %p320 = scmp.eq.s32.totalorder %s33, 0
      %p321 = por %p319, %p320
      %p322 = scmp.ne.s32.totalorder %s310, %s311
      %p323 = scmp.eq.s32.totalorder %s34, 3
      %p324 = por %p322, %p323
      %p326 = scmp.ne.s32.totalorder %s311, %s325
      %p327 = scmp.eq.s32.totalorder %s34, 0
      %p328 = por %p326, %p327
      %s330 = sadd.s32 %s329, 1
      %p333 = scmp.eq.s32.totalorder %s28, 3
      %p334 = scmp.ne.s32.totalorder %s329, %s331
      %p335 = scmp.eq.s32.totalorder %s28, 0
      %p336 = por %p334, %p335
      %p337 = scmp.ne.s32.totalorder %s329, %s331
      %p338 = scmp.eq.s32.totalorder %s33, 3
      %p339 = por %p337, %p338
      %p340 = scmp.ne.s32.totalorder %s331, %s332
      %p341 = scmp.eq.s32.totalorder %s33, 0
      %p342 = por %p340, %p341
      %p343 = scmp.ne.s32.totalorder %s331, %s332
      %p344 = scmp.eq.s32.totalorder %s34, 3
      %p345 = por %p343, %p344
      %p347 = scmp.ne.s32.totalorder %s332, %s346
      %p348 = scmp.eq.s32.totalorder %s34, 0
      %p349 = por %p347, %p348
      %s351 = sadd.s32 %s350, 1
      %p354 = scmp.eq.s32.totalorder %s28, 3
      %p355 = scmp.ne.s32.totalorder %s350, %s352
      %p356 = scmp.eq.s32.totalorder %s28, 0
      %p357 = por %p355, %p356
      %p358 = scmp.ne.s32.totalorder %s350, %s352
      %p359 = scmp.eq.s32.totalorder %s33, 3
      %p360 = por %p358, %p359
      %p361 = scmp.ne.s32.totalorder %s352, %s353
      %p362 = scmp.eq.s32.totalorder %s33, 0
      %p363 = por %p361, %p362
      %p364 = scmp.ne.s32.totalorder %s352, %s353
      %p365 = scmp.eq.s32.totalorder %s34, 3
      %p366 = por %p364, %p365
      %p368 = scmp.ne.s32.totalorder %s353, %s367
      %p369 = scmp.eq.s32.totalorder %s34, 0
      %p370 = por %p368, %p369
      %s371 = ssub.s32 %s28, %s35
      %p372 = scmp.eq.s32.totalorder %s371, 0
      %s374 = sadd.s32 %s373, 1
      %s375 = scalar_select %p372, %s373, %s374
      %p378 = pneg %p372
      %p379 = scmp.eq.s32.totalorder %s28, 3
      %p380 = por %p378, %p379
      %p381 = scmp.ne.s32.totalorder %s373, %s376
      %p382 = scmp.eq.s32.totalorder %s28, 0
      %p383 = por %p381, %p382
      %p384 = scmp.ne.s32.totalorder %s373, %s376
      %p385 = scmp.eq.s32.totalorder %s33, 3
      %p386 = por %p384, %p385
      %p387 = scmp.ne.s32.totalorder %s376, %s377
      %p388 = scmp.eq.s32.totalorder %s33, 0
      %p389 = por %p387, %p388
      %p390 = scmp.ne.s32.totalorder %s376, %s377
      %p391 = scmp.eq.s32.totalorder %s34, 3
      %p392 = por %p390, %p391
      %p394 = scmp.ne.s32.totalorder %s377, %s393
      %p395 = scmp.eq.s32.totalorder %s34, 0
      %p396 = por %p394, %p395
      %s398 = sadd.s32 %s397, 1
      %p401 = scmp.eq.s32.totalorder %s28, 3
      %p402 = scmp.ne.s32.totalorder %s397, %s399
      %p403 = scmp.eq.s32.totalorder %s28, 0
      %p404 = por %p402, %p403
      %p405 = scmp.ne.s32.totalorder %s397, %s399
      %p406 = scmp.eq.s32.totalorder %s33, 3
      %p407 = por %p405, %p406
      %p408 = scmp.ne.s32.totalorder %s399, %s400
      %p409 = scmp.eq.s32.totalorder %s33, 0
      %p410 = por %p408, %p409
      %p411 = scmp.ne.s32.totalorder %s399, %s400
      %p412 = scmp.eq.s32.totalorder %s34, 3
      %p413 = por %p411, %p412
      %p415 = scmp.ne.s32.totalorder %s400, %s414
      %p416 = scmp.eq.s32.totalorder %s34, 0
      %p417 = por %p415, %p416
      %s419 = sadd.s32 %s418, 1
      %p422 = scmp.eq.s32.totalorder %s28, 3
      %p423 = scmp.ne.s32.totalorder %s418, %s420
      %p424 = scmp.eq.s32.totalorder %s28, 0
      %p425 = por %p423, %p424
      %p426 = scmp.ne.s32.totalorder %s418, %s420
      %p427 = scmp.eq.s32.totalorder %s33, 3
      %p428 = por %p426, %p427
      %p429 = scmp.ne.s32.totalorder %s420, %s421
      %p430 = scmp.eq.s32.totalorder %s33, 0
      %p431 = por %p429, %p430
      %p432 = scmp.ne.s32.totalorder %s420, %s421
      %p433 = scmp.eq.s32.totalorder %s34, 3
      %p434 = por %p432, %p433
      %p436 = scmp.ne.s32.totalorder %s421, %s435
      %p437 = scmp.eq.s32.totalorder %s34, 0
      %p438 = por %p436, %p437
      %p439 = scmp.le.s32.totalorder 1, %s28
      %p440 = scmp.lt.s32.totalorder %s28, 5
      %p441 = pnand %p439, %p440
      %p442 = pneg %p441
      // Predicated region
      $region9: #{run.41} parent=5 // pred_check
        _
      $region10: #{run.41} parent=5 // pred_check_branch
        %444 = sbr.rel (%p441) target = $region12
      $region11: #{run.41} parent=5 // pred_region
        %s445 = ssub.s32 %s28, 1
        // Predicated region
        $region13: #{run.41} parent=11 // pred_check
          %p446 = pneg %p153
        $region14: #{run.41} parent=11 // pred_check_branch
          %448 = sbr.rel (%p446) target = $region16
        $region15: #{run.41} parent=11 // pred_region
          _
        $region16: #{run.41} parent=11 // pred_fallthru
          _
        // Predicated region
        $region17: #{run.41} parent=11 // pred_check
          %p449 = pneg %p174
        $region18: #{run.41} parent=11 // pred_check_branch
          %451 = sbr.rel (%p449) target = $region20
        $region19: #{run.41} parent=11 // pred_region
          _
        $region20: #{run.41} parent=11 // pred_fallthru
          _
        // Predicated region
        $region21: #{run.41} parent=11 // pred_check
          %p452 = pneg %p195
        $region22: #{run.41} parent=11 // pred_check_branch
          %454 = sbr.rel (%p452) target = $region24
        $region23: #{run.41} parent=11 // pred_region
          _
        $region24: #{run.41} parent=11 // pred_fallthru
          _
        // Predicated region
        $region25: #{run.41} parent=11 // pred_check
          %p455 = pneg %p216
        $region26: #{run.41} parent=11 // pred_check_branch
          %457 = sbr.rel (%p455) target = $region28
        $region27: #{run.41} parent=11 // pred_region
          _
        $region28: #{run.41} parent=11 // pred_fallthru
          _
        // Predicated region
        $region29: #{run.41} parent=11 // pred_check
          %p458 = pneg %p237
        $region30: #{run.41} parent=11 // pred_check_branch
          %460 = sbr.rel (%p458) target = $region32
        $region31: #{run.41} parent=11 // pred_region
          _
        $region32: #{run.41} parent=11 // pred_fallthru
          _
        // Predicated region
        $region33: #{run.41} parent=11 // pred_check
          %p461 = pneg %p258
        $region34: #{run.41} parent=11 // pred_check_branch
          %463 = sbr.rel (%p461) target = $region36
        $region35: #{run.41} parent=11 // pred_region
          _
        $region36: #{run.41} parent=11 // pred_fallthru
          _
        // Predicated region
        $region37: #{run.41} parent=11 // pred_check
          %p464 = pneg %p279
        $region38: #{run.41} parent=11 // pred_check_branch
          %466 = sbr.rel (%p464) target = $region40
        $region39: #{run.41} parent=11 // pred_region
          _
        $region40: #{run.41} parent=11 // pred_fallthru
          _
        // Predicated region
        $region41: #{run.41} parent=11 // pred_check
          %p467 = pneg %p300
        $region42: #{run.41} parent=11 // pred_check_branch
          %469 = sbr.rel (%p467) target = $region44
        $region43: #{run.41} parent=11 // pred_region
          _
        $region44: #{run.41} parent=11 // pred_fallthru
          _
        // Predicated region
        $region45: #{run.41} parent=11 // pred_check
          %p470 = pneg %p321
        $region46: #{run.41} parent=11 // pred_check_branch
          %472 = sbr.rel (%p470) target = $region48
        $region47: #{run.41} parent=11 // pred_region
          _
        $region48: #{run.41} parent=11 // pred_fallthru
          _
        // Predicated region
        $region49: #{run.41} parent=11 // pred_check
          %p473 = pneg %p342
        $region50: #{run.41} parent=11 // pred_check_branch
          %475 = sbr.rel (%p473) target = $region52
        $region51: #{run.41} parent=11 // pred_region
          _
        $region52: #{run.41} parent=11 // pred_fallthru
          _
        // Predicated region
        $region53: #{run.41} parent=11 // pred_check
          %p476 = pneg %p363
        $region54: #{run.41} parent=11 // pred_check_branch
          %478 = sbr.rel (%p476) target = $region56
        $region55: #{run.41} parent=11 // pred_region
          _
        $region56: #{run.41} parent=11 // pred_fallthru
          _
      $region12: #{run.41} parent=5 // pred_fallthru
        _
      %p479 = scmp.lt.s32.totalorder %s28, 4
      // Predicated region
      $region57: #{run.41} parent=5 // pred_check
        %p480 = pneg %p479
      $region58: #{run.41} parent=5 // pred_check_branch
        %482 = sbr.rel (%p480) target = $region60
      $region59: #{run.41} parent=5 // pred_region
        // Predicated region
        $region61: #{run.41} parent=59 // pred_check
          %p483 = pneg %p48
        $region62: #{run.41} parent=59 // pred_check_branch
          %485 = sbr.rel (%p483) target = $region64
        $region63: #{run.41} parent=59 // pred_region
          %p486 = scmp.lt.s32.totalorder %s28, 3
          %s487 = scalar_select %p486, %s28, 3
          %s488 = smul.addr %s487, 2
          %s489 = scalar_lea.vmem %s0, %s488
        $region64: #{run.41} parent=59 // pred_fallthru
          _
        // Predicated region
        $region65: #{run.41} parent=59 // pred_check
          %p490 = pneg %p74
        $region66: #{run.41} parent=59 // pred_check_branch
          %492 = sbr.rel (%p490) target = $region68
        $region67: #{run.41} parent=59 // pred_region
          %p493 = scmp.lt.s32.totalorder %s28, 3
          %s494 = scalar_select %p493, %s28, 3
          %s495 = smul.addr %s494, 2
          %s496 = scalar_lea.vmem %s1, %s495
        $region68: #{run.41} parent=59 // pred_fallthru
          _
        // Predicated region
        $region69: #{run.41} parent=59 // pred_check
          %p497 = pneg %p100
        $region70: #{run.41} parent=59 // pred_check_branch
          %499 = sbr.rel (%p497) target = $region72
        $region71: #{run.41} parent=59 // pred_region
          %p500 = scmp.lt.s32.totalorder %s28, 3
          %s501 = scalar_select %p500, %s28, 3
          %s502 = smul.addr %s501, 2
          %s503 = scalar_lea.vmem %s2, %s502
        $region72: #{run.41} parent=59 // pred_fallthru
          _
        // Predicated region
        $region73: #{run.41} parent=59 // pred_check
          %p504 = pneg %p126
        $region74: #{run.41} parent=59 // pred_check_branch
          %506 = sbr.rel (%p504) target = $region76
        $region75: #{run.41} parent=59 // pred_region
          %p507 = scmp.lt.s32.totalorder %s28, 3
          %s508 = scalar_select %p507, %s28, 3
          %s509 = smul.addr %s508, 2
          %s510 = scalar_lea.vmem %s3, %s509
        $region76: #{run.41} parent=59 // pred_fallthru
          _
      $region60: #{run.41} parent=5 // pred_fallthru
        _
      %p511 = scmp.le.s32.totalorder 1, %s28
      %p512 = scmp.lt.s32.totalorder %s28, 5
      %p513 = pnand %p511, %p512
      %p514 = pneg %p513
      // Predicated region
      $region77: #{run.41} parent=5 // pred_check
        _
      $region78: #{run.41} parent=5 // pred_check_branch
        %516 = sbr.rel (%p513) target = $region80
      $region79: #{run.41} parent=5 // pred_region
        %s517 = ssub.s32 %s28, 1
        %p518 = scmp.lt.s32.totalorder %s33, 3
        %s519 = scalar_select %p518, %s33, 3
        %s520 = smul.addr %s519, 2
        %s521 = scalar_lea.vmem %s0, %s520
        %p522 = pneg %p54
        %p523 = pneg %p51
        %p524 = scmp.lt.s32.totalorder %s33, 3
        %s525 = scalar_select %p524, %s33, 3
        %s526 = smul.addr %s525, 2
        %s527 = scalar_lea.vmem %s1, %s526
        %p528 = pneg %p80
        %p529 = pneg %p77
        %p530 = scmp.lt.s32.totalorder %s33, 3
        %s531 = scalar_select %p530, %s33, 3
        %s532 = smul.addr %s531, 2
        %s533 = scalar_lea.vmem %s2, %s532
        %p534 = pneg %p106
        %p535 = pneg %p103
        %p536 = scmp.lt.s32.totalorder %s33, 3
        %s537 = scalar_select %p536, %s33, 3
        %s538 = smul.addr %s537, 2
        %s539 = scalar_lea.vmem %s3, %s538
        %p540 = pneg %p132
        %p541 = pneg %p129
        %p542 = pneg %p153
        %p543 = pneg %p150
        %p544 = pneg %p174
        %p545 = pneg %p171
        %p546 = pneg %p195
        %p547 = pneg %p192
        %p548 = pneg %p216
        %p549 = pneg %p213
        %p550 = pneg %p237
        %p551 = pneg %p234
        %p552 = pneg %p258
        %p553 = pneg %p255
        %p554 = pneg %p279
        %p555 = pneg %p276
        %p556 = pneg %p300
        %p557 = pneg %p297
        %p558 = pneg %p321
        %p559 = pneg %p318
        %p560 = pneg %p342
        %p561 = pneg %p339
        %p562 = pneg %p363
        %p563 = pneg %p360
        %p564 = pneg %p389
        %p565 = pneg %p386
        %s566 = sand.u32 %s376, 1
        %s567 = scalar_lea.sflag [#allocation5], %s566
        %s568 = sand.u32 %s376, 1
        %s569 = smul.addr %s568, 2
        %s570 = scalar_lea.vmem [#allocation4], %s569
        %p571 = pneg %p410
        %p572 = pneg %p407
        %p573 = pneg %p431
        %p574 = pneg %p428
        %p575 = scmp.lt.s32.totalorder %s33, 3
        %s576 = scalar_select %p575, %s33, 3
        %s577 = smul.addr %s576, 2
        %s578 = scalar_lea.vmem %s0, %s577
        %p579 = scmp.lt.s32.totalorder %s33, 3
        %s580 = scalar_select %p579, %s33, 3
        %s581 = smul.addr %s580, 2
        %s582 = scalar_lea.vmem %s1, %s581
        %p583 = scmp.lt.s32.totalorder %s33, 3
        %s584 = scalar_select %p583, %s33, 3
        %s585 = smul.addr %s584, 2
        %s586 = scalar_lea.vmem %s2, %s585
        %p587 = scmp.lt.s32.totalorder %s33, 3
        %s588 = scalar_select %p587, %s33, 3
        %s589 = smul.addr %s588, 2
        %s590 = scalar_lea.vmem %s3, %s589
        %p591 = scmp.eq.s32.totalorder %s33, 0
        // Predicated region
        $region81: #{run.41} parent=79 // pred_check
          %p592 = pneg %p591
        $region82: #{run.41} parent=79 // pred_check_branch
          %594 = sbr.rel (%p592) target = $region84
        $region83: #{run.41} parent=79 // pred_region
          %v595 = vld [vmem:[%s4] sm:$0x3]
          %vm596 = vcmask 254976
          %597 = vst.msk [vmem:[#allocation2] sm:$0x3] %vm596, %v595
          %v598 = vld [vmem:[%s5] sm:$0x3]
          %599 = vst.msk [vmem:[#allocation3] sm:$0x3] %vm596, %v598
        $region84: #{run.41} parent=79 // pred_fallthru
          _
        %v600 = vld [vmem:[%s590] sm:$0x3]
        %v601 = vld [vmem:[%s578] sm:$0x3]
        %v602 = vld [vmem:[%s582] sm:$0x3]
        %v603 = vmul.f32 %v601, %v602
        %v604 = vld [vmem:[%s586] sm:$0x3]
        %v605 = vmul.f32 %v603, %v604
        %v606 = vld [vmem:[#allocation2] sm:$0x3]
        %608 = vset.pattern.permute.xlu0 0
        %609 = vperm.xlu0 %608, %v600
        %v610 = vpop.permute.xlu0 %609
        %v612 = vmul.f32 %v606, %v610
        %v613 = vld [vmem:[#allocation3] sm:$0x3]
        %v614 = vmul.f32 %v613, %v610
        %v615 = vld [vmem:[%s6] sm:$0xff]
        %v616 = vld [vmem:[%s6 + $0x8] sm:$0xff]
        %v617 = vld [vmem:[%s6 + $0x10] sm:$0xff]
        %v618 = vld [vmem:[%s6 + $0x18] sm:$0xff]
        %vm619 = vcmask 261120
        %v621 = vsel %vm619, %v605, 0
        %623 = vmatprep.subr.mxu0 0.0
        %624 = vmatpush1.msra.mxu0 0.0
        %625 = vmatprep.subr.mxu0 0.0
        %626 = vmatpush1.msra.mxu0 0.0
        %627 = vmatprep.subr.mxu0 0.0
        %628 = vmatpush1.msra.mxu0 0.0
        %629 = vmatprep.subr.mxu0 0.0
        %630 = vmatpush1.msra.mxu0 0.0
        %631 = vmatprep.subr.mxu0 0.0
        %632 = vmatpush1.msra.mxu0 0.0
        %633 = vmatprep.subr.mxu0 0.0
        %634 = vmatpush1.msra.mxu0 0.0
        %635 = vmatprep.subr.mxu0 0.0
        %636 = vmatpush1.msra.mxu0 0.0
        %637 = vmatprep.subr.mxu0 0.0
        %638 = vmatpush1.msra.mxu0 0.0
        %639 = vmatprep.subr.mxu0 0.0
        %640 = vmatpush1.msra.mxu0 0.0
        %641 = vmatprep.subr.mxu0 0.0
        %642 = vmatpush1.msra.mxu0 0.0
        %643 = vmatprep.subr.mxu0 0.0
        %644 = vmatpush1.msra.mxu0 0.0
        %645 = vmatprep.subr.mxu0 0.0
        %646 = vmatpush1.msra.mxu0 0.0
        %647 = vmatprep.subr.mxu0 0.0
        %648 = vmatpush1.msra.mxu0 %v618
        %649 = vmatprep.subr.mxu0 0.0
        %650 = vmatpush1.msra.mxu0 %v617
        %651 = vmatprep.subr.mxu0 0.0
        %652 = vmatpush1.msra.mxu0 %v616
        %653 = vmatprep.subr.mxu0 0.0
        %654 = vmatpush1.msra.mxu0 %v615
        %655 = vmatprep.subr.mxu0 0.0
        %656 = vmatpush2.msra.mxu0 0.0
        %657 = vmatprep.subr.mxu0 0.0
        %658 = vmatpush2.msra.mxu0 0.0
        %659 = vmatprep.subr.mxu0 0.0
        %660 = vmatpush2.msra.mxu0 0.0
        %661 = vmatprep.subr.mxu0 0.0
        %662 = vmatpush2.msra.mxu0 0.0
        %663 = vmatprep.subr.mxu0 0.0
        %664 = vmatpush2.msra.mxu0 0.0
        %665 = vmatprep.subr.mxu0 0.0
        %666 = vmatpush2.msra.mxu0 0.0
        %667 = vmatprep.subr.mxu0 0.0
        %668 = vmatpush2.msra.mxu0 0.0
        %669 = vmatprep.subr.mxu0 0.0
        %670 = vmatpush2.msra.mxu0 0.0
        %671 = vmatprep.subr.mxu0 0.0
        %672 = vmatpush2.msra.mxu0 0.0
        %673 = vmatprep.subr.mxu0 0.0
        %674 = vmatpush2.msra.mxu0 0.0
        %675 = vmatprep.subr.mxu0 0.0
        %676 = vmatpush2.msra.mxu0 0.0
        %677 = vmatprep.subr.mxu0 0.0
        %678 = vmatpush2.msra.mxu0 0.0
        %679 = vmatprep.subr.mxu0 0.0
        %680 = vmatpush2.msra.mxu0 0.0
        %681 = vmatprep.subr.mxu0 0.0
        %682 = vmatpush2.msra.mxu0 0.0
        %683 = vmatprep.subr.mxu0 0.0
        %684 = vmatpush2.msra.mxu0 0.0
        %685 = vmatprep.subr.mxu0 0.0
        %686 = vmatpush2.msra.mxu0 0.0
        %687 = vmatprep.mubr.f32.mxu0 0.0
        %688 = vmatmul.mubr.f32.gmra.mxu0 %v621
        %v689 = vpop.f32.mrf.mxu0
        %v690 = vadd.f32 0.0, %v689
        %v691 = vpop.f32.mrf.mxu0
        %692 = vdwg.mxu0
        %v693 = vld [vmem:[%s9] sm:$0x1]
        %v694 = vld [vmem:[%s10] sm:$0x1]
        %vm695 = vcmask 1041408
        %v696 = vsel %vm695, %v690, 0.0
        %697 = vadd.xlane.f32.xlu0 %v696
        %v698 = vpop.xlane.xlu0 %697
        %v699 = vrcp.pop 128.0
        %v700 = vmul.f32 %v698, %v699
        %v701 = vsub.f32 %v690, %v700
        %v702 = vmul.f32 %v701, %v701
        %v703 = vsel %vm695, %v702, 0.0
        %704 = vadd.xlane.f32.xlu0 %v703
        %v705 = vpop.xlane.xlu0 %704
        %v706 = vmul.f32 %v705, %v699
        %v707 = vadd.f32 %v706, 1e-05
        %v708 = vrsqrt.pop %v707
        %v709 = vmul.f32 %v701, %v708
        %v711 = vlaneseq
        %v712 = vshrl.u32 %v711, 7
        %v713 = vsub.s32 0, %v712
        %v714 = vrot.slane %v693, %v713
        %v716 = vmul.f32 %v709, %v714
        %v718 = vlaneseq
        %v719 = vshrl.u32 %v718, 7
        %v720 = vsub.s32 0, %v719
        %v721 = vrot.slane %v694, %v720
        %v723 = vadd.f32 %v716, %v721
        %v724 = vld [vmem:[%s7] sm:$0xff]
        %v725 = vld [vmem:[%s7 + $0x8] sm:$0xff]
        %v726 = vld [vmem:[%s7 + $0x10] sm:$0xff]
        %v727 = vld [vmem:[%s7 + $0x18] sm:$0xff]
        %v729 = vsel %vm619, %v612, 0
        %731 = vmatprep.subr.mxu0 0.0
        %732 = vmatpush1.msra.mxu0 0.0
        %733 = vmatprep.subr.mxu0 0.0
        %734 = vmatpush1.msra.mxu0 0.0
        %735 = vmatprep.subr.mxu0 0.0
        %736 = vmatpush1.msra.mxu0 0.0
        %737 = vmatprep.subr.mxu0 0.0
        %738 = vmatpush1.msra.mxu0 0.0
        %739 = vmatprep.subr.mxu0 0.0
        %740 = vmatpush1.msra.mxu0 0.0
        %741 = vmatprep.subr.mxu0 0.0
        %742 = vmatpush1.msra.mxu0 0.0
        %743 = vmatprep.subr.mxu0 0.0
        %744 = vmatpush1.msra.mxu0 0.0
        %745 = vmatprep.subr.mxu0 0.0
        %746 = vmatpush1.msra.mxu0 0.0
        %747 = vmatprep.subr.mxu0 0.0
        %748 = vmatpush1.msra.mxu0 0.0
        %749 = vmatprep.subr.mxu0 0.0
        %750 = vmatpush1.msra.mxu0 0.0
        %751 = vmatprep.subr.mxu0 0.0
        %752 = vmatpush1.msra.mxu0 0.0
        %753 = vmatprep.subr.mxu0 0.0
        %754 = vmatpush1.msra.mxu0 0.0
        %755 = vmatprep.subr.mxu0 0.0
        %756 = vmatpush1.msra.mxu0 %v727
        %757 = vmatprep.subr.mxu0 0.0
        %758 = vmatpush1.msra.mxu0 %v726
        %759 = vmatprep.subr.mxu0 0.0
        %760 = vmatpush1.msra.mxu0 %v725
        %761 = vmatprep.subr.mxu0 0.0
        %762 = vmatpush1.msra.mxu0 %v724
        %763 = vmatprep.subr.mxu0 0.0
        %764 = vmatpush2.msra.mxu0 0.0
        %765 = vmatprep.subr.mxu0 0.0
        %766 = vmatpush2.msra.mxu0 0.0
        %767 = vmatprep.subr.mxu0 0.0
        %768 = vmatpush2.msra.mxu0 0.0
        %769 = vmatprep.subr.mxu0 0.0
        %770 = vmatpush2.msra.mxu0 0.0
        %771 = vmatprep.subr.mxu0 0.0
        %772 = vmatpush2.msra.mxu0 0.0
        %773 = vmatprep.subr.mxu0 0.0
        %774 = vmatpush2.msra.mxu0 0.0
        %775 = vmatprep.subr.mxu0 0.0
        %776 = vmatpush2.msra.mxu0 0.0
        %777 = vmatprep.subr.mxu0 0.0
        %778 = vmatpush2.msra.mxu0 0.0
        %779 = vmatprep.subr.mxu0 0.0
        %780 = vmatpush2.msra.mxu0 0.0
        %781 = vmatprep.subr.mxu0 0.0
        %782 = vmatpush2.msra.mxu0 0.0
        %783 = vmatprep.subr.mxu0 0.0
        %784 = vmatpush2.msra.mxu0 0.0
        %785 = vmatprep.subr.mxu0 0.0
        %786 = vmatpush2.msra.mxu0 0.0
        %787 = vmatprep.subr.mxu0 0.0
        %788 = vmatpush2.msra.mxu0 0.0
        %789 = vmatprep.subr.mxu0 0.0
        %790 = vmatpush2.msra.mxu0 0.0
        %791 = vmatprep.subr.mxu0 0.0
        %792 = vmatpush2.msra.mxu0 0.0
        %793 = vmatprep.subr.mxu0 0.0
        %794 = vmatpush2.msra.mxu0 0.0
        %795 = vmatprep.mubr.f32.mxu0 0.0
        %796 = vmatmul.mubr.f32.gmra.mxu0 %v729
        %v797 = vpop.f32.mrf.mxu0
        %v798 = vadd.f32 0.0, %v797
        %v799 = vpop.f32.mrf.mxu0
        %800 = vdwg.mxu0
        %v801 = vld [vmem:[%s11] sm:$0x1]
        %v802 = vld [vmem:[%s12] sm:$0x1]
        %v803 = vsel %vm695, %v798, 0.0
        %804 = vadd.xlane.f32.xlu0 %v803
        %v805 = vpop.xlane.xlu0 %804
        %v806 = vmul.f32 %v805, %v699
        %v807 = vsub.f32 %v798, %v806
        %v808 = vmul.f32 %v807, %v807
        %v809 = vsel %vm695, %v808, 0.0
        %810 = vadd.xlane.f32.xlu0 %v809
        %v811 = vpop.xlane.xlu0 %810
        %v812 = vmul.f32 %v811, %v699
        %v813 = vadd.f32 %v812, 1e-05
        %v814 = vrsqrt.pop %v813
        %v815 = vmul.f32 %v807, %v814
        %v817 = vlaneseq
        %v818 = vshrl.u32 %v817, 7
        %v819 = vsub.s32 0, %v818
        %v820 = vrot.slane %v801, %v819
        %v822 = vmul.f32 %v815, %v820
        %v824 = vlaneseq
        %v825 = vshrl.u32 %v824, 7
        %v826 = vsub.s32 0, %v825
        %v827 = vrot.slane %v802, %v826
        %v829 = vadd.f32 %v822, %v827
        %v830 = vadd.f32 %v723, %v829
        %v831 = vld [vmem:[%s8] sm:$0x1]
        %v833 = vlaneseq
        %v834 = vshrl.u32 %v833, 7
        %v835 = vsub.s32 0, %v834
        %v836 = vrot.slane %v831, %v835
        %v838 = vadd.f32 %v830, %v836
        %v839 = vxor.u32 %v838, 2147483648
        %v840 = vmul.f32 %v839, 1.442695
        %v841 = vpow.pop %v840
        %v842 = vadd.f32 %v841, 1.0
        %v843 = vrcp.pop %v842
        %v844 = vmul.f32 1.0, %v843
        %v845 = vtanh.pop %v838
        %847 = vrot.lane.b32.xlu0 %v614, 32
        %v848 = vpop.permute.xlu0 %847
        %v850 = vmul.f32 %v844, %v848
        %852 = vrot.lane.b32.xlu0 %v845, 64
        %v853 = vpop.permute.xlu0 %852
        %v855 = vmul.f32 %v844, %v853
        %857 = vrot.lane.b32.xlu0 %v855, 32
        %v858 = vpop.permute.xlu0 %857
        %v860 = vadd.f32 %v850, %v858
        %v861 = vld [vmem:[%s13] sm:$0x1]
        %v862 = vld [vmem:[%s14] sm:$0x1]
        %864 = vrot.lane.b32.xlu0 %v860, 96
        %v865 = vpop.permute.xlu0 %864
        %vm867 = vcmask 254976
        %v868 = vsel %vm867, %v865, 0.0
        %869 = vadd.xlane.f32.xlu0 %v868
        %v870 = vpop.xlane.xlu0 %869
        %v871 = vrcp.pop 32.0
        %v872 = vmul.f32 %v870, %v871
        %v873 = vsub.f32 %v860, %v872
        %v874 = vmul.f32 %v873, %v873
        %876 = vrot.lane.b32.xlu0 %v874, 96
        %v877 = vpop.permute.xlu0 %876
        %v879 = vsel %vm867, %v877, 0.0
        %880 = vadd.xlane.f32.xlu0 %v879
        %v881 = vpop.xlane.xlu0 %880
        %v882 = vmul.f32 %v881, %v871
        %v883 = vadd.f32 %v882, 1e-05
        %v884 = vrsqrt.pop %v883
        %v885 = vmul.f32 %v873, %v884
        %v887 = vlaneseq
        %v888 = vshrl.u32 %v887, 7
        %v889 = vsub.s32 0, %v888
        %v890 = vrot.slane %v861, %v889
        %891 = vrot.lane.b32.xlu0 %v890, 32
        %v892 = vpop.permute.xlu0 %891
        %v894 = vmul.f32 %v885, %v892
        %v896 = vlaneseq
        %v897 = vshrl.u32 %v896, 7
        %v898 = vsub.s32 0, %v897
        %v899 = vrot.slane %v862, %v898
        %900 = vrot.lane.b32.xlu0 %v899, 32
        %v901 = vpop.permute.xlu0 %900
        %v903 = vadd.f32 %v894, %v901
        %v904 = vtanh.pop %v903
        %906 = vrot.lane.b32.xlu0 %v904, 64
        %v907 = vpop.permute.xlu0 %906
        %v909 = vmul.f32 %v844, %v907
        %911 = vrot.lane.b32.xlu0 %v909, 32
        %v912 = vpop.permute.xlu0 %911
        %914 = vst.msk [vmem:[#allocation2] sm:$0x3] %vm867, %v912
        %915 = vst.msk [vmem:[#allocation3] sm:$0x3] %vm867, %v865
        %916 = vst.msk [vmem:[%s570] sm:$0x3] %vm867, %v912
        %917 = vst.msk [vmem:[#allocation6] sm:$0x3] %vm867, %v912
        %918 = vst.msk [vmem:[#allocation8] sm:$0x3] %vm867, %v865
        %s919 = sand.u32 %s376, 1
        %s920 = scalar_lea.sflag [#allocation5], %s919
        %s921 = sand.u32 %s376, 1
        %s922 = smul.addr %s921, 2
        %s923 = scalar_lea.vmem [#allocation4], %s922
        // Predicated region
        $region85: #{run.41} parent=79 // pred_check
          %p924 = pneg %p386
        $region86: #{run.41} parent=79 // pred_check_branch
          %926 = sbr.rel (%p924) target = $region88
        $region87: #{run.41} parent=79 // pred_region
          %s928 = ssub.s32 32, 32
          %929 = vsyncadd %s920, %s928
          %s930 = smul.addr %s33, 32
          %s931 = scalar_lea.hbm %s15, %s930
          %s933 = sshll.u32 %s923, 4
          %s934 = int_to_ptr.vmem [resolvable:$true] %s933
          %936 = dma.vmem_to_hbm [thread:$0]  %s934, 32, %s931, %s920
        $region88: #{run.41} parent=79 // pred_fallthru
          _
        // Predicated region
        $region89: #{run.41} parent=79 // pred_check
          %p937 = pneg %p407
        $region90: #{run.41} parent=79 // pred_check_branch
          %939 = sbr.rel (%p937) target = $region92
        $region91: #{run.41} parent=79 // pred_region
          %s941 = ssub.s32 32, 32
          %942 = vsyncadd [#allocation7], %s941
          %s944 = sshll.u32 [#allocation6], 4
          %s945 = int_to_ptr.vmem [resolvable:$true] %s944
          %947 = dma.vmem_to_hbm [thread:$0]  %s945, 32, %s16, [#allocation7]
        $region92: #{run.41} parent=79 // pred_fallthru
          _
        // Predicated region
        $region93: #{run.41} parent=79 // pred_check
          %p948 = pneg %p428
        $region94: #{run.41} parent=79 // pred_check_branch
          %950 = sbr.rel (%p948) target = $region96
        $region95: #{run.41} parent=79 // pred_region
          %s952 = ssub.s32 32, 32
          %953 = vsyncadd [#allocation7], %s952
          %s955 = sshll.u32 [#allocation8], 4
          %s956 = int_to_ptr.vmem [resolvable:$true] %s955
          %958 = dma.vmem_to_hbm [thread:$0]  %s956, 32, %s17, [#allocation7]
        $region96: #{run.41} parent=79 // pred_fallthru
          _
        // Predicated region
        $region97: #{run.41} parent=79 // pred_check
          %p959 = pneg %p407
        $region98: #{run.41} parent=79 // pred_check_branch
          %961 = sbr.rel (%p959) target = $region100
        $region99: #{run.41} parent=79 // pred_region
          %962 = dma.done [#allocation7], 32
        $region100: #{run.41} parent=79 // pred_fallthru
          _
        // Predicated region
        $region101: #{run.41} parent=79 // pred_check
          %p963 = pneg %p428
        $region102: #{run.41} parent=79 // pred_check_branch
          %965 = sbr.rel (%p963) target = $region104
        $region103: #{run.41} parent=79 // pred_region
          %966 = dma.done [#allocation7], 32
        $region104: #{run.41} parent=79 // pred_fallthru
          _
      $region80: #{run.41} parent=5 // pred_fallthru
        _
      %p967 = scmp.le.s32.totalorder 2, %s28
      // Predicated region
      $region105: #{run.41} parent=5 // pred_check
        %p968 = pneg %p967
      $region106: #{run.41} parent=5 // pred_check_branch
        %970 = sbr.rel (%p968) target = $region108
      $region107: #{run.41} parent=5 // pred_region
        %s971 = ssub.s32 %s28, 2
        // Predicated region
        $region109: #{run.41} parent=107 // pred_check
          %p972 = pneg %p392
        $region110: #{run.41} parent=107 // pred_check_branch
          %974 = sbr.rel (%p972) target = $region112
        $region111: #{run.41} parent=107 // pred_region
          %s975 = sand.u32 %s377, 1
          %s976 = scalar_lea.sflag [#allocation5], %s975
          %s977 = sand.u32 %s377, 1
          %s978 = smul.addr %s977, 2
          %s979 = scalar_lea.vmem [#allocation4], %s978
          %980 = dma.done %s976, 32
        $region112: #{run.41} parent=107 // pred_fallthru
          _
      $region108: #{run.41} parent=5 // pred_fallthru
        _
    $region6: #{run.41} parent=1 // loop_footer
      %s32 = sadd.s32 1, %s28
    $region7: #{run.41} parent=1 // loop_footer_branch
      %27 = sbr.rel target = $region3
    $region8: #{run.41} parent=1 // loop_exit
      _
    %981 = vsyncpa [#allocation5], 1
    %s982 = scalar_lea.sflag [#allocation5], 1
    %983 = vsyncpa %s982, 1
    %984 = vsyncpa [#allocation7], 1

</llo_original>
